<compile_context>
chip_gen: v7x
topology: tpu7x:2x2x1
jax: 0.10.0
libtpu: 0.0.40
codegen_flags: <defaults>
</compile_context>

<pallas_src>
import functools
import math

import jax
import jax.numpy as jnp
from jax import lax
from jax.experimental import pallas as pl
from jax.experimental.pallas import tpu as pltpu


# --------------------------- fused Pallas kernel -----------------------------

def _fused_forward_kernel(*refs, num_layers, nhead, d_model):
    # refs = (x, emb_w, emb_b, [12 refs per layer...], fc_w, fc_b, out)
    x_ref = refs[0]
    o_ref = refs[-1]
    p = refs[1:-1]
    emb_w, emb_b = p[0], p[1]
    fc_w, fc_b = p[-2], p[-1]
    layers = p[2:-2]

    E = d_model
    H = nhead
    Dh = E // H
    scale = 1.0 / math.sqrt(Dh)

    def mm(x, w_ref, b_ref=None):
        # bf16 operands, fp32 accumulation on the MXU.
        y = jnp.dot(x.astype(jnp.bfloat16), w_ref[...],
                    preferred_element_type=jnp.float32)
        if b_ref is not None:
            y = y + b_ref[...]
        return y

    def add_layernorm(x, res, g_ref, b_ref, eps=1e-5):
        # fused residual add + LayerNorm (PyTorch eps=1e-5), fp32 math.
        y = x + res
        mean = jnp.mean(y, axis=-1, keepdims=True)
        c = y - mean
        var = jnp.mean(c * c, axis=-1, keepdims=True)
        return c * lax.rsqrt(var + eps) * g_ref[...] + b_ref[...]

    h = mm(x_ref[...], emb_w, emb_b)                       # (S, E) fp32

    for l in range(num_layers):
        (in_w, in_b, out_w, out_b, ln1_g, ln1_b,
         ff1_w, ff1_b, ff2_w, ff2_b, ln2_g, ln2_b) = layers[12 * l: 12 * (l + 1)]

        # ---- multi-head self-attention (batch-local, all in VMEM) ----------
        qkv = mm(h, in_w, in_b)                            # (S, 3E) fp32
        q_all = qkv[:, :E] * scale                         # scale once on q slab
        heads = []
        for hd in range(H):
            lo = hd * Dh
            q = q_all[:, lo:lo + Dh].astype(jnp.bfloat16)                # (S, Dh)
            k = qkv[:, E + lo:E + lo + Dh].astype(jnp.bfloat16)          # (S, Dh)
            v = qkv[:, 2 * E + lo:2 * E + lo + Dh].astype(jnp.bfloat16)  # (S, Dh)
            # scores = q @ k^T  (contract head_dim of both operands)
            s = lax.dot_general(q, k, (((1,), (1,)), ((), ())),
                                preferred_element_type=jnp.float32)      # (S, S)
            s = s - jnp.max(s, axis=-1, keepdims=True)
            e = jnp.exp(s)
            prob = e * pl.reciprocal(jnp.sum(e, axis=-1, keepdims=True),
                                     approx=True)
            heads.append(jnp.dot(prob.astype(jnp.bfloat16), v,
                                 preferred_element_type=jnp.float32))    # (S, Dh)
        # Lane-concat heads back into one slab -> single deep out-proj matmul.
        attn = jnp.concatenate(heads, axis=-1)             # (S, E)
        attn = mm(attn, out_w, out_b)                      # (S, E)

        h = add_layernorm(h, attn, ln1_g, ln1_b)           # post-norm

        # ---- feed-forward ---------------------------------------------------
        ff = jnp.maximum(mm(h, ff1_w, ff1_b), 0.0)         # (S, dim_ff)
        ff = mm(ff, ff2_w, ff2_b)                          # (S, E)
        h = add_layernorm(h, ff, ln2_g, ln2_b)

    o_ref[...] = mm(h, fc_w, fc_b).astype(o_ref.dtype)     # (S, output_dim)


def forward_pallas(params, x, nhead):
    """x: (S, B, input_dim) -> (S, B, output_dim); one fused Pallas kernel."""
    S, B, input_dim = x.shape
    d_model = params["emb_w"].shape[1]
    output_dim = params["fc_w"].shape[1]
    num_layers = len(params["layers"])
    assert S % 8 == 0, "sequence length must be a multiple of 8 (sublane tile)"

    # Batch-major token slab: rows of one batch element are contiguous, so the
    # grid axis is the batch (self-attention is independent per batch element).
    x2 = x.transpose(1, 0, 2).reshape(B * S, input_dim)

    bf16 = lambda w: w.astype(jnp.bfloat16)
    flat = [bf16(params["emb_w"]), params["emb_b"]]
    for layer in params["layers"]:
        flat += [
            bf16(layer["in_proj_w"]), layer["in_proj_b"],
            bf16(layer["out_proj_w"]), layer["out_proj_b"],
            layer["ln1_g"], layer["ln1_b"],
            bf16(layer["ff1_w"]), layer["ff1_b"],
            bf16(layer["ff2_w"]), layer["ff2_b"],
            layer["ln2_g"], layer["ln2_b"],
        ]
    flat += [bf16(params["fc_w"]), params["fc_b"]]

    in_specs = [pl.BlockSpec((S, input_dim), lambda b: (b, 0))]
    # Weights: full-array VMEM-resident blocks, same block for every grid step
    # (no re-DMA across batch iterations).
    in_specs += [pl.BlockSpec(w.shape, lambda b: (0, 0)) for w in flat]
    out_spec = pl.BlockSpec((S, output_dim), lambda b: (b, 0))

    kernel = functools.partial(_fused_forward_kernel, num_layers=num_layers,
                               nhead=nhead, d_model=d_model)
    out2 = pl.pallas_call(
        kernel,
        grid=(B,),
        in_specs=in_specs,
        out_specs=out_spec,
        out_shape=jax.ShapeDtypeStruct((B * S, output_dim), jnp.float32),
        compiler_params=pltpu.CompilerParams(
            dimension_semantics=("parallel",)),
    )(x2, *flat)
    return out2.reshape(B, S, output_dim).transpose(1, 0, 2)


# ------------------------ pure-JAX fp32 reference ----------------------------

def _ln_ref(y, g, b, eps=1e-5):
    mean = y.mean(-1, keepdims=True)
    var = ((y - mean) ** 2).mean(-1, keepdims=True)
    return (y - mean) / jnp.sqrt(var + eps) * g + b


def forward_ref(params, x, nhead):
    S, B, input_dim = x.shape
    d_model = params["emb_w"].shape[1]
    Dh = d_model // nhead

    def lin(t, w, b):
        return t @ w + b

    h = lin(x.reshape(S * B, input_dim), params["emb_w"], params["emb_b"])
    for layer in params["layers"]:
        qkv = lin(h, layer["in_proj_w"], layer["in_proj_b"])
        q, k, v = jnp.split(qkv, 3, axis=-1)

        def to_heads(t):
            return t.reshape(S, B * nhead, Dh).transpose(1, 0, 2)

        qh, kh, vh = to_heads(q), to_heads(k), to_heads(v)
        s = jnp.einsum("bqd,bkd->bqk", qh / math.sqrt(Dh), kh)
        p = jax.nn.softmax(s, axis=-1)
        o = jnp.einsum("bqk,bkd->bqd", p, vh)
        o = o.transpose(1, 0, 2).reshape(S * B, d_model)
        attn_out = lin(o, layer["out_proj_w"], layer["out_proj_b"])

        h = _ln_ref(h + attn_out, layer["ln1_g"], layer["ln1_b"])
        ff = jnp.maximum(lin(h, layer["ff1_w"], layer["ff1_b"]), 0.0)
        ff = lin(ff, layer["ff2_w"], layer["ff2_b"])
        h = _ln_ref(h + ff, layer["ln2_g"], layer["ln2_b"])

    out = lin(h, params["fc_w"], params["fc_b"])
    return out.reshape(S, B, -1)


# ------------------------------ params ---------------------------------------

def init_params(key, input_dim, d_model, nhead, num_layers, output_dim,
                dim_ff=2048):
    """Deterministic synthetic parameters (weights stored as (in, out))."""
    def nxt():
        nonlocal key
        key, sub = jax.random.split(key)
        return sub

    def w(shape, scale=0.05):
        return jax.random.normal(nxt(), shape, jnp.float32) * scale

    params = {
        "emb_w": w((input_dim, d_model)),
        "emb_b": w((1, d_model)),
        "fc_w": w((d_model, output_dim)),
        "fc_b": w((1, output_dim)),
        "layers": [],
    }
    for _ in range(num_layers):
        params["layers"].append({
            "in_proj_w": w((d_model, 3 * d_model)),   # [Wq^T | Wk^T | Wv^T]
            "in_proj_b": w((1, 3 * d_model)),
            "out_proj_w": w((d_model, d_model)),
            "out_proj_b": w((1, d_model)),
            "ln1_g": jnp.ones((1, d_model), jnp.float32),
            "ln1_b": jnp.zeros((1, d_model), jnp.float32),
            "ff1_w": w((d_model, dim_ff)),
            "ff1_b": w((1, dim_ff)),
            "ff2_w": w((dim_ff, d_model)),
            "ff2_b": w((1, d_model)),
            "ln2_g": jnp.ones((1, d_model), jnp.float32),
            "ln2_b": jnp.zeros((1, d_model), jnp.float32),
        })
    return params


# ------------------------------- main -----------------------------------------

if __name__ == "__main__":
    S, B = 8, 2
    input_dim, d_model, nhead, num_layers, output_dim = 16, 32, 4, 2, 4

    key = jax.random.PRNGKey(0)
    pkey, xkey = jax.random.split(key)
    params = init_params(pkey, input_dim, d_model, nhead, num_layers, output_dim)
    x = jax.random.normal(xkey, (S, B, input_dim), dtype=jnp.float32)

    fwd = jax.jit(forward_pallas, static_argnums=(2,))
    out = jax.block_until_ready(fwd(params, x, nhead))
    ref = jax.block_until_ready(forward_ref(params, x, nhead))

    assert out.shape == (S, B, output_dim), out.shape
    # bf16 MXU operands + approx softmax reciprocal vs. pure-fp32 reference
    # -> loosened tolerance (fp32 accumulation keeps the error small).
    assert bool(jnp.allclose(out, ref, rtol=2e-2, atol=2e-2)), (
        "mismatch vs reference: max|diff|=%f"
        % float(jnp.max(jnp.abs(out - ref))))
    print("KERNEL_OK")
</pallas_src>

<mosaic_0001>
module attributes {stable_mosaic.version = 11 : i64} {
  func.func @_fused_forward_kernel(%arg0: i32, %arg1: memref<8x16xf32, #tpu.memory_space<vmem>>, %arg2: memref<16x32xbf16, #tpu.memory_space<vmem>>, %arg3: memref<1x32xf32, #tpu.memory_space<vmem>>, %arg4: memref<32x96xbf16, #tpu.memory_space<vmem>>, %arg5: memref<1x96xf32, #tpu.memory_space<vmem>>, %arg6: memref<32x32xbf16, #tpu.memory_space<vmem>>, %arg7: memref<1x32xf32, #tpu.memory_space<vmem>>, %arg8: memref<1x32xf32, #tpu.memory_space<vmem>>, %arg9: memref<1x32xf32, #tpu.memory_space<vmem>>, %arg10: memref<32x2048xbf16, #tpu.memory_space<vmem>>, %arg11: memref<1x2048xf32, #tpu.memory_space<vmem>>, %arg12: memref<2048x32xbf16, #tpu.memory_space<vmem>>, %arg13: memref<1x32xf32, #tpu.memory_space<vmem>>, %arg14: memref<1x32xf32, #tpu.memory_space<vmem>>, %arg15: memref<1x32xf32, #tpu.memory_space<vmem>>, %arg16: memref<32x96xbf16, #tpu.memory_space<vmem>>, %arg17: memref<1x96xf32, #tpu.memory_space<vmem>>, %arg18: memref<32x32xbf16, #tpu.memory_space<vmem>>, %arg19: memref<1x32xf32, #tpu.memory_space<vmem>>, %arg20: memref<1x32xf32, #tpu.memory_space<vmem>>, %arg21: memref<1x32xf32, #tpu.memory_space<vmem>>, %arg22: memref<32x2048xbf16, #tpu.memory_space<vmem>>, %arg23: memref<1x2048xf32, #tpu.memory_space<vmem>>, %arg24: memref<2048x32xbf16, #tpu.memory_space<vmem>>, %arg25: memref<1x32xf32, #tpu.memory_space<vmem>>, %arg26: memref<1x32xf32, #tpu.memory_space<vmem>>, %arg27: memref<1x32xf32, #tpu.memory_space<vmem>>, %arg28: memref<32x4xbf16, #tpu.memory_space<vmem>>, %arg29: memref<1x4xf32, #tpu.memory_space<vmem>>, %arg30: memref<8x4xf32, #tpu.memory_space<vmem>>) attributes {dimension_semantics = [#tpu.dimension_semantics<parallel>], iteration_bounds = array<i64: 2>, scalar_prefetch = 0 : i64, scratch_operands = 0 : i64, tpu.core_type = #tpu.core_type<tc>, window_params = [{transform_indices = @transform_0, window_bounds = array<i64: 8, 16>}, {pipeline_mode = #tpu.pipeline_mode<synchronous>, transform_indices = @transform_1, window_bounds = array<i64: 16, 32>}, {pipeline_mode = #tpu.pipeline_mode<synchronous>, transform_indices = @transform_2, window_bounds = array<i64: 1, 32>}, {pipeline_mode = #tpu.pipeline_mode<synchronous>, transform_indices = @transform_3, window_bounds = array<i64: 32, 96>}, {pipeline_mode = #tpu.pipeline_mode<synchronous>, transform_indices = @transform_4, window_bounds = array<i64: 1, 96>}, {pipeline_mode = #tpu.pipeline_mode<synchronous>, transform_indices = @transform_5, window_bounds = array<i64: 32, 32>}, {pipeline_mode = #tpu.pipeline_mode<synchronous>, transform_indices = @transform_6, window_bounds = array<i64: 1, 32>}, {pipeline_mode = #tpu.pipeline_mode<synchronous>, transform_indices = @transform_7, window_bounds = array<i64: 1, 32>}, {pipeline_mode = #tpu.pipeline_mode<synchronous>, transform_indices = @transform_8, window_bounds = array<i64: 1, 32>}, {pipeline_mode = #tpu.pipeline_mode<synchronous>, transform_indices = @transform_9, window_bounds = array<i64: 32, 2048>}, {pipeline_mode = #tpu.pipeline_mode<synchronous>, transform_indices = @transform_10, window_bounds = array<i64: 1, 2048>}, {pipeline_mode = #tpu.pipeline_mode<synchronous>, transform_indices = @transform_11, window_bounds = array<i64: 2048, 32>}, {pipeline_mode = #tpu.pipeline_mode<synchronous>, transform_indices = @transform_12, window_bounds = array<i64: 1, 32>}, {pipeline_mode = #tpu.pipeline_mode<synchronous>, transform_indices = @transform_13, window_bounds = array<i64: 1, 32>}, {pipeline_mode = #tpu.pipeline_mode<synchronous>, transform_indices = @transform_14, window_bounds = array<i64: 1, 32>}, {pipeline_mode = #tpu.pipeline_mode<synchronous>, transform_indices = @transform_15, window_bounds = array<i64: 32, 96>}, {pipeline_mode = #tpu.pipeline_mode<synchronous>, transform_indices = @transform_16, window_bounds = array<i64: 1, 96>}, {pipeline_mode = #tpu.pipeline_mode<synchronous>, transform_indices = @transform_17, window_bounds = array<i64: 32, 32>}, {pipeline_mode = #tpu.pipeline_mode<synchronous>, transform_indices = @transform_18, window_bounds = array<i64: 1, 32>}, {pipeline_mode = #tpu.pipeline_mode<synchronous>, transform_indices = @transform_19, window_bounds = array<i64: 1, 32>}, {pipeline_mode = #tpu.pipeline_mode<synchronous>, transform_indices = @transform_20, window_bounds = array<i64: 1, 32>}, {pipeline_mode = #tpu.pipeline_mode<synchronous>, transform_indices = @transform_21, window_bounds = array<i64: 32, 2048>}, {pipeline_mode = #tpu.pipeline_mode<synchronous>, transform_indices = @transform_22, window_bounds = array<i64: 1, 2048>}, {pipeline_mode = #tpu.pipeline_mode<synchronous>, transform_indices = @transform_23, window_bounds = array<i64: 2048, 32>}, {pipeline_mode = #tpu.pipeline_mode<synchronous>, transform_indices = @transform_24, window_bounds = array<i64: 1, 32>}, {pipeline_mode = #tpu.pipeline_mode<synchronous>, transform_indices = @transform_25, window_bounds = array<i64: 1, 32>}, {pipeline_mode = #tpu.pipeline_mode<synchronous>, transform_indices = @transform_26, window_bounds = array<i64: 1, 32>}, {pipeline_mode = #tpu.pipeline_mode<synchronous>, transform_indices = @transform_27, window_bounds = array<i64: 32, 4>}, {pipeline_mode = #tpu.pipeline_mode<synchronous>, transform_indices = @transform_28, window_bounds = array<i64: 1, 4>}, {transform_indices = @transform_29, window_bounds = array<i64: 8, 4>}]} {
    %c0 = arith.constant 0 : index
    %c0_0 = arith.constant 0 : index
    %0 = vector.load %arg1[%c0, %c0_0] : memref<8x16xf32, #tpu.memory_space<vmem>>, vector<8x16xf32>
    %1 = arith.truncf %0 : vector<8x16xf32> to vector<8x16xbf16>
    %c0_1 = arith.constant 0 : index
    %c0_2 = arith.constant 0 : index
    %2 = vector.load %arg2[%c0_1, %c0_2] : memref<16x32xbf16, #tpu.memory_space<vmem>>, vector<16x32xbf16>
    %cst = arith.constant dense<0.000000e+00> : vector<8x32xf32>
    %3 = tpu.matmul %1, %2, %cst {dimension_numbers = #tpu.dot_dimension_numbers<[1], [0], [0], [1], [0, 0, 1, 1], [], []>} : vector<8x16xbf16>, vector<16x32xbf16>, vector<8x32xf32> -> vector<8x32xf32>
    %c0_3 = arith.constant 0 : index
    %c0_4 = arith.constant 0 : index
    %4 = vector.load %arg3[%c0_3, %c0_4] : memref<1x32xf32, #tpu.memory_space<vmem>>, vector<1x32xf32>
    %5 = vector.broadcast %4 : vector<1x32xf32> to vector<8x32xf32>
    %6 = arith.addf %3, %5 : vector<8x32xf32>
    %7 = arith.truncf %6 : vector<8x32xf32> to vector<8x32xbf16>
    %c0_5 = arith.constant 0 : index
    %c0_6 = arith.constant 0 : index
    %8 = vector.load %arg4[%c0_5, %c0_6] : memref<32x96xbf16, #tpu.memory_space<vmem>>, vector<32x96xbf16>
    %cst_7 = arith.constant dense<0.000000e+00> : vector<8x96xf32>
    %9 = tpu.matmul %7, %8, %cst_7 {dimension_numbers = #tpu.dot_dimension_numbers<[1], [0], [0], [1], [0, 0, 1, 1], [], []>} : vector<8x32xbf16>, vector<32x96xbf16>, vector<8x96xf32> -> vector<8x96xf32>
    %c0_8 = arith.constant 0 : index
    %c0_9 = arith.constant 0 : index
    %10 = vector.load %arg5[%c0_8, %c0_9] : memref<1x96xf32, #tpu.memory_space<vmem>>, vector<1x96xf32>
    %11 = vector.broadcast %10 : vector<1x96xf32> to vector<8x96xf32>
    %12 = arith.addf %9, %11 : vector<8x96xf32>
    %13 = vector.extract_strided_slice %12 {offsets = [0, 0], sizes = [8, 32], strides = [1, 1]} : vector<8x96xf32> to vector<8x32xf32>
    %cst_10 = arith.constant 0.353553385 : f32
    %14 = vector.broadcast %cst_10 : f32 to vector<8x32xf32>
    %15 = arith.mulf %13, %14 : vector<8x32xf32>
    %16 = vector.extract_strided_slice %15 {offsets = [0, 0], sizes = [8, 8], strides = [1, 1]} : vector<8x32xf32> to vector<8x8xf32>
    %17 = arith.truncf %16 : vector<8x8xf32> to vector<8x8xbf16>
    %18 = vector.extract_strided_slice %12 {offsets = [0, 32], sizes = [8, 8], strides = [1, 1]} : vector<8x96xf32> to vector<8x8xf32>
    %19 = arith.truncf %18 : vector<8x8xf32> to vector<8x8xbf16>
    %20 = vector.extract_strided_slice %12 {offsets = [0, 64], sizes = [8, 8], strides = [1, 1]} : vector<8x96xf32> to vector<8x8xf32>
    %21 = arith.truncf %20 : vector<8x8xf32> to vector<8x8xbf16>
    %cst_11 = arith.constant dense<0.000000e+00> : vector<8x8xf32>
    %22 = tpu.matmul %17, %19, %cst_11 {dimension_numbers = #tpu.dot_dimension_numbers<[1], [1], [0], [0], [0, 0, 1, 0], [], []>} : vector<8x8xbf16>, vector<8x8xbf16>, vector<8x8xf32> -> vector<8x8xf32>
    %cst_12 = arith.constant dense<0xFF800000> : vector<8xf32>
    %23 = vector.multi_reduction <maximumf>, %22, %cst_12 [1] : vector<8x8xf32> to vector<8xf32>
    %24 = vector.shape_cast %23 : vector<8xf32> to vector<8x1xf32>
    %25 = vector.broadcast %24 : vector<8x1xf32> to vector<8x8xf32>
    %26 = arith.subf %22, %25 : vector<8x8xf32>
    %27 = math.exp %26 : vector<8x8xf32>
    %cst_13 = arith.constant dense<0.000000e+00> : vector<8xf32>
    %28 = vector.multi_reduction <add>, %27, %cst_13 [1] : vector<8x8xf32> to vector<8xf32>
    %29 = vector.shape_cast %28 : vector<8xf32> to vector<8x1xf32>
    %30 = tpu.reciprocal %29 {approx = true} : vector<8x1xf32> -> vector<8x1xf32>
    %31 = vector.broadcast %30 : vector<8x1xf32> to vector<8x8xf32>
    %32 = arith.mulf %27, %31 : vector<8x8xf32>
    %33 = arith.truncf %32 : vector<8x8xf32> to vector<8x8xbf16>
    %cst_14 = arith.constant dense<0.000000e+00> : vector<8x8xf32>
    %34 = tpu.matmul %33, %21, %cst_14 {dimension_numbers = #tpu.dot_dimension_numbers<[1], [0], [0], [1], [0, 0, 1, 1], [], []>} : vector<8x8xbf16>, vector<8x8xbf16>, vector<8x8xf32> -> vector<8x8xf32>
    %35 = vector.extract_strided_slice %15 {offsets = [0, 8], sizes = [8, 8], strides = [1, 1]} : vector<8x32xf32> to vector<8x8xf32>
    %36 = arith.truncf %35 : vector<8x8xf32> to vector<8x8xbf16>
    %37 = vector.extract_strided_slice %12 {offsets = [0, 40], sizes = [8, 8], strides = [1, 1]} : vector<8x96xf32> to vector<8x8xf32>
    %38 = arith.truncf %37 : vector<8x8xf32> to vector<8x8xbf16>
    %39 = vector.extract_strided_slice %12 {offsets = [0, 72], sizes = [8, 8], strides = [1, 1]} : vector<8x96xf32> to vector<8x8xf32>
    %40 = arith.truncf %39 : vector<8x8xf32> to vector<8x8xbf16>
    %cst_15 = arith.constant dense<0.000000e+00> : vector<8x8xf32>
    %41 = tpu.matmul %36, %38, %cst_15 {dimension_numbers = #tpu.dot_dimension_numbers<[1], [1], [0], [0], [0, 0, 1, 0], [], []>} : vector<8x8xbf16>, vector<8x8xbf16>, vector<8x8xf32> -> vector<8x8xf32>
    %cst_16 = arith.constant dense<0xFF800000> : vector<8xf32>
    %42 = vector.multi_reduction <maximumf>, %41, %cst_16 [1] : vector<8x8xf32> to vector<8xf32>
    %43 = vector.shape_cast %42 : vector<8xf32> to vector<8x1xf32>
    %44 = vector.broadcast %43 : vector<8x1xf32> to vector<8x8xf32>
    %45 = arith.subf %41, %44 : vector<8x8xf32>
    %46 = math.exp %45 : vector<8x8xf32>
    %cst_17 = arith.constant dense<0.000000e+00> : vector<8xf32>
    %47 = vector.multi_reduction <add>, %46, %cst_17 [1] : vector<8x8xf32> to vector<8xf32>
    %48 = vector.shape_cast %47 : vector<8xf32> to vector<8x1xf32>
    %49 = tpu.reciprocal %48 {approx = true} : vector<8x1xf32> -> vector<8x1xf32>
    %50 = vector.broadcast %49 : vector<8x1xf32> to vector<8x8xf32>
    %51 = arith.mulf %46, %50 : vector<8x8xf32>
    %52 = arith.truncf %51 : vector<8x8xf32> to vector<8x8xbf16>
    %cst_18 = arith.constant dense<0.000000e+00> : vector<8x8xf32>
    %53 = tpu.matmul %52, %40, %cst_18 {dimension_numbers = #tpu.dot_dimension_numbers<[1], [0], [0], [1], [0, 0, 1, 1], [], []>} : vector<8x8xbf16>, vector<8x8xbf16>, vector<8x8xf32> -> vector<8x8xf32>
    %54 = vector.extract_strided_slice %15 {offsets = [0, 16], sizes = [8, 8], strides = [1, 1]} : vector<8x32xf32> to vector<8x8xf32>
    %55 = arith.truncf %54 : vector<8x8xf32> to vector<8x8xbf16>
    %56 = vector.extract_strided_slice %12 {offsets = [0, 48], sizes = [8, 8], strides = [1, 1]} : vector<8x96xf32> to vector<8x8xf32>
    %57 = arith.truncf %56 : vector<8x8xf32> to vector<8x8xbf16>
    %58 = vector.extract_strided_slice %12 {offsets = [0, 80], sizes = [8, 8], strides = [1, 1]} : vector<8x96xf32> to vector<8x8xf32>
    %59 = arith.truncf %58 : vector<8x8xf32> to vector<8x8xbf16>
    %cst_19 = arith.constant dense<0.000000e+00> : vector<8x8xf32>
    %60 = tpu.matmul %55, %57, %cst_19 {dimension_numbers = #tpu.dot_dimension_numbers<[1], [1], [0], [0], [0, 0, 1, 0], [], []>} : vector<8x8xbf16>, vector<8x8xbf16>, vector<8x8xf32> -> vector<8x8xf32>
    %cst_20 = arith.constant dense<0xFF800000> : vector<8xf32>
    %61 = vector.multi_reduction <maximumf>, %60, %cst_20 [1] : vector<8x8xf32> to vector<8xf32>
    %62 = vector.shape_cast %61 : vector<8xf32> to vector<8x1xf32>
    %63 = vector.broadcast %62 : vector<8x1xf32> to vector<8x8xf32>
    %64 = arith.subf %60, %63 : vector<8x8xf32>
    %65 = math.exp %64 : vector<8x8xf32>
    %cst_21 = arith.constant dense<0.000000e+00> : vector<8xf32>
    %66 = vector.multi_reduction <add>, %65, %cst_21 [1] : vector<8x8xf32> to vector<8xf32>
    %67 = vector.shape_cast %66 : vector<8xf32> to vector<8x1xf32>
    %68 = tpu.reciprocal %67 {approx = true} : vector<8x1xf32> -> vector<8x1xf32>
    %69 = vector.broadcast %68 : vector<8x1xf32> to vector<8x8xf32>
    %70 = arith.mulf %65, %69 : vector<8x8xf32>
    %71 = arith.truncf %70 : vector<8x8xf32> to vector<8x8xbf16>
    %cst_22 = arith.constant dense<0.000000e+00> : vector<8x8xf32>
    %72 = tpu.matmul %71, %59, %cst_22 {dimension_numbers = #tpu.dot_dimension_numbers<[1], [0], [0], [1], [0, 0, 1, 1], [], []>} : vector<8x8xbf16>, vector<8x8xbf16>, vector<8x8xf32> -> vector<8x8xf32>
    %73 = vector.extract_strided_slice %15 {offsets = [0, 24], sizes = [8, 8], strides = [1, 1]} : vector<8x32xf32> to vector<8x8xf32>
    %74 = arith.truncf %73 : vector<8x8xf32> to vector<8x8xbf16>
    %75 = vector.extract_strided_slice %12 {offsets = [0, 56], sizes = [8, 8], strides = [1, 1]} : vector<8x96xf32> to vector<8x8xf32>
    %76 = arith.truncf %75 : vector<8x8xf32> to vector<8x8xbf16>
    %77 = vector.extract_strided_slice %12 {offsets = [0, 88], sizes = [8, 8], strides = [1, 1]} : vector<8x96xf32> to vector<8x8xf32>
    %78 = arith.truncf %77 : vector<8x8xf32> to vector<8x8xbf16>
    %cst_23 = arith.constant dense<0.000000e+00> : vector<8x8xf32>
    %79 = tpu.matmul %74, %76, %cst_23 {dimension_numbers = #tpu.dot_dimension_numbers<[1], [1], [0], [0], [0, 0, 1, 0], [], []>} : vector<8x8xbf16>, vector<8x8xbf16>, vector<8x8xf32> -> vector<8x8xf32>
    %cst_24 = arith.constant dense<0xFF800000> : vector<8xf32>
    %80 = vector.multi_reduction <maximumf>, %79, %cst_24 [1] : vector<8x8xf32> to vector<8xf32>
    %81 = vector.shape_cast %80 : vector<8xf32> to vector<8x1xf32>
    %82 = vector.broadcast %81 : vector<8x1xf32> to vector<8x8xf32>
    %83 = arith.subf %79, %82 : vector<8x8xf32>
    %84 = math.exp %83 : vector<8x8xf32>
    %cst_25 = arith.constant dense<0.000000e+00> : vector<8xf32>
    %85 = vector.multi_reduction <add>, %84, %cst_25 [1] : vector<8x8xf32> to vector<8xf32>
    %86 = vector.shape_cast %85 : vector<8xf32> to vector<8x1xf32>
    %87 = tpu.reciprocal %86 {approx = true} : vector<8x1xf32> -> vector<8x1xf32>
    %88 = vector.broadcast %87 : vector<8x1xf32> to vector<8x8xf32>
    %89 = arith.mulf %84, %88 : vector<8x8xf32>
    %90 = arith.truncf %89 : vector<8x8xf32> to vector<8x8xbf16>
    %cst_26 = arith.constant dense<0.000000e+00> : vector<8x8xf32>
    %91 = tpu.matmul %90, %78, %cst_26 {dimension_numbers = #tpu.dot_dimension_numbers<[1], [0], [0], [1], [0, 0, 1, 1], [], []>} : vector<8x8xbf16>, vector<8x8xbf16>, vector<8x8xf32> -> vector<8x8xf32>
    %92 = tpu.concatenate %34, %53, %72, %91 in 1 : vector<8x8xf32>, vector<8x8xf32>, vector<8x8xf32>, vector<8x8xf32> -> vector<8x32xf32>
    %93 = arith.truncf %92 : vector<8x32xf32> to vector<8x32xbf16>
    %c0_27 = arith.constant 0 : index
    %c0_28 = arith.constant 0 : index
    %94 = vector.load %arg6[%c0_27, %c0_28] : memref<32x32xbf16, #tpu.memory_space<vmem>>, vector<32x32xbf16>
    %cst_29 = arith.constant dense<0.000000e+00> : vector<8x32xf32>
    %95 = tpu.matmul %93, %94, %cst_29 {dimension_numbers = #tpu.dot_dimension_numbers<[1], [0], [0], [1], [0, 0, 1, 1], [], []>} : vector<8x32xbf16>, vector<32x32xbf16>, vector<8x32xf32> -> vector<8x32xf32>
    %c0_30 = arith.constant 0 : index
    %c0_31 = arith.constant 0 : index
    %96 = vector.load %arg7[%c0_30, %c0_31] : memref<1x32xf32, #tpu.memory_space<vmem>>, vector<1x32xf32>
    %97 = vector.broadcast %96 : vector<1x32xf32> to vector<8x32xf32>
    %98 = arith.addf %95, %97 : vector<8x32xf32>
    %99 = arith.addf %6, %98 : vector<8x32xf32>
    %cst_32 = arith.constant dense<0.000000e+00> : vector<8xf32>
    %100 = vector.multi_reduction <add>, %99, %cst_32 [1] : vector<8x32xf32> to vector<8xf32>
    %101 = vector.shape_cast %100 : vector<8xf32> to vector<8x1xf32>
    %cst_33 = arith.constant 3.200000e+01 : f32
    %102 = vector.broadcast %cst_33 : f32 to vector<8x1xf32>
    %103 = arith.divf %101, %102 : vector<8x1xf32>
    %104 = vector.broadcast %103 : vector<8x1xf32> to vector<8x32xf32>
    %105 = arith.subf %99, %104 : vector<8x32xf32>
    %106 = arith.mulf %105, %105 : vector<8x32xf32>
    %cst_34 = arith.constant dense<0.000000e+00> : vector<8xf32>
    %107 = vector.multi_reduction <add>, %106, %cst_34 [1] : vector<8x32xf32> to vector<8xf32>
    %108 = vector.shape_cast %107 : vector<8xf32> to vector<8x1xf32>
    %cst_35 = arith.constant 3.200000e+01 : f32
    %109 = vector.broadcast %cst_35 : f32 to vector<8x1xf32>
    %110 = arith.divf %108, %109 : vector<8x1xf32>
    %cst_36 = arith.constant 9.99999974E-6 : f32
    %111 = vector.broadcast %cst_36 : f32 to vector<8x1xf32>
    %112 = arith.addf %110, %111 : vector<8x1xf32>
    %113 = math.rsqrt %112 : vector<8x1xf32>
    %114 = vector.broadcast %113 : vector<8x1xf32> to vector<8x32xf32>
    %115 = arith.mulf %105, %114 : vector<8x32xf32>
    %c0_37 = arith.constant 0 : index
    %c0_38 = arith.constant 0 : index
    %116 = vector.load %arg8[%c0_37, %c0_38] : memref<1x32xf32, #tpu.memory_space<vmem>>, vector<1x32xf32>
    %117 = vector.broadcast %116 : vector<1x32xf32> to vector<8x32xf32>
    %118 = arith.mulf %115, %117 : vector<8x32xf32>
    %c0_39 = arith.constant 0 : index
    %c0_40 = arith.constant 0 : index
    %119 = vector.load %arg9[%c0_39, %c0_40] : memref<1x32xf32, #tpu.memory_space<vmem>>, vector<1x32xf32>
    %120 = vector.broadcast %119 : vector<1x32xf32> to vector<8x32xf32>
    %121 = arith.addf %118, %120 : vector<8x32xf32>
    %122 = arith.truncf %121 : vector<8x32xf32> to vector<8x32xbf16>
    %c0_41 = arith.constant 0 : index
    %c0_42 = arith.constant 0 : index
    %123 = vector.load %arg10[%c0_41, %c0_42] : memref<32x2048xbf16, #tpu.memory_space<vmem>>, vector<32x2048xbf16>
    %cst_43 = arith.constant dense<0.000000e+00> : vector<8x2048xf32>
    %124 = tpu.matmul %122, %123, %cst_43 {dimension_numbers = #tpu.dot_dimension_numbers<[1], [0], [0], [1], [0, 0, 1, 1], [], []>} : vector<8x32xbf16>, vector<32x2048xbf16>, vector<8x2048xf32> -> vector<8x2048xf32>
    %c0_44 = arith.constant 0 : index
    %c0_45 = arith.constant 0 : index
    %125 = vector.load %arg11[%c0_44, %c0_45] : memref<1x2048xf32, #tpu.memory_space<vmem>>, vector<1x2048xf32>
    %126 = vector.broadcast %125 : vector<1x2048xf32> to vector<8x2048xf32>
    %127 = arith.addf %124, %126 : vector<8x2048xf32>
    %cst_46 = arith.constant 0.000000e+00 : f32
    %128 = vector.broadcast %cst_46 : f32 to vector<8x2048xf32>
    %129 = arith.maximumf %127, %128 : vector<8x2048xf32>
    %130 = arith.truncf %129 : vector<8x2048xf32> to vector<8x2048xbf16>
    %c0_47 = arith.constant 0 : index
    %c0_48 = arith.constant 0 : index
    %131 = vector.load %arg12[%c0_47, %c0_48] : memref<2048x32xbf16, #tpu.memory_space<vmem>>, vector<2048x32xbf16>
    %cst_49 = arith.constant dense<0.000000e+00> : vector<8x32xf32>
    %132 = tpu.matmul %130, %131, %cst_49 {dimension_numbers = #tpu.dot_dimension_numbers<[1], [0], [0], [1], [0, 0, 1, 1], [], []>} : vector<8x2048xbf16>, vector<2048x32xbf16>, vector<8x32xf32> -> vector<8x32xf32>
    %c0_50 = arith.constant 0 : index
    %c0_51 = arith.constant 0 : index
    %133 = vector.load %arg13[%c0_50, %c0_51] : memref<1x32xf32, #tpu.memory_space<vmem>>, vector<1x32xf32>
    %134 = vector.broadcast %133 : vector<1x32xf32> to vector<8x32xf32>
    %135 = arith.addf %132, %134 : vector<8x32xf32>
    %136 = arith.addf %121, %135 : vector<8x32xf32>
    %cst_52 = arith.constant dense<0.000000e+00> : vector<8xf32>
    %137 = vector.multi_reduction <add>, %136, %cst_52 [1] : vector<8x32xf32> to vector<8xf32>
    %138 = vector.shape_cast %137 : vector<8xf32> to vector<8x1xf32>
    %cst_53 = arith.constant 3.200000e+01 : f32
    %139 = vector.broadcast %cst_53 : f32 to vector<8x1xf32>
    %140 = arith.divf %138, %139 : vector<8x1xf32>
    %141 = vector.broadcast %140 : vector<8x1xf32> to vector<8x32xf32>
    %142 = arith.subf %136, %141 : vector<8x32xf32>
    %143 = arith.mulf %142, %142 : vector<8x32xf32>
    %cst_54 = arith.constant dense<0.000000e+00> : vector<8xf32>
    %144 = vector.multi_reduction <add>, %143, %cst_54 [1] : vector<8x32xf32> to vector<8xf32>
    %145 = vector.shape_cast %144 : vector<8xf32> to vector<8x1xf32>
    %cst_55 = arith.constant 3.200000e+01 : f32
    %146 = vector.broadcast %cst_55 : f32 to vector<8x1xf32>
    %147 = arith.divf %145, %146 : vector<8x1xf32>
    %cst_56 = arith.constant 9.99999974E-6 : f32
    %148 = vector.broadcast %cst_56 : f32 to vector<8x1xf32>
    %149 = arith.addf %147, %148 : vector<8x1xf32>
    %150 = math.rsqrt %149 : vector<8x1xf32>
    %151 = vector.broadcast %150 : vector<8x1xf32> to vector<8x32xf32>
    %152 = arith.mulf %142, %151 : vector<8x32xf32>
    %c0_57 = arith.constant 0 : index
    %c0_58 = arith.constant 0 : index
    %153 = vector.load %arg14[%c0_57, %c0_58] : memref<1x32xf32, #tpu.memory_space<vmem>>, vector<1x32xf32>
    %154 = vector.broadcast %153 : vector<1x32xf32> to vector<8x32xf32>
    %155 = arith.mulf %152, %154 : vector<8x32xf32>
    %c0_59 = arith.constant 0 : index
    %c0_60 = arith.constant 0 : index
    %156 = vector.load %arg15[%c0_59, %c0_60] : memref<1x32xf32, #tpu.memory_space<vmem>>, vector<1x32xf32>
    %157 = vector.broadcast %156 : vector<1x32xf32> to vector<8x32xf32>
    %158 = arith.addf %155, %157 : vector<8x32xf32>
    %159 = arith.truncf %158 : vector<8x32xf32> to vector<8x32xbf16>
    %c0_61 = arith.constant 0 : index
    %c0_62 = arith.constant 0 : index
    %160 = vector.load %arg16[%c0_61, %c0_62] : memref<32x96xbf16, #tpu.memory_space<vmem>>, vector<32x96xbf16>
    %cst_63 = arith.constant dense<0.000000e+00> : vector<8x96xf32>
    %161 = tpu.matmul %159, %160, %cst_63 {dimension_numbers = #tpu.dot_dimension_numbers<[1], [0], [0], [1], [0, 0, 1, 1], [], []>} : vector<8x32xbf16>, vector<32x96xbf16>, vector<8x96xf32> -> vector<8x96xf32>
    %c0_64 = arith.constant 0 : index
    %c0_65 = arith.constant 0 : index
    %162 = vector.load %arg17[%c0_64, %c0_65] : memref<1x96xf32, #tpu.memory_space<vmem>>, vector<1x96xf32>
    %163 = vector.broadcast %162 : vector<1x96xf32> to vector<8x96xf32>
    %164 = arith.addf %161, %163 : vector<8x96xf32>
    %165 = vector.extract_strided_slice %164 {offsets = [0, 0], sizes = [8, 32], strides = [1, 1]} : vector<8x96xf32> to vector<8x32xf32>
    %cst_66 = arith.constant 0.353553385 : f32
    %166 = vector.broadcast %cst_66 : f32 to vector<8x32xf32>
    %167 = arith.mulf %165, %166 : vector<8x32xf32>
    %168 = vector.extract_strided_slice %167 {offsets = [0, 0], sizes = [8, 8], strides = [1, 1]} : vector<8x32xf32> to vector<8x8xf32>
    %169 = arith.truncf %168 : vector<8x8xf32> to vector<8x8xbf16>
    %170 = vector.extract_strided_slice %164 {offsets = [0, 32], sizes = [8, 8], strides = [1, 1]} : vector<8x96xf32> to vector<8x8xf32>
    %171 = arith.truncf %170 : vector<8x8xf32> to vector<8x8xbf16>
    %172 = vector.extract_strided_slice %164 {offsets = [0, 64], sizes = [8, 8], strides = [1, 1]} : vector<8x96xf32> to vector<8x8xf32>
    %173 = arith.truncf %172 : vector<8x8xf32> to vector<8x8xbf16>
    %cst_67 = arith.constant dense<0.000000e+00> : vector<8x8xf32>
    %174 = tpu.matmul %169, %171, %cst_67 {dimension_numbers = #tpu.dot_dimension_numbers<[1], [1], [0], [0], [0, 0, 1, 0], [], []>} : vector<8x8xbf16>, vector<8x8xbf16>, vector<8x8xf32> -> vector<8x8xf32>
    %cst_68 = arith.constant dense<0xFF800000> : vector<8xf32>
    %175 = vector.multi_reduction <maximumf>, %174, %cst_68 [1] : vector<8x8xf32> to vector<8xf32>
    %176 = vector.shape_cast %175 : vector<8xf32> to vector<8x1xf32>
    %177 = vector.broadcast %176 : vector<8x1xf32> to vector<8x8xf32>
    %178 = arith.subf %174, %177 : vector<8x8xf32>
    %179 = math.exp %178 : vector<8x8xf32>
    %cst_69 = arith.constant dense<0.000000e+00> : vector<8xf32>
    %180 = vector.multi_reduction <add>, %179, %cst_69 [1] : vector<8x8xf32> to vector<8xf32>
    %181 = vector.shape_cast %180 : vector<8xf32> to vector<8x1xf32>
    %182 = tpu.reciprocal %181 {approx = true} : vector<8x1xf32> -> vector<8x1xf32>
    %183 = vector.broadcast %182 : vector<8x1xf32> to vector<8x8xf32>
    %184 = arith.mulf %179, %183 : vector<8x8xf32>
    %185 = arith.truncf %184 : vector<8x8xf32> to vector<8x8xbf16>
    %cst_70 = arith.constant dense<0.000000e+00> : vector<8x8xf32>
    %186 = tpu.matmul %185, %173, %cst_70 {dimension_numbers = #tpu.dot_dimension_numbers<[1], [0], [0], [1], [0, 0, 1, 1], [], []>} : vector<8x8xbf16>, vector<8x8xbf16>, vector<8x8xf32> -> vector<8x8xf32>
    %187 = vector.extract_strided_slice %167 {offsets = [0, 8], sizes = [8, 8], strides = [1, 1]} : vector<8x32xf32> to vector<8x8xf32>
    %188 = arith.truncf %187 : vector<8x8xf32> to vector<8x8xbf16>
    %189 = vector.extract_strided_slice %164 {offsets = [0, 40], sizes = [8, 8], strides = [1, 1]} : vector<8x96xf32> to vector<8x8xf32>
    %190 = arith.truncf %189 : vector<8x8xf32> to vector<8x8xbf16>
    %191 = vector.extract_strided_slice %164 {offsets = [0, 72], sizes = [8, 8], strides = [1, 1]} : vector<8x96xf32> to vector<8x8xf32>
    %192 = arith.truncf %191 : vector<8x8xf32> to vector<8x8xbf16>
    %cst_71 = arith.constant dense<0.000000e+00> : vector<8x8xf32>
    %193 = tpu.matmul %188, %190, %cst_71 {dimension_numbers = #tpu.dot_dimension_numbers<[1], [1], [0], [0], [0, 0, 1, 0], [], []>} : vector<8x8xbf16>, vector<8x8xbf16>, vector<8x8xf32> -> vector<8x8xf32>
    %cst_72 = arith.constant dense<0xFF800000> : vector<8xf32>
    %194 = vector.multi_reduction <maximumf>, %193, %cst_72 [1] : vector<8x8xf32> to vector<8xf32>
    %195 = vector.shape_cast %194 : vector<8xf32> to vector<8x1xf32>
    %196 = vector.broadcast %195 : vector<8x1xf32> to vector<8x8xf32>
    %197 = arith.subf %193, %196 : vector<8x8xf32>
    %198 = math.exp %197 : vector<8x8xf32>
    %cst_73 = arith.constant dense<0.000000e+00> : vector<8xf32>
    %199 = vector.multi_reduction <add>, %198, %cst_73 [1] : vector<8x8xf32> to vector<8xf32>
    %200 = vector.shape_cast %199 : vector<8xf32> to vector<8x1xf32>
    %201 = tpu.reciprocal %200 {approx = true} : vector<8x1xf32> -> vector<8x1xf32>
    %202 = vector.broadcast %201 : vector<8x1xf32> to vector<8x8xf32>
    %203 = arith.mulf %198, %202 : vector<8x8xf32>
    %204 = arith.truncf %203 : vector<8x8xf32> to vector<8x8xbf16>
    %cst_74 = arith.constant dense<0.000000e+00> : vector<8x8xf32>
    %205 = tpu.matmul %204, %192, %cst_74 {dimension_numbers = #tpu.dot_dimension_numbers<[1], [0], [0], [1], [0, 0, 1, 1], [], []>} : vector<8x8xbf16>, vector<8x8xbf16>, vector<8x8xf32> -> vector<8x8xf32>
    %206 = vector.extract_strided_slice %167 {offsets = [0, 16], sizes = [8, 8], strides = [1, 1]} : vector<8x32xf32> to vector<8x8xf32>
    %207 = arith.truncf %206 : vector<8x8xf32> to vector<8x8xbf16>
    %208 = vector.extract_strided_slice %164 {offsets = [0, 48], sizes = [8, 8], strides = [1, 1]} : vector<8x96xf32> to vector<8x8xf32>
    %209 = arith.truncf %208 : vector<8x8xf32> to vector<8x8xbf16>
    %210 = vector.extract_strided_slice %164 {offsets = [0, 80], sizes = [8, 8], strides = [1, 1]} : vector<8x96xf32> to vector<8x8xf32>
    %211 = arith.truncf %210 : vector<8x8xf32> to vector<8x8xbf16>
    %cst_75 = arith.constant dense<0.000000e+00> : vector<8x8xf32>
    %212 = tpu.matmul %207, %209, %cst_75 {dimension_numbers = #tpu.dot_dimension_numbers<[1], [1], [0], [0], [0, 0, 1, 0], [], []>} : vector<8x8xbf16>, vector<8x8xbf16>, vector<8x8xf32> -> vector<8x8xf32>
    %cst_76 = arith.constant dense<0xFF800000> : vector<8xf32>
    %213 = vector.multi_reduction <maximumf>, %212, %cst_76 [1] : vector<8x8xf32> to vector<8xf32>
    %214 = vector.shape_cast %213 : vector<8xf32> to vector<8x1xf32>
    %215 = vector.broadcast %214 : vector<8x1xf32> to vector<8x8xf32>
    %216 = arith.subf %212, %215 : vector<8x8xf32>
    %217 = math.exp %216 : vector<8x8xf32>
    %cst_77 = arith.constant dense<0.000000e+00> : vector<8xf32>
    %218 = vector.multi_reduction <add>, %217, %cst_77 [1] : vector<8x8xf32> to vector<8xf32>
    %219 = vector.shape_cast %218 : vector<8xf32> to vector<8x1xf32>
    %220 = tpu.reciprocal %219 {approx = true} : vector<8x1xf32> -> vector<8x1xf32>
    %221 = vector.broadcast %220 : vector<8x1xf32> to vector<8x8xf32>
    %222 = arith.mulf %217, %221 : vector<8x8xf32>
    %223 = arith.truncf %222 : vector<8x8xf32> to vector<8x8xbf16>
    %cst_78 = arith.constant dense<0.000000e+00> : vector<8x8xf32>
    %224 = tpu.matmul %223, %211, %cst_78 {dimension_numbers = #tpu.dot_dimension_numbers<[1], [0], [0], [1], [0, 0, 1, 1], [], []>} : vector<8x8xbf16>, vector<8x8xbf16>, vector<8x8xf32> -> vector<8x8xf32>
    %225 = vector.extract_strided_slice %167 {offsets = [0, 24], sizes = [8, 8], strides = [1, 1]} : vector<8x32xf32> to vector<8x8xf32>
    %226 = arith.truncf %225 : vector<8x8xf32> to vector<8x8xbf16>
    %227 = vector.extract_strided_slice %164 {offsets = [0, 56], sizes = [8, 8], strides = [1, 1]} : vector<8x96xf32> to vector<8x8xf32>
    %228 = arith.truncf %227 : vector<8x8xf32> to vector<8x8xbf16>
    %229 = vector.extract_strided_slice %164 {offsets = [0, 88], sizes = [8, 8], strides = [1, 1]} : vector<8x96xf32> to vector<8x8xf32>
    %230 = arith.truncf %229 : vector<8x8xf32> to vector<8x8xbf16>
    %cst_79 = arith.constant dense<0.000000e+00> : vector<8x8xf32>
    %231 = tpu.matmul %226, %228, %cst_79 {dimension_numbers = #tpu.dot_dimension_numbers<[1], [1], [0], [0], [0, 0, 1, 0], [], []>} : vector<8x8xbf16>, vector<8x8xbf16>, vector<8x8xf32> -> vector<8x8xf32>
    %cst_80 = arith.constant dense<0xFF800000> : vector<8xf32>
    %232 = vector.multi_reduction <maximumf>, %231, %cst_80 [1] : vector<8x8xf32> to vector<8xf32>
    %233 = vector.shape_cast %232 : vector<8xf32> to vector<8x1xf32>
    %234 = vector.broadcast %233 : vector<8x1xf32> to vector<8x8xf32>
    %235 = arith.subf %231, %234 : vector<8x8xf32>
    %236 = math.exp %235 : vector<8x8xf32>
    %cst_81 = arith.constant dense<0.000000e+00> : vector<8xf32>
    %237 = vector.multi_reduction <add>, %236, %cst_81 [1] : vector<8x8xf32> to vector<8xf32>
    %238 = vector.shape_cast %237 : vector<8xf32> to vector<8x1xf32>
    %239 = tpu.reciprocal %238 {approx = true} : vector<8x1xf32> -> vector<8x1xf32>
    %240 = vector.broadcast %239 : vector<8x1xf32> to vector<8x8xf32>
    %241 = arith.mulf %236, %240 : vector<8x8xf32>
    %242 = arith.truncf %241 : vector<8x8xf32> to vector<8x8xbf16>
    %cst_82 = arith.constant dense<0.000000e+00> : vector<8x8xf32>
    %243 = tpu.matmul %242, %230, %cst_82 {dimension_numbers = #tpu.dot_dimension_numbers<[1], [0], [0], [1], [0, 0, 1, 1], [], []>} : vector<8x8xbf16>, vector<8x8xbf16>, vector<8x8xf32> -> vector<8x8xf32>
    %244 = tpu.concatenate %186, %205, %224, %243 in 1 : vector<8x8xf32>, vector<8x8xf32>, vector<8x8xf32>, vector<8x8xf32> -> vector<8x32xf32>
    %245 = arith.truncf %244 : vector<8x32xf32> to vector<8x32xbf16>
    %c0_83 = arith.constant 0 : index
    %c0_84 = arith.constant 0 : index
    %246 = vector.load %arg18[%c0_83, %c0_84] : memref<32x32xbf16, #tpu.memory_space<vmem>>, vector<32x32xbf16>
    %cst_85 = arith.constant dense<0.000000e+00> : vector<8x32xf32>
    %247 = tpu.matmul %245, %246, %cst_85 {dimension_numbers = #tpu.dot_dimension_numbers<[1], [0], [0], [1], [0, 0, 1, 1], [], []>} : vector<8x32xbf16>, vector<32x32xbf16>, vector<8x32xf32> -> vector<8x32xf32>
    %c0_86 = arith.constant 0 : index
    %c0_87 = arith.constant 0 : index
    %248 = vector.load %arg19[%c0_86, %c0_87] : memref<1x32xf32, #tpu.memory_space<vmem>>, vector<1x32xf32>
    %249 = vector.broadcast %248 : vector<1x32xf32> to vector<8x32xf32>
    %250 = arith.addf %247, %249 : vector<8x32xf32>
    %251 = arith.addf %158, %250 : vector<8x32xf32>
    %cst_88 = arith.constant dense<0.000000e+00> : vector<8xf32>
    %252 = vector.multi_reduction <add>, %251, %cst_88 [1] : vector<8x32xf32> to vector<8xf32>
    %253 = vector.shape_cast %252 : vector<8xf32> to vector<8x1xf32>
    %cst_89 = arith.constant 3.200000e+01 : f32
    %254 = vector.broadcast %cst_89 : f32 to vector<8x1xf32>
    %255 = arith.divf %253, %254 : vector<8x1xf32>
    %256 = vector.broadcast %255 : vector<8x1xf32> to vector<8x32xf32>
    %257 = arith.subf %251, %256 : vector<8x32xf32>
    %258 = arith.mulf %257, %257 : vector<8x32xf32>
    %cst_90 = arith.constant dense<0.000000e+00> : vector<8xf32>
    %259 = vector.multi_reduction <add>, %258, %cst_90 [1] : vector<8x32xf32> to vector<8xf32>
    %260 = vector.shape_cast %259 : vector<8xf32> to vector<8x1xf32>
    %cst_91 = arith.constant 3.200000e+01 : f32
    %261 = vector.broadcast %cst_91 : f32 to vector<8x1xf32>
    %262 = arith.divf %260, %261 : vector<8x1xf32>
    %cst_92 = arith.constant 9.99999974E-6 : f32
    %263 = vector.broadcast %cst_92 : f32 to vector<8x1xf32>
    %264 = arith.addf %262, %263 : vector<8x1xf32>
    %265 = math.rsqrt %264 : vector<8x1xf32>
    %266 = vector.broadcast %265 : vector<8x1xf32> to vector<8x32xf32>
    %267 = arith.mulf %257, %266 : vector<8x32xf32>
    %c0_93 = arith.constant 0 : index
    %c0_94 = arith.constant 0 : index
    %268 = vector.load %arg20[%c0_93, %c0_94] : memref<1x32xf32, #tpu.memory_space<vmem>>, vector<1x32xf32>
    %269 = vector.broadcast %268 : vector<1x32xf32> to vector<8x32xf32>
    %270 = arith.mulf %267, %269 : vector<8x32xf32>
    %c0_95 = arith.constant 0 : index
    %c0_96 = arith.constant 0 : index
    %271 = vector.load %arg21[%c0_95, %c0_96] : memref<1x32xf32, #tpu.memory_space<vmem>>, vector<1x32xf32>
    %272 = vector.broadcast %271 : vector<1x32xf32> to vector<8x32xf32>
    %273 = arith.addf %270, %272 : vector<8x32xf32>
    %274 = arith.truncf %273 : vector<8x32xf32> to vector<8x32xbf16>
    %c0_97 = arith.constant 0 : index
    %c0_98 = arith.constant 0 : index
    %275 = vector.load %arg22[%c0_97, %c0_98] : memref<32x2048xbf16, #tpu.memory_space<vmem>>, vector<32x2048xbf16>
    %cst_99 = arith.constant dense<0.000000e+00> : vector<8x2048xf32>
    %276 = tpu.matmul %274, %275, %cst_99 {dimension_numbers = #tpu.dot_dimension_numbers<[1], [0], [0], [1], [0, 0, 1, 1], [], []>} : vector<8x32xbf16>, vector<32x2048xbf16>, vector<8x2048xf32> -> vector<8x2048xf32>
    %c0_100 = arith.constant 0 : index
    %c0_101 = arith.constant 0 : index
    %277 = vector.load %arg23[%c0_100, %c0_101] : memref<1x2048xf32, #tpu.memory_space<vmem>>, vector<1x2048xf32>
    %278 = vector.broadcast %277 : vector<1x2048xf32> to vector<8x2048xf32>
    %279 = arith.addf %276, %278 : vector<8x2048xf32>
    %cst_102 = arith.constant 0.000000e+00 : f32
    %280 = vector.broadcast %cst_102 : f32 to vector<8x2048xf32>
    %281 = arith.maximumf %279, %280 : vector<8x2048xf32>
    %282 = arith.truncf %281 : vector<8x2048xf32> to vector<8x2048xbf16>
    %c0_103 = arith.constant 0 : index
    %c0_104 = arith.constant 0 : index
    %283 = vector.load %arg24[%c0_103, %c0_104] : memref<2048x32xbf16, #tpu.memory_space<vmem>>, vector<2048x32xbf16>
    %cst_105 = arith.constant dense<0.000000e+00> : vector<8x32xf32>
    %284 = tpu.matmul %282, %283, %cst_105 {dimension_numbers = #tpu.dot_dimension_numbers<[1], [0], [0], [1], [0, 0, 1, 1], [], []>} : vector<8x2048xbf16>, vector<2048x32xbf16>, vector<8x32xf32> -> vector<8x32xf32>
    %c0_106 = arith.constant 0 : index
    %c0_107 = arith.constant 0 : index
    %285 = vector.load %arg25[%c0_106, %c0_107] : memref<1x32xf32, #tpu.memory_space<vmem>>, vector<1x32xf32>
    %286 = vector.broadcast %285 : vector<1x32xf32> to vector<8x32xf32>
    %287 = arith.addf %284, %286 : vector<8x32xf32>
    %288 = arith.addf %273, %287 : vector<8x32xf32>
    %cst_108 = arith.constant dense<0.000000e+00> : vector<8xf32>
    %289 = vector.multi_reduction <add>, %288, %cst_108 [1] : vector<8x32xf32> to vector<8xf32>
    %290 = vector.shape_cast %289 : vector<8xf32> to vector<8x1xf32>
    %cst_109 = arith.constant 3.200000e+01 : f32
    %291 = vector.broadcast %cst_109 : f32 to vector<8x1xf32>
    %292 = arith.divf %290, %291 : vector<8x1xf32>
    %293 = vector.broadcast %292 : vector<8x1xf32> to vector<8x32xf32>
    %294 = arith.subf %288, %293 : vector<8x32xf32>
    %295 = arith.mulf %294, %294 : vector<8x32xf32>
    %cst_110 = arith.constant dense<0.000000e+00> : vector<8xf32>
    %296 = vector.multi_reduction <add>, %295, %cst_110 [1] : vector<8x32xf32> to vector<8xf32>
    %297 = vector.shape_cast %296 : vector<8xf32> to vector<8x1xf32>
    %cst_111 = arith.constant 3.200000e+01 : f32
    %298 = vector.broadcast %cst_111 : f32 to vector<8x1xf32>
    %299 = arith.divf %297, %298 : vector<8x1xf32>
    %cst_112 = arith.constant 9.99999974E-6 : f32
    %300 = vector.broadcast %cst_112 : f32 to vector<8x1xf32>
    %301 = arith.addf %299, %300 : vector<8x1xf32>
    %302 = math.rsqrt %301 : vector<8x1xf32>
    %303 = vector.broadcast %302 : vector<8x1xf32> to vector<8x32xf32>
    %304 = arith.mulf %294, %303 : vector<8x32xf32>
    %c0_113 = arith.constant 0 : index
    %c0_114 = arith.constant 0 : index
    %305 = vector.load %arg26[%c0_113, %c0_114] : memref<1x32xf32, #tpu.memory_space<vmem>>, vector<1x32xf32>
    %306 = vector.broadcast %305 : vector<1x32xf32> to vector<8x32xf32>
    %307 = arith.mulf %304, %306 : vector<8x32xf32>
    %c0_115 = arith.constant 0 : index
    %c0_116 = arith.constant 0 : index
    %308 = vector.load %arg27[%c0_115, %c0_116] : memref<1x32xf32, #tpu.memory_space<vmem>>, vector<1x32xf32>
    %309 = vector.broadcast %308 : vector<1x32xf32> to vector<8x32xf32>
    %310 = arith.addf %307, %309 : vector<8x32xf32>
    %311 = arith.truncf %310 : vector<8x32xf32> to vector<8x32xbf16>
    %c0_117 = arith.constant 0 : index
    %c0_118 = arith.constant 0 : index
    %312 = vector.load %arg28[%c0_117, %c0_118] : memref<32x4xbf16, #tpu.memory_space<vmem>>, vector<32x4xbf16>
    %cst_119 = arith.constant dense<0.000000e+00> : vector<8x4xf32>
    %313 = tpu.matmul %311, %312, %cst_119 {dimension_numbers = #tpu.dot_dimension_numbers<[1], [0], [0], [1], [0, 0, 1, 1], [], []>} : vector<8x32xbf16>, vector<32x4xbf16>, vector<8x4xf32> -> vector<8x4xf32>
    %c0_120 = arith.constant 0 : index
    %c0_121 = arith.constant 0 : index
    %314 = vector.load %arg29[%c0_120, %c0_121] : memref<1x4xf32, #tpu.memory_space<vmem>>, vector<1x4xf32>
    %315 = vector.broadcast %314 : vector<1x4xf32> to vector<8x4xf32>
    %316 = arith.addf %313, %315 : vector<8x4xf32>
    %c0_122 = arith.constant 0 : index
    %c0_123 = arith.constant 0 : index
    %317 = vector.load %arg30[%c0_122, %c0_123] : memref<8x4xf32, #tpu.memory_space<vmem>>, vector<8x4xf32>
    tpu.vector_store %arg30[%c0_122, %c0_123], %316 {strides = array<i32>} : memref<8x4xf32, #tpu.memory_space<vmem>>, vector<8x4xf32>,
    return
  }
  func.func @transform_0(%arg0: i32) -> (i32, i32) {
    %c0_i32 = arith.constant 0 : i32
    %c0_i32_0 = arith.constant 0 : i32
    return %arg0, %c0_i32 : i32, i32
  }
  func.func @transform_1(%arg0: i32) -> (i32, i32) {
    %c0_i32 = arith.constant 0 : i32
    %c0_i32_0 = arith.constant 0 : i32
    %c0_i32_1 = arith.constant 0 : i32
    return %c0_i32, %c0_i32_0 : i32, i32
  }
  func.func @transform_2(%arg0: i32) -> (i32, i32) {
    %c0_i32 = arith.constant 0 : i32
    %c0_i32_0 = arith.constant 0 : i32
    %c0_i32_1 = arith.constant 0 : i32
    return %c0_i32, %c0_i32_0 : i32, i32
  }
  func.func @transform_3(%arg0: i32) -> (i32, i32) {
    %c0_i32 = arith.constant 0 : i32
    %c0_i32_0 = arith.constant 0 : i32
    %c0_i32_1 = arith.constant 0 : i32
    return %c0_i32, %c0_i32_0 : i32, i32
  }
  func.func @transform_4(%arg0: i32) -> (i32, i32) {
    %c0_i32 = arith.constant 0 : i32
    %c0_i32_0 = arith.constant 0 : i32
    %c0_i32_1 = arith.constant 0 : i32
    return %c0_i32, %c0_i32_0 : i32, i32
  }
  func.func @transform_5(%arg0: i32) -> (i32, i32) {
    %c0_i32 = arith.constant 0 : i32
    %c0_i32_0 = arith.constant 0 : i32
    %c0_i32_1 = arith.constant 0 : i32
    return %c0_i32, %c0_i32_0 : i32, i32
  }
  func.func @transform_6(%arg0: i32) -> (i32, i32) {
    %c0_i32 = arith.constant 0 : i32
    %c0_i32_0 = arith.constant 0 : i32
    %c0_i32_1 = arith.constant 0 : i32
    return %c0_i32, %c0_i32_0 : i32, i32
  }
  func.func @transform_7(%arg0: i32) -> (i32, i32) {
    %c0_i32 = arith.constant 0 : i32
    %c0_i32_0 = arith.constant 0 : i32
    %c0_i32_1 = arith.constant 0 : i32
    return %c0_i32, %c0_i32_0 : i32, i32
  }
  func.func @transform_8(%arg0: i32) -> (i32, i32) {
    %c0_i32 = arith.constant 0 : i32
    %c0_i32_0 = arith.constant 0 : i32
    %c0_i32_1 = arith.constant 0 : i32
    return %c0_i32, %c0_i32_0 : i32, i32
  }
  func.func @transform_9(%arg0: i32) -> (i32, i32) {
    %c0_i32 = arith.constant 0 : i32
    %c0_i32_0 = arith.constant 0 : i32
    %c0_i32_1 = arith.constant 0 : i32
    return %c0_i32, %c0_i32_0 : i32, i32
  }
  func.func @transform_10(%arg0: i32) -> (i32, i32) {
    %c0_i32 = arith.constant 0 : i32
    %c0_i32_0 = arith.constant 0 : i32
    %c0_i32_1 = arith.constant 0 : i32
    return %c0_i32, %c0_i32_0 : i32, i32
  }
  func.func @transform_11(%arg0: i32) -> (i32, i32) {
    %c0_i32 = arith.constant 0 : i32
    %c0_i32_0 = arith.constant 0 : i32
    %c0_i32_1 = arith.constant 0 : i32
    return %c0_i32, %c0_i32_0 : i32, i32
  }
  func.func @transform_12(%arg0: i32) -> (i32, i32) {
    %c0_i32 = arith.constant 0 : i32
    %c0_i32_0 = arith.constant 0 : i32
    %c0_i32_1 = arith.constant 0 : i32
    return %c0_i32, %c0_i32_0 : i32, i32
  }
  func.func @transform_13(%arg0: i32) -> (i32, i32) {
    %c0_i32 = arith.constant 0 : i32
    %c0_i32_0 = arith.constant 0 : i32
    %c0_i32_1 = arith.constant 0 : i32
    return %c0_i32, %c0_i32_0 : i32, i32
  }
  func.func @transform_14(%arg0: i32) -> (i32, i32) {
    %c0_i32 = arith.constant 0 : i32
    %c0_i32_0 = arith.constant 0 : i32
    %c0_i32_1 = arith.constant 0 : i32
    return %c0_i32, %c0_i32_0 : i32, i32
  }
  func.func @transform_15(%arg0: i32) -> (i32, i32) {
    %c0_i32 = arith.constant 0 : i32
    %c0_i32_0 = arith.constant 0 : i32
    %c0_i32_1 = arith.constant 0 : i32
    return %c0_i32, %c0_i32_0 : i32, i32
  }
  func.func @transform_16(%arg0: i32) -> (i32, i32) {
    %c0_i32 = arith.constant 0 : i32
    %c0_i32_0 = arith.constant 0 : i32
    %c0_i32_1 = arith.constant 0 : i32
    return %c0_i32, %c0_i32_0 : i32, i32
  }
  func.func @transform_17(%arg0: i32) -> (i32, i32) {
    %c0_i32 = arith.constant 0 : i32
    %c0_i32_0 = arith.constant 0 : i32
    %c0_i32_1 = arith.constant 0 : i32
    return %c0_i32, %c0_i32_0 : i32, i32
  }
  func.func @transform_18(%arg0: i32) -> (i32, i32) {
    %c0_i32 = arith.constant 0 : i32
    %c0_i32_0 = arith.constant 0 : i32
    %c0_i32_1 = arith.constant 0 : i32
    return %c0_i32, %c0_i32_0 : i32, i32
  }
  func.func @transform_19(%arg0: i32) -> (i32, i32) {
    %c0_i32 = arith.constant 0 : i32
    %c0_i32_0 = arith.constant 0 : i32
    %c0_i32_1 = arith.constant 0 : i32
    return %c0_i32, %c0_i32_0 : i32, i32
  }
  func.func @transform_20(%arg0: i32) -> (i32, i32) {
    %c0_i32 = arith.constant 0 : i32
    %c0_i32_0 = arith.constant 0 : i32
    %c0_i32_1 = arith.constant 0 : i32
    return %c0_i32, %c0_i32_0 : i32, i32
  }
  func.func @transform_21(%arg0: i32) -> (i32, i32) {
    %c0_i32 = arith.constant 0 : i32
    %c0_i32_0 = arith.constant 0 : i32
    %c0_i32_1 = arith.constant 0 : i32
    return %c0_i32, %c0_i32_0 : i32, i32
  }
  func.func @transform_22(%arg0: i32) -> (i32, i32) {
    %c0_i32 = arith.constant 0 : i32
    %c0_i32_0 = arith.constant 0 : i32
    %c0_i32_1 = arith.constant 0 : i32
    return %c0_i32, %c0_i32_0 : i32, i32
  }
  func.func @transform_23(%arg0: i32) -> (i32, i32) {
    %c0_i32 = arith.constant 0 : i32
    %c0_i32_0 = arith.constant 0 : i32
    %c0_i32_1 = arith.constant 0 : i32
    return %c0_i32, %c0_i32_0 : i32, i32
  }
  func.func @transform_24(%arg0: i32) -> (i32, i32) {
    %c0_i32 = arith.constant 0 : i32
    %c0_i32_0 = arith.constant 0 : i32
    %c0_i32_1 = arith.constant 0 : i32
    return %c0_i32, %c0_i32_0 : i32, i32
  }
  func.func @transform_25(%arg0: i32) -> (i32, i32) {
    %c0_i32 = arith.constant 0 : i32
    %c0_i32_0 = arith.constant 0 : i32
    %c0_i32_1 = arith.constant 0 : i32
    return %c0_i32, %c0_i32_0 : i32, i32
  }
  func.func @transform_26(%arg0: i32) -> (i32, i32) {
    %c0_i32 = arith.constant 0 : i32
    %c0_i32_0 = arith.constant 0 : i32
    %c0_i32_1 = arith.constant 0 : i32
    return %c0_i32, %c0_i32_0 : i32, i32
  }
  func.func @transform_27(%arg0: i32) -> (i32, i32) {
    %c0_i32 = arith.constant 0 : i32
    %c0_i32_0 = arith.constant 0 : i32
    %c0_i32_1 = arith.constant 0 : i32
    return %c0_i32, %c0_i32_0 : i32, i32
  }
  func.func @transform_28(%arg0: i32) -> (i32, i32) {
    %c0_i32 = arith.constant 0 : i32
    %c0_i32_0 = arith.constant 0 : i32
    %c0_i32_1 = arith.constant 0 : i32
    return %c0_i32, %c0_i32_0 : i32, i32
  }
  func.func @transform_29(%arg0: i32) -> (i32, i32) {
    %c0_i32 = arith.constant 0 : i32
    %c0_i32_0 = arith.constant 0 : i32
    return %arg0, %c0_i32 : i32, i32
  }
}

</mosaic_0001>

<llo_original>
// kernel: forward_pallas.1
$region0: #{forward_pallas.1}
  #allocation0 [shape = 'u32[]', space=smem, size = 0x4, offset = 0x4, fixed_abs, tag = 'smem constant byte address 0x4 - core index']
  #allocation1 [shape = 'u32[144,128]{1,0:T(1,128)}', space=vmem, size = 0x12000, scoped, tag = 'internal scratch']
  %s0 = inlined_call_operand.smem [shape: u32[30], index: -1, kind: input, shape index: {}]
  %s1 = sld [smem:[%s0]]
  %s2 = scalar_lea.smem %s0, 1
  %s3 = sld [smem:[%s2]]
  %s4 = scalar_lea.smem %s0, 2
  %s5 = sld [smem:[%s4]]
  %s6 = scalar_lea.smem %s0, 3
  %s7 = sld [smem:[%s6]]
  %s8 = scalar_lea.smem %s0, 4
  %s9 = sld [smem:[%s8]]
  %s10 = scalar_lea.smem %s0, 5
  %s11 = sld [smem:[%s10]]
  %s12 = scalar_lea.smem %s0, 6
  %s13 = sld [smem:[%s12]]
  %s14 = scalar_lea.smem %s0, 7
  %s15 = sld [smem:[%s14]]
  %s16 = scalar_lea.smem %s0, 8
  %s17 = sld [smem:[%s16]]
  %s18 = scalar_lea.smem %s0, 9
  %s19 = sld [smem:[%s18]]
  %s20 = scalar_lea.smem %s0, 10
  %s21 = sld [smem:[%s20]]
  %s22 = scalar_lea.smem %s0, 11
  %s23 = sld [smem:[%s22]]
  %s24 = scalar_lea.smem %s0, 12
  %s25 = sld [smem:[%s24]]
  %s26 = scalar_lea.smem %s0, 13
  %s27 = sld [smem:[%s26]]
  %s28 = scalar_lea.smem %s0, 14
  %s29 = sld [smem:[%s28]]
  %s30 = scalar_lea.smem %s0, 15
  %s31 = sld [smem:[%s30]]
  %s32 = scalar_lea.smem %s0, 16
  %s33 = sld [smem:[%s32]]
  %s34 = scalar_lea.smem %s0, 17
  %s35 = sld [smem:[%s34]]
  %s36 = scalar_lea.smem %s0, 18
  %s37 = sld [smem:[%s36]]
  %s38 = scalar_lea.smem %s0, 19
  %s39 = sld [smem:[%s38]]
  %s40 = scalar_lea.smem %s0, 20
  %s41 = sld [smem:[%s40]]
  %s42 = scalar_lea.smem %s0, 21
  %s43 = sld [smem:[%s42]]
  %s44 = scalar_lea.smem %s0, 22
  %s45 = sld [smem:[%s44]]
  %s46 = scalar_lea.smem %s0, 23
  %s47 = sld [smem:[%s46]]
  %s48 = scalar_lea.smem %s0, 24
  %s49 = sld [smem:[%s48]]
  %s50 = scalar_lea.smem %s0, 25
  %s51 = sld [smem:[%s50]]
  %s52 = scalar_lea.smem %s0, 26
  %s53 = sld [smem:[%s52]]
  %s54 = scalar_lea.smem %s0, 27
  %s55 = sld [smem:[%s54]]
  %s56 = scalar_lea.smem %s0, 28
  %s57 = sld [smem:[%s56]]
  %s58 = scalar_lea.smem %s0, 29
  %s59 = sld [smem:[%s58]]
  %s60 = sld [smem:[#allocation0]]
  $region149: #{forward_pallas.1} parent=0
    _
  %s62 = ssub.s32 1, %s60
  %s63 = scalar_select 0, %s62, %s60
  loop: start=0, step=1, limit=4
  $region2: #{forward_pallas.1} parent=0 // loop_pre_header
    _
  $region3: #{forward_pallas.1} parent=0 // loop_header
    %s65 = sphi 0, %s69
    %p66 = scmp.ge.s32.totalorder %s65, 4
    %s75 = sphi 0, %s77
    %s78 = sphi 0, %s75
    %s79 = sphi 0, %s78
    %s95 = sphi 0, %s79
    %s99 = sphi 0, %s99
    %s101 = sphi 0, %s99
    %s102 = sphi 0, %s101
    %s116 = sphi 0, %s102
    %s120 = sphi 0, %s120
    %s122 = sphi 0, %s120
    %s123 = sphi 0, %s122
    %s137 = sphi 0, %s123
    %s141 = sphi 0, %s141
    %s143 = sphi 0, %s141
    %s144 = sphi 0, %s143
    %s158 = sphi 0, %s144
    %s162 = sphi 0, %s162
    %s164 = sphi 0, %s162
    %s165 = sphi 0, %s164
    %s179 = sphi 0, %s165
    %s183 = sphi 0, %s183
    %s185 = sphi 0, %s183
    %s186 = sphi 0, %s185
    %s200 = sphi 0, %s186
    %s204 = sphi 0, %s204
    %s206 = sphi 0, %s204
    %s207 = sphi 0, %s206
    %s221 = sphi 0, %s207
    %s225 = sphi 0, %s225
    %s227 = sphi 0, %s225
    %s228 = sphi 0, %s227
    %s242 = sphi 0, %s228
    %s246 = sphi 0, %s246
    %s248 = sphi 0, %s246
    %s249 = sphi 0, %s248
    %s263 = sphi 0, %s249
    %s267 = sphi 0, %s267
    %s269 = sphi 0, %s267
    %s270 = sphi 0, %s269
    %s284 = sphi 0, %s270
    %s288 = sphi 0, %s288
    %s290 = sphi 0, %s288
    %s291 = sphi 0, %s290
    %s305 = sphi 0, %s291
    %s309 = sphi 0, %s309
    %s311 = sphi 0, %s309
    %s312 = sphi 0, %s311
    %s326 = sphi 0, %s312
    %s330 = sphi 0, %s330
    %s332 = sphi 0, %s330
    %s333 = sphi 0, %s332
    %s347 = sphi 0, %s333
    %s351 = sphi 0, %s351
    %s353 = sphi 0, %s351
    %s354 = sphi 0, %s353
    %s368 = sphi 0, %s354
    %s372 = sphi 0, %s372
    %s374 = sphi 0, %s372
    %s375 = sphi 0, %s374
    %s389 = sphi 0, %s375
    %s393 = sphi 0, %s393
    %s395 = sphi 0, %s393
    %s396 = sphi 0, %s395
    %s410 = sphi 0, %s396
    %s414 = sphi 0, %s414
    %s416 = sphi 0, %s414
    %s417 = sphi 0, %s416
    %s431 = sphi 0, %s417
    %s435 = sphi 0, %s435
    %s437 = sphi 0, %s435
    %s438 = sphi 0, %s437
    %s452 = sphi 0, %s438
    %s456 = sphi 0, %s456
    %s458 = sphi 0, %s456
    %s459 = sphi 0, %s458
    %s473 = sphi 0, %s459
    %s477 = sphi 0, %s477
    %s479 = sphi 0, %s477
    %s480 = sphi 0, %s479
    %s494 = sphi 0, %s480
    %s498 = sphi 0, %s498
    %s500 = sphi 0, %s498
    %s501 = sphi 0, %s500
    %s515 = sphi 0, %s501
    %s519 = sphi 0, %s519
    %s521 = sphi 0, %s519
    %s522 = sphi 0, %s521
    %s536 = sphi 0, %s522
    %s540 = sphi 0, %s540
    %s542 = sphi 0, %s540
    %s543 = sphi 0, %s542
    %s557 = sphi 0, %s543
    %s561 = sphi 0, %s561
    %s563 = sphi 0, %s561
    %s564 = sphi 0, %s563
    %s578 = sphi 0, %s564
    %s582 = sphi 0, %s582
    %s584 = sphi 0, %s582
    %s585 = sphi 0, %s584
    %s599 = sphi 0, %s585
    %s603 = sphi 0, %s603
    %s605 = sphi 0, %s603
    %s606 = sphi 0, %s605
    %s620 = sphi 0, %s606
    %s624 = sphi 0, %s624
    %s626 = sphi 0, %s624
    %s627 = sphi 0, %s626
    %s641 = sphi 0, %s627
    %s645 = sphi 0, %s645
    %s647 = sphi 0, %s645
    %s648 = sphi 0, %s647
    %s662 = sphi 0, %s648
    %s666 = sphi 0, %s666
    %s668 = sphi 0, %s666
    %s669 = sphi 0, %s668
    %s683 = sphi 0, %s669
    %s689 = sphi 0, %s691
    %s692 = sphi 0, %s689
    %s693 = sphi 0, %s692
    %s709 = sphi 0, %s693
  $region4: #{forward_pallas.1} parent=0 // loop_header_branch
    %68 = sbr.rel (%p66) target = $region8
  $region5: #{forward_pallas.1} parent=0 // loop_body
    %s70 = ssub.s32 %s65, 1
    %s71 = ssub.s32 %s65, 2
    %s72 = sadd.s32 %s65, 1
    %s73 = ssub.s32 %s65, %s72
    %p74 = scmp.eq.s32.totalorder %s73, 0
    %s76 = sadd.s32 %s75, 1
    %s77 = scalar_select %p74, %s75, %s76
    %p80 = pneg %p74
    %p81 = scmp.eq.s32.totalorder %s65, 1
    %p82 = por %p80, %p81
    %p83 = scmp.ne.s32.totalorder %s75, %s78
    %p84 = scmp.eq.s32.totalorder %s65, 0
    %p85 = por %p83, %p84
    %p86 = scmp.ne.s32.totalorder %s75, %s78
    %p87 = scmp.eq.s32.totalorder %s70, 1
    %p88 = por %p86, %p87
    %p89 = scmp.ne.s32.totalorder %s78, %s79
    %p90 = scmp.eq.s32.totalorder %s70, 0
    %p91 = por %p89, %p90
    %p92 = scmp.ne.s32.totalorder %s78, %s79
    %p93 = scmp.eq.s32.totalorder %s71, 1
    %p94 = por %p92, %p93
    %p96 = scmp.ne.s32.totalorder %s79, %s95
    %p97 = scmp.eq.s32.totalorder %s71, 0
    %p98 = por %p96, %p97
    %s100 = sadd.s32 %s99, 1
    %p103 = scmp.eq.s32.totalorder %s65, 1
    %p104 = scmp.ne.s32.totalorder %s99, %s101
    %p105 = scmp.eq.s32.totalorder %s65, 0
    %p106 = por %p104, %p105
    %p107 = scmp.ne.s32.totalorder %s99, %s101
    %p108 = scmp.eq.s32.totalorder %s70, 1
    %p109 = por %p107, %p108
    %p110 = scmp.ne.s32.totalorder %s101, %s102
    %p111 = scmp.eq.s32.totalorder %s70, 0
    %p112 = por %p110, %p111
    %p113 = scmp.ne.s32.totalorder %s101, %s102
    %p114 = scmp.eq.s32.totalorder %s71, 1
    %p115 = por %p113, %p114
    %p117 = scmp.ne.s32.totalorder %s102, %s116
    %p118 = scmp.eq.s32.totalorder %s71, 0
    %p119 = por %p117, %p118
    %s121 = sadd.s32 %s120, 1
    %p124 = scmp.eq.s32.totalorder %s65, 1
    %p125 = scmp.ne.s32.totalorder %s120, %s122
    %p126 = scmp.eq.s32.totalorder %s65, 0
    %p127 = por %p125, %p126
    %p128 = scmp.ne.s32.totalorder %s120, %s122
    %p129 = scmp.eq.s32.totalorder %s70, 1
    %p130 = por %p128, %p129
    %p131 = scmp.ne.s32.totalorder %s122, %s123
    %p132 = scmp.eq.s32.totalorder %s70, 0
    %p133 = por %p131, %p132
    %p134 = scmp.ne.s32.totalorder %s122, %s123
    %p135 = scmp.eq.s32.totalorder %s71, 1
    %p136 = por %p134, %p135
    %p138 = scmp.ne.s32.totalorder %s123, %s137
    %p139 = scmp.eq.s32.totalorder %s71, 0
    %p140 = por %p138, %p139
    %s142 = sadd.s32 %s141, 1
    %p145 = scmp.eq.s32.totalorder %s65, 1
    %p146 = scmp.ne.s32.totalorder %s141, %s143
    %p147 = scmp.eq.s32.totalorder %s65, 0
    %p148 = por %p146, %p147
    %p149 = scmp.ne.s32.totalorder %s141, %s143
    %p150 = scmp.eq.s32.totalorder %s70, 1
    %p151 = por %p149, %p150
    %p152 = scmp.ne.s32.totalorder %s143, %s144
    %p153 = scmp.eq.s32.totalorder %s70, 0
    %p154 = por %p152, %p153
    %p155 = scmp.ne.s32.totalorder %s143, %s144
    %p156 = scmp.eq.s32.totalorder %s71, 1
    %p157 = por %p155, %p156
    %p159 = scmp.ne.s32.totalorder %s144, %s158
    %p160 = scmp.eq.s32.totalorder %s71, 0
    %p161 = por %p159, %p160
    %s163 = sadd.s32 %s162, 1
    %p166 = scmp.eq.s32.totalorder %s65, 1
    %p167 = scmp.ne.s32.totalorder %s162, %s164
    %p168 = scmp.eq.s32.totalorder %s65, 0
    %p169 = por %p167, %p168
    %p170 = scmp.ne.s32.totalorder %s162, %s164
    %p171 = scmp.eq.s32.totalorder %s70, 1
    %p172 = por %p170, %p171
    %p173 = scmp.ne.s32.totalorder %s164, %s165
    %p174 = scmp.eq.s32.totalorder %s70, 0
    %p175 = por %p173, %p174
    %p176 = scmp.ne.s32.totalorder %s164, %s165
    %p177 = scmp.eq.s32.totalorder %s71, 1
    %p178 = por %p176, %p177
    %p180 = scmp.ne.s32.totalorder %s165, %s179
    %p181 = scmp.eq.s32.totalorder %s71, 0
    %p182 = por %p180, %p181
    %s184 = sadd.s32 %s183, 1
    %p187 = scmp.eq.s32.totalorder %s65, 1
    %p188 = scmp.ne.s32.totalorder %s183, %s185
    %p189 = scmp.eq.s32.totalorder %s65, 0
    %p190 = por %p188, %p189
    %p191 = scmp.ne.s32.totalorder %s183, %s185
    %p192 = scmp.eq.s32.totalorder %s70, 1
    %p193 = por %p191, %p192
    %p194 = scmp.ne.s32.totalorder %s185, %s186
    %p195 = scmp.eq.s32.totalorder %s70, 0
    %p196 = por %p194, %p195
    %p197 = scmp.ne.s32.totalorder %s185, %s186
    %p198 = scmp.eq.s32.totalorder %s71, 1
    %p199 = por %p197, %p198
    %p201 = scmp.ne.s32.totalorder %s186, %s200
    %p202 = scmp.eq.s32.totalorder %s71, 0
    %p203 = por %p201, %p202
    %s205 = sadd.s32 %s204, 1
    %p208 = scmp.eq.s32.totalorder %s65, 1
    %p209 = scmp.ne.s32.totalorder %s204, %s206
    %p210 = scmp.eq.s32.totalorder %s65, 0
    %p211 = por %p209, %p210
    %p212 = scmp.ne.s32.totalorder %s204, %s206
    %p213 = scmp.eq.s32.totalorder %s70, 1
    %p214 = por %p212, %p213
    %p215 = scmp.ne.s32.totalorder %s206, %s207
    %p216 = scmp.eq.s32.totalorder %s70, 0
    %p217 = por %p215, %p216
    %p218 = scmp.ne.s32.totalorder %s206, %s207
    %p219 = scmp.eq.s32.totalorder %s71, 1
    %p220 = por %p218, %p219
    %p222 = scmp.ne.s32.totalorder %s207, %s221
    %p223 = scmp.eq.s32.totalorder %s71, 0
    %p224 = por %p222, %p223
    %s226 = sadd.s32 %s225, 1
    %p229 = scmp.eq.s32.totalorder %s65, 1
    %p230 = scmp.ne.s32.totalorder %s225, %s227
    %p231 = scmp.eq.s32.totalorder %s65, 0
    %p232 = por %p230, %p231
    %p233 = scmp.ne.s32.totalorder %s225, %s227
    %p234 = scmp.eq.s32.totalorder %s70, 1
    %p235 = por %p233, %p234
    %p236 = scmp.ne.s32.totalorder %s227, %s228
    %p237 = scmp.eq.s32.totalorder %s70, 0
    %p238 = por %p236, %p237
    %p239 = scmp.ne.s32.totalorder %s227, %s228
    %p240 = scmp.eq.s32.totalorder %s71, 1
    %p241 = por %p239, %p240
    %p243 = scmp.ne.s32.totalorder %s228, %s242
    %p244 = scmp.eq.s32.totalorder %s71, 0
    %p245 = por %p243, %p244
    %s247 = sadd.s32 %s246, 1
    %p250 = scmp.eq.s32.totalorder %s65, 1
    %p251 = scmp.ne.s32.totalorder %s246, %s248
    %p252 = scmp.eq.s32.totalorder %s65, 0
    %p253 = por %p251, %p252
    %p254 = scmp.ne.s32.totalorder %s246, %s248
    %p255 = scmp.eq.s32.totalorder %s70, 1
    %p256 = por %p254, %p255
    %p257 = scmp.ne.s32.totalorder %s248, %s249
    %p258 = scmp.eq.s32.totalorder %s70, 0
    %p259 = por %p257, %p258
    %p260 = scmp.ne.s32.totalorder %s248, %s249
    %p261 = scmp.eq.s32.totalorder %s71, 1
    %p262 = por %p260, %p261
    %p264 = scmp.ne.s32.totalorder %s249, %s263
    %p265 = scmp.eq.s32.totalorder %s71, 0
    %p266 = por %p264, %p265
    %s268 = sadd.s32 %s267, 1
    %p271 = scmp.eq.s32.totalorder %s65, 1
    %p272 = scmp.ne.s32.totalorder %s267, %s269
    %p273 = scmp.eq.s32.totalorder %s65, 0
    %p274 = por %p272, %p273
    %p275 = scmp.ne.s32.totalorder %s267, %s269
    %p276 = scmp.eq.s32.totalorder %s70, 1
    %p277 = por %p275, %p276
    %p278 = scmp.ne.s32.totalorder %s269, %s270
    %p279 = scmp.eq.s32.totalorder %s70, 0
    %p280 = por %p278, %p279
    %p281 = scmp.ne.s32.totalorder %s269, %s270
    %p282 = scmp.eq.s32.totalorder %s71, 1
    %p283 = por %p281, %p282
    %p285 = scmp.ne.s32.totalorder %s270, %s284
    %p286 = scmp.eq.s32.totalorder %s71, 0
    %p287 = por %p285, %p286
    %s289 = sadd.s32 %s288, 1
    %p292 = scmp.eq.s32.totalorder %s65, 1
    %p293 = scmp.ne.s32.totalorder %s288, %s290
    %p294 = scmp.eq.s32.totalorder %s65, 0
    %p295 = por %p293, %p294
    %p296 = scmp.ne.s32.totalorder %s288, %s290
    %p297 = scmp.eq.s32.totalorder %s70, 1
    %p298 = por %p296, %p297
    %p299 = scmp.ne.s32.totalorder %s290, %s291
    %p300 = scmp.eq.s32.totalorder %s70, 0
    %p301 = por %p299, %p300
    %p302 = scmp.ne.s32.totalorder %s290, %s291
    %p303 = scmp.eq.s32.totalorder %s71, 1
    %p304 = por %p302, %p303
    %p306 = scmp.ne.s32.totalorder %s291, %s305
    %p307 = scmp.eq.s32.totalorder %s71, 0
    %p308 = por %p306, %p307
    %s310 = sadd.s32 %s309, 1
    %p313 = scmp.eq.s32.totalorder %s65, 1
    %p314 = scmp.ne.s32.totalorder %s309, %s311
    %p315 = scmp.eq.s32.totalorder %s65, 0
    %p316 = por %p314, %p315
    %p317 = scmp.ne.s32.totalorder %s309, %s311
    %p318 = scmp.eq.s32.totalorder %s70, 1
    %p319 = por %p317, %p318
    %p320 = scmp.ne.s32.totalorder %s311, %s312
    %p321 = scmp.eq.s32.totalorder %s70, 0
    %p322 = por %p320, %p321
    %p323 = scmp.ne.s32.totalorder %s311, %s312
    %p324 = scmp.eq.s32.totalorder %s71, 1
    %p325 = por %p323, %p324
    %p327 = scmp.ne.s32.totalorder %s312, %s326
    %p328 = scmp.eq.s32.totalorder %s71, 0
    %p329 = por %p327, %p328
    %s331 = sadd.s32 %s330, 1
    %p334 = scmp.eq.s32.totalorder %s65, 1
    %p335 = scmp.ne.s32.totalorder %s330, %s332
    %p336 = scmp.eq.s32.totalorder %s65, 0
    %p337 = por %p335, %p336
    %p338 = scmp.ne.s32.totalorder %s330, %s332
    %p339 = scmp.eq.s32.totalorder %s70, 1
    %p340 = por %p338, %p339
    %p341 = scmp.ne.s32.totalorder %s332, %s333
    %p342 = scmp.eq.s32.totalorder %s70, 0
    %p343 = por %p341, %p342
    %p344 = scmp.ne.s32.totalorder %s332, %s333
    %p345 = scmp.eq.s32.totalorder %s71, 1
    %p346 = por %p344, %p345
    %p348 = scmp.ne.s32.totalorder %s333, %s347
    %p349 = scmp.eq.s32.totalorder %s71, 0
    %p350 = por %p348, %p349
    %s352 = sadd.s32 %s351, 1
    %p355 = scmp.eq.s32.totalorder %s65, 1
    %p356 = scmp.ne.s32.totalorder %s351, %s353
    %p357 = scmp.eq.s32.totalorder %s65, 0
    %p358 = por %p356, %p357
    %p359 = scmp.ne.s32.totalorder %s351, %s353
    %p360 = scmp.eq.s32.totalorder %s70, 1
    %p361 = por %p359, %p360
    %p362 = scmp.ne.s32.totalorder %s353, %s354
    %p363 = scmp.eq.s32.totalorder %s70, 0
    %p364 = por %p362, %p363
    %p365 = scmp.ne.s32.totalorder %s353, %s354
    %p366 = scmp.eq.s32.totalorder %s71, 1
    %p367 = por %p365, %p366
    %p369 = scmp.ne.s32.totalorder %s354, %s368
    %p370 = scmp.eq.s32.totalorder %s71, 0
    %p371 = por %p369, %p370
    %s373 = sadd.s32 %s372, 1
    %p376 = scmp.eq.s32.totalorder %s65, 1
    %p377 = scmp.ne.s32.totalorder %s372, %s374
    %p378 = scmp.eq.s32.totalorder %s65, 0
    %p379 = por %p377, %p378
    %p380 = scmp.ne.s32.totalorder %s372, %s374
    %p381 = scmp.eq.s32.totalorder %s70, 1
    %p382 = por %p380, %p381
    %p383 = scmp.ne.s32.totalorder %s374, %s375
    %p384 = scmp.eq.s32.totalorder %s70, 0
    %p385 = por %p383, %p384
    %p386 = scmp.ne.s32.totalorder %s374, %s375
    %p387 = scmp.eq.s32.totalorder %s71, 1
    %p388 = por %p386, %p387
    %p390 = scmp.ne.s32.totalorder %s375, %s389
    %p391 = scmp.eq.s32.totalorder %s71, 0
    %p392 = por %p390, %p391
    %s394 = sadd.s32 %s393, 1
    %p397 = scmp.eq.s32.totalorder %s65, 1
    %p398 = scmp.ne.s32.totalorder %s393, %s395
    %p399 = scmp.eq.s32.totalorder %s65, 0
    %p400 = por %p398, %p399
    %p401 = scmp.ne.s32.totalorder %s393, %s395
    %p402 = scmp.eq.s32.totalorder %s70, 1
    %p403 = por %p401, %p402
    %p404 = scmp.ne.s32.totalorder %s395, %s396
    %p405 = scmp.eq.s32.totalorder %s70, 0
    %p406 = por %p404, %p405
    %p407 = scmp.ne.s32.totalorder %s395, %s396
    %p408 = scmp.eq.s32.totalorder %s71, 1
    %p409 = por %p407, %p408
    %p411 = scmp.ne.s32.totalorder %s396, %s410
    %p412 = scmp.eq.s32.totalorder %s71, 0
    %p413 = por %p411, %p412
    %s415 = sadd.s32 %s414, 1
    %p418 = scmp.eq.s32.totalorder %s65, 1
    %p419 = scmp.ne.s32.totalorder %s414, %s416
    %p420 = scmp.eq.s32.totalorder %s65, 0
    %p421 = por %p419, %p420
    %p422 = scmp.ne.s32.totalorder %s414, %s416
    %p423 = scmp.eq.s32.totalorder %s70, 1
    %p424 = por %p422, %p423
    %p425 = scmp.ne.s32.totalorder %s416, %s417
    %p426 = scmp.eq.s32.totalorder %s70, 0
    %p427 = por %p425, %p426
    %p428 = scmp.ne.s32.totalorder %s416, %s417
    %p429 = scmp.eq.s32.totalorder %s71, 1
    %p430 = por %p428, %p429
    %p432 = scmp.ne.s32.totalorder %s417, %s431
    %p433 = scmp.eq.s32.totalorder %s71, 0
    %p434 = por %p432, %p433
    %s436 = sadd.s32 %s435, 1
    %p439 = scmp.eq.s32.totalorder %s65, 1
    %p440 = scmp.ne.s32.totalorder %s435, %s437
    %p441 = scmp.eq.s32.totalorder %s65, 0
    %p442 = por %p440, %p441
    %p443 = scmp.ne.s32.totalorder %s435, %s437
    %p444 = scmp.eq.s32.totalorder %s70, 1
    %p445 = por %p443, %p444
    %p446 = scmp.ne.s32.totalorder %s437, %s438
    %p447 = scmp.eq.s32.totalorder %s70, 0
    %p448 = por %p446, %p447
    %p449 = scmp.ne.s32.totalorder %s437, %s438
    %p450 = scmp.eq.s32.totalorder %s71, 1
    %p451 = por %p449, %p450
    %p453 = scmp.ne.s32.totalorder %s438, %s452
    %p454 = scmp.eq.s32.totalorder %s71, 0
    %p455 = por %p453, %p454
    %s457 = sadd.s32 %s456, 1
    %p460 = scmp.eq.s32.totalorder %s65, 1
    %p461 = scmp.ne.s32.totalorder %s456, %s458
    %p462 = scmp.eq.s32.totalorder %s65, 0
    %p463 = por %p461, %p462
    %p464 = scmp.ne.s32.totalorder %s456, %s458
    %p465 = scmp.eq.s32.totalorder %s70, 1
    %p466 = por %p464, %p465
    %p467 = scmp.ne.s32.totalorder %s458, %s459
    %p468 = scmp.eq.s32.totalorder %s70, 0
    %p469 = por %p467, %p468
    %p470 = scmp.ne.s32.totalorder %s458, %s459
    %p471 = scmp.eq.s32.totalorder %s71, 1
    %p472 = por %p470, %p471
    %p474 = scmp.ne.s32.totalorder %s459, %s473
    %p475 = scmp.eq.s32.totalorder %s71, 0
    %p476 = por %p474, %p475
    %s478 = sadd.s32 %s477, 1
    %p481 = scmp.eq.s32.totalorder %s65, 1
    %p482 = scmp.ne.s32.totalorder %s477, %s479
    %p483 = scmp.eq.s32.totalorder %s65, 0
    %p484 = por %p482, %p483
    %p485 = scmp.ne.s32.totalorder %s477, %s479
    %p486 = scmp.eq.s32.totalorder %s70, 1
    %p487 = por %p485, %p486
    %p488 = scmp.ne.s32.totalorder %s479, %s480
    %p489 = scmp.eq.s32.totalorder %s70, 0
    %p490 = por %p488, %p489
    %p491 = scmp.ne.s32.totalorder %s479, %s480
    %p492 = scmp.eq.s32.totalorder %s71, 1
    %p493 = por %p491, %p492
    %p495 = scmp.ne.s32.totalorder %s480, %s494
    %p496 = scmp.eq.s32.totalorder %s71, 0
    %p497 = por %p495, %p496
    %s499 = sadd.s32 %s498, 1
    %p502 = scmp.eq.s32.totalorder %s65, 1
    %p503 = scmp.ne.s32.totalorder %s498, %s500
    %p504 = scmp.eq.s32.totalorder %s65, 0
    %p505 = por %p503, %p504
    %p506 = scmp.ne.s32.totalorder %s498, %s500
    %p507 = scmp.eq.s32.totalorder %s70, 1
    %p508 = por %p506, %p507
    %p509 = scmp.ne.s32.totalorder %s500, %s501
    %p510 = scmp.eq.s32.totalorder %s70, 0
    %p511 = por %p509, %p510
    %p512 = scmp.ne.s32.totalorder %s500, %s501
    %p513 = scmp.eq.s32.totalorder %s71, 1
    %p514 = por %p512, %p513
    %p516 = scmp.ne.s32.totalorder %s501, %s515
    %p517 = scmp.eq.s32.totalorder %s71, 0
    %p518 = por %p516, %p517
    %s520 = sadd.s32 %s519, 1
    %p523 = scmp.eq.s32.totalorder %s65, 1
    %p524 = scmp.ne.s32.totalorder %s519, %s521
    %p525 = scmp.eq.s32.totalorder %s65, 0
    %p526 = por %p524, %p525
    %p527 = scmp.ne.s32.totalorder %s519, %s521
    %p528 = scmp.eq.s32.totalorder %s70, 1
    %p529 = por %p527, %p528
    %p530 = scmp.ne.s32.totalorder %s521, %s522
    %p531 = scmp.eq.s32.totalorder %s70, 0
    %p532 = por %p530, %p531
    %p533 = scmp.ne.s32.totalorder %s521, %s522
    %p534 = scmp.eq.s32.totalorder %s71, 1
    %p535 = por %p533, %p534
    %p537 = scmp.ne.s32.totalorder %s522, %s536
    %p538 = scmp.eq.s32.totalorder %s71, 0
    %p539 = por %p537, %p538
    %s541 = sadd.s32 %s540, 1
    %p544 = scmp.eq.s32.totalorder %s65, 1
    %p545 = scmp.ne.s32.totalorder %s540, %s542
    %p546 = scmp.eq.s32.totalorder %s65, 0
    %p547 = por %p545, %p546
    %p548 = scmp.ne.s32.totalorder %s540, %s542
    %p549 = scmp.eq.s32.totalorder %s70, 1
    %p550 = por %p548, %p549
    %p551 = scmp.ne.s32.totalorder %s542, %s543
    %p552 = scmp.eq.s32.totalorder %s70, 0
    %p553 = por %p551, %p552
    %p554 = scmp.ne.s32.totalorder %s542, %s543
    %p555 = scmp.eq.s32.totalorder %s71, 1
    %p556 = por %p554, %p555
    %p558 = scmp.ne.s32.totalorder %s543, %s557
    %p559 = scmp.eq.s32.totalorder %s71, 0
    %p560 = por %p558, %p559
    %s562 = sadd.s32 %s561, 1
    %p565 = scmp.eq.s32.totalorder %s65, 1
    %p566 = scmp.ne.s32.totalorder %s561, %s563
    %p567 = scmp.eq.s32.totalorder %s65, 0
    %p568 = por %p566, %p567
    %p569 = scmp.ne.s32.totalorder %s561, %s563
    %p570 = scmp.eq.s32.totalorder %s70, 1
    %p571 = por %p569, %p570
    %p572 = scmp.ne.s32.totalorder %s563, %s564
    %p573 = scmp.eq.s32.totalorder %s70, 0
    %p574 = por %p572, %p573
    %p575 = scmp.ne.s32.totalorder %s563, %s564
    %p576 = scmp.eq.s32.totalorder %s71, 1
    %p577 = por %p575, %p576
    %p579 = scmp.ne.s32.totalorder %s564, %s578
    %p580 = scmp.eq.s32.totalorder %s71, 0
    %p581 = por %p579, %p580
    %s583 = sadd.s32 %s582, 1
    %p586 = scmp.eq.s32.totalorder %s65, 1
    %p587 = scmp.ne.s32.totalorder %s582, %s584
    %p588 = scmp.eq.s32.totalorder %s65, 0
    %p589 = por %p587, %p588
    %p590 = scmp.ne.s32.totalorder %s582, %s584
    %p591 = scmp.eq.s32.totalorder %s70, 1
    %p592 = por %p590, %p591
    %p593 = scmp.ne.s32.totalorder %s584, %s585
    %p594 = scmp.eq.s32.totalorder %s70, 0
    %p595 = por %p593, %p594
    %p596 = scmp.ne.s32.totalorder %s584, %s585
    %p597 = scmp.eq.s32.totalorder %s71, 1
    %p598 = por %p596, %p597
    %p600 = scmp.ne.s32.totalorder %s585, %s599
    %p601 = scmp.eq.s32.totalorder %s71, 0
    %p602 = por %p600, %p601
    %s604 = sadd.s32 %s603, 1
    %p607 = scmp.eq.s32.totalorder %s65, 1
    %p608 = scmp.ne.s32.totalorder %s603, %s605
    %p609 = scmp.eq.s32.totalorder %s65, 0
    %p610 = por %p608, %p609
    %p611 = scmp.ne.s32.totalorder %s603, %s605
    %p612 = scmp.eq.s32.totalorder %s70, 1
    %p613 = por %p611, %p612
    %p614 = scmp.ne.s32.totalorder %s605, %s606
    %p615 = scmp.eq.s32.totalorder %s70, 0
    %p616 = por %p614, %p615
    %p617 = scmp.ne.s32.totalorder %s605, %s606
    %p618 = scmp.eq.s32.totalorder %s71, 1
    %p619 = por %p617, %p618
    %p621 = scmp.ne.s32.totalorder %s606, %s620
    %p622 = scmp.eq.s32.totalorder %s71, 0
    %p623 = por %p621, %p622
    %s625 = sadd.s32 %s624, 1
    %p628 = scmp.eq.s32.totalorder %s65, 1
    %p629 = scmp.ne.s32.totalorder %s624, %s626
    %p630 = scmp.eq.s32.totalorder %s65, 0
    %p631 = por %p629, %p630
    %p632 = scmp.ne.s32.totalorder %s624, %s626
    %p633 = scmp.eq.s32.totalorder %s70, 1
    %p634 = por %p632, %p633
    %p635 = scmp.ne.s32.totalorder %s626, %s627
    %p636 = scmp.eq.s32.totalorder %s70, 0
    %p637 = por %p635, %p636
    %p638 = scmp.ne.s32.totalorder %s626, %s627
    %p639 = scmp.eq.s32.totalorder %s71, 1
    %p640 = por %p638, %p639
    %p642 = scmp.ne.s32.totalorder %s627, %s641
    %p643 = scmp.eq.s32.totalorder %s71, 0
    %p644 = por %p642, %p643
    %s646 = sadd.s32 %s645, 1
    %p649 = scmp.eq.s32.totalorder %s65, 1
    %p650 = scmp.ne.s32.totalorder %s645, %s647
    %p651 = scmp.eq.s32.totalorder %s65, 0
    %p652 = por %p650, %p651
    %p653 = scmp.ne.s32.totalorder %s645, %s647
    %p654 = scmp.eq.s32.totalorder %s70, 1
    %p655 = por %p653, %p654
    %p656 = scmp.ne.s32.totalorder %s647, %s648
    %p657 = scmp.eq.s32.totalorder %s70, 0
    %p658 = por %p656, %p657
    %p659 = scmp.ne.s32.totalorder %s647, %s648
    %p660 = scmp.eq.s32.totalorder %s71, 1
    %p661 = por %p659, %p660
    %p663 = scmp.ne.s32.totalorder %s648, %s662
    %p664 = scmp.eq.s32.totalorder %s71, 0
    %p665 = por %p663, %p664
    %s667 = sadd.s32 %s666, 1
    %p670 = scmp.eq.s32.totalorder %s65, 1
    %p671 = scmp.ne.s32.totalorder %s666, %s668
    %p672 = scmp.eq.s32.totalorder %s65, 0
    %p673 = por %p671, %p672
    %p674 = scmp.ne.s32.totalorder %s666, %s668
    %p675 = scmp.eq.s32.totalorder %s70, 1
    %p676 = por %p674, %p675
    %p677 = scmp.ne.s32.totalorder %s668, %s669
    %p678 = scmp.eq.s32.totalorder %s70, 0
    %p679 = por %p677, %p678
    %p680 = scmp.ne.s32.totalorder %s668, %s669
    %p681 = scmp.eq.s32.totalorder %s71, 1
    %p682 = por %p680, %p681
    %p684 = scmp.ne.s32.totalorder %s669, %s683
    %p685 = scmp.eq.s32.totalorder %s71, 0
    %p686 = por %p684, %p685
    %s687 = ssub.s32 %s65, %s72
    %p688 = scmp.eq.s32.totalorder %s687, 0
    %s690 = sadd.s32 %s689, 1
    %s691 = scalar_select %p688, %s689, %s690
    %p694 = pneg %p688
    %p695 = scmp.eq.s32.totalorder %s65, 1
    %p696 = por %p694, %p695
    %p697 = scmp.ne.s32.totalorder %s689, %s692
    %p698 = scmp.eq.s32.totalorder %s65, 0
    %p699 = por %p697, %p698
    %p700 = scmp.ne.s32.totalorder %s689, %s692
    %p701 = scmp.eq.s32.totalorder %s70, 1
    %p702 = por %p700, %p701
    %p703 = scmp.ne.s32.totalorder %s692, %s693
    %p704 = scmp.eq.s32.totalorder %s70, 0
    %p705 = por %p703, %p704
    %p706 = scmp.ne.s32.totalorder %s692, %s693
    %p707 = scmp.eq.s32.totalorder %s71, 1
    %p708 = por %p706, %p707
    %p710 = scmp.ne.s32.totalorder %s693, %s709
    %p711 = scmp.eq.s32.totalorder %s71, 0
    %p712 = por %p710, %p711
    %p713 = scmp.le.s32.totalorder 1, %s65
    %p714 = scmp.lt.s32.totalorder %s65, 3
    %p715 = pnand %p713, %p714
    %p716 = pneg %p715
    // Predicated region
    $region9: #{forward_pallas.1} parent=5 // pred_check
      _
    $region10: #{forward_pallas.1} parent=5 // pred_check_branch
      %718 = sbr.rel (%p715) target = $region12
    $region11: #{forward_pallas.1} parent=5 // pred_region
      %s719 = ssub.s32 %s65, 1
      // Predicated region
      $region13: #{forward_pallas.1} parent=11 // pred_check
        %p720 = pneg %p112
      $region14: #{forward_pallas.1} parent=11 // pred_check_branch
        %722 = sbr.rel (%p720) target = $region16
      $region15: #{forward_pallas.1} parent=11 // pred_region
        _
      $region16: #{forward_pallas.1} parent=11 // pred_fallthru
        _
      // Predicated region
      $region17: #{forward_pallas.1} parent=11 // pred_check
        %p723 = pneg %p133
      $region18: #{forward_pallas.1} parent=11 // pred_check_branch
        %725 = sbr.rel (%p723) target = $region20
      $region19: #{forward_pallas.1} parent=11 // pred_region
        _
      $region20: #{forward_pallas.1} parent=11 // pred_fallthru
        _
      // Predicated region
      $region21: #{forward_pallas.1} parent=11 // pred_check
        %p726 = pneg %p154
      $region22: #{forward_pallas.1} parent=11 // pred_check_branch
        %728 = sbr.rel (%p726) target = $region24
      $region23: #{forward_pallas.1} parent=11 // pred_region
        _
      $region24: #{forward_pallas.1} parent=11 // pred_fallthru
        _
      // Predicated region
      $region25: #{forward_pallas.1} parent=11 // pred_check
        %p729 = pneg %p175
      $region26: #{forward_pallas.1} parent=11 // pred_check_branch
        %731 = sbr.rel (%p729) target = $region28
      $region27: #{forward_pallas.1} parent=11 // pred_region
        _
      $region28: #{forward_pallas.1} parent=11 // pred_fallthru
        _
      // Predicated region
      $region29: #{forward_pallas.1} parent=11 // pred_check
        %p732 = pneg %p196
      $region30: #{forward_pallas.1} parent=11 // pred_check_branch
        %734 = sbr.rel (%p732) target = $region32
      $region31: #{forward_pallas.1} parent=11 // pred_region
        _
      $region32: #{forward_pallas.1} parent=11 // pred_fallthru
        _
      // Predicated region
      $region33: #{forward_pallas.1} parent=11 // pred_check
        %p735 = pneg %p217
      $region34: #{forward_pallas.1} parent=11 // pred_check_branch
        %737 = sbr.rel (%p735) target = $region36
      $region35: #{forward_pallas.1} parent=11 // pred_region
        _
      $region36: #{forward_pallas.1} parent=11 // pred_fallthru
        _
      // Predicated region
      $region37: #{forward_pallas.1} parent=11 // pred_check
        %p738 = pneg %p238
      $region38: #{forward_pallas.1} parent=11 // pred_check_branch
        %740 = sbr.rel (%p738) target = $region40
      $region39: #{forward_pallas.1} parent=11 // pred_region
        _
      $region40: #{forward_pallas.1} parent=11 // pred_fallthru
        _
      // Predicated region
      $region41: #{forward_pallas.1} parent=11 // pred_check
        %p741 = pneg %p259
      $region42: #{forward_pallas.1} parent=11 // pred_check_branch
        %743 = sbr.rel (%p741) target = $region44
      $region43: #{forward_pallas.1} parent=11 // pred_region
        _
      $region44: #{forward_pallas.1} parent=11 // pred_fallthru
        _
      // Predicated region
      $region45: #{forward_pallas.1} parent=11 // pred_check
        %p744 = pneg %p280
      $region46: #{forward_pallas.1} parent=11 // pred_check_branch
        %746 = sbr.rel (%p744) target = $region48
      $region47: #{forward_pallas.1} parent=11 // pred_region
        _
      $region48: #{forward_pallas.1} parent=11 // pred_fallthru
        _
      // Predicated region
      $region49: #{forward_pallas.1} parent=11 // pred_check
        %p747 = pneg %p301
      $region50: #{forward_pallas.1} parent=11 // pred_check_branch
        %749 = sbr.rel (%p747) target = $region52
      $region51: #{forward_pallas.1} parent=11 // pred_region
        _
      $region52: #{forward_pallas.1} parent=11 // pred_fallthru
        _
      // Predicated region
      $region53: #{forward_pallas.1} parent=11 // pred_check
        %p750 = pneg %p322
      $region54: #{forward_pallas.1} parent=11 // pred_check_branch
        %752 = sbr.rel (%p750) target = $region56
      $region55: #{forward_pallas.1} parent=11 // pred_region
        _
      $region56: #{forward_pallas.1} parent=11 // pred_fallthru
        _
      // Predicated region
      $region57: #{forward_pallas.1} parent=11 // pred_check
        %p753 = pneg %p343
      $region58: #{forward_pallas.1} parent=11 // pred_check_branch
        %755 = sbr.rel (%p753) target = $region60
      $region59: #{forward_pallas.1} parent=11 // pred_region
        _
      $region60: #{forward_pallas.1} parent=11 // pred_fallthru
        _
      // Predicated region
      $region61: #{forward_pallas.1} parent=11 // pred_check
        %p756 = pneg %p364
      $region62: #{forward_pallas.1} parent=11 // pred_check_branch
        %758 = sbr.rel (%p756) target = $region64
      $region63: #{forward_pallas.1} parent=11 // pred_region
        _
      $region64: #{forward_pallas.1} parent=11 // pred_fallthru
        _
      // Predicated region
      $region65: #{forward_pallas.1} parent=11 // pred_check
        %p759 = pneg %p385
      $region66: #{forward_pallas.1} parent=11 // pred_check_branch
        %761 = sbr.rel (%p759) target = $region68
      $region67: #{forward_pallas.1} parent=11 // pred_region
        _
      $region68: #{forward_pallas.1} parent=11 // pred_fallthru
        _
      // Predicated region
      $region69: #{forward_pallas.1} parent=11 // pred_check
        %p762 = pneg %p406
      $region70: #{forward_pallas.1} parent=11 // pred_check_branch
        %764 = sbr.rel (%p762) target = $region72
      $region71: #{forward_pallas.1} parent=11 // pred_region
        _
      $region72: #{forward_pallas.1} parent=11 // pred_fallthru
        _
      // Predicated region
      $region73: #{forward_pallas.1} parent=11 // pred_check
        %p765 = pneg %p427
      $region74: #{forward_pallas.1} parent=11 // pred_check_branch
        %767 = sbr.rel (%p765) target = $region76
      $region75: #{forward_pallas.1} parent=11 // pred_region
        _
      $region76: #{forward_pallas.1} parent=11 // pred_fallthru
        _
      // Predicated region
      $region77: #{forward_pallas.1} parent=11 // pred_check
        %p768 = pneg %p448
      $region78: #{forward_pallas.1} parent=11 // pred_check_branch
        %770 = sbr.rel (%p768) target = $region80
      $region79: #{forward_pallas.1} parent=11 // pred_region
        _
      $region80: #{forward_pallas.1} parent=11 // pred_fallthru
        _
      // Predicated region
      $region81: #{forward_pallas.1} parent=11 // pred_check
        %p771 = pneg %p469
      $region82: #{forward_pallas.1} parent=11 // pred_check_branch
        %773 = sbr.rel (%p771) target = $region84
      $region83: #{forward_pallas.1} parent=11 // pred_region
        _
      $region84: #{forward_pallas.1} parent=11 // pred_fallthru
        _
      // Predicated region
      $region85: #{forward_pallas.1} parent=11 // pred_check
        %p774 = pneg %p490
      $region86: #{forward_pallas.1} parent=11 // pred_check_branch
        %776 = sbr.rel (%p774) target = $region88
      $region87: #{forward_pallas.1} parent=11 // pred_region
        _
      $region88: #{forward_pallas.1} parent=11 // pred_fallthru
        _
      // Predicated region
      $region89: #{forward_pallas.1} parent=11 // pred_check
        %p777 = pneg %p511
      $region90: #{forward_pallas.1} parent=11 // pred_check_branch
        %779 = sbr.rel (%p777) target = $region92
      $region91: #{forward_pallas.1} parent=11 // pred_region
        _
      $region92: #{forward_pallas.1} parent=11 // pred_fallthru
        _
      // Predicated region
      $region93: #{forward_pallas.1} parent=11 // pred_check
        %p780 = pneg %p532
      $region94: #{forward_pallas.1} parent=11 // pred_check_branch
        %782 = sbr.rel (%p780) target = $region96
      $region95: #{forward_pallas.1} parent=11 // pred_region
        _
      $region96: #{forward_pallas.1} parent=11 // pred_fallthru
        _
      // Predicated region
      $region97: #{forward_pallas.1} parent=11 // pred_check
        %p783 = pneg %p553
      $region98: #{forward_pallas.1} parent=11 // pred_check_branch
        %785 = sbr.rel (%p783) target = $region100
      $region99: #{forward_pallas.1} parent=11 // pred_region
        _
      $region100: #{forward_pallas.1} parent=11 // pred_fallthru
        _
      // Predicated region
      $region101: #{forward_pallas.1} parent=11 // pred_check
        %p786 = pneg %p574
      $region102: #{forward_pallas.1} parent=11 // pred_check_branch
        %788 = sbr.rel (%p786) target = $region104
      $region103: #{forward_pallas.1} parent=11 // pred_region
        _
      $region104: #{forward_pallas.1} parent=11 // pred_fallthru
        _
      // Predicated region
      $region105: #{forward_pallas.1} parent=11 // pred_check
        %p789 = pneg %p595
      $region106: #{forward_pallas.1} parent=11 // pred_check_branch
        %791 = sbr.rel (%p789) target = $region108
      $region107: #{forward_pallas.1} parent=11 // pred_region
        _
      $region108: #{forward_pallas.1} parent=11 // pred_fallthru
        _
      // Predicated region
      $region109: #{forward_pallas.1} parent=11 // pred_check
        %p792 = pneg %p616
      $region110: #{forward_pallas.1} parent=11 // pred_check_branch
        %794 = sbr.rel (%p792) target = $region112
      $region111: #{forward_pallas.1} parent=11 // pred_region
        _
      $region112: #{forward_pallas.1} parent=11 // pred_fallthru
        _
      // Predicated region
      $region113: #{forward_pallas.1} parent=11 // pred_check
        %p795 = pneg %p637
      $region114: #{forward_pallas.1} parent=11 // pred_check_branch
        %797 = sbr.rel (%p795) target = $region116
      $region115: #{forward_pallas.1} parent=11 // pred_region
        _
      $region116: #{forward_pallas.1} parent=11 // pred_fallthru
        _
      // Predicated region
      $region117: #{forward_pallas.1} parent=11 // pred_check
        %p798 = pneg %p658
      $region118: #{forward_pallas.1} parent=11 // pred_check_branch
        %800 = sbr.rel (%p798) target = $region120
      $region119: #{forward_pallas.1} parent=11 // pred_region
        _
      $region120: #{forward_pallas.1} parent=11 // pred_fallthru
        _
      // Predicated region
      $region121: #{forward_pallas.1} parent=11 // pred_check
        %p801 = pneg %p679
      $region122: #{forward_pallas.1} parent=11 // pred_check_branch
        %803 = sbr.rel (%p801) target = $region124
      $region123: #{forward_pallas.1} parent=11 // pred_region
        _
      $region124: #{forward_pallas.1} parent=11 // pred_fallthru
        _
    $region12: #{forward_pallas.1} parent=5 // pred_fallthru
      _
    %p804 = scmp.lt.s32.totalorder %s65, 2
    // Predicated region
    $region125: #{forward_pallas.1} parent=5 // pred_check
      %p805 = pneg %p804
    $region126: #{forward_pallas.1} parent=5 // pred_check_branch
      %807 = sbr.rel (%p805) target = $region128
    $region127: #{forward_pallas.1} parent=5 // pred_region
      // Predicated region
      $region129: #{forward_pallas.1} parent=127 // pred_check
        %p808 = pneg %p85
      $region130: #{forward_pallas.1} parent=127 // pred_check_branch
        %810 = sbr.rel (%p808) target = $region132
      $region131: #{forward_pallas.1} parent=127 // pred_region
        %p811 = scmp.lt.s32.totalorder %s65, 1
        %s812 = scalar_select %p811, %s65, 1
        %s813 = smul.addr %s812, 8
        %s814 = scalar_lea.vmem %s1, %s813
      $region132: #{forward_pallas.1} parent=127 // pred_fallthru
        _
    $region128: #{forward_pallas.1} parent=5 // pred_fallthru
      _
    %p815 = scmp.le.s32.totalorder 1, %s65
    %p816 = scmp.lt.s32.totalorder %s65, 3
    %p817 = pnand %p815, %p816
    %p818 = pneg %p817
    // Predicated region
    $region133: #{forward_pallas.1} parent=5 // pred_check
      _
    $region134: #{forward_pallas.1} parent=5 // pred_check_branch
      %820 = sbr.rel (%p817) target = $region136
    $region135: #{forward_pallas.1} parent=5 // pred_region
      %s821 = ssub.s32 %s65, 1
      %p822 = scmp.lt.s32.totalorder %s70, 1
      %s823 = scalar_select %p822, %s70, 1
      %s824 = smul.addr %s823, 8
      %s825 = scalar_lea.vmem %s1, %s824
      %p826 = pneg %p91
      %p827 = pneg %p88
      %p828 = pneg %p112
      %p829 = pneg %p109
      %p830 = pneg %p133
      %p831 = pneg %p130
      %p832 = pneg %p154
      %p833 = pneg %p151
      %p834 = pneg %p175
      %p835 = pneg %p172
      %p836 = pneg %p196
      %p837 = pneg %p193
      %p838 = pneg %p217
      %p839 = pneg %p214
      %p840 = pneg %p238
      %p841 = pneg %p235
      %p842 = pneg %p259
      %p843 = pneg %p256
      %p844 = pneg %p280
      %p845 = pneg %p277
      %p846 = pneg %p301
      %p847 = pneg %p298
      %p848 = pneg %p322
      %p849 = pneg %p319
      %p850 = pneg %p343
      %p851 = pneg %p340
      %p852 = pneg %p364
      %p853 = pneg %p361
      %p854 = pneg %p385
      %p855 = pneg %p382
      %p856 = pneg %p406
      %p857 = pneg %p403
      %p858 = pneg %p427
      %p859 = pneg %p424
      %p860 = pneg %p448
      %p861 = pneg %p445
      %p862 = pneg %p469
      %p863 = pneg %p466
      %p864 = pneg %p490
      %p865 = pneg %p487
      %p866 = pneg %p511
      %p867 = pneg %p508
      %p868 = pneg %p532
      %p869 = pneg %p529
      %p870 = pneg %p553
      %p871 = pneg %p550
      %p872 = pneg %p574
      %p873 = pneg %p571
      %p874 = pneg %p595
      %p875 = pneg %p592
      %p876 = pneg %p616
      %p877 = pneg %p613
      %p878 = pneg %p637
      %p879 = pneg %p634
      %p880 = pneg %p658
      %p881 = pneg %p655
      %p882 = pneg %p679
      %p883 = pneg %p676
      %p884 = pneg %p705
      %p885 = pneg %p702
      %p886 = scmp.lt.s32.totalorder %s70, 1
      %s887 = scalar_select %p886, %s70, 1
      %s888 = smul.addr %s887, 8
      %s889 = scalar_lea.vmem %s59, %s888
      %p890 = scmp.lt.s32.totalorder %s70, 1
      %s891 = scalar_select %p890, %s70, 1
      %s892 = smul.addr %s891, 8
      %s893 = scalar_lea.vmem %s1, %s892
      %p894 = scmp.lt.s32.totalorder %s70, 1
      %s895 = scalar_select %p894, %s70, 1
      %s896 = smul.addr %s895, 8
      %s897 = scalar_lea.vmem %s59, %s896
      %v899 = vld [vmem:[%s893] sm:$0xff]
      %v900 = vpack.c.bf16 %v899, %v899
      %v901 = vld [vmem:[%s3] sm:$0xf]
      %v902 = vld [vmem:[%s3 + $0x4] sm:$0xf]
      %v903 = vld [vmem:[%s5] sm:$0x1]
      %v905 = vlaneseq
      %v906 = vshrl.u32 %v905, 7
      %v907 = vsub.s32 0, %v906
      %v908 = vrot.slane %v903, %v907
      %v912 = vunpack.c.l.b16 %v901
      %v913 = vunpack.c.l.b16 %v902
      %v914 = vpack.c.b16 %v913, %v912
      %vm916 = vcmask 130048
      %v918 = vsel %vm916, %v900, 0
      %920 = vmatprep.subr.bf16.mxu0 0
      %921 = vmatpush1.bf16.msra.mxu0 %v914
      %922 = vmatprep.subr.bf16.mxu0 0
      %923 = vmatpush1.bf16.msra.mxu0 0
      %924 = vmatprep.subr.bf16.mxu0 0
      %925 = vmatpush1.bf16.msra.mxu0 0
      %926 = vmatprep.subr.bf16.mxu0 0
      %927 = vmatpush1.bf16.msra.mxu0 0
      %928 = vmatprep.subr.bf16.mxu0 0
      %929 = vmatpush1.bf16.msra.mxu0 0
      %930 = vmatprep.subr.bf16.mxu0 0
      %931 = vmatpush1.bf16.msra.mxu0 0
      %932 = vmatprep.subr.bf16.mxu0 0
      %933 = vmatpush1.bf16.msra.mxu0 0
      %934 = vmatprep.subr.bf16.mxu0 0
      %935 = vmatpush1.bf16.msra.mxu0 0
      %936 = vmatprep.subr.bf16.mxu0 0
      %937 = vmatpush1.bf16.msra.mxu0 0
      %938 = vmatprep.subr.bf16.mxu0 0
      %939 = vmatpush1.bf16.msra.mxu0 0
      %940 = vmatprep.subr.bf16.mxu0 0
      %941 = vmatpush1.bf16.msra.mxu0 0
      %942 = vmatprep.subr.bf16.mxu0 0
      %943 = vmatpush1.bf16.msra.mxu0 0
      %944 = vmatprep.subr.bf16.mxu0 0
      %945 = vmatpush1.bf16.msra.mxu0 0
      %946 = vmatprep.subr.bf16.mxu0 0
      %947 = vmatpush1.bf16.msra.mxu0 0
      %948 = vmatprep.subr.bf16.mxu0 0
      %949 = vmatpush1.bf16.msra.mxu0 0
      %950 = vmatprep.subr.bf16.mxu0 0
      %951 = vmatpush1.bf16.msra.mxu0 0
      %952 = vmatprep.mubr.bf16.mxu0 0
      %953 = vmatmul.mubr.bf16.gmra.mrb[0].mxu0 %v918
      %v954 = vpop.f32.mrb[0].mxu0
      %v955 = vadd.f32 %v908, %v954
      %v956 = vpop.f32.mrb[0].mxu0
      %v957 = vpop.f32.mrb[0].mxu0
      %v958 = vpop.f32.mrb[0].mxu0
      %959 = vdwg.mxu0
      %v960 = vpack.c.bf16 %v955, %v955
      %v961 = vld [vmem:[%s7] sm:$0xf]
      %v962 = vld [vmem:[%s7 + $0x4] sm:$0xf]
      %v963 = vld [vmem:[%s7 + $0x8] sm:$0xf]
      %v964 = vld [vmem:[%s7 + $0xc] sm:$0xf]
      %v965 = vld [vmem:[%s9] sm:$0x1]
      %v967 = vlaneseq
      %v968 = vshrl.u32 %v967, 7
      %v969 = vsub.s32 0, %v968
      %v970 = vrot.slane %v965, %v969
      %v976 = vunpack.c.l.b16 %v961
      %v977 = vunpack.c.l.b16 %v962
      %v978 = vunpack.c.l.b16 %v963
      %v979 = vunpack.c.l.b16 %v964
      %v980 = vpack.c.b16 %v977, %v976
      %v981 = vpack.c.b16 %v979, %v978
      %vm984 = vcmask 261120
      %v986 = vsel %vm984, %v960, 0
      %988 = vmatprep.subr.bf16.mxu0 0
      %989 = vmatpush1.bf16.msra.mxu0 %v980
      %990 = vmatprep.subr.bf16.mxu0 0
      %991 = vmatpush1.bf16.msra.mxu0 %v981
      %992 = vmatprep.subr.bf16.mxu0 0
      %993 = vmatpush1.bf16.msra.mxu0 0
      %994 = vmatprep.subr.bf16.mxu0 0
      %995 = vmatpush1.bf16.msra.mxu0 0
      %996 = vmatprep.subr.bf16.mxu0 0
      %997 = vmatpush1.bf16.msra.mxu0 0
      %998 = vmatprep.subr.bf16.mxu0 0
      %999 = vmatpush1.bf16.msra.mxu0 0
      %1000 = vmatprep.subr.bf16.mxu0 0
      %1001 = vmatpush1.bf16.msra.mxu0 0
      %1002 = vmatprep.subr.bf16.mxu0 0
      %1003 = vmatpush1.bf16.msra.mxu0 0
      %1004 = vmatprep.subr.bf16.mxu0 0
      %1005 = vmatpush1.bf16.msra.mxu0 0
      %1006 = vmatprep.subr.bf16.mxu0 0
      %1007 = vmatpush1.bf16.msra.mxu0 0
      %1008 = vmatprep.subr.bf16.mxu0 0
      %1009 = vmatpush1.bf16.msra.mxu0 0
      %1010 = vmatprep.subr.bf16.mxu0 0
      %1011 = vmatpush1.bf16.msra.mxu0 0
      %1012 = vmatprep.subr.bf16.mxu0 0
      %1013 = vmatpush1.bf16.msra.mxu0 0
      %1014 = vmatprep.subr.bf16.mxu0 0
      %1015 = vmatpush1.bf16.msra.mxu0 0
      %1016 = vmatprep.subr.bf16.mxu0 0
      %1017 = vmatpush1.bf16.msra.mxu0 0
      %1018 = vmatprep.subr.bf16.mxu0 0
      %1019 = vmatpush1.bf16.msra.mxu0 0
      %1020 = vmatprep.mubr.bf16.mxu0 0
      %1021 = vmatmul.mubr.bf16.gmra.mrb[0].mxu0 %v986
      %v1022 = vpop.f32.mrb[0].mxu0
      %v1023 = vadd.f32 %v970, %v1022
      %v1024 = vpop.f32.mrb[0].mxu0
      %v1025 = vpop.f32.mrb[0].mxu0
      %v1026 = vpop.f32.mrb[0].mxu0
      %1027 = vdwg.mxu0
      %v1028 = vmul.f32 %v1023, 0.35355338
      %v1029 = vpack.c.bf16 %v1028, %v1028
      %v1030 = vpack.c.bf16 %v1023, %v1023
      %1032 = vrot.lane.b32.xlu0 %v1030, 96
      %v1033 = vpop.permute.xlu0 %1032
      %vm1034 = vcmask 64512
      %v1036 = vsel %vm1034, %v1029, 0
      %v1039 = vsel %vm1034, %v1033, 0
      %1041 = vmatprep.subr.bf16.mxu0 0
      %1042 = vmatpush1.bf16.xpose.msra.mxu0 %v1039
      %1043 = vmatprep.subr.bf16.mxu0 0
      %1044 = vmatpush1.bf16.xpose.msra.mxu0 0
      %1045 = vmatprep.subr.bf16.mxu0 0
      %1046 = vmatpush1.bf16.xpose.msra.mxu0 0
      %1047 = vmatprep.subr.bf16.mxu0 0
      %1048 = vmatpush1.bf16.xpose.msra.mxu0 0
      %1049 = vmatprep.subr.bf16.mxu0 0
      %1050 = vmatpush1.bf16.xpose.msra.mxu0 0
      %1051 = vmatprep.subr.bf16.mxu0 0
      %1052 = vmatpush1.bf16.xpose.msra.mxu0 0
      %1053 = vmatprep.subr.bf16.mxu0 0
      %1054 = vmatpush1.bf16.xpose.msra.mxu0 0
      %1055 = vmatprep.subr.bf16.mxu0 0
      %1056 = vmatpush1.bf16.xpose.msra.mxu0 0
      %1057 = vmatprep.subr.bf16.mxu0 0
      %1058 = vmatpush1.bf16.xpose.msra.mxu0 0
      %1059 = vmatprep.subr.bf16.mxu0 0
      %1060 = vmatpush1.bf16.xpose.msra.mxu0 0
      %1061 = vmatprep.subr.bf16.mxu0 0
      %1062 = vmatpush1.bf16.xpose.msra.mxu0 0
      %1063 = vmatprep.subr.bf16.mxu0 0
      %1064 = vmatpush1.bf16.xpose.msra.mxu0 0
      %1065 = vmatprep.subr.bf16.mxu0 0
      %1066 = vmatpush1.bf16.xpose.msra.mxu0 0
      %1067 = vmatprep.subr.bf16.mxu0 0
      %1068 = vmatpush1.bf16.xpose.msra.mxu0 0
      %1069 = vmatprep.subr.bf16.mxu0 0
      %1070 = vmatpush1.bf16.xpose.msra.mxu0 0
      %1071 = vmatprep.subr.bf16.mxu0 0
      %1072 = vmatpush1.bf16.xpose.msra.mxu0 0
      %1073 = vmatprep.mubr.bf16.mxu0 0
      %1074 = vmatmul.mubr.bf16.gmra.mrb[0].mxu0 %v1036
      %v1075 = vpop.f32.mrb[0].mxu0
      %v1076 = vadd.f32 0.0, %v1075
      %v1077 = vpop.f32.mrb[0].mxu0
      %v1078 = vpop.f32.mrb[0].mxu0
      %v1079 = vpop.f32.mrb[0].mxu0
      %1080 = vdwg.mxu0
      %v1081 = vsel %vm1034, %v1076, -inf
      %1082 = vmax.xlane.f32.xlu0 %v1081
      %v1083 = vpop.xlane.xlu0 %1082
      %v1084 = vsub.f32 %v1076, %v1083
      %v1085 = vmul.f32 %v1084, 1.442695
      %v1086 = vpow.pop %v1085
      %v1087 = vsel %vm1034, %v1086, 0.0
      %1088 = vadd.xlane.f32.xlu0 %v1087
      %v1089 = vpop.xlane.xlu0 %1088
      %v1090 = vrcp.pop %v1089
      %v1091 = vmul.f32 %v1086, %v1090
      %v1092 = vpack.c.bf16 %v1091, %v1091
      %1093 = vrot.lane.b32.xlu0 %v1030, 64
      %v1094 = vpop.permute.xlu0 %1093
      %v1096 = vsel %vm1034, %v1092, 0
      %vm1098 = vcmask 1043456
      %v1100 = vsel %vm1098, %v1094, 0
      %1102 = vmatprep.subr.bf16.mxu0 0
      %1103 = vmatpush1.bf16.msra.mxu0 %v1100
      %1104 = vmatprep.subr.bf16.mxu0 0
      %1105 = vmatpush1.bf16.msra.mxu0 0
      %1106 = vmatprep.subr.bf16.mxu0 0
      %1107 = vmatpush1.bf16.msra.mxu0 0
      %1108 = vmatprep.subr.bf16.mxu0 0
      %1109 = vmatpush1.bf16.msra.mxu0 0
      %1110 = vmatprep.subr.bf16.mxu0 0
      %1111 = vmatpush1.bf16.msra.mxu0 0
      %1112 = vmatprep.subr.bf16.mxu0 0
      %1113 = vmatpush1.bf16.msra.mxu0 0
      %1114 = vmatprep.subr.bf16.mxu0 0
      %1115 = vmatpush1.bf16.msra.mxu0 0
      %1116 = vmatprep.subr.bf16.mxu0 0
      %1117 = vmatpush1.bf16.msra.mxu0 0
      %1118 = vmatprep.subr.bf16.mxu0 0
      %1119 = vmatpush1.bf16.msra.mxu0 0
      %1120 = vmatprep.subr.bf16.mxu0 0
      %1121 = vmatpush1.bf16.msra.mxu0 0
      %1122 = vmatprep.subr.bf16.mxu0 0
      %1123 = vmatpush1.bf16.msra.mxu0 0
      %1124 = vmatprep.subr.bf16.mxu0 0
      %1125 = vmatpush1.bf16.msra.mxu0 0
      %1126 = vmatprep.subr.bf16.mxu0 0
      %1127 = vmatpush1.bf16.msra.mxu0 0
      %1128 = vmatprep.subr.bf16.mxu0 0
      %1129 = vmatpush1.bf16.msra.mxu0 0
      %1130 = vmatprep.subr.bf16.mxu0 0
      %1131 = vmatpush1.bf16.msra.mxu0 0
      %1132 = vmatprep.subr.bf16.mxu0 0
      %1133 = vmatpush1.bf16.msra.mxu0 0
      %1134 = vmatprep.mubr.bf16.mxu0 0
      %1135 = vmatmul.mubr.bf16.gmra.mrb[0].mxu0 %v1096
      %v1136 = vpop.f32.mrb[0].mxu0
      %v1137 = vadd.f32 0.0, %v1136
      %v1138 = vpop.f32.mrb[0].mxu0
      %v1139 = vpop.f32.mrb[0].mxu0
      %v1140 = vpop.f32.mrb[0].mxu0
      %1141 = vdwg.mxu0
      %1143 = vrot.lane.b32.xlu0 %v1029, 120
      %v1144 = vpop.permute.xlu0 %1143
      %1145 = vrot.lane.b32.xlu0 %v1030, 88
      %v1146 = vpop.permute.xlu0 %1145
      %v1148 = vsel %vm1034, %v1144, 0
      %v1151 = vsel %vm1034, %v1146, 0
      %1153 = vmatprep.subr.bf16.mxu0 0
      %1154 = vmatpush1.bf16.xpose.msra.mxu0 %v1151
      %1155 = vmatprep.subr.bf16.mxu0 0
      %1156 = vmatpush1.bf16.xpose.msra.mxu0 0
      %1157 = vmatprep.subr.bf16.mxu0 0
      %1158 = vmatpush1.bf16.xpose.msra.mxu0 0
      %1159 = vmatprep.subr.bf16.mxu0 0
      %1160 = vmatpush1.bf16.xpose.msra.mxu0 0
      %1161 = vmatprep.subr.bf16.mxu0 0
      %1162 = vmatpush1.bf16.xpose.msra.mxu0 0
      %1163 = vmatprep.subr.bf16.mxu0 0
      %1164 = vmatpush1.bf16.xpose.msra.mxu0 0
      %1165 = vmatprep.subr.bf16.mxu0 0
      %1166 = vmatpush1.bf16.xpose.msra.mxu0 0
      %1167 = vmatprep.subr.bf16.mxu0 0
      %1168 = vmatpush1.bf16.xpose.msra.mxu0 0
      %1169 = vmatprep.subr.bf16.mxu0 0
      %1170 = vmatpush1.bf16.xpose.msra.mxu0 0
      %1171 = vmatprep.subr.bf16.mxu0 0
      %1172 = vmatpush1.bf16.xpose.msra.mxu0 0
      %1173 = vmatprep.subr.bf16.mxu0 0
      %1174 = vmatpush1.bf16.xpose.msra.mxu0 0
      %1175 = vmatprep.subr.bf16.mxu0 0
      %1176 = vmatpush1.bf16.xpose.msra.mxu0 0
      %1177 = vmatprep.subr.bf16.mxu0 0
      %1178 = vmatpush1.bf16.xpose.msra.mxu0 0
      %1179 = vmatprep.subr.bf16.mxu0 0
      %1180 = vmatpush1.bf16.xpose.msra.mxu0 0
      %1181 = vmatprep.subr.bf16.mxu0 0
      %1182 = vmatpush1.bf16.xpose.msra.mxu0 0
      %1183 = vmatprep.subr.bf16.mxu0 0
      %1184 = vmatpush1.bf16.xpose.msra.mxu0 0
      %1185 = vmatprep.mubr.bf16.mxu0 0
      %1186 = vmatmul.mubr.bf16.gmra.mrb[0].mxu0 %v1148
      %v1187 = vpop.f32.mrb[0].mxu0
      %v1188 = vadd.f32 0.0, %v1187
      %v1189 = vpop.f32.mrb[0].mxu0
      %v1190 = vpop.f32.mrb[0].mxu0
      %v1191 = vpop.f32.mrb[0].mxu0
      %1192 = vdwg.mxu0
      %v1193 = vsel %vm1034, %v1188, -inf
      %1194 = vmax.xlane.f32.xlu0 %v1193
      %v1195 = vpop.xlane.xlu0 %1194
      %v1196 = vsub.f32 %v1188, %v1195
      %v1197 = vmul.f32 %v1196, 1.442695
      %v1198 = vpow.pop %v1197
      %v1199 = vsel %vm1034, %v1198, 0.0
      %1200 = vadd.xlane.f32.xlu0 %v1199
      %v1201 = vpop.xlane.xlu0 %1200
      %v1202 = vrcp.pop %v1201
      %v1203 = vmul.f32 %v1198, %v1202
      %v1204 = vpack.c.bf16 %v1203, %v1203
      %1205 = vrot.lane.b32.xlu0 %v1030, 56
      %v1206 = vpop.permute.xlu0 %1205
      %v1208 = vsel %vm1034, %v1204, 0
      %v1211 = vsel %vm1098, %v1206, 0
      %1213 = vmatprep.subr.bf16.mxu0 0
      %1214 = vmatpush1.bf16.msra.mxu0 %v1211
      %1215 = vmatprep.subr.bf16.mxu0 0
      %1216 = vmatpush1.bf16.msra.mxu0 0
      %1217 = vmatprep.subr.bf16.mxu0 0
      %1218 = vmatpush1.bf16.msra.mxu0 0
      %1219 = vmatprep.subr.bf16.mxu0 0
      %1220 = vmatpush1.bf16.msra.mxu0 0
      %1221 = vmatprep.subr.bf16.mxu0 0
      %1222 = vmatpush1.bf16.msra.mxu0 0
      %1223 = vmatprep.subr.bf16.mxu0 0
      %1224 = vmatpush1.bf16.msra.mxu0 0
      %1225 = vmatprep.subr.bf16.mxu0 0
      %1226 = vmatpush1.bf16.msra.mxu0 0
      %1227 = vmatprep.subr.bf16.mxu0 0
      %1228 = vmatpush1.bf16.msra.mxu0 0
      %1229 = vmatprep.subr.bf16.mxu0 0
      %1230 = vmatpush1.bf16.msra.mxu0 0
      %1231 = vmatprep.subr.bf16.mxu0 0
      %1232 = vmatpush1.bf16.msra.mxu0 0
      %1233 = vmatprep.subr.bf16.mxu0 0
      %1234 = vmatpush1.bf16.msra.mxu0 0
      %1235 = vmatprep.subr.bf16.mxu0 0
      %1236 = vmatpush1.bf16.msra.mxu0 0
      %1237 = vmatprep.subr.bf16.mxu0 0
      %1238 = vmatpush1.bf16.msra.mxu0 0
      %1239 = vmatprep.subr.bf16.mxu0 0
      %1240 = vmatpush1.bf16.msra.mxu0 0
      %1241 = vmatprep.subr.bf16.mxu0 0
      %1242 = vmatpush1.bf16.msra.mxu0 0
      %1243 = vmatprep.subr.bf16.mxu0 0
      %1244 = vmatpush1.bf16.msra.mxu0 0
      %1245 = vmatprep.mubr.bf16.mxu0 0
      %1246 = vmatmul.mubr.bf16.gmra.mrb[0].mxu0 %v1208
      %v1247 = vpop.f32.mrb[0].mxu0
      %v1248 = vadd.f32 0.0, %v1247
      %v1249 = vpop.f32.mrb[0].mxu0
      %v1250 = vpop.f32.mrb[0].mxu0
      %v1251 = vpop.f32.mrb[0].mxu0
      %1252 = vdwg.mxu0
      %1253 = vrot.lane.b32.xlu0 %v1029, 112
      %v1254 = vpop.permute.xlu0 %1253
      %1255 = vrot.lane.b32.xlu0 %v1030, 80
      %v1256 = vpop.permute.xlu0 %1255
      %v1258 = vsel %vm1034, %v1254, 0
      %v1261 = vsel %vm1034, %v1256, 0
      %1263 = vmatprep.subr.bf16.mxu0 0
      %1264 = vmatpush1.bf16.xpose.msra.mxu0 %v1261
      %1265 = vmatprep.subr.bf16.mxu0 0
      %1266 = vmatpush1.bf16.xpose.msra.mxu0 0
      %1267 = vmatprep.subr.bf16.mxu0 0
      %1268 = vmatpush1.bf16.xpose.msra.mxu0 0
      %1269 = vmatprep.subr.bf16.mxu0 0
      %1270 = vmatpush1.bf16.xpose.msra.mxu0 0
      %1271 = vmatprep.subr.bf16.mxu0 0
      %1272 = vmatpush1.bf16.xpose.msra.mxu0 0
      %1273 = vmatprep.subr.bf16.mxu0 0
      %1274 = vmatpush1.bf16.xpose.msra.mxu0 0
      %1275 = vmatprep.subr.bf16.mxu0 0
      %1276 = vmatpush1.bf16.xpose.msra.mxu0 0
      %1277 = vmatprep.subr.bf16.mxu0 0
      %1278 = vmatpush1.bf16.xpose.msra.mxu0 0
      %1279 = vmatprep.subr.bf16.mxu0 0
      %1280 = vmatpush1.bf16.xpose.msra.mxu0 0
      %1281 = vmatprep.subr.bf16.mxu0 0
      %1282 = vmatpush1.bf16.xpose.msra.mxu0 0
      %1283 = vmatprep.subr.bf16.mxu0 0
      %1284 = vmatpush1.bf16.xpose.msra.mxu0 0
      %1285 = vmatprep.subr.bf16.mxu0 0
      %1286 = vmatpush1.bf16.xpose.msra.mxu0 0
      %1287 = vmatprep.subr.bf16.mxu0 0
      %1288 = vmatpush1.bf16.xpose.msra.mxu0 0
      %1289 = vmatprep.subr.bf16.mxu0 0
      %1290 = vmatpush1.bf16.xpose.msra.mxu0 0
      %1291 = vmatprep.subr.bf16.mxu0 0
      %1292 = vmatpush1.bf16.xpose.msra.mxu0 0
      %1293 = vmatprep.subr.bf16.mxu0 0
      %1294 = vmatpush1.bf16.xpose.msra.mxu0 0
      %1295 = vmatprep.mubr.bf16.mxu0 0
      %1296 = vmatmul.mubr.bf16.gmra.mrb[0].mxu0 %v1258
      %v1297 = vpop.f32.mrb[0].mxu0
      %v1298 = vadd.f32 0.0, %v1297
      %v1299 = vpop.f32.mrb[0].mxu0
      %v1300 = vpop.f32.mrb[0].mxu0
      %v1301 = vpop.f32.mrb[0].mxu0
      %1302 = vdwg.mxu0
      %v1303 = vsel %vm1034, %v1298, -inf
      %1304 = vmax.xlane.f32.xlu0 %v1303
      %v1305 = vpop.xlane.xlu0 %1304
      %v1306 = vsub.f32 %v1298, %v1305
      %v1307 = vmul.f32 %v1306, 1.442695
      %v1308 = vpow.pop %v1307
      %v1309 = vsel %vm1034, %v1308, 0.0
      %1310 = vadd.xlane.f32.xlu0 %v1309
      %v1311 = vpop.xlane.xlu0 %1310
      %v1312 = vrcp.pop %v1311
      %v1313 = vmul.f32 %v1308, %v1312
      %v1314 = vpack.c.bf16 %v1313, %v1313
      %1315 = vrot.lane.b32.xlu0 %v1030, 48
      %v1316 = vpop.permute.xlu0 %1315
      %v1318 = vsel %vm1034, %v1314, 0
      %v1321 = vsel %vm1098, %v1316, 0
      %1323 = vmatprep.subr.bf16.mxu0 0
      %1324 = vmatpush1.bf16.msra.mxu0 %v1321
      %1325 = vmatprep.subr.bf16.mxu0 0
      %1326 = vmatpush1.bf16.msra.mxu0 0
      %1327 = vmatprep.subr.bf16.mxu0 0
      %1328 = vmatpush1.bf16.msra.mxu0 0
      %1329 = vmatprep.subr.bf16.mxu0 0
      %1330 = vmatpush1.bf16.msra.mxu0 0
      %1331 = vmatprep.subr.bf16.mxu0 0
      %1332 = vmatpush1.bf16.msra.mxu0 0
      %1333 = vmatprep.subr.bf16.mxu0 0
      %1334 = vmatpush1.bf16.msra.mxu0 0
      %1335 = vmatprep.subr.bf16.mxu0 0
      %1336 = vmatpush1.bf16.msra.mxu0 0
      %1337 = vmatprep.subr.bf16.mxu0 0
      %1338 = vmatpush1.bf16.msra.mxu0 0
      %1339 = vmatprep.subr.bf16.mxu0 0
      %1340 = vmatpush1.bf16.msra.mxu0 0
      %1341 = vmatprep.subr.bf16.mxu0 0
      %1342 = vmatpush1.bf16.msra.mxu0 0
      %1343 = vmatprep.subr.bf16.mxu0 0
      %1344 = vmatpush1.bf16.msra.mxu0 0
      %1345 = vmatprep.subr.bf16.mxu0 0
      %1346 = vmatpush1.bf16.msra.mxu0 0
      %1347 = vmatprep.subr.bf16.mxu0 0
      %1348 = vmatpush1.bf16.msra.mxu0 0
      %1349 = vmatprep.subr.bf16.mxu0 0
      %1350 = vmatpush1.bf16.msra.mxu0 0
      %1351 = vmatprep.subr.bf16.mxu0 0
      %1352 = vmatpush1.bf16.msra.mxu0 0
      %1353 = vmatprep.subr.bf16.mxu0 0
      %1354 = vmatpush1.bf16.msra.mxu0 0
      %1355 = vmatprep.mubr.bf16.mxu0 0
      %1356 = vmatmul.mubr.bf16.gmra.mrb[0].mxu0 %v1318
      %v1357 = vpop.f32.mrb[0].mxu0
      %v1358 = vadd.f32 0.0, %v1357
      %v1359 = vpop.f32.mrb[0].mxu0
      %v1360 = vpop.f32.mrb[0].mxu0
      %v1361 = vpop.f32.mrb[0].mxu0
      %1362 = vdwg.mxu0
      %1363 = vrot.lane.b32.xlu0 %v1029, 104
      %v1364 = vpop.permute.xlu0 %1363
      %1365 = vrot.lane.b32.xlu0 %v1030, 72
      %v1366 = vpop.permute.xlu0 %1365
      %v1368 = vsel %vm1034, %v1364, 0
      %v1371 = vsel %vm1034, %v1366, 0
      %1373 = vmatprep.subr.bf16.mxu0 0
      %1374 = vmatpush1.bf16.xpose.msra.mxu0 %v1371
      %1375 = vmatprep.subr.bf16.mxu0 0
      %1376 = vmatpush1.bf16.xpose.msra.mxu0 0
      %1377 = vmatprep.subr.bf16.mxu0 0
      %1378 = vmatpush1.bf16.xpose.msra.mxu0 0
      %1379 = vmatprep.subr.bf16.mxu0 0
      %1380 = vmatpush1.bf16.xpose.msra.mxu0 0
      %1381 = vmatprep.subr.bf16.mxu0 0
      %1382 = vmatpush1.bf16.xpose.msra.mxu0 0
      %1383 = vmatprep.subr.bf16.mxu0 0
      %1384 = vmatpush1.bf16.xpose.msra.mxu0 0
      %1385 = vmatprep.subr.bf16.mxu0 0
      %1386 = vmatpush1.bf16.xpose.msra.mxu0 0
      %1387 = vmatprep.subr.bf16.mxu0 0
      %1388 = vmatpush1.bf16.xpose.msra.mxu0 0
      %1389 = vmatprep.subr.bf16.mxu0 0
      %1390 = vmatpush1.bf16.xpose.msra.mxu0 0
      %1391 = vmatprep.subr.bf16.mxu0 0
      %1392 = vmatpush1.bf16.xpose.msra.mxu0 0
      %1393 = vmatprep.subr.bf16.mxu0 0
      %1394 = vmatpush1.bf16.xpose.msra.mxu0 0
      %1395 = vmatprep.subr.bf16.mxu0 0
      %1396 = vmatpush1.bf16.xpose.msra.mxu0 0
      %1397 = vmatprep.subr.bf16.mxu0 0
      %1398 = vmatpush1.bf16.xpose.msra.mxu0 0
      %1399 = vmatprep.subr.bf16.mxu0 0
      %1400 = vmatpush1.bf16.xpose.msra.mxu0 0
      %1401 = vmatprep.subr.bf16.mxu0 0
      %1402 = vmatpush1.bf16.xpose.msra.mxu0 0
      %1403 = vmatprep.subr.bf16.mxu0 0
      %1404 = vmatpush1.bf16.xpose.msra.mxu0 0
      %1405 = vmatprep.mubr.bf16.mxu0 0
      %1406 = vmatmul.mubr.bf16.gmra.mrb[0].mxu0 %v1368
      %v1407 = vpop.f32.mrb[0].mxu0
      %v1408 = vadd.f32 0.0, %v1407
      %v1409 = vpop.f32.mrb[0].mxu0
      %v1410 = vpop.f32.mrb[0].mxu0
      %v1411 = vpop.f32.mrb[0].mxu0
      %1412 = vdwg.mxu0
      %v1413 = vsel %vm1034, %v1408, -inf
      %1414 = vmax.xlane.f32.xlu0 %v1413
      %v1415 = vpop.xlane.xlu0 %1414
      %v1416 = vsub.f32 %v1408, %v1415
      %v1417 = vmul.f32 %v1416, 1.442695
      %v1418 = vpow.pop %v1417
      %v1419 = vsel %vm1034, %v1418, 0.0
      %1420 = vadd.xlane.f32.xlu0 %v1419
      %v1421 = vpop.xlane.xlu0 %1420
      %v1422 = vrcp.pop %v1421
      %v1423 = vmul.f32 %v1418, %v1422
      %v1424 = vpack.c.bf16 %v1423, %v1423
      %1425 = vrot.lane.b32.xlu0 %v1030, 40
      %v1426 = vpop.permute.xlu0 %1425
      %v1428 = vsel %vm1034, %v1424, 0
      %v1431 = vsel %vm1098, %v1426, 0
      %1433 = vmatprep.subr.bf16.mxu0 0
      %1434 = vmatpush1.bf16.msra.mxu0 %v1431
      %1435 = vmatprep.subr.bf16.mxu0 0
      %1436 = vmatpush1.bf16.msra.mxu0 0
      %1437 = vmatprep.subr.bf16.mxu0 0
      %1438 = vmatpush1.bf16.msra.mxu0 0
      %1439 = vmatprep.subr.bf16.mxu0 0
      %1440 = vmatpush1.bf16.msra.mxu0 0
      %1441 = vmatprep.subr.bf16.mxu0 0
      %1442 = vmatpush1.bf16.msra.mxu0 0
      %1443 = vmatprep.subr.bf16.mxu0 0
      %1444 = vmatpush1.bf16.msra.mxu0 0
      %1445 = vmatprep.subr.bf16.mxu0 0
      %1446 = vmatpush1.bf16.msra.mxu0 0
      %1447 = vmatprep.subr.bf16.mxu0 0
      %1448 = vmatpush1.bf16.msra.mxu0 0
      %1449 = vmatprep.subr.bf16.mxu0 0
      %1450 = vmatpush1.bf16.msra.mxu0 0
      %1451 = vmatprep.subr.bf16.mxu0 0
      %1452 = vmatpush1.bf16.msra.mxu0 0
      %1453 = vmatprep.subr.bf16.mxu0 0
      %1454 = vmatpush1.bf16.msra.mxu0 0
      %1455 = vmatprep.subr.bf16.mxu0 0
      %1456 = vmatpush1.bf16.msra.mxu0 0
      %1457 = vmatprep.subr.bf16.mxu0 0
      %1458 = vmatpush1.bf16.msra.mxu0 0
      %1459 = vmatprep.subr.bf16.mxu0 0
      %1460 = vmatpush1.bf16.msra.mxu0 0
      %1461 = vmatprep.subr.bf16.mxu0 0
      %1462 = vmatpush1.bf16.msra.mxu0 0
      %1463 = vmatprep.subr.bf16.mxu0 0
      %1464 = vmatpush1.bf16.msra.mxu0 0
      %1465 = vmatprep.mubr.bf16.mxu0 0
      %1466 = vmatmul.mubr.bf16.gmra.mrb[0].mxu0 %v1428
      %v1467 = vpop.f32.mrb[0].mxu0
      %v1468 = vadd.f32 0.0, %v1467
      %v1469 = vpop.f32.mrb[0].mxu0
      %v1470 = vpop.f32.mrb[0].mxu0
      %v1471 = vpop.f32.mrb[0].mxu0
      %1472 = vdwg.mxu0
      %1474 = vrot.lane.b32.xlu0 %v1248, 8
      %v1475 = vpop.permute.xlu0 %1474
      %1478 = vrot.lane.b32.xlu0 %v1358, 16
      %v1479 = vpop.permute.xlu0 %1478
      %1482 = vrot.lane.b32.xlu0 %v1468, 24
      %v1483 = vpop.permute.xlu0 %1482
      %v1485 = vsel %vm1034, %v1137, %v1475
      %v1486 = vsel %vm916, %v1485, %v1479
      %vm1487 = vcmask 195584
      %v1488 = vsel %vm1487, %v1486, %v1483
      %v1489 = vpack.c.bf16 %v1488, %v1488
      %v1490 = vld [vmem:[%s11] sm:$0xf]
      %v1491 = vld [vmem:[%s11 + $0x4] sm:$0xf]
      %v1492 = vld [vmem:[%s11 + $0x8] sm:$0xf]
      %v1493 = vld [vmem:[%s11 + $0xc] sm:$0xf]
      %v1494 = vld [vmem:[%s13] sm:$0x1]
      %v1496 = vlaneseq
      %v1497 = vshrl.u32 %v1496, 7
      %v1498 = vsub.s32 0, %v1497
      %v1499 = vrot.slane %v1494, %v1498
      %v1505 = vunpack.c.l.b16 %v1490
      %v1506 = vunpack.c.l.b16 %v1491
      %v1507 = vunpack.c.l.b16 %v1492
      %v1508 = vunpack.c.l.b16 %v1493
      %v1509 = vpack.c.b16 %v1506, %v1505
      %v1510 = vpack.c.b16 %v1508, %v1507
      %v1514 = vsel %vm984, %v1489, 0
      %1516 = vmatprep.subr.bf16.mxu0 0
      %1517 = vmatpush1.bf16.msra.mxu0 %v1509
      %1518 = vmatprep.subr.bf16.mxu0 0
      %1519 = vmatpush1.bf16.msra.mxu0 %v1510
      %1520 = vmatprep.subr.bf16.mxu0 0
      %1521 = vmatpush1.bf16.msra.mxu0 0
      %1522 = vmatprep.subr.bf16.mxu0 0
      %1523 = vmatpush1.bf16.msra.mxu0 0
      %1524 = vmatprep.subr.bf16.mxu0 0
      %1525 = vmatpush1.bf16.msra.mxu0 0
      %1526 = vmatprep.subr.bf16.mxu0 0
      %1527 = vmatpush1.bf16.msra.mxu0 0
      %1528 = vmatprep.subr.bf16.mxu0 0
      %1529 = vmatpush1.bf16.msra.mxu0 0
      %1530 = vmatprep.subr.bf16.mxu0 0
      %1531 = vmatpush1.bf16.msra.mxu0 0
      %1532 = vmatprep.subr.bf16.mxu0 0
      %1533 = vmatpush1.bf16.msra.mxu0 0
      %1534 = vmatprep.subr.bf16.mxu0 0
      %1535 = vmatpush1.bf16.msra.mxu0 0
      %1536 = vmatprep.subr.bf16.mxu0 0
      %1537 = vmatpush1.bf16.msra.mxu0 0
      %1538 = vmatprep.subr.bf16.mxu0 0
      %1539 = vmatpush1.bf16.msra.mxu0 0
      %1540 = vmatprep.subr.bf16.mxu0 0
      %1541 = vmatpush1.bf16.msra.mxu0 0
      %1542 = vmatprep.subr.bf16.mxu0 0
      %1543 = vmatpush1.bf16.msra.mxu0 0
      %1544 = vmatprep.subr.bf16.mxu0 0
      %1545 = vmatpush1.bf16.msra.mxu0 0
      %1546 = vmatprep.subr.bf16.mxu0 0
      %1547 = vmatpush1.bf16.msra.mxu0 0
      %1548 = vmatprep.mubr.bf16.mxu0 0
      %1549 = vmatmul.mubr.bf16.gmra.mrb[0].mxu0 %v1514
      %v1550 = vpop.f32.mrb[0].mxu0
      %v1551 = vadd.f32 %v1499, %v1550
      %v1552 = vpop.f32.mrb[0].mxu0
      %v1553 = vpop.f32.mrb[0].mxu0
      %v1554 = vpop.f32.mrb[0].mxu0
      %1555 = vdwg.mxu0
      %v1556 = vadd.f32 %v955, %v1551
      %v1557 = vsel %vm984, %v1556, 0.0
      %1558 = vadd.xlane.f32.xlu0 %v1557
      %v1559 = vpop.xlane.xlu0 %1558
      %v1560 = vrcp.pop 32.0
      %v1561 = vmul.f32 %v1559, %v1560
      %v1562 = vsub.f32 %v1556, %v1561
      %v1563 = vmul.f32 %v1562, %v1562
      %v1564 = vsel %vm984, %v1563, 0.0
      %1565 = vadd.xlane.f32.xlu0 %v1564
      %v1566 = vpop.xlane.xlu0 %1565
      %v1567 = vmul.f32 %v1566, %v1560
      %v1568 = vadd.f32 %v1567, 1e-05
      %v1569 = vrsqrt.pop %v1568
      %v1570 = vmul.f32 %v1562, %v1569
      %v1571 = vld [vmem:[%s15] sm:$0x1]
      %v1573 = vlaneseq
      %v1574 = vshrl.u32 %v1573, 7
      %v1575 = vsub.s32 0, %v1574
      %v1576 = vrot.slane %v1571, %v1575
      %v1578 = vmul.f32 %v1570, %v1576
      %v1579 = vld [vmem:[%s17] sm:$0x1]
      %v1581 = vlaneseq
      %v1582 = vshrl.u32 %v1581, 7
      %v1583 = vsub.s32 0, %v1582
      %v1584 = vrot.slane %v1579, %v1583
      %v1586 = vadd.f32 %v1578, %v1584
      %v1587 = vpack.c.bf16 %v1586, %v1586
      %v1588 = vld [vmem:[%s19] sm:$0xff]
      %v1589 = vld [vmem:[%s19 + $0x8] sm:$0xff]
      %v1590 = vld [vmem:[%s19 + $0x10] sm:$0xff]
      %v1591 = vld [vmem:[%s19 + $0x18] sm:$0xff]
      %v1592 = vld [vmem:[%s19 + $0x20] sm:$0xff]
      %v1593 = vld [vmem:[%s19 + $0x28] sm:$0xff]
      %v1594 = vld [vmem:[%s19 + $0x30] sm:$0xff]
      %v1595 = vld [vmem:[%s19 + $0x38] sm:$0xff]
      %v1596 = vld [vmem:[%s19 + $0x40] sm:$0xff]
      %v1597 = vld [vmem:[%s19 + $0x48] sm:$0xff]
      %v1598 = vld [vmem:[%s19 + $0x50] sm:$0xff]
      %v1599 = vld [vmem:[%s19 + $0x58] sm:$0xff]
      %v1600 = vld [vmem:[%s19 + $0x60] sm:$0xff]
      %v1601 = vld [vmem:[%s19 + $0x68] sm:$0xff]
      %v1602 = vld [vmem:[%s19 + $0x70] sm:$0xff]
      %v1603 = vld [vmem:[%s19 + $0x78] sm:$0xff]
      %v1604 = vld [vmem:[%s19 + $0x80] sm:$0xff]
      %v1605 = vld [vmem:[%s19 + $0x88] sm:$0xff]
      %v1606 = vld [vmem:[%s19 + $0x90] sm:$0xff]
      %v1607 = vld [vmem:[%s19 + $0x98] sm:$0xff]
      %v1608 = vld [vmem:[%s19 + $0xa0] sm:$0xff]
      %v1609 = vld [vmem:[%s19 + $0xa8] sm:$0xff]
      %v1610 = vld [vmem:[%s19 + $0xb0] sm:$0xff]
      %v1611 = vld [vmem:[%s19 + $0xb8] sm:$0xff]
      %v1612 = vld [vmem:[%s19 + $0xc0] sm:$0xff]
      %v1613 = vld [vmem:[%s19 + $0xc8] sm:$0xff]
      %v1614 = vld [vmem:[%s19 + $0xd0] sm:$0xff]
      %v1615 = vld [vmem:[%s19 + $0xd8] sm:$0xff]
      %v1616 = vld [vmem:[%s19 + $0xe0] sm:$0xff]
      %v1617 = vld [vmem:[%s19 + $0xe8] sm:$0xff]
      %v1618 = vld [vmem:[%s19 + $0xf0] sm:$0xff]
      %v1619 = vld [vmem:[%s19 + $0xf8] sm:$0xff]
      %v1620 = vld [vmem:[%s21] sm:$0xff]
      %v1621 = vld [vmem:[%s21 + $0x8] sm:$0xff]
      %v1624 = vlaneseq
      %v1625 = vshrl.u32 %v1624, 7
      %v1626 = vsub.s32 0, %v1625
      %v1627 = vrot.slane %v1620, %v1626
      %v1628 = vlaneseq
      %v1629 = vshrl.u32 %v1628, 7
      %v1630 = vsub.s32 1, %v1629
      %v1631 = vrot.slane %v1620, %v1630
      %v1632 = vlaneseq
      %v1633 = vshrl.u32 %v1632, 7
      %v1634 = vsub.s32 2, %v1633
      %v1635 = vrot.slane %v1620, %v1634
      %v1636 = vlaneseq
      %v1637 = vshrl.u32 %v1636, 7
      %v1638 = vsub.s32 3, %v1637
      %v1639 = vrot.slane %v1620, %v1638
      %v1640 = vlaneseq
      %v1641 = vshrl.u32 %v1640, 7
      %v1642 = vsub.s32 4, %v1641
      %v1643 = vrot.slane %v1620, %v1642
      %v1644 = vlaneseq
      %v1645 = vshrl.u32 %v1644, 7
      %v1646 = vsub.s32 5, %v1645
      %v1647 = vrot.slane %v1620, %v1646
      %v1648 = vlaneseq
      %v1649 = vshrl.u32 %v1648, 7
      %v1650 = vsub.s32 6, %v1649
      %v1651 = vrot.slane %v1620, %v1650
      %v1652 = vlaneseq
      %v1653 = vshrl.u32 %v1652, 7
      %v1654 = vsub.s32 7, %v1653
      %v1655 = vrot.slane %v1620, %v1654
      %v1656 = vlaneseq
      %v1657 = vshrl.u32 %v1656, 7
      %v1658 = vsub.s32 0, %v1657
      %v1659 = vrot.slane %v1621, %v1658
      %v1660 = vlaneseq
      %v1661 = vshrl.u32 %v1660, 7
      %v1662 = vsub.s32 1, %v1661
      %v1663 = vrot.slane %v1621, %v1662
      %v1664 = vlaneseq
      %v1665 = vshrl.u32 %v1664, 7
      %v1666 = vsub.s32 2, %v1665
      %v1667 = vrot.slane %v1621, %v1666
      %v1668 = vlaneseq
      %v1669 = vshrl.u32 %v1668, 7
      %v1670 = vsub.s32 3, %v1669
      %v1671 = vrot.slane %v1621, %v1670
      %v1672 = vlaneseq
      %v1673 = vshrl.u32 %v1672, 7
      %v1674 = vsub.s32 4, %v1673
      %v1675 = vrot.slane %v1621, %v1674
      %v1676 = vlaneseq
      %v1677 = vshrl.u32 %v1676, 7
      %v1678 = vsub.s32 5, %v1677
      %v1679 = vrot.slane %v1621, %v1678
      %v1680 = vlaneseq
      %v1681 = vshrl.u32 %v1680, 7
      %v1682 = vsub.s32 6, %v1681
      %v1683 = vrot.slane %v1621, %v1682
      %v1684 = vlaneseq
      %v1685 = vshrl.u32 %v1684, 7
      %v1686 = vsub.s32 7, %v1685
      %v1687 = vrot.slane %v1621, %v1686
      %v1736 = vunpack.c.l.b16 %v1588
      %v1737 = vunpack.c.h.b16 %v1588
      %v1738 = vunpack.c.l.b16 %v1589
      %v1739 = vunpack.c.h.b16 %v1589
      %v1740 = vunpack.c.l.b16 %v1590
      %v1741 = vunpack.c.h.b16 %v1590
      %v1742 = vunpack.c.l.b16 %v1591
      %v1743 = vunpack.c.h.b16 %v1591
      %v1744 = vunpack.c.l.b16 %v1592
      %v1745 = vunpack.c.h.b16 %v1592
      %v1746 = vunpack.c.l.b16 %v1593
      %v1747 = vunpack.c.h.b16 %v1593
      %v1748 = vunpack.c.l.b16 %v1594
      %v1749 = vunpack.c.h.b16 %v1594
      %v1750 = vunpack.c.l.b16 %v1595
      %v1751 = vunpack.c.h.b16 %v1595
      %v1752 = vunpack.c.l.b16 %v1596
      %v1753 = vunpack.c.h.b16 %v1596
      %v1754 = vunpack.c.l.b16 %v1597
      %v1755 = vunpack.c.h.b16 %v1597
      %v1756 = vunpack.c.l.b16 %v1598
      %v1757 = vunpack.c.h.b16 %v1598
      %v1758 = vunpack.c.l.b16 %v1599
      %v1759 = vunpack.c.h.b16 %v1599
      %v1760 = vunpack.c.l.b16 %v1600
      %v1761 = vunpack.c.h.b16 %v1600
      %v1762 = vunpack.c.l.b16 %v1601
      %v1763 = vunpack.c.h.b16 %v1601
      %v1764 = vunpack.c.l.b16 %v1602
      %v1765 = vunpack.c.h.b16 %v1602
      %v1766 = vunpack.c.l.b16 %v1603
      %v1767 = vunpack.c.h.b16 %v1603
      %v1768 = vunpack.c.l.b16 %v1604
      %v1769 = vunpack.c.h.b16 %v1604
      %v1770 = vunpack.c.l.b16 %v1605
      %v1771 = vunpack.c.h.b16 %v1605
      %v1772 = vunpack.c.l.b16 %v1606
      %v1773 = vunpack.c.h.b16 %v1606
      %v1774 = vunpack.c.l.b16 %v1607
      %v1775 = vunpack.c.h.b16 %v1607
      %v1776 = vunpack.c.l.b16 %v1608
      %v1777 = vunpack.c.h.b16 %v1608
      %v1778 = vunpack.c.l.b16 %v1609
      %v1779 = vunpack.c.h.b16 %v1609
      %v1780 = vunpack.c.l.b16 %v1610
      %v1781 = vunpack.c.h.b16 %v1610
      %v1782 = vunpack.c.l.b16 %v1611
      %v1783 = vunpack.c.h.b16 %v1611
      %v1784 = vunpack.c.l.b16 %v1612
      %v1785 = vunpack.c.h.b16 %v1612
      %v1786 = vunpack.c.l.b16 %v1613
      %v1787 = vunpack.c.h.b16 %v1613
      %v1788 = vunpack.c.l.b16 %v1614
      %v1789 = vunpack.c.h.b16 %v1614
      %v1790 = vunpack.c.l.b16 %v1615
      %v1791 = vunpack.c.h.b16 %v1615
      %v1792 = vunpack.c.l.b16 %v1616
      %v1793 = vunpack.c.h.b16 %v1616
      %v1794 = vunpack.c.l.b16 %v1617
      %v1795 = vunpack.c.h.b16 %v1617
      %v1796 = vunpack.c.l.b16 %v1618
      %v1797 = vunpack.c.h.b16 %v1618
      %v1798 = vunpack.c.l.b16 %v1619
      %v1799 = vunpack.c.h.b16 %v1619
      %v1800 = vpack.c.b16 %v1752, %v1736
      %v1801 = vpack.c.b16 %v1753, %v1737
      %v1802 = vpack.c.b16 %v1754, %v1738
      %v1803 = vpack.c.b16 %v1755, %v1739
      %v1804 = vpack.c.b16 %v1756, %v1740
      %v1805 = vpack.c.b16 %v1757, %v1741
      %v1806 = vpack.c.b16 %v1758, %v1742
      %v1807 = vpack.c.b16 %v1759, %v1743
      %v1808 = vpack.c.b16 %v1760, %v1744
      %v1809 = vpack.c.b16 %v1761, %v1745
      %v1810 = vpack.c.b16 %v1762, %v1746
      %v1811 = vpack.c.b16 %v1763, %v1747
      %v1812 = vpack.c.b16 %v1764, %v1748
      %v1813 = vpack.c.b16 %v1765, %v1749
      %v1814 = vpack.c.b16 %v1766, %v1750
      %v1815 = vpack.c.b16 %v1767, %v1751
      %v1816 = vpack.c.b16 %v1784, %v1768
      %v1817 = vpack.c.b16 %v1785, %v1769
      %v1818 = vpack.c.b16 %v1786, %v1770
      %v1819 = vpack.c.b16 %v1787, %v1771
      %v1820 = vpack.c.b16 %v1788, %v1772
      %v1821 = vpack.c.b16 %v1789, %v1773
      %v1822 = vpack.c.b16 %v1790, %v1774
      %v1823 = vpack.c.b16 %v1791, %v1775
      %v1824 = vpack.c.b16 %v1792, %v1776
      %v1825 = vpack.c.b16 %v1793, %v1777
      %v1826 = vpack.c.b16 %v1794, %v1778
      %v1827 = vpack.c.b16 %v1795, %v1779
      %v1828 = vpack.c.b16 %v1796, %v1780
      %v1829 = vpack.c.b16 %v1797, %v1781
      %v1830 = vpack.c.b16 %v1798, %v1782
      %v1831 = vpack.c.b16 %v1799, %v1783
      %v1865 = vsel %vm984, %v1587, 0
      %1867 = vmatprep.subr.bf16.mxu0 %v1801
      %1868 = vmatpush1.bf16.msra.mxu0 %v1800
      %1869 = vmatprep.subr.bf16.mxu0 %v1817
      %1870 = vmatpush1.bf16.msra.mxu0 %v1816
      %1871 = vmatprep.subr.bf16.mxu0 0
      %1872 = vmatpush1.bf16.msra.mxu0 0
      %1873 = vmatprep.subr.bf16.mxu0 0
      %1874 = vmatpush1.bf16.msra.mxu0 0
      %1875 = vmatprep.subr.bf16.mxu0 0
      %1876 = vmatpush1.bf16.msra.mxu0 0
      %1877 = vmatprep.subr.bf16.mxu0 0
      %1878 = vmatpush1.bf16.msra.mxu0 0
      %1879 = vmatprep.subr.bf16.mxu0 0
      %1880 = vmatpush1.bf16.msra.mxu0 0
      %1881 = vmatprep.subr.bf16.mxu0 0
      %1882 = vmatpush1.bf16.msra.mxu0 0
      %1883 = vmatprep.subr.bf16.mxu0 0
      %1884 = vmatpush1.bf16.msra.mxu0 0
      %1885 = vmatprep.subr.bf16.mxu0 0
      %1886 = vmatpush1.bf16.msra.mxu0 0
      %1887 = vmatprep.subr.bf16.mxu0 0
      %1888 = vmatpush1.bf16.msra.mxu0 0
      %1889 = vmatprep.subr.bf16.mxu0 0
      %1890 = vmatpush1.bf16.msra.mxu0 0
      %1891 = vmatprep.subr.bf16.mxu0 0
      %1892 = vmatpush1.bf16.msra.mxu0 0
      %1893 = vmatprep.subr.bf16.mxu0 0
      %1894 = vmatpush1.bf16.msra.mxu0 0
      %1895 = vmatprep.subr.bf16.mxu0 0
      %1896 = vmatpush1.bf16.msra.mxu0 0
      %1897 = vmatprep.subr.bf16.mxu0 0
      %1898 = vmatpush1.bf16.msra.mxu0 0
      %1899 = vmatprep.mubr.bf16.mxu0 0
      %1900 = vmatmul.mubr.bf16.gmra.mrb[0].mxu0 %v1865
      %v1901 = vpop.f32.mrb[0].mxu0
      %v1902 = vadd.f32 %v1627, %v1901
      %v1903 = vpop.f32.mrb[0].mxu0
      %v1904 = vadd.f32 %v1631, %v1903
      %v1905 = vpop.f32.mrb[0].mxu0
      %v1906 = vpop.f32.mrb[0].mxu0
      %1907 = vdwg.mxu0
      %1908 = vmatprep.subr.bf16.mxu0 %v1803
      %1909 = vmatpush1.bf16.msra.mxu0 %v1802
      %1910 = vmatprep.subr.bf16.mxu0 %v1819
      %1911 = vmatpush1.bf16.msra.mxu0 %v1818
      %1912 = vmatprep.subr.bf16.mxu0 0
      %1913 = vmatpush1.bf16.msra.mxu0 0
      %1914 = vmatprep.subr.bf16.mxu0 0
      %1915 = vmatpush1.bf16.msra.mxu0 0
      %1916 = vmatprep.subr.bf16.mxu0 0
      %1917 = vmatpush1.bf16.msra.mxu0 0
      %1918 = vmatprep.subr.bf16.mxu0 0
      %1919 = vmatpush1.bf16.msra.mxu0 0
      %1920 = vmatprep.subr.bf16.mxu0 0
      %1921 = vmatpush1.bf16.msra.mxu0 0
      %1922 = vmatprep.subr.bf16.mxu0 0
      %1923 = vmatpush1.bf16.msra.mxu0 0
      %1924 = vmatprep.subr.bf16.mxu0 0
      %1925 = vmatpush1.bf16.msra.mxu0 0
      %1926 = vmatprep.subr.bf16.mxu0 0
      %1927 = vmatpush1.bf16.msra.mxu0 0
      %1928 = vmatprep.subr.bf16.mxu0 0
      %1929 = vmatpush1.bf16.msra.mxu0 0
      %1930 = vmatprep.subr.bf16.mxu0 0
      %1931 = vmatpush1.bf16.msra.mxu0 0
      %1932 = vmatprep.subr.bf16.mxu0 0
      %1933 = vmatpush1.bf16.msra.mxu0 0
      %1934 = vmatprep.subr.bf16.mxu0 0
      %1935 = vmatpush1.bf16.msra.mxu0 0
      %1936 = vmatprep.subr.bf16.mxu0 0
      %1937 = vmatpush1.bf16.msra.mxu0 0
      %1938 = vmatprep.subr.bf16.mxu0 0
      %1939 = vmatpush1.bf16.msra.mxu0 0
      %1940 = vmatprep.mubr.bf16.mxu0 0
      %1941 = vmatmul.mubr.bf16.gmra.mrb[0].mxu0 %v1865
      %v1942 = vpop.f32.mrb[0].mxu0
      %v1943 = vadd.f32 %v1635, %v1942
      %v1944 = vpop.f32.mrb[0].mxu0
      %v1945 = vadd.f32 %v1639, %v1944
      %v1946 = vpop.f32.mrb[0].mxu0
      %v1947 = vpop.f32.mrb[0].mxu0
      %1948 = vdwg.mxu0
      %1949 = vmatprep.subr.bf16.mxu0 %v1805
      %1950 = vmatpush1.bf16.msra.mxu0 %v1804
      %1951 = vmatprep.subr.bf16.mxu0 %v1821
      %1952 = vmatpush1.bf16.msra.mxu0 %v1820
      %1953 = vmatprep.subr.bf16.mxu0 0
      %1954 = vmatpush1.bf16.msra.mxu0 0
      %1955 = vmatprep.subr.bf16.mxu0 0
      %1956 = vmatpush1.bf16.msra.mxu0 0
      %1957 = vmatprep.subr.bf16.mxu0 0
      %1958 = vmatpush1.bf16.msra.mxu0 0
      %1959 = vmatprep.subr.bf16.mxu0 0
      %1960 = vmatpush1.bf16.msra.mxu0 0
      %1961 = vmatprep.subr.bf16.mxu0 0
      %1962 = vmatpush1.bf16.msra.mxu0 0
      %1963 = vmatprep.subr.bf16.mxu0 0
      %1964 = vmatpush1.bf16.msra.mxu0 0
      %1965 = vmatprep.subr.bf16.mxu0 0
      %1966 = vmatpush1.bf16.msra.mxu0 0
      %1967 = vmatprep.subr.bf16.mxu0 0
      %1968 = vmatpush1.bf16.msra.mxu0 0
      %1969 = vmatprep.subr.bf16.mxu0 0
      %1970 = vmatpush1.bf16.msra.mxu0 0
      %1971 = vmatprep.subr.bf16.mxu0 0
      %1972 = vmatpush1.bf16.msra.mxu0 0
      %1973 = vmatprep.subr.bf16.mxu0 0
      %1974 = vmatpush1.bf16.msra.mxu0 0
      %1975 = vmatprep.subr.bf16.mxu0 0
      %1976 = vmatpush1.bf16.msra.mxu0 0
      %1977 = vmatprep.subr.bf16.mxu0 0
      %1978 = vmatpush1.bf16.msra.mxu0 0
      %1979 = vmatprep.subr.bf16.mxu0 0
      %1980 = vmatpush1.bf16.msra.mxu0 0
      %1981 = vmatprep.mubr.bf16.mxu0 0
      %1982 = vmatmul.mubr.bf16.gmra.mrb[0].mxu0 %v1865
      %v1983 = vpop.f32.mrb[0].mxu0
      %v1984 = vadd.f32 %v1643, %v1983
      %v1985 = vpop.f32.mrb[0].mxu0
      %v1986 = vadd.f32 %v1647, %v1985
      %v1987 = vpop.f32.mrb[0].mxu0
      %v1988 = vpop.f32.mrb[0].mxu0
      %1989 = vdwg.mxu0
      %1990 = vmatprep.subr.bf16.mxu0 %v1807
      %1991 = vmatpush1.bf16.msra.mxu0 %v1806
      %1992 = vmatprep.subr.bf16.mxu0 %v1823
      %1993 = vmatpush1.bf16.msra.mxu0 %v1822
      %1994 = vmatprep.subr.bf16.mxu0 0
      %1995 = vmatpush1.bf16.msra.mxu0 0
      %1996 = vmatprep.subr.bf16.mxu0 0
      %1997 = vmatpush1.bf16.msra.mxu0 0
      %1998 = vmatprep.subr.bf16.mxu0 0
      %1999 = vmatpush1.bf16.msra.mxu0 0
      %2000 = vmatprep.subr.bf16.mxu0 0
      %2001 = vmatpush1.bf16.msra.mxu0 0
      %2002 = vmatprep.subr.bf16.mxu0 0
      %2003 = vmatpush1.bf16.msra.mxu0 0
      %2004 = vmatprep.subr.bf16.mxu0 0
      %2005 = vmatpush1.bf16.msra.mxu0 0
      %2006 = vmatprep.subr.bf16.mxu0 0
      %2007 = vmatpush1.bf16.msra.mxu0 0
      %2008 = vmatprep.subr.bf16.mxu0 0
      %2009 = vmatpush1.bf16.msra.mxu0 0
      %2010 = vmatprep.subr.bf16.mxu0 0
      %2011 = vmatpush1.bf16.msra.mxu0 0
      %2012 = vmatprep.subr.bf16.mxu0 0
      %2013 = vmatpush1.bf16.msra.mxu0 0
      %2014 = vmatprep.subr.bf16.mxu0 0
      %2015 = vmatpush1.bf16.msra.mxu0 0
      %2016 = vmatprep.subr.bf16.mxu0 0
      %2017 = vmatpush1.bf16.msra.mxu0 0
      %2018 = vmatprep.subr.bf16.mxu0 0
      %2019 = vmatpush1.bf16.msra.mxu0 0
      %2020 = vmatprep.subr.bf16.mxu0 0
      %2021 = vmatpush1.bf16.msra.mxu0 0
      %2022 = vmatprep.mubr.bf16.mxu0 0
      %2023 = vmatmul.mubr.bf16.gmra.mrb[0].mxu0 %v1865
      %v2024 = vpop.f32.mrb[0].mxu0
      %v2025 = vadd.f32 %v1651, %v2024
      %v2026 = vpop.f32.mrb[0].mxu0
      %v2027 = vadd.f32 %v1655, %v2026
      %v2028 = vpop.f32.mrb[0].mxu0
      %v2029 = vpop.f32.mrb[0].mxu0
      %2030 = vdwg.mxu0
      %2031 = vmatprep.subr.bf16.mxu0 %v1809
      %2032 = vmatpush1.bf16.msra.mxu0 %v1808
      %2033 = vmatprep.subr.bf16.mxu0 %v1825
      %2034 = vmatpush1.bf16.msra.mxu0 %v1824
      %2035 = vmatprep.subr.bf16.mxu0 0
      %2036 = vmatpush1.bf16.msra.mxu0 0
      %2037 = vmatprep.subr.bf16.mxu0 0
      %2038 = vmatpush1.bf16.msra.mxu0 0
      %2039 = vmatprep.subr.bf16.mxu0 0
      %2040 = vmatpush1.bf16.msra.mxu0 0
      %2041 = vmatprep.subr.bf16.mxu0 0
      %2042 = vmatpush1.bf16.msra.mxu0 0
      %2043 = vmatprep.subr.bf16.mxu0 0
      %2044 = vmatpush1.bf16.msra.mxu0 0
      %2045 = vmatprep.subr.bf16.mxu0 0
      %2046 = vmatpush1.bf16.msra.mxu0 0
      %2047 = vmatprep.subr.bf16.mxu0 0
      %2048 = vmatpush1.bf16.msra.mxu0 0
      %2049 = vmatprep.subr.bf16.mxu0 0
      %2050 = vmatpush1.bf16.msra.mxu0 0
      %2051 = vmatprep.subr.bf16.mxu0 0
      %2052 = vmatpush1.bf16.msra.mxu0 0
      %2053 = vmatprep.subr.bf16.mxu0 0
      %2054 = vmatpush1.bf16.msra.mxu0 0
      %2055 = vmatprep.subr.bf16.mxu0 0
      %2056 = vmatpush1.bf16.msra.mxu0 0
      %2057 = vmatprep.subr.bf16.mxu0 0
      %2058 = vmatpush1.bf16.msra.mxu0 0
      %2059 = vmatprep.subr.bf16.mxu0 0
      %2060 = vmatpush1.bf16.msra.mxu0 0
      %2061 = vmatprep.subr.bf16.mxu0 0
      %2062 = vmatpush1.bf16.msra.mxu0 0
      %2063 = vmatprep.mubr.bf16.mxu0 0
      %2064 = vmatmul.mubr.bf16.gmra.mrb[0].mxu0 %v1865
      %v2065 = vpop.f32.mrb[0].mxu0
      %v2066 = vadd.f32 %v1659, %v2065
      %v2067 = vpop.f32.mrb[0].mxu0
      %v2068 = vadd.f32 %v1663, %v2067
      %v2069 = vpop.f32.mrb[0].mxu0
      %v2070 = vpop.f32.mrb[0].mxu0
      %2071 = vdwg.mxu0
      %2072 = vmatprep.subr.bf16.mxu0 %v1811
      %2073 = vmatpush1.bf16.msra.mxu0 %v1810
      %2074 = vmatprep.subr.bf16.mxu0 %v1827
      %2075 = vmatpush1.bf16.msra.mxu0 %v1826
      %2076 = vmatprep.subr.bf16.mxu0 0
      %2077 = vmatpush1.bf16.msra.mxu0 0
      %2078 = vmatprep.subr.bf16.mxu0 0
      %2079 = vmatpush1.bf16.msra.mxu0 0
      %2080 = vmatprep.subr.bf16.mxu0 0
      %2081 = vmatpush1.bf16.msra.mxu0 0
      %2082 = vmatprep.subr.bf16.mxu0 0
      %2083 = vmatpush1.bf16.msra.mxu0 0
      %2084 = vmatprep.subr.bf16.mxu0 0
      %2085 = vmatpush1.bf16.msra.mxu0 0
      %2086 = vmatprep.subr.bf16.mxu0 0
      %2087 = vmatpush1.bf16.msra.mxu0 0
      %2088 = vmatprep.subr.bf16.mxu0 0
      %2089 = vmatpush1.bf16.msra.mxu0 0
      %2090 = vmatprep.subr.bf16.mxu0 0
      %2091 = vmatpush1.bf16.msra.mxu0 0
      %2092 = vmatprep.subr.bf16.mxu0 0
      %2093 = vmatpush1.bf16.msra.mxu0 0
      %2094 = vmatprep.subr.bf16.mxu0 0
      %2095 = vmatpush1.bf16.msra.mxu0 0
      %2096 = vmatprep.subr.bf16.mxu0 0
      %2097 = vmatpush1.bf16.msra.mxu0 0
      %2098 = vmatprep.subr.bf16.mxu0 0
      %2099 = vmatpush1.bf16.msra.mxu0 0
      %2100 = vmatprep.subr.bf16.mxu0 0
      %2101 = vmatpush1.bf16.msra.mxu0 0
      %2102 = vmatprep.subr.bf16.mxu0 0
      %2103 = vmatpush1.bf16.msra.mxu0 0
      %2104 = vmatprep.mubr.bf16.mxu0 0
      %2105 = vmatmul.mubr.bf16.gmra.mrb[0].mxu0 %v1865
      %v2106 = vpop.f32.mrb[0].mxu0
      %v2107 = vadd.f32 %v1667, %v2106
      %v2108 = vpop.f32.mrb[0].mxu0
      %v2109 = vadd.f32 %v1671, %v2108
      %v2110 = vpop.f32.mrb[0].mxu0
      %v2111 = vpop.f32.mrb[0].mxu0
      %2112 = vdwg.mxu0
      %2113 = vmatprep.subr.bf16.mxu0 %v1813
      %2114 = vmatpush1.bf16.msra.mxu0 %v1812
      %2115 = vmatprep.subr.bf16.mxu0 %v1829
      %2116 = vmatpush1.bf16.msra.mxu0 %v1828
      %2117 = vmatprep.subr.bf16.mxu0 0
      %2118 = vmatpush1.bf16.msra.mxu0 0
      %2119 = vmatprep.subr.bf16.mxu0 0
      %2120 = vmatpush1.bf16.msra.mxu0 0
      %2121 = vmatprep.subr.bf16.mxu0 0
      %2122 = vmatpush1.bf16.msra.mxu0 0
      %2123 = vmatprep.subr.bf16.mxu0 0
      %2124 = vmatpush1.bf16.msra.mxu0 0
      %2125 = vmatprep.subr.bf16.mxu0 0
      %2126 = vmatpush1.bf16.msra.mxu0 0
      %2127 = vmatprep.subr.bf16.mxu0 0
      %2128 = vmatpush1.bf16.msra.mxu0 0
      %2129 = vmatprep.subr.bf16.mxu0 0
      %2130 = vmatpush1.bf16.msra.mxu0 0
      %2131 = vmatprep.subr.bf16.mxu0 0
      %2132 = vmatpush1.bf16.msra.mxu0 0
      %2133 = vmatprep.subr.bf16.mxu0 0
      %2134 = vmatpush1.bf16.msra.mxu0 0
      %2135 = vmatprep.subr.bf16.mxu0 0
      %2136 = vmatpush1.bf16.msra.mxu0 0
      %2137 = vmatprep.subr.bf16.mxu0 0
      %2138 = vmatpush1.bf16.msra.mxu0 0
      %2139 = vmatprep.subr.bf16.mxu0 0
      %2140 = vmatpush1.bf16.msra.mxu0 0
      %2141 = vmatprep.subr.bf16.mxu0 0
      %2142 = vmatpush1.bf16.msra.mxu0 0
      %2143 = vmatprep.subr.bf16.mxu0 0
      %2144 = vmatpush1.bf16.msra.mxu0 0
      %2145 = vmatprep.mubr.bf16.mxu0 0
      %2146 = vmatmul.mubr.bf16.gmra.mrb[0].mxu0 %v1865
      %v2147 = vpop.f32.mrb[0].mxu0
      %v2148 = vadd.f32 %v1675, %v2147
      %v2149 = vpop.f32.mrb[0].mxu0
      %v2150 = vadd.f32 %v1679, %v2149
      %v2151 = vpop.f32.mrb[0].mxu0
      %v2152 = vpop.f32.mrb[0].mxu0
      %2153 = vdwg.mxu0
      %2154 = vmatprep.subr.bf16.mxu0 %v1815
      %2155 = vmatpush1.bf16.msra.mxu0 %v1814
      %2156 = vmatprep.subr.bf16.mxu0 %v1831
      %2157 = vmatpush1.bf16.msra.mxu0 %v1830
      %2158 = vmatprep.subr.bf16.mxu0 0
      %2159 = vmatpush1.bf16.msra.mxu0 0
      %2160 = vmatprep.subr.bf16.mxu0 0
      %2161 = vmatpush1.bf16.msra.mxu0 0
      %2162 = vmatprep.subr.bf16.mxu0 0
      %2163 = vmatpush1.bf16.msra.mxu0 0
      %2164 = vmatprep.subr.bf16.mxu0 0
      %2165 = vmatpush1.bf16.msra.mxu0 0
      %2166 = vmatprep.subr.bf16.mxu0 0
      %2167 = vmatpush1.bf16.msra.mxu0 0
      %2168 = vmatprep.subr.bf16.mxu0 0
      %2169 = vmatpush1.bf16.msra.mxu0 0
      %2170 = vmatprep.subr.bf16.mxu0 0
      %2171 = vmatpush1.bf16.msra.mxu0 0
      %2172 = vmatprep.subr.bf16.mxu0 0
      %2173 = vmatpush1.bf16.msra.mxu0 0
      %2174 = vmatprep.subr.bf16.mxu0 0
      %2175 = vmatpush1.bf16.msra.mxu0 0
      %2176 = vmatprep.subr.bf16.mxu0 0
      %2177 = vmatpush1.bf16.msra.mxu0 0
      %2178 = vmatprep.subr.bf16.mxu0 0
      %2179 = vmatpush1.bf16.msra.mxu0 0
      %2180 = vmatprep.subr.bf16.mxu0 0
      %2181 = vmatpush1.bf16.msra.mxu0 0
      %2182 = vmatprep.subr.bf16.mxu0 0
      %2183 = vmatpush1.bf16.msra.mxu0 0
      %2184 = vmatprep.subr.bf16.mxu0 0
      %2185 = vmatpush1.bf16.msra.mxu0 0
      %2186 = vmatprep.mubr.bf16.mxu0 0
      %2187 = vmatmul.mubr.bf16.gmra.mrb[0].mxu0 %v1865
      %v2188 = vpop.f32.mrb[0].mxu0
      %v2189 = vadd.f32 %v1683, %v2188
      %v2190 = vpop.f32.mrb[0].mxu0
      %v2191 = vadd.f32 %v1687, %v2190
      %v2192 = vpop.f32.mrb[0].mxu0
      %v2193 = vpop.f32.mrb[0].mxu0
      %2194 = vdwg.mxu0
      %v2195 = vmax.f32 %v1902, 0.0
      %v2196 = vmax.f32 %v1904, 0.0
      %v2197 = vmax.f32 %v1943, 0.0
      %v2198 = vmax.f32 %v1945, 0.0
      %v2199 = vmax.f32 %v1984, 0.0
      %v2200 = vmax.f32 %v1986, 0.0
      %v2201 = vmax.f32 %v2025, 0.0
      %v2202 = vmax.f32 %v2027, 0.0
      %v2203 = vmax.f32 %v2066, 0.0
      %v2204 = vmax.f32 %v2068, 0.0
      %v2205 = vmax.f32 %v2107, 0.0
      %v2206 = vmax.f32 %v2109, 0.0
      %v2207 = vmax.f32 %v2148, 0.0
      %v2208 = vmax.f32 %v2150, 0.0
      %v2209 = vmax.f32 %v2189, 0.0
      %v2210 = vmax.f32 %v2191, 0.0
      %v2211 = vpack.c.bf16 %v2195, %v2195
      %v2212 = vpack.c.bf16 %v2196, %v2196
      %v2213 = vpack.c.bf16 %v2197, %v2197
      %v2214 = vpack.c.bf16 %v2198, %v2198
      %v2215 = vpack.c.bf16 %v2199, %v2199
      %v2216 = vpack.c.bf16 %v2200, %v2200
      %v2217 = vpack.c.bf16 %v2201, %v2201
      %v2218 = vpack.c.bf16 %v2202, %v2202
      %v2219 = vpack.c.bf16 %v2203, %v2203
      %v2220 = vpack.c.bf16 %v2204, %v2204
      %v2221 = vpack.c.bf16 %v2205, %v2205
      %v2222 = vpack.c.bf16 %v2206, %v2206
      %v2223 = vpack.c.bf16 %v2207, %v2207
      %v2224 = vpack.c.bf16 %v2208, %v2208
      %v2225 = vpack.c.bf16 %v2209, %v2209
      %v2226 = vpack.c.bf16 %v2210, %v2210
      %v2227 = vld [vmem:[%s23] sm:$0xf]
      %v2228 = vld [vmem:[%s23 + $0x4] sm:$0xf]
      %v2229 = vld [vmem:[%s23 + $0x8] sm:$0xf]
      %v2230 = vld [vmem:[%s23 + $0xc] sm:$0xf]
      %v2231 = vld [vmem:[%s23 + $0x10] sm:$0xf]
      %v2232 = vld [vmem:[%s23 + $0x14] sm:$0xf]
      %v2233 = vld [vmem:[%s23 + $0x18] sm:$0xf]
      %v2234 = vld [vmem:[%s23 + $0x1c] sm:$0xf]
      %v2235 = vld [vmem:[%s23 + $0x20] sm:$0xf]
      %v2236 = vld [vmem:[%s23 + $0x24] sm:$0xf]
      %v2237 = vld [vmem:[%s23 + $0x28] sm:$0xf]
      %v2238 = vld [vmem:[%s23 + $0x2c] sm:$0xf]
      %v2239 = vld [vmem:[%s23 + $0x30] sm:$0xf]
      %v2240 = vld [vmem:[%s23 + $0x34] sm:$0xf]
      %v2241 = vld [vmem:[%s23 + $0x38] sm:$0xf]
      %v2242 = vld [vmem:[%s23 + $0x3c] sm:$0xf]
      %v2243 = vld [vmem:[%s23 + $0x40] sm:$0xf]
      %v2244 = vld [vmem:[%s23 + $0x44] sm:$0xf]
      %v2245 = vld [vmem:[%s23 + $0x48] sm:$0xf]
      %v2246 = vld [vmem:[%s23 + $0x4c] sm:$0xf]
      %v2247 = vld [vmem:[%s23 + $0x50] sm:$0xf]
      %v2248 = vld [vmem:[%s23 + $0x54] sm:$0xf]
      %v2249 = vld [vmem:[%s23 + $0x58] sm:$0xf]
      %v2250 = vld [vmem:[%s23 + $0x5c] sm:$0xf]
      %v2251 = vld [vmem:[%s23 + $0x60] sm:$0xf]
      %v2252 = vld [vmem:[%s23 + $0x64] sm:$0xf]
      %v2253 = vld [vmem:[%s23 + $0x68] sm:$0xf]
      %v2254 = vld [vmem:[%s23 + $0x6c] sm:$0xf]
      %v2255 = vld [vmem:[%s23 + $0x70] sm:$0xf]
      %v2256 = vld [vmem:[%s23 + $0x74] sm:$0xf]
      %v2257 = vld [vmem:[%s23 + $0x78] sm:$0xf]
      %v2258 = vld [vmem:[%s23 + $0x7c] sm:$0xf]
      %v2259 = vld [vmem:[%s23 + $0x80] sm:$0xf]
      %v2260 = vld [vmem:[%s23 + $0x84] sm:$0xf]
      %v2261 = vld [vmem:[%s23 + $0x88] sm:$0xf]
      %v2262 = vld [vmem:[%s23 + $0x8c] sm:$0xf]
      %v2263 = vld [vmem:[%s23 + $0x90] sm:$0xf]
      %v2264 = vld [vmem:[%s23 + $0x94] sm:$0xf]
      %v2265 = vld [vmem:[%s23 + $0x98] sm:$0xf]
      %v2266 = vld [vmem:[%s23 + $0x9c] sm:$0xf]
      %v2267 = vld [vmem:[%s23 + $0xa0] sm:$0xf]
      %v2268 = vld [vmem:[%s23 + $0xa4] sm:$0xf]
      %v2269 = vld [vmem:[%s23 + $0xa8] sm:$0xf]
      %v2270 = vld [vmem:[%s23 + $0xac] sm:$0xf]
      %v2271 = vld [vmem:[%s23 + $0xb0] sm:$0xf]
      %v2272 = vld [vmem:[%s23 + $0xb4] sm:$0xf]
      %v2273 = vld [vmem:[%s23 + $0xb8] sm:$0xf]
      %v2274 = vld [vmem:[%s23 + $0xbc] sm:$0xf]
      %v2275 = vld [vmem:[%s23 + $0xc0] sm:$0xf]
      %v2276 = vld [vmem:[%s23 + $0xc4] sm:$0xf]
      %v2277 = vld [vmem:[%s23 + $0xc8] sm:$0xf]
      %v2278 = vld [vmem:[%s23 + $0xcc] sm:$0xf]
      %v2279 = vld [vmem:[%s23 + $0xd0] sm:$0xf]
      %v2280 = vld [vmem:[%s23 + $0xd4] sm:$0xf]
      %v2281 = vld [vmem:[%s23 + $0xd8] sm:$0xf]
      %v2282 = vld [vmem:[%s23 + $0xdc] sm:$0xf]
      %v2283 = vld [vmem:[%s23 + $0xe0] sm:$0xf]
      %v2284 = vld [vmem:[%s23 + $0xe4] sm:$0xf]
      %v2285 = vld [vmem:[%s23 + $0xe8] sm:$0xf]
      %v2286 = vld [vmem:[%s23 + $0xec] sm:$0xf]
      %v2287 = vld [vmem:[%s23 + $0xf0] sm:$0xf]
      %v2288 = vld [vmem:[%s23 + $0xf4] sm:$0xf]
      %v2289 = vld [vmem:[%s23 + $0xf8] sm:$0xf]
      %v2290 = vld [vmem:[%s23 + $0xfc] sm:$0xf]
      %v2291 = vld [vmem:[%s23 + $0x100] sm:$0xf]
      %v2292 = vld [vmem:[%s23 + $0x104] sm:$0xf]
      %v2293 = vld [vmem:[%s23 + $0x108] sm:$0xf]
      %v2294 = vld [vmem:[%s23 + $0x10c] sm:$0xf]
      %v2295 = vld [vmem:[%s23 + $0x110] sm:$0xf]
      %v2296 = vld [vmem:[%s23 + $0x114] sm:$0xf]
      %v2297 = vld [vmem:[%s23 + $0x118] sm:$0xf]
      %v2298 = vld [vmem:[%s23 + $0x11c] sm:$0xf]
      %v2299 = vld [vmem:[%s23 + $0x120] sm:$0xf]
      %v2300 = vld [vmem:[%s23 + $0x124] sm:$0xf]
      %v2301 = vld [vmem:[%s23 + $0x128] sm:$0xf]
      %v2302 = vld [vmem:[%s23 + $0x12c] sm:$0xf]
      %v2303 = vld [vmem:[%s23 + $0x130] sm:$0xf]
      %v2304 = vld [vmem:[%s23 + $0x134] sm:$0xf]
      %v2305 = vld [vmem:[%s23 + $0x138] sm:$0xf]
      %v2306 = vld [vmem:[%s23 + $0x13c] sm:$0xf]
      %v2307 = vld [vmem:[%s23 + $0x140] sm:$0xf]
      %v2308 = vld [vmem:[%s23 + $0x144] sm:$0xf]
      %v2309 = vld [vmem:[%s23 + $0x148] sm:$0xf]
      %v2310 = vld [vmem:[%s23 + $0x14c] sm:$0xf]
      %v2311 = vld [vmem:[%s23 + $0x150] sm:$0xf]
      %v2312 = vld [vmem:[%s23 + $0x154] sm:$0xf]
      %v2313 = vld [vmem:[%s23 + $0x158] sm:$0xf]
      %v2314 = vld [vmem:[%s23 + $0x15c] sm:$0xf]
      %v2315 = vld [vmem:[%s23 + $0x160] sm:$0xf]
      %v2316 = vld [vmem:[%s23 + $0x164] sm:$0xf]
      %v2317 = vld [vmem:[%s23 + $0x168] sm:$0xf]
      %v2318 = vld [vmem:[%s23 + $0x16c] sm:$0xf]
      %v2319 = vld [vmem:[%s23 + $0x170] sm:$0xf]
      %v2320 = vld [vmem:[%s23 + $0x174] sm:$0xf]
      %v2321 = vld [vmem:[%s23 + $0x178] sm:$0xf]
      %v2322 = vld [vmem:[%s23 + $0x17c] sm:$0xf]
      %v2323 = vld [vmem:[%s23 + $0x180] sm:$0xf]
      %v2324 = vld [vmem:[%s23 + $0x184] sm:$0xf]
      %v2325 = vld [vmem:[%s23 + $0x188] sm:$0xf]
      %v2326 = vld [vmem:[%s23 + $0x18c] sm:$0xf]
      %v2327 = vld [vmem:[%s23 + $0x190] sm:$0xf]
      %v2328 = vld [vmem:[%s23 + $0x194] sm:$0xf]
      %v2329 = vld [vmem:[%s23 + $0x198] sm:$0xf]
      %v2330 = vld [vmem:[%s23 + $0x19c] sm:$0xf]
      %v2331 = vld [vmem:[%s23 + $0x1a0] sm:$0xf]
      %v2332 = vld [vmem:[%s23 + $0x1a4] sm:$0xf]
      %v2333 = vld [vmem:[%s23 + $0x1a8] sm:$0xf]
      %v2334 = vld [vmem:[%s23 + $0x1ac] sm:$0xf]
      %v2335 = vld [vmem:[%s23 + $0x1b0] sm:$0xf]
      %v2336 = vld [vmem:[%s23 + $0x1b4] sm:$0xf]
      %v2337 = vld [vmem:[%s23 + $0x1b8] sm:$0xf]
      %v2338 = vld [vmem:[%s23 + $0x1bc] sm:$0xf]
      %v2339 = vld [vmem:[%s23 + $0x1c0] sm:$0xf]
      %v2340 = vld [vmem:[%s23 + $0x1c4] sm:$0xf]
      %v2341 = vld [vmem:[%s23 + $0x1c8] sm:$0xf]
      %v2342 = vld [vmem:[%s23 + $0x1cc] sm:$0xf]
      %v2343 = vld [vmem:[%s23 + $0x1d0] sm:$0xf]
      %v2344 = vld [vmem:[%s23 + $0x1d4] sm:$0xf]
      %v2345 = vld [vmem:[%s23 + $0x1d8] sm:$0xf]
      %v2346 = vld [vmem:[%s23 + $0x1dc] sm:$0xf]
      %v2347 = vld [vmem:[%s23 + $0x1e0] sm:$0xf]
      %v2348 = vld [vmem:[%s23 + $0x1e4] sm:$0xf]
      %v2349 = vld [vmem:[%s23 + $0x1e8] sm:$0xf]
      %v2350 = vld [vmem:[%s23 + $0x1ec] sm:$0xf]
      %v2351 = vld [vmem:[%s23 + $0x1f0] sm:$0xf]
      %v2352 = vld [vmem:[%s23 + $0x1f4] sm:$0xf]
      %v2353 = vld [vmem:[%s23 + $0x1f8] sm:$0xf]
      %v2354 = vld [vmem:[%s23 + $0x1fc] sm:$0xf]
      %v2355 = vld [vmem:[%s23 + $0x200] sm:$0xf]
      %v2356 = vld [vmem:[%s23 + $0x204] sm:$0xf]
      %v2357 = vld [vmem:[%s23 + $0x208] sm:$0xf]
      %v2358 = vld [vmem:[%s23 + $0x20c] sm:$0xf]
      %v2359 = vld [vmem:[%s23 + $0x210] sm:$0xf]
      %v2360 = vld [vmem:[%s23 + $0x214] sm:$0xf]
      %v2361 = vld [vmem:[%s23 + $0x218] sm:$0xf]
      %v2362 = vld [vmem:[%s23 + $0x21c] sm:$0xf]
      %v2363 = vld [vmem:[%s23 + $0x220] sm:$0xf]
      %v2364 = vld [vmem:[%s23 + $0x224] sm:$0xf]
      %v2365 = vld [vmem:[%s23 + $0x228] sm:$0xf]
      %v2366 = vld [vmem:[%s23 + $0x22c] sm:$0xf]
      %v2367 = vld [vmem:[%s23 + $0x230] sm:$0xf]
      %v2368 = vld [vmem:[%s23 + $0x234] sm:$0xf]
      %v2369 = vld [vmem:[%s23 + $0x238] sm:$0xf]
      %v2370 = vld [vmem:[%s23 + $0x23c] sm:$0xf]
      %v2371 = vld [vmem:[%s23 + $0x240] sm:$0xf]
      %v2372 = vld [vmem:[%s23 + $0x244] sm:$0xf]
      %v2373 = vld [vmem:[%s23 + $0x248] sm:$0xf]
      %v2374 = vld [vmem:[%s23 + $0x24c] sm:$0xf]
      %v2375 = vld [vmem:[%s23 + $0x250] sm:$0xf]
      %v2376 = vld [vmem:[%s23 + $0x254] sm:$0xf]
      %v2377 = vld [vmem:[%s23 + $0x258] sm:$0xf]
      %v2378 = vld [vmem:[%s23 + $0x25c] sm:$0xf]
      %v2379 = vld [vmem:[%s23 + $0x260] sm:$0xf]
      %v2380 = vld [vmem:[%s23 + $0x264] sm:$0xf]
      %v2381 = vld [vmem:[%s23 + $0x268] sm:$0xf]
      %v2382 = vld [vmem:[%s23 + $0x26c] sm:$0xf]
      %v2383 = vld [vmem:[%s23 + $0x270] sm:$0xf]
      %v2384 = vld [vmem:[%s23 + $0x274] sm:$0xf]
      %v2385 = vld [vmem:[%s23 + $0x278] sm:$0xf]
      %v2386 = vld [vmem:[%s23 + $0x27c] sm:$0xf]
      %v2387 = vld [vmem:[%s23 + $0x280] sm:$0xf]
      %v2388 = vld [vmem:[%s23 + $0x284] sm:$0xf]
      %v2389 = vld [vmem:[%s23 + $0x288] sm:$0xf]
      %v2390 = vld [vmem:[%s23 + $0x28c] sm:$0xf]
      %v2391 = vld [vmem:[%s23 + $0x290] sm:$0xf]
      %v2392 = vld [vmem:[%s23 + $0x294] sm:$0xf]
      %v2393 = vld [vmem:[%s23 + $0x298] sm:$0xf]
      %v2394 = vld [vmem:[%s23 + $0x29c] sm:$0xf]
      %v2395 = vld [vmem:[%s23 + $0x2a0] sm:$0xf]
      %v2396 = vld [vmem:[%s23 + $0x2a4] sm:$0xf]
      %v2397 = vld [vmem:[%s23 + $0x2a8] sm:$0xf]
      %v2398 = vld [vmem:[%s23 + $0x2ac] sm:$0xf]
      %v2399 = vld [vmem:[%s23 + $0x2b0] sm:$0xf]
      %v2400 = vld [vmem:[%s23 + $0x2b4] sm:$0xf]
      %v2401 = vld [vmem:[%s23 + $0x2b8] sm:$0xf]
      %v2402 = vld [vmem:[%s23 + $0x2bc] sm:$0xf]
      %v2403 = vld [vmem:[%s23 + $0x2c0] sm:$0xf]
      %v2404 = vld [vmem:[%s23 + $0x2c4] sm:$0xf]
      %v2405 = vld [vmem:[%s23 + $0x2c8] sm:$0xf]
      %v2406 = vld [vmem:[%s23 + $0x2cc] sm:$0xf]
      %v2407 = vld [vmem:[%s23 + $0x2d0] sm:$0xf]
      %v2408 = vld [vmem:[%s23 + $0x2d4] sm:$0xf]
      %v2409 = vld [vmem:[%s23 + $0x2d8] sm:$0xf]
      %v2410 = vld [vmem:[%s23 + $0x2dc] sm:$0xf]
      %v2411 = vld [vmem:[%s23 + $0x2e0] sm:$0xf]
      %v2412 = vld [vmem:[%s23 + $0x2e4] sm:$0xf]
      %v2413 = vld [vmem:[%s23 + $0x2e8] sm:$0xf]
      %v2414 = vld [vmem:[%s23 + $0x2ec] sm:$0xf]
      %v2415 = vld [vmem:[%s23 + $0x2f0] sm:$0xf]
      %v2416 = vld [vmem:[%s23 + $0x2f4] sm:$0xf]
      %v2417 = vld [vmem:[%s23 + $0x2f8] sm:$0xf]
      %v2418 = vld [vmem:[%s23 + $0x2fc] sm:$0xf]
      %v2419 = vld [vmem:[%s23 + $0x300] sm:$0xf]
      %v2420 = vld [vmem:[%s23 + $0x304] sm:$0xf]
      %v2421 = vld [vmem:[%s23 + $0x308] sm:$0xf]
      %v2422 = vld [vmem:[%s23 + $0x30c] sm:$0xf]
      %v2423 = vld [vmem:[%s23 + $0x310] sm:$0xf]
      %v2424 = vld [vmem:[%s23 + $0x314] sm:$0xf]
      %v2425 = vld [vmem:[%s23 + $0x318] sm:$0xf]
      %v2426 = vld [vmem:[%s23 + $0x31c] sm:$0xf]
      %v2427 = vld [vmem:[%s23 + $0x320] sm:$0xf]
      %v2428 = vld [vmem:[%s23 + $0x324] sm:$0xf]
      %v2429 = vld [vmem:[%s23 + $0x328] sm:$0xf]
      %v2430 = vld [vmem:[%s23 + $0x32c] sm:$0xf]
      %v2431 = vld [vmem:[%s23 + $0x330] sm:$0xf]
      %v2432 = vld [vmem:[%s23 + $0x334] sm:$0xf]
      %v2433 = vld [vmem:[%s23 + $0x338] sm:$0xf]
      %v2434 = vld [vmem:[%s23 + $0x33c] sm:$0xf]
      %v2435 = vld [vmem:[%s23 + $0x340] sm:$0xf]
      %v2436 = vld [vmem:[%s23 + $0x344] sm:$0xf]
      %v2437 = vld [vmem:[%s23 + $0x348] sm:$0xf]
      %v2438 = vld [vmem:[%s23 + $0x34c] sm:$0xf]
      %v2439 = vld [vmem:[%s23 + $0x350] sm:$0xf]
      %v2440 = vld [vmem:[%s23 + $0x354] sm:$0xf]
      %v2441 = vld [vmem:[%s23 + $0x358] sm:$0xf]
      %v2442 = vld [vmem:[%s23 + $0x35c] sm:$0xf]
      %v2443 = vld [vmem:[%s23 + $0x360] sm:$0xf]
      %v2444 = vld [vmem:[%s23 + $0x364] sm:$0xf]
      %v2445 = vld [vmem:[%s23 + $0x368] sm:$0xf]
      %v2446 = vld [vmem:[%s23 + $0x36c] sm:$0xf]
      %v2447 = vld [vmem:[%s23 + $0x370] sm:$0xf]
      %v2448 = vld [vmem:[%s23 + $0x374] sm:$0xf]
      %v2449 = vld [vmem:[%s23 + $0x378] sm:$0xf]
      %v2450 = vld [vmem:[%s23 + $0x37c] sm:$0xf]
      %v2451 = vld [vmem:[%s23 + $0x380] sm:$0xf]
      %v2452 = vld [vmem:[%s23 + $0x384] sm:$0xf]
      %v2453 = vld [vmem:[%s23 + $0x388] sm:$0xf]
      %v2454 = vld [vmem:[%s23 + $0x38c] sm:$0xf]
      %v2455 = vld [vmem:[%s23 + $0x390] sm:$0xf]
      %v2456 = vld [vmem:[%s23 + $0x394] sm:$0xf]
      %v2457 = vld [vmem:[%s23 + $0x398] sm:$0xf]
      %v2458 = vld [vmem:[%s23 + $0x39c] sm:$0xf]
      %v2459 = vld [vmem:[%s23 + $0x3a0] sm:$0xf]
      %v2460 = vld [vmem:[%s23 + $0x3a4] sm:$0xf]
      %v2461 = vld [vmem:[%s23 + $0x3a8] sm:$0xf]
      %v2462 = vld [vmem:[%s23 + $0x3ac] sm:$0xf]
      %v2463 = vld [vmem:[%s23 + $0x3b0] sm:$0xf]
      %v2464 = vld [vmem:[%s23 + $0x3b4] sm:$0xf]
      %v2465 = vld [vmem:[%s23 + $0x3b8] sm:$0xf]
      %v2466 = vld [vmem:[%s23 + $0x3bc] sm:$0xf]
      %v2467 = vld [vmem:[%s23 + $0x3c0] sm:$0xf]
      %v2468 = vld [vmem:[%s23 + $0x3c4] sm:$0xf]
      %v2469 = vld [vmem:[%s23 + $0x3c8] sm:$0xf]
      %v2470 = vld [vmem:[%s23 + $0x3cc] sm:$0xf]
      %v2471 = vld [vmem:[%s23 + $0x3d0] sm:$0xf]
      %v2472 = vld [vmem:[%s23 + $0x3d4] sm:$0xf]
      %v2473 = vld [vmem:[%s23 + $0x3d8] sm:$0xf]
      %v2474 = vld [vmem:[%s23 + $0x3dc] sm:$0xf]
      %v2475 = vld [vmem:[%s23 + $0x3e0] sm:$0xf]
      %v2476 = vld [vmem:[%s23 + $0x3e4] sm:$0xf]
      %v2477 = vld [vmem:[%s23 + $0x3e8] sm:$0xf]
      %v2478 = vld [vmem:[%s23 + $0x3ec] sm:$0xf]
      %v2479 = vld [vmem:[%s23 + $0x3f0] sm:$0xf]
      %v2480 = vld [vmem:[%s23 + $0x3f4] sm:$0xf]
      %v2481 = vld [vmem:[%s23 + $0x3f8] sm:$0xf]
      %v2482 = vld [vmem:[%s23 + $0x3fc] sm:$0xf]
      %v2483 = vld [vmem:[%s25] sm:$0x1]
      %v2485 = vlaneseq
      %v2486 = vshrl.u32 %v2485, 7
      %v2487 = vsub.s32 0, %v2486
      %v2488 = vrot.slane %v2483, %v2487
      %v2746 = vunpack.c.l.b16 %v2227
      %v2747 = vunpack.c.l.b16 %v2228
      %v2748 = vunpack.c.l.b16 %v2229
      %v2749 = vunpack.c.l.b16 %v2230
      %v2750 = vunpack.c.l.b16 %v2231
      %v2751 = vunpack.c.l.b16 %v2232
      %v2752 = vunpack.c.l.b16 %v2233
      %v2753 = vunpack.c.l.b16 %v2234
      %v2754 = vunpack.c.l.b16 %v2235
      %v2755 = vunpack.c.l.b16 %v2236
      %v2756 = vunpack.c.l.b16 %v2237
      %v2757 = vunpack.c.l.b16 %v2238
      %v2758 = vunpack.c.l.b16 %v2239
      %v2759 = vunpack.c.l.b16 %v2240
      %v2760 = vunpack.c.l.b16 %v2241
      %v2761 = vunpack.c.l.b16 %v2242
      %v2762 = vunpack.c.l.b16 %v2243
      %v2763 = vunpack.c.l.b16 %v2244
      %v2764 = vunpack.c.l.b16 %v2245
      %v2765 = vunpack.c.l.b16 %v2246
      %v2766 = vunpack.c.l.b16 %v2247
      %v2767 = vunpack.c.l.b16 %v2248
      %v2768 = vunpack.c.l.b16 %v2249
      %v2769 = vunpack.c.l.b16 %v2250
      %v2770 = vunpack.c.l.b16 %v2251
      %v2771 = vunpack.c.l.b16 %v2252
      %v2772 = vunpack.c.l.b16 %v2253
      %v2773 = vunpack.c.l.b16 %v2254
      %v2774 = vunpack.c.l.b16 %v2255
      %v2775 = vunpack.c.l.b16 %v2256
      %v2776 = vunpack.c.l.b16 %v2257
      %v2777 = vunpack.c.l.b16 %v2258
      %v2778 = vunpack.c.l.b16 %v2259
      %v2779 = vunpack.c.l.b16 %v2260
      %v2780 = vunpack.c.l.b16 %v2261
      %v2781 = vunpack.c.l.b16 %v2262
      %v2782 = vunpack.c.l.b16 %v2263
      %v2783 = vunpack.c.l.b16 %v2264
      %v2784 = vunpack.c.l.b16 %v2265
      %v2785 = vunpack.c.l.b16 %v2266
      %v2786 = vunpack.c.l.b16 %v2267
      %v2787 = vunpack.c.l.b16 %v2268
      %v2788 = vunpack.c.l.b16 %v2269
      %v2789 = vunpack.c.l.b16 %v2270
      %v2790 = vunpack.c.l.b16 %v2271
      %v2791 = vunpack.c.l.b16 %v2272
      %v2792 = vunpack.c.l.b16 %v2273
      %v2793 = vunpack.c.l.b16 %v2274
      %v2794 = vunpack.c.l.b16 %v2275
      %v2795 = vunpack.c.l.b16 %v2276
      %v2796 = vunpack.c.l.b16 %v2277
      %v2797 = vunpack.c.l.b16 %v2278
      %v2798 = vunpack.c.l.b16 %v2279
      %v2799 = vunpack.c.l.b16 %v2280
      %v2800 = vunpack.c.l.b16 %v2281
      %v2801 = vunpack.c.l.b16 %v2282
      %v2802 = vunpack.c.l.b16 %v2283
      %v2803 = vunpack.c.l.b16 %v2284
      %v2804 = vunpack.c.l.b16 %v2285
      %v2805 = vunpack.c.l.b16 %v2286
      %v2806 = vunpack.c.l.b16 %v2287
      %v2807 = vunpack.c.l.b16 %v2288
      %v2808 = vunpack.c.l.b16 %v2289
      %v2809 = vunpack.c.l.b16 %v2290
      %v2810 = vunpack.c.l.b16 %v2291
      %v2811 = vunpack.c.l.b16 %v2292
      %v2812 = vunpack.c.l.b16 %v2293
      %v2813 = vunpack.c.l.b16 %v2294
      %v2814 = vunpack.c.l.b16 %v2295
      %v2815 = vunpack.c.l.b16 %v2296
      %v2816 = vunpack.c.l.b16 %v2297
      %v2817 = vunpack.c.l.b16 %v2298
      %v2818 = vunpack.c.l.b16 %v2299
      %v2819 = vunpack.c.l.b16 %v2300
      %v2820 = vunpack.c.l.b16 %v2301
      %v2821 = vunpack.c.l.b16 %v2302
      %v2822 = vunpack.c.l.b16 %v2303
      %v2823 = vunpack.c.l.b16 %v2304
      %v2824 = vunpack.c.l.b16 %v2305
      %v2825 = vunpack.c.l.b16 %v2306
      %v2826 = vunpack.c.l.b16 %v2307
      %v2827 = vunpack.c.l.b16 %v2308
      %v2828 = vunpack.c.l.b16 %v2309
      %v2829 = vunpack.c.l.b16 %v2310
      %v2830 = vunpack.c.l.b16 %v2311
      %v2831 = vunpack.c.l.b16 %v2312
      %v2832 = vunpack.c.l.b16 %v2313
      %v2833 = vunpack.c.l.b16 %v2314
      %v2834 = vunpack.c.l.b16 %v2315
      %v2835 = vunpack.c.l.b16 %v2316
      %v2836 = vunpack.c.l.b16 %v2317
      %v2837 = vunpack.c.l.b16 %v2318
      %v2838 = vunpack.c.l.b16 %v2319
      %v2839 = vunpack.c.l.b16 %v2320
      %v2840 = vunpack.c.l.b16 %v2321
      %v2841 = vunpack.c.l.b16 %v2322
      %v2842 = vunpack.c.l.b16 %v2323
      %v2843 = vunpack.c.l.b16 %v2324
      %v2844 = vunpack.c.l.b16 %v2325
      %v2845 = vunpack.c.l.b16 %v2326
      %v2846 = vunpack.c.l.b16 %v2327
      %v2847 = vunpack.c.l.b16 %v2328
      %v2848 = vunpack.c.l.b16 %v2329
      %v2849 = vunpack.c.l.b16 %v2330
      %v2850 = vunpack.c.l.b16 %v2331
      %v2851 = vunpack.c.l.b16 %v2332
      %v2852 = vunpack.c.l.b16 %v2333
      %v2853 = vunpack.c.l.b16 %v2334
      %v2854 = vunpack.c.l.b16 %v2335
      %v2855 = vunpack.c.l.b16 %v2336
      %v2856 = vunpack.c.l.b16 %v2337
      %v2857 = vunpack.c.l.b16 %v2338
      %v2858 = vunpack.c.l.b16 %v2339
      %v2859 = vunpack.c.l.b16 %v2340
      %v2860 = vunpack.c.l.b16 %v2341
      %v2861 = vunpack.c.l.b16 %v2342
      %v2862 = vunpack.c.l.b16 %v2343
      %v2863 = vunpack.c.l.b16 %v2344
      %v2864 = vunpack.c.l.b16 %v2345
      %v2865 = vunpack.c.l.b16 %v2346
      %v2866 = vunpack.c.l.b16 %v2347
      %v2867 = vunpack.c.l.b16 %v2348
      %v2868 = vunpack.c.l.b16 %v2349
      %v2869 = vunpack.c.l.b16 %v2350
      %v2870 = vunpack.c.l.b16 %v2351
      %v2871 = vunpack.c.l.b16 %v2352
      %v2872 = vunpack.c.l.b16 %v2353
      %v2873 = vunpack.c.l.b16 %v2354
      %v2874 = vunpack.c.l.b16 %v2355
      %v2875 = vunpack.c.l.b16 %v2356
      %v2876 = vunpack.c.l.b16 %v2357
      %v2877 = vunpack.c.l.b16 %v2358
      %v2878 = vunpack.c.l.b16 %v2359
      %v2879 = vunpack.c.l.b16 %v2360
      %v2880 = vunpack.c.l.b16 %v2361
      %v2881 = vunpack.c.l.b16 %v2362
      %v2882 = vunpack.c.l.b16 %v2363
      %v2883 = vunpack.c.l.b16 %v2364
      %v2884 = vunpack.c.l.b16 %v2365
      %v2885 = vunpack.c.l.b16 %v2366
      %v2886 = vunpack.c.l.b16 %v2367
      %v2887 = vunpack.c.l.b16 %v2368
      %v2888 = vunpack.c.l.b16 %v2369
      %v2889 = vunpack.c.l.b16 %v2370
      %v2890 = vunpack.c.l.b16 %v2371
      %v2891 = vunpack.c.l.b16 %v2372
      %v2892 = vunpack.c.l.b16 %v2373
      %v2893 = vunpack.c.l.b16 %v2374
      %v2894 = vunpack.c.l.b16 %v2375
      %v2895 = vunpack.c.l.b16 %v2376
      %v2896 = vunpack.c.l.b16 %v2377
      %v2897 = vunpack.c.l.b16 %v2378
      %v2898 = vunpack.c.l.b16 %v2379
      %v2899 = vunpack.c.l.b16 %v2380
      %v2900 = vunpack.c.l.b16 %v2381
      %v2901 = vunpack.c.l.b16 %v2382
      %v2902 = vunpack.c.l.b16 %v2383
      %v2903 = vunpack.c.l.b16 %v2384
      %v2904 = vunpack.c.l.b16 %v2385
      %v2905 = vunpack.c.l.b16 %v2386
      %v2906 = vunpack.c.l.b16 %v2387
      %v2907 = vunpack.c.l.b16 %v2388
      %v2908 = vunpack.c.l.b16 %v2389
      %v2909 = vunpack.c.l.b16 %v2390
      %v2910 = vunpack.c.l.b16 %v2391
      %v2911 = vunpack.c.l.b16 %v2392
      %v2912 = vunpack.c.l.b16 %v2393
      %v2913 = vunpack.c.l.b16 %v2394
      %v2914 = vunpack.c.l.b16 %v2395
      %v2915 = vunpack.c.l.b16 %v2396
      %v2916 = vunpack.c.l.b16 %v2397
      %v2917 = vunpack.c.l.b16 %v2398
      %v2918 = vunpack.c.l.b16 %v2399
      %v2919 = vunpack.c.l.b16 %v2400
      %v2920 = vunpack.c.l.b16 %v2401
      %v2921 = vunpack.c.l.b16 %v2402
      %v2922 = vunpack.c.l.b16 %v2403
      %v2923 = vunpack.c.l.b16 %v2404
      %v2924 = vunpack.c.l.b16 %v2405
      %v2925 = vunpack.c.l.b16 %v2406
      %v2926 = vunpack.c.l.b16 %v2407
      %v2927 = vunpack.c.l.b16 %v2408
      %v2928 = vunpack.c.l.b16 %v2409
      %v2929 = vunpack.c.l.b16 %v2410
      %v2930 = vunpack.c.l.b16 %v2411
      %v2931 = vunpack.c.l.b16 %v2412
      %v2932 = vunpack.c.l.b16 %v2413
      %v2933 = vunpack.c.l.b16 %v2414
      %v2934 = vunpack.c.l.b16 %v2415
      %v2935 = vunpack.c.l.b16 %v2416
      %v2936 = vunpack.c.l.b16 %v2417
      %v2937 = vunpack.c.l.b16 %v2418
      %v2938 = vunpack.c.l.b16 %v2419
      %v2939 = vunpack.c.l.b16 %v2420
      %v2940 = vunpack.c.l.b16 %v2421
      %v2941 = vunpack.c.l.b16 %v2422
      %v2942 = vunpack.c.l.b16 %v2423
      %v2943 = vunpack.c.l.b16 %v2424
      %v2944 = vunpack.c.l.b16 %v2425
      %v2945 = vunpack.c.l.b16 %v2426
      %v2946 = vunpack.c.l.b16 %v2427
      %v2947 = vunpack.c.l.b16 %v2428
      %v2948 = vunpack.c.l.b16 %v2429
      %v2949 = vunpack.c.l.b16 %v2430
      %v2950 = vunpack.c.l.b16 %v2431
      %v2951 = vunpack.c.l.b16 %v2432
      %v2952 = vunpack.c.l.b16 %v2433
      %v2953 = vunpack.c.l.b16 %v2434
      %v2954 = vunpack.c.l.b16 %v2435
      %v2955 = vunpack.c.l.b16 %v2436
      %v2956 = vunpack.c.l.b16 %v2437
      %v2957 = vunpack.c.l.b16 %v2438
      %v2958 = vunpack.c.l.b16 %v2439
      %v2959 = vunpack.c.l.b16 %v2440
      %v2960 = vunpack.c.l.b16 %v2441
      %v2961 = vunpack.c.l.b16 %v2442
      %v2962 = vunpack.c.l.b16 %v2443
      %v2963 = vunpack.c.l.b16 %v2444
      %v2964 = vunpack.c.l.b16 %v2445
      %v2965 = vunpack.c.l.b16 %v2446
      %v2966 = vunpack.c.l.b16 %v2447
      %v2967 = vunpack.c.l.b16 %v2448
      %v2968 = vunpack.c.l.b16 %v2449
      %v2969 = vunpack.c.l.b16 %v2450
      %v2970 = vunpack.c.l.b16 %v2451
      %v2971 = vunpack.c.l.b16 %v2452
      %v2972 = vunpack.c.l.b16 %v2453
      %v2973 = vunpack.c.l.b16 %v2454
      %v2974 = vunpack.c.l.b16 %v2455
      %v2975 = vunpack.c.l.b16 %v2456
      %v2976 = vunpack.c.l.b16 %v2457
      %v2977 = vunpack.c.l.b16 %v2458
      %v2978 = vunpack.c.l.b16 %v2459
      %v2979 = vunpack.c.l.b16 %v2460
      %v2980 = vunpack.c.l.b16 %v2461
      %v2981 = vunpack.c.l.b16 %v2462
      %v2982 = vunpack.c.l.b16 %v2463
      %v2983 = vunpack.c.l.b16 %v2464
      %v2984 = vunpack.c.l.b16 %v2465
      %v2985 = vunpack.c.l.b16 %v2466
      %v2986 = vunpack.c.l.b16 %v2467
      %v2987 = vunpack.c.l.b16 %v2468
      %v2988 = vunpack.c.l.b16 %v2469
      %v2989 = vunpack.c.l.b16 %v2470
      %v2990 = vunpack.c.l.b16 %v2471
      %v2991 = vunpack.c.l.b16 %v2472
      %v2992 = vunpack.c.l.b16 %v2473
      %v2993 = vunpack.c.l.b16 %v2474
      %v2994 = vunpack.c.l.b16 %v2475
      %v2995 = vunpack.c.l.b16 %v2476
      %v2996 = vunpack.c.l.b16 %v2477
      %v2997 = vunpack.c.l.b16 %v2478
      %v2998 = vunpack.c.l.b16 %v2479
      %v2999 = vunpack.c.l.b16 %v2480
      %v3000 = vunpack.c.l.b16 %v2481
      %v3001 = vunpack.c.l.b16 %v2482
      %v3002 = vpack.c.b16 %v2747, %v2746
      %v3003 = vpack.c.b16 %v2749, %v2748
      %v3004 = vpack.c.b16 %v2751, %v2750
      %v3005 = vpack.c.b16 %v2753, %v2752
      %v3006 = vpack.c.b16 %v2755, %v2754
      %v3007 = vpack.c.b16 %v2757, %v2756
      %v3008 = vpack.c.b16 %v2759, %v2758
      %v3009 = vpack.c.b16 %v2761, %v2760
      %v3010 = vpack.c.b16 %v2763, %v2762
      %v3011 = vpack.c.b16 %v2765, %v2764
      %v3012 = vpack.c.b16 %v2767, %v2766
      %v3013 = vpack.c.b16 %v2769, %v2768
      %v3014 = vpack.c.b16 %v2771, %v2770
      %v3015 = vpack.c.b16 %v2773, %v2772
      %v3016 = vpack.c.b16 %v2775, %v2774
      %v3017 = vpack.c.b16 %v2777, %v2776
      %v3018 = vpack.c.b16 %v2779, %v2778
      %v3019 = vpack.c.b16 %v2781, %v2780
      %v3020 = vpack.c.b16 %v2783, %v2782
      %v3021 = vpack.c.b16 %v2785, %v2784
      %v3022 = vpack.c.b16 %v2787, %v2786
      %v3023 = vpack.c.b16 %v2789, %v2788
      %v3024 = vpack.c.b16 %v2791, %v2790
      %v3025 = vpack.c.b16 %v2793, %v2792
      %v3026 = vpack.c.b16 %v2795, %v2794
      %v3027 = vpack.c.b16 %v2797, %v2796
      %v3028 = vpack.c.b16 %v2799, %v2798
      %v3029 = vpack.c.b16 %v2801, %v2800
      %v3030 = vpack.c.b16 %v2803, %v2802
      %v3031 = vpack.c.b16 %v2805, %v2804
      %v3032 = vpack.c.b16 %v2807, %v2806
      %v3033 = vpack.c.b16 %v2809, %v2808
      %v3034 = vpack.c.b16 %v2811, %v2810
      %v3035 = vpack.c.b16 %v2813, %v2812
      %v3036 = vpack.c.b16 %v2815, %v2814
      %v3037 = vpack.c.b16 %v2817, %v2816
      %v3038 = vpack.c.b16 %v2819, %v2818
      %v3039 = vpack.c.b16 %v2821, %v2820
      %v3040 = vpack.c.b16 %v2823, %v2822
      %v3041 = vpack.c.b16 %v2825, %v2824
      %v3042 = vpack.c.b16 %v2827, %v2826
      %v3043 = vpack.c.b16 %v2829, %v2828
      %v3044 = vpack.c.b16 %v2831, %v2830
      %v3045 = vpack.c.b16 %v2833, %v2832
      %v3046 = vpack.c.b16 %v2835, %v2834
      %v3047 = vpack.c.b16 %v2837, %v2836
      %v3048 = vpack.c.b16 %v2839, %v2838
      %v3049 = vpack.c.b16 %v2841, %v2840
      %v3050 = vpack.c.b16 %v2843, %v2842
      %v3051 = vpack.c.b16 %v2845, %v2844
      %v3052 = vpack.c.b16 %v2847, %v2846
      %v3053 = vpack.c.b16 %v2849, %v2848
      %v3054 = vpack.c.b16 %v2851, %v2850
      %v3055 = vpack.c.b16 %v2853, %v2852
      %v3056 = vpack.c.b16 %v2855, %v2854
      %v3057 = vpack.c.b16 %v2857, %v2856
      %v3058 = vpack.c.b16 %v2859, %v2858
      %v3059 = vpack.c.b16 %v2861, %v2860
      %v3060 = vpack.c.b16 %v2863, %v2862
      %v3061 = vpack.c.b16 %v2865, %v2864
      %v3062 = vpack.c.b16 %v2867, %v2866
      %v3063 = vpack.c.b16 %v2869, %v2868
      %v3064 = vpack.c.b16 %v2871, %v2870
      %v3065 = vpack.c.b16 %v2873, %v2872
      %v3066 = vpack.c.b16 %v2875, %v2874
      %v3067 = vpack.c.b16 %v2877, %v2876
      %v3068 = vpack.c.b16 %v2879, %v2878
      %v3069 = vpack.c.b16 %v2881, %v2880
      %v3070 = vpack.c.b16 %v2883, %v2882
      %v3071 = vpack.c.b16 %v2885, %v2884
      %v3072 = vpack.c.b16 %v2887, %v2886
      %v3073 = vpack.c.b16 %v2889, %v2888
      %v3074 = vpack.c.b16 %v2891, %v2890
      %v3075 = vpack.c.b16 %v2893, %v2892
      %v3076 = vpack.c.b16 %v2895, %v2894
      %v3077 = vpack.c.b16 %v2897, %v2896
      %v3078 = vpack.c.b16 %v2899, %v2898
      %v3079 = vpack.c.b16 %v2901, %v2900
      %v3080 = vpack.c.b16 %v2903, %v2902
      %v3081 = vpack.c.b16 %v2905, %v2904
      %v3082 = vpack.c.b16 %v2907, %v2906
      %v3083 = vpack.c.b16 %v2909, %v2908
      %v3084 = vpack.c.b16 %v2911, %v2910
      %v3085 = vpack.c.b16 %v2913, %v2912
      %v3086 = vpack.c.b16 %v2915, %v2914
      %v3087 = vpack.c.b16 %v2917, %v2916
      %v3088 = vpack.c.b16 %v2919, %v2918
      %v3089 = vpack.c.b16 %v2921, %v2920
      %v3090 = vpack.c.b16 %v2923, %v2922
      %v3091 = vpack.c.b16 %v2925, %v2924
      %v3092 = vpack.c.b16 %v2927, %v2926
      %v3093 = vpack.c.b16 %v2929, %v2928
      %v3094 = vpack.c.b16 %v2931, %v2930
      %v3095 = vpack.c.b16 %v2933, %v2932
      %v3096 = vpack.c.b16 %v2935, %v2934
      %v3097 = vpack.c.b16 %v2937, %v2936
      %v3098 = vpack.c.b16 %v2939, %v2938
      %v3099 = vpack.c.b16 %v2941, %v2940
      %v3100 = vpack.c.b16 %v2943, %v2942
      %v3101 = vpack.c.b16 %v2945, %v2944
      %v3102 = vpack.c.b16 %v2947, %v2946
      %v3103 = vpack.c.b16 %v2949, %v2948
      %v3104 = vpack.c.b16 %v2951, %v2950
      %v3105 = vpack.c.b16 %v2953, %v2952
      %v3106 = vpack.c.b16 %v2955, %v2954
      %v3107 = vpack.c.b16 %v2957, %v2956
      %v3108 = vpack.c.b16 %v2959, %v2958
      %v3109 = vpack.c.b16 %v2961, %v2960
      %v3110 = vpack.c.b16 %v2963, %v2962
      %v3111 = vpack.c.b16 %v2965, %v2964
      %v3112 = vpack.c.b16 %v2967, %v2966
      %v3113 = vpack.c.b16 %v2969, %v2968
      %v3114 = vpack.c.b16 %v2971, %v2970
      %v3115 = vpack.c.b16 %v2973, %v2972
      %v3116 = vpack.c.b16 %v2975, %v2974
      %v3117 = vpack.c.b16 %v2977, %v2976
      %v3118 = vpack.c.b16 %v2979, %v2978
      %v3119 = vpack.c.b16 %v2981, %v2980
      %v3120 = vpack.c.b16 %v2983, %v2982
      %v3121 = vpack.c.b16 %v2985, %v2984
      %v3122 = vpack.c.b16 %v2987, %v2986
      %v3123 = vpack.c.b16 %v2989, %v2988
      %v3124 = vpack.c.b16 %v2991, %v2990
      %v3125 = vpack.c.b16 %v2993, %v2992
      %v3126 = vpack.c.b16 %v2995, %v2994
      %v3127 = vpack.c.b16 %v2997, %v2996
      %v3128 = vpack.c.b16 %v2999, %v2998
      %v3129 = vpack.c.b16 %v3001, %v3000
      %3258 = vmatprep.subr.bf16.mxu0 0
      %3259 = vmatpush1.bf16.msra.mxu0 %v3002
      %3260 = vmatprep.subr.bf16.mxu0 0
      %3261 = vmatpush1.bf16.msra.mxu0 %v3003
      %3262 = vmatprep.subr.bf16.mxu0 0
      %3263 = vmatpush1.bf16.msra.mxu0 %v3004
      %3264 = vmatprep.subr.bf16.mxu0 0
      %3265 = vmatpush1.bf16.msra.mxu0 %v3005
      %3266 = vmatprep.subr.bf16.mxu0 0
      %3267 = vmatpush1.bf16.msra.mxu0 %v3006
      %3268 = vmatprep.subr.bf16.mxu0 0
      %3269 = vmatpush1.bf16.msra.mxu0 %v3007
      %3270 = vmatprep.subr.bf16.mxu0 0
      %3271 = vmatpush1.bf16.msra.mxu0 %v3008
      %3272 = vmatprep.subr.bf16.mxu0 0
      %3273 = vmatpush1.bf16.msra.mxu0 %v3009
      %3274 = vmatprep.subr.bf16.mxu0 0
      %3275 = vmatpush1.bf16.msra.mxu0 %v3010
      %3276 = vmatprep.subr.bf16.mxu0 0
      %3277 = vmatpush1.bf16.msra.mxu0 %v3011
      %3278 = vmatprep.subr.bf16.mxu0 0
      %3279 = vmatpush1.bf16.msra.mxu0 %v3012
      %3280 = vmatprep.subr.bf16.mxu0 0
      %3281 = vmatpush1.bf16.msra.mxu0 %v3013
      %3282 = vmatprep.subr.bf16.mxu0 0
      %3283 = vmatpush1.bf16.msra.mxu0 %v3014
      %3284 = vmatprep.subr.bf16.mxu0 0
      %3285 = vmatpush1.bf16.msra.mxu0 %v3015
      %3286 = vmatprep.subr.bf16.mxu0 0
      %3287 = vmatpush1.bf16.msra.mxu0 %v3016
      %3288 = vmatprep.subr.bf16.mxu0 0
      %3289 = vmatpush1.bf16.msra.mxu0 %v3017
      %3290 = vmatprep.mubr.bf16.mxu0 %v2212
      %3291 = vmatmul.mubr.bf16.gmra.mrb[0].mxu0 %v2211
      %v3292 = vpop.f32.mrb[0].mxu0
      %v3293 = vadd.f32 %v2488, %v3292
      %v3294 = vpop.f32.mrb[0].mxu0
      %v3295 = vpop.f32.mrb[0].mxu0
      %v3296 = vpop.f32.mrb[0].mxu0
      %3297 = vdwg.mxu0
      %3298 = vmatprep.subr.bf16.mxu0 0
      %3299 = vmatpush1.bf16.msra.mxu0 %v3018
      %3300 = vmatprep.subr.bf16.mxu0 0
      %3301 = vmatpush1.bf16.msra.mxu0 %v3019
      %3302 = vmatprep.subr.bf16.mxu0 0
      %3303 = vmatpush1.bf16.msra.mxu0 %v3020
      %3304 = vmatprep.subr.bf16.mxu0 0
      %3305 = vmatpush1.bf16.msra.mxu0 %v3021
      %3306 = vmatprep.subr.bf16.mxu0 0
      %3307 = vmatpush1.bf16.msra.mxu0 %v3022
      %3308 = vmatprep.subr.bf16.mxu0 0
      %3309 = vmatpush1.bf16.msra.mxu0 %v3023
      %3310 = vmatprep.subr.bf16.mxu0 0
      %3311 = vmatpush1.bf16.msra.mxu0 %v3024
      %3312 = vmatprep.subr.bf16.mxu0 0
      %3313 = vmatpush1.bf16.msra.mxu0 %v3025
      %3314 = vmatprep.subr.bf16.mxu0 0
      %3315 = vmatpush1.bf16.msra.mxu0 %v3026
      %3316 = vmatprep.subr.bf16.mxu0 0
      %3317 = vmatpush1.bf16.msra.mxu0 %v3027
      %3318 = vmatprep.subr.bf16.mxu0 0
      %3319 = vmatpush1.bf16.msra.mxu0 %v3028
      %3320 = vmatprep.subr.bf16.mxu0 0
      %3321 = vmatpush1.bf16.msra.mxu0 %v3029
      %3322 = vmatprep.subr.bf16.mxu0 0
      %3323 = vmatpush1.bf16.msra.mxu0 %v3030
      %3324 = vmatprep.subr.bf16.mxu0 0
      %3325 = vmatpush1.bf16.msra.mxu0 %v3031
      %3326 = vmatprep.subr.bf16.mxu0 0
      %3327 = vmatpush1.bf16.msra.mxu0 %v3032
      %3328 = vmatprep.subr.bf16.mxu0 0
      %3329 = vmatpush1.bf16.msra.mxu0 %v3033
      %3330 = vmatprep.mubr.bf16.mxu0 %v2214
      %3331 = vmatmul.mubr.bf16.gmra.mrb[0].mxu0 %v2213
      %v3332 = vpop.f32.mrb[0].mxu0
      %v3333 = vadd.f32 %v3293, %v3332
      %v3334 = vpop.f32.mrb[0].mxu0
      %v3335 = vpop.f32.mrb[0].mxu0
      %v3336 = vpop.f32.mrb[0].mxu0
      %3337 = vdwg.mxu0
      %3338 = vmatprep.subr.bf16.mxu0 0
      %3339 = vmatpush1.bf16.msra.mxu0 %v3034
      %3340 = vmatprep.subr.bf16.mxu0 0
      %3341 = vmatpush1.bf16.msra.mxu0 %v3035
      %3342 = vmatprep.subr.bf16.mxu0 0
      %3343 = vmatpush1.bf16.msra.mxu0 %v3036
      %3344 = vmatprep.subr.bf16.mxu0 0
      %3345 = vmatpush1.bf16.msra.mxu0 %v3037
      %3346 = vmatprep.subr.bf16.mxu0 0
      %3347 = vmatpush1.bf16.msra.mxu0 %v3038
      %3348 = vmatprep.subr.bf16.mxu0 0
      %3349 = vmatpush1.bf16.msra.mxu0 %v3039
      %3350 = vmatprep.subr.bf16.mxu0 0
      %3351 = vmatpush1.bf16.msra.mxu0 %v3040
      %3352 = vmatprep.subr.bf16.mxu0 0
      %3353 = vmatpush1.bf16.msra.mxu0 %v3041
      %3354 = vmatprep.subr.bf16.mxu0 0
      %3355 = vmatpush1.bf16.msra.mxu0 %v3042
      %3356 = vmatprep.subr.bf16.mxu0 0
      %3357 = vmatpush1.bf16.msra.mxu0 %v3043
      %3358 = vmatprep.subr.bf16.mxu0 0
      %3359 = vmatpush1.bf16.msra.mxu0 %v3044
      %3360 = vmatprep.subr.bf16.mxu0 0
      %3361 = vmatpush1.bf16.msra.mxu0 %v3045
      %3362 = vmatprep.subr.bf16.mxu0 0
      %3363 = vmatpush1.bf16.msra.mxu0 %v3046
      %3364 = vmatprep.subr.bf16.mxu0 0
      %3365 = vmatpush1.bf16.msra.mxu0 %v3047
      %3366 = vmatprep.subr.bf16.mxu0 0
      %3367 = vmatpush1.bf16.msra.mxu0 %v3048
      %3368 = vmatprep.subr.bf16.mxu0 0
      %3369 = vmatpush1.bf16.msra.mxu0 %v3049
      %3370 = vmatprep.mubr.bf16.mxu0 %v2216
      %3371 = vmatmul.mubr.bf16.gmra.mrb[0].mxu0 %v2215
      %v3372 = vpop.f32.mrb[0].mxu0
      %v3373 = vadd.f32 %v3333, %v3372
      %v3374 = vpop.f32.mrb[0].mxu0
      %v3375 = vpop.f32.mrb[0].mxu0
      %v3376 = vpop.f32.mrb[0].mxu0
      %3377 = vdwg.mxu0
      %3378 = vmatprep.subr.bf16.mxu0 0
      %3379 = vmatpush1.bf16.msra.mxu0 %v3050
      %3380 = vmatprep.subr.bf16.mxu0 0
      %3381 = vmatpush1.bf16.msra.mxu0 %v3051
      %3382 = vmatprep.subr.bf16.mxu0 0
      %3383 = vmatpush1.bf16.msra.mxu0 %v3052
      %3384 = vmatprep.subr.bf16.mxu0 0
      %3385 = vmatpush1.bf16.msra.mxu0 %v3053
      %3386 = vmatprep.subr.bf16.mxu0 0
      %3387 = vmatpush1.bf16.msra.mxu0 %v3054
      %3388 = vmatprep.subr.bf16.mxu0 0
      %3389 = vmatpush1.bf16.msra.mxu0 %v3055
      %3390 = vmatprep.subr.bf16.mxu0 0
      %3391 = vmatpush1.bf16.msra.mxu0 %v3056
      %3392 = vmatprep.subr.bf16.mxu0 0
      %3393 = vmatpush1.bf16.msra.mxu0 %v3057
      %3394 = vmatprep.subr.bf16.mxu0 0
      %3395 = vmatpush1.bf16.msra.mxu0 %v3058
      %3396 = vmatprep.subr.bf16.mxu0 0
      %3397 = vmatpush1.bf16.msra.mxu0 %v3059
      %3398 = vmatprep.subr.bf16.mxu0 0
      %3399 = vmatpush1.bf16.msra.mxu0 %v3060
      %3400 = vmatprep.subr.bf16.mxu0 0
      %3401 = vmatpush1.bf16.msra.mxu0 %v3061
      %3402 = vmatprep.subr.bf16.mxu0 0
      %3403 = vmatpush1.bf16.msra.mxu0 %v3062
      %3404 = vmatprep.subr.bf16.mxu0 0
      %3405 = vmatpush1.bf16.msra.mxu0 %v3063
      %3406 = vmatprep.subr.bf16.mxu0 0
      %3407 = vmatpush1.bf16.msra.mxu0 %v3064
      %3408 = vmatprep.subr.bf16.mxu0 0
      %3409 = vmatpush1.bf16.msra.mxu0 %v3065
      %3410 = vmatprep.mubr.bf16.mxu0 %v2218
      %3411 = vmatmul.mubr.bf16.gmra.mrb[0].mxu0 %v2217
      %v3412 = vpop.f32.mrb[0].mxu0
      %v3413 = vadd.f32 %v3373, %v3412
      %v3414 = vpop.f32.mrb[0].mxu0
      %v3415 = vpop.f32.mrb[0].mxu0
      %v3416 = vpop.f32.mrb[0].mxu0
      %3417 = vdwg.mxu0
      %3418 = vmatprep.subr.bf16.mxu0 0
      %3419 = vmatpush1.bf16.msra.mxu0 %v3066
      %3420 = vmatprep.subr.bf16.mxu0 0
      %3421 = vmatpush1.bf16.msra.mxu0 %v3067
      %3422 = vmatprep.subr.bf16.mxu0 0
      %3423 = vmatpush1.bf16.msra.mxu0 %v3068
      %3424 = vmatprep.subr.bf16.mxu0 0
      %3425 = vmatpush1.bf16.msra.mxu0 %v3069
      %3426 = vmatprep.subr.bf16.mxu0 0
      %3427 = vmatpush1.bf16.msra.mxu0 %v3070
      %3428 = vmatprep.subr.bf16.mxu0 0
      %3429 = vmatpush1.bf16.msra.mxu0 %v3071
      %3430 = vmatprep.subr.bf16.mxu0 0
      %3431 = vmatpush1.bf16.msra.mxu0 %v3072
      %3432 = vmatprep.subr.bf16.mxu0 0
      %3433 = vmatpush1.bf16.msra.mxu0 %v3073
      %3434 = vmatprep.subr.bf16.mxu0 0
      %3435 = vmatpush1.bf16.msra.mxu0 %v3074
      %3436 = vmatprep.subr.bf16.mxu0 0
      %3437 = vmatpush1.bf16.msra.mxu0 %v3075
      %3438 = vmatprep.subr.bf16.mxu0 0
      %3439 = vmatpush1.bf16.msra.mxu0 %v3076
      %3440 = vmatprep.subr.bf16.mxu0 0
      %3441 = vmatpush1.bf16.msra.mxu0 %v3077
      %3442 = vmatprep.subr.bf16.mxu0 0
      %3443 = vmatpush1.bf16.msra.mxu0 %v3078
      %3444 = vmatprep.subr.bf16.mxu0 0
      %3445 = vmatpush1.bf16.msra.mxu0 %v3079
      %3446 = vmatprep.subr.bf16.mxu0 0
      %3447 = vmatpush1.bf16.msra.mxu0 %v3080
      %3448 = vmatprep.subr.bf16.mxu0 0
      %3449 = vmatpush1.bf16.msra.mxu0 %v3081
      %3450 = vmatprep.mubr.bf16.mxu0 %v2220
      %3451 = vmatmul.mubr.bf16.gmra.mrb[0].mxu0 %v2219
      %v3452 = vpop.f32.mrb[0].mxu0
      %v3453 = vadd.f32 %v3413, %v3452
      %v3454 = vpop.f32.mrb[0].mxu0
      %v3455 = vpop.f32.mrb[0].mxu0
      %v3456 = vpop.f32.mrb[0].mxu0
      %3457 = vdwg.mxu0
      %3458 = vmatprep.subr.bf16.mxu0 0
      %3459 = vmatpush1.bf16.msra.mxu0 %v3082
      %3460 = vmatprep.subr.bf16.mxu0 0
      %3461 = vmatpush1.bf16.msra.mxu0 %v3083
      %3462 = vmatprep.subr.bf16.mxu0 0
      %3463 = vmatpush1.bf16.msra.mxu0 %v3084
      %3464 = vmatprep.subr.bf16.mxu0 0
      %3465 = vmatpush1.bf16.msra.mxu0 %v3085
      %3466 = vmatprep.subr.bf16.mxu0 0
      %3467 = vmatpush1.bf16.msra.mxu0 %v3086
      %3468 = vmatprep.subr.bf16.mxu0 0
      %3469 = vmatpush1.bf16.msra.mxu0 %v3087
      %3470 = vmatprep.subr.bf16.mxu0 0
      %3471 = vmatpush1.bf16.msra.mxu0 %v3088
      %3472 = vmatprep.subr.bf16.mxu0 0
      %3473 = vmatpush1.bf16.msra.mxu0 %v3089
      %3474 = vmatprep.subr.bf16.mxu0 0
      %3475 = vmatpush1.bf16.msra.mxu0 %v3090
      %3476 = vmatprep.subr.bf16.mxu0 0
      %3477 = vmatpush1.bf16.msra.mxu0 %v3091
      %3478 = vmatprep.subr.bf16.mxu0 0
      %3479 = vmatpush1.bf16.msra.mxu0 %v3092
      %3480 = vmatprep.subr.bf16.mxu0 0
      %3481 = vmatpush1.bf16.msra.mxu0 %v3093
      %3482 = vmatprep.subr.bf16.mxu0 0
      %3483 = vmatpush1.bf16.msra.mxu0 %v3094
      %3484 = vmatprep.subr.bf16.mxu0 0
      %3485 = vmatpush1.bf16.msra.mxu0 %v3095
      %3486 = vmatprep.subr.bf16.mxu0 0
      %3487 = vmatpush1.bf16.msra.mxu0 %v3096
      %3488 = vmatprep.subr.bf16.mxu0 0
      %3489 = vmatpush1.bf16.msra.mxu0 %v3097
      %3490 = vmatprep.mubr.bf16.mxu0 %v2222
      %3491 = vmatmul.mubr.bf16.gmra.mrb[0].mxu0 %v2221
      %v3492 = vpop.f32.mrb[0].mxu0
      %v3493 = vadd.f32 %v3453, %v3492
      %v3494 = vpop.f32.mrb[0].mxu0
      %v3495 = vpop.f32.mrb[0].mxu0
      %v3496 = vpop.f32.mrb[0].mxu0
      %3497 = vdwg.mxu0
      %3498 = vmatprep.subr.bf16.mxu0 0
      %3499 = vmatpush1.bf16.msra.mxu0 %v3098
      %3500 = vmatprep.subr.bf16.mxu0 0
      %3501 = vmatpush1.bf16.msra.mxu0 %v3099
      %3502 = vmatprep.subr.bf16.mxu0 0
      %3503 = vmatpush1.bf16.msra.mxu0 %v3100
      %3504 = vmatprep.subr.bf16.mxu0 0
      %3505 = vmatpush1.bf16.msra.mxu0 %v3101
      %3506 = vmatprep.subr.bf16.mxu0 0
      %3507 = vmatpush1.bf16.msra.mxu0 %v3102
      %3508 = vmatprep.subr.bf16.mxu0 0
      %3509 = vmatpush1.bf16.msra.mxu0 %v3103
      %3510 = vmatprep.subr.bf16.mxu0 0
      %3511 = vmatpush1.bf16.msra.mxu0 %v3104
      %3512 = vmatprep.subr.bf16.mxu0 0
      %3513 = vmatpush1.bf16.msra.mxu0 %v3105
      %3514 = vmatprep.subr.bf16.mxu0 0
      %3515 = vmatpush1.bf16.msra.mxu0 %v3106
      %3516 = vmatprep.subr.bf16.mxu0 0
      %3517 = vmatpush1.bf16.msra.mxu0 %v3107
      %3518 = vmatprep.subr.bf16.mxu0 0
      %3519 = vmatpush1.bf16.msra.mxu0 %v3108
      %3520 = vmatprep.subr.bf16.mxu0 0
      %3521 = vmatpush1.bf16.msra.mxu0 %v3109
      %3522 = vmatprep.subr.bf16.mxu0 0
      %3523 = vmatpush1.bf16.msra.mxu0 %v3110
      %3524 = vmatprep.subr.bf16.mxu0 0
      %3525 = vmatpush1.bf16.msra.mxu0 %v3111
      %3526 = vmatprep.subr.bf16.mxu0 0
      %3527 = vmatpush1.bf16.msra.mxu0 %v3112
      %3528 = vmatprep.subr.bf16.mxu0 0
      %3529 = vmatpush1.bf16.msra.mxu0 %v3113
      %3530 = vmatprep.mubr.bf16.mxu0 %v2224
      %3531 = vmatmul.mubr.bf16.gmra.mrb[0].mxu0 %v2223
      %v3532 = vpop.f32.mrb[0].mxu0
      %v3533 = vadd.f32 %v3493, %v3532
      %v3534 = vpop.f32.mrb[0].mxu0
      %v3535 = vpop.f32.mrb[0].mxu0
      %v3536 = vpop.f32.mrb[0].mxu0
      %3537 = vdwg.mxu0
      %3538 = vmatprep.subr.bf16.mxu0 0
      %3539 = vmatpush1.bf16.msra.mxu0 %v3114
      %3540 = vmatprep.subr.bf16.mxu0 0
      %3541 = vmatpush1.bf16.msra.mxu0 %v3115
      %3542 = vmatprep.subr.bf16.mxu0 0
      %3543 = vmatpush1.bf16.msra.mxu0 %v3116
      %3544 = vmatprep.subr.bf16.mxu0 0
      %3545 = vmatpush1.bf16.msra.mxu0 %v3117
      %3546 = vmatprep.subr.bf16.mxu0 0
      %3547 = vmatpush1.bf16.msra.mxu0 %v3118
      %3548 = vmatprep.subr.bf16.mxu0 0
      %3549 = vmatpush1.bf16.msra.mxu0 %v3119
      %3550 = vmatprep.subr.bf16.mxu0 0
      %3551 = vmatpush1.bf16.msra.mxu0 %v3120
      %3552 = vmatprep.subr.bf16.mxu0 0
      %3553 = vmatpush1.bf16.msra.mxu0 %v3121
      %3554 = vmatprep.subr.bf16.mxu0 0
      %3555 = vmatpush1.bf16.msra.mxu0 %v3122
      %3556 = vmatprep.subr.bf16.mxu0 0
      %3557 = vmatpush1.bf16.msra.mxu0 %v3123
      %3558 = vmatprep.subr.bf16.mxu0 0
      %3559 = vmatpush1.bf16.msra.mxu0 %v3124
      %3560 = vmatprep.subr.bf16.mxu0 0
      %3561 = vmatpush1.bf16.msra.mxu0 %v3125
      %3562 = vmatprep.subr.bf16.mxu0 0
      %3563 = vmatpush1.bf16.msra.mxu0 %v3126
      %3564 = vmatprep.subr.bf16.mxu0 0
      %3565 = vmatpush1.bf16.msra.mxu0 %v3127
      %3566 = vmatprep.subr.bf16.mxu0 0
      %3567 = vmatpush1.bf16.msra.mxu0 %v3128
      %3568 = vmatprep.subr.bf16.mxu0 0
      %3569 = vmatpush1.bf16.msra.mxu0 %v3129
      %3570 = vmatprep.mubr.bf16.mxu0 %v2226
      %3571 = vmatmul.mubr.bf16.gmra.mrb[0].mxu0 %v2225
      %v3572 = vpop.f32.mrb[0].mxu0
      %v3573 = vadd.f32 %v3533, %v3572
      %v3574 = vpop.f32.mrb[0].mxu0
      %v3575 = vpop.f32.mrb[0].mxu0
      %v3576 = vpop.f32.mrb[0].mxu0
      %3577 = vdwg.mxu0
      %v3578 = vadd.f32 %v1586, %v3573
      %v3579 = vsel %vm984, %v3578, 0.0
      %3580 = vadd.xlane.f32.xlu0 %v3579
      %v3581 = vpop.xlane.xlu0 %3580
      %v3582 = vmul.f32 %v3581, %v1560
      %v3583 = vsub.f32 %v3578, %v3582
      %v3584 = vmul.f32 %v3583, %v3583
      %v3585 = vsel %vm984, %v3584, 0.0
      %3586 = vadd.xlane.f32.xlu0 %v3585
      %v3587 = vpop.xlane.xlu0 %3586
      %v3588 = vmul.f32 %v3587, %v1560
      %v3589 = vadd.f32 %v3588, 1e-05
      %v3590 = vrsqrt.pop %v3589
      %v3591 = vmul.f32 %v3583, %v3590
      %v3592 = vld [vmem:[%s27] sm:$0x1]
      %v3594 = vlaneseq
      %v3595 = vshrl.u32 %v3594, 7
      %v3596 = vsub.s32 0, %v3595
      %v3597 = vrot.slane %v3592, %v3596
      %v3599 = vmul.f32 %v3591, %v3597
      %v3600 = vld [vmem:[%s29] sm:$0x1]
      %v3602 = vlaneseq
      %v3603 = vshrl.u32 %v3602, 7
      %v3604 = vsub.s32 0, %v3603
      %v3605 = vrot.slane %v3600, %v3604
      %v3607 = vadd.f32 %v3599, %v3605
      %v3608 = vpack.c.bf16 %v3607, %v3607
      %v3609 = vld [vmem:[%s31] sm:$0xf]
      %v3610 = vld [vmem:[%s31 + $0x4] sm:$0xf]
      %v3611 = vld [vmem:[%s31 + $0x8] sm:$0xf]
      %v3612 = vld [vmem:[%s31 + $0xc] sm:$0xf]
      %v3613 = vld [vmem:[%s33] sm:$0x1]
      %v3615 = vlaneseq
      %v3616 = vshrl.u32 %v3615, 7
      %v3617 = vsub.s32 0, %v3616
      %v3618 = vrot.slane %v3613, %v3617
      %v3624 = vunpack.c.l.b16 %v3609
      %v3625 = vunpack.c.l.b16 %v3610
      %v3626 = vunpack.c.l.b16 %v3611
      %v3627 = vunpack.c.l.b16 %v3612
      %v3628 = vpack.c.b16 %v3625, %v3624
      %v3629 = vpack.c.b16 %v3627, %v3626
      %v3633 = vsel %vm984, %v3608, 0
      %3635 = vmatprep.subr.bf16.mxu0 0
      %3636 = vmatpush1.bf16.msra.mxu0 %v3628
      %3637 = vmatprep.subr.bf16.mxu0 0
      %3638 = vmatpush1.bf16.msra.mxu0 %v3629
      %3639 = vmatprep.subr.bf16.mxu0 0
      %3640 = vmatpush1.bf16.msra.mxu0 0
      %3641 = vmatprep.subr.bf16.mxu0 0
      %3642 = vmatpush1.bf16.msra.mxu0 0
      %3643 = vmatprep.subr.bf16.mxu0 0
      %3644 = vmatpush1.bf16.msra.mxu0 0
      %3645 = vmatprep.subr.bf16.mxu0 0
      %3646 = vmatpush1.bf16.msra.mxu0 0
      %3647 = vmatprep.subr.bf16.mxu0 0
      %3648 = vmatpush1.bf16.msra.mxu0 0
      %3649 = vmatprep.subr.bf16.mxu0 0
      %3650 = vmatpush1.bf16.msra.mxu0 0
      %3651 = vmatprep.subr.bf16.mxu0 0
      %3652 = vmatpush1.bf16.msra.mxu0 0
      %3653 = vmatprep.subr.bf16.mxu0 0
      %3654 = vmatpush1.bf16.msra.mxu0 0
      %3655 = vmatprep.subr.bf16.mxu0 0
      %3656 = vmatpush1.bf16.msra.mxu0 0
      %3657 = vmatprep.subr.bf16.mxu0 0
      %3658 = vmatpush1.bf16.msra.mxu0 0
      %3659 = vmatprep.subr.bf16.mxu0 0
      %3660 = vmatpush1.bf16.msra.mxu0 0
      %3661 = vmatprep.subr.bf16.mxu0 0
      %3662 = vmatpush1.bf16.msra.mxu0 0
      %3663 = vmatprep.subr.bf16.mxu0 0
      %3664 = vmatpush1.bf16.msra.mxu0 0
      %3665 = vmatprep.subr.bf16.mxu0 0
      %3666 = vmatpush1.bf16.msra.mxu0 0
      %3667 = vmatprep.mubr.bf16.mxu0 0
      %3668 = vmatmul.mubr.bf16.gmra.mrb[0].mxu0 %v3633
      %v3669 = vpop.f32.mrb[0].mxu0
      %v3670 = vadd.f32 %v3618, %v3669
      %v3671 = vpop.f32.mrb[0].mxu0
      %v3672 = vpop.f32.mrb[0].mxu0
      %v3673 = vpop.f32.mrb[0].mxu0
      %3674 = vdwg.mxu0
      %v3675 = vmul.f32 %v3670, 0.35355338
      %v3676 = vpack.c.bf16 %v3675, %v3675
      %v3677 = vpack.c.bf16 %v3670, %v3670
      %3679 = vrot.lane.b32.xlu0 %v3677, 96
      %v3680 = vpop.permute.xlu0 %3679
      %v3682 = vsel %vm1034, %v3676, 0
      %v3685 = vsel %vm1034, %v3680, 0
      %3687 = vmatprep.subr.bf16.mxu0 0
      %3688 = vmatpush1.bf16.xpose.msra.mxu0 %v3685
      %3689 = vmatprep.subr.bf16.mxu0 0
      %3690 = vmatpush1.bf16.xpose.msra.mxu0 0
      %3691 = vmatprep.subr.bf16.mxu0 0
      %3692 = vmatpush1.bf16.xpose.msra.mxu0 0
      %3693 = vmatprep.subr.bf16.mxu0 0
      %3694 = vmatpush1.bf16.xpose.msra.mxu0 0
      %3695 = vmatprep.subr.bf16.mxu0 0
      %3696 = vmatpush1.bf16.xpose.msra.mxu0 0
      %3697 = vmatprep.subr.bf16.mxu0 0
      %3698 = vmatpush1.bf16.xpose.msra.mxu0 0
      %3699 = vmatprep.subr.bf16.mxu0 0
      %3700 = vmatpush1.bf16.xpose.msra.mxu0 0
      %3701 = vmatprep.subr.bf16.mxu0 0
      %3702 = vmatpush1.bf16.xpose.msra.mxu0 0
      %3703 = vmatprep.subr.bf16.mxu0 0
      %3704 = vmatpush1.bf16.xpose.msra.mxu0 0
      %3705 = vmatprep.subr.bf16.mxu0 0
      %3706 = vmatpush1.bf16.xpose.msra.mxu0 0
      %3707 = vmatprep.subr.bf16.mxu0 0
      %3708 = vmatpush1.bf16.xpose.msra.mxu0 0
      %3709 = vmatprep.subr.bf16.mxu0 0
      %3710 = vmatpush1.bf16.xpose.msra.mxu0 0
      %3711 = vmatprep.subr.bf16.mxu0 0
      %3712 = vmatpush1.bf16.xpose.msra.mxu0 0
      %3713 = vmatprep.subr.bf16.mxu0 0
      %3714 = vmatpush1.bf16.xpose.msra.mxu0 0
      %3715 = vmatprep.subr.bf16.mxu0 0
      %3716 = vmatpush1.bf16.xpose.msra.mxu0 0
      %3717 = vmatprep.subr.bf16.mxu0 0
      %3718 = vmatpush1.bf16.xpose.msra.mxu0 0
      %3719 = vmatprep.mubr.bf16.mxu0 0
      %3720 = vmatmul.mubr.bf16.gmra.mrb[0].mxu0 %v3682
      %v3721 = vpop.f32.mrb[0].mxu0
      %v3722 = vadd.f32 0.0, %v3721
      %v3723 = vpop.f32.mrb[0].mxu0
      %v3724 = vpop.f32.mrb[0].mxu0
      %v3725 = vpop.f32.mrb[0].mxu0
      %3726 = vdwg.mxu0
      %v3727 = vsel %vm1034, %v3722, -inf
      %3728 = vmax.xlane.f32.xlu0 %v3727
      %v3729 = vpop.xlane.xlu0 %3728
      %v3730 = vsub.f32 %v3722, %v3729
      %v3731 = vmul.f32 %v3730, 1.442695
      %v3732 = vpow.pop %v3731
      %v3733 = vsel %vm1034, %v3732, 0.0
      %3734 = vadd.xlane.f32.xlu0 %v3733
      %v3735 = vpop.xlane.xlu0 %3734
      %v3736 = vrcp.pop %v3735
      %v3737 = vmul.f32 %v3732, %v3736
      %v3738 = vpack.c.bf16 %v3737, %v3737
      %3739 = vrot.lane.b32.xlu0 %v3677, 64
      %v3740 = vpop.permute.xlu0 %3739
      %v3742 = vsel %vm1034, %v3738, 0
      %v3745 = vsel %vm1098, %v3740, 0
      %3747 = vmatprep.subr.bf16.mxu0 0
      %3748 = vmatpush1.bf16.msra.mxu0 %v3745
      %3749 = vmatprep.subr.bf16.mxu0 0
      %3750 = vmatpush1.bf16.msra.mxu0 0
      %3751 = vmatprep.subr.bf16.mxu0 0
      %3752 = vmatpush1.bf16.msra.mxu0 0
      %3753 = vmatprep.subr.bf16.mxu0 0
      %3754 = vmatpush1.bf16.msra.mxu0 0
      %3755 = vmatprep.subr.bf16.mxu0 0
      %3756 = vmatpush1.bf16.msra.mxu0 0
      %3757 = vmatprep.subr.bf16.mxu0 0
      %3758 = vmatpush1.bf16.msra.mxu0 0
      %3759 = vmatprep.subr.bf16.mxu0 0
      %3760 = vmatpush1.bf16.msra.mxu0 0
      %3761 = vmatprep.subr.bf16.mxu0 0
      %3762 = vmatpush1.bf16.msra.mxu0 0
      %3763 = vmatprep.subr.bf16.mxu0 0
      %3764 = vmatpush1.bf16.msra.mxu0 0
      %3765 = vmatprep.subr.bf16.mxu0 0
      %3766 = vmatpush1.bf16.msra.mxu0 0
      %3767 = vmatprep.subr.bf16.mxu0 0
      %3768 = vmatpush1.bf16.msra.mxu0 0
      %3769 = vmatprep.subr.bf16.mxu0 0
      %3770 = vmatpush1.bf16.msra.mxu0 0
      %3771 = vmatprep.subr.bf16.mxu0 0
      %3772 = vmatpush1.bf16.msra.mxu0 0
      %3773 = vmatprep.subr.bf16.mxu0 0
      %3774 = vmatpush1.bf16.msra.mxu0 0
      %3775 = vmatprep.subr.bf16.mxu0 0
      %3776 = vmatpush1.bf16.msra.mxu0 0
      %3777 = vmatprep.subr.bf16.mxu0 0
      %3778 = vmatpush1.bf16.msra.mxu0 0
      %3779 = vmatprep.mubr.bf16.mxu0 0
      %3780 = vmatmul.mubr.bf16.gmra.mrb[0].mxu0 %v3742
      %v3781 = vpop.f32.mrb[0].mxu0
      %v3782 = vadd.f32 0.0, %v3781
      %v3783 = vpop.f32.mrb[0].mxu0
      %v3784 = vpop.f32.mrb[0].mxu0
      %v3785 = vpop.f32.mrb[0].mxu0
      %3786 = vdwg.mxu0
      %3788 = vrot.lane.b32.xlu0 %v3676, 120
      %v3789 = vpop.permute.xlu0 %3788
      %3790 = vrot.lane.b32.xlu0 %v3677, 88
      %v3791 = vpop.permute.xlu0 %3790
      %v3793 = vsel %vm1034, %v3789, 0
      %v3796 = vsel %vm1034, %v3791, 0
      %3798 = vmatprep.subr.bf16.mxu0 0
      %3799 = vmatpush1.bf16.xpose.msra.mxu0 %v3796
      %3800 = vmatprep.subr.bf16.mxu0 0
      %3801 = vmatpush1.bf16.xpose.msra.mxu0 0
      %3802 = vmatprep.subr.bf16.mxu0 0
      %3803 = vmatpush1.bf16.xpose.msra.mxu0 0
      %3804 = vmatprep.subr.bf16.mxu0 0
      %3805 = vmatpush1.bf16.xpose.msra.mxu0 0
      %3806 = vmatprep.subr.bf16.mxu0 0
      %3807 = vmatpush1.bf16.xpose.msra.mxu0 0
      %3808 = vmatprep.subr.bf16.mxu0 0
      %3809 = vmatpush1.bf16.xpose.msra.mxu0 0
      %3810 = vmatprep.subr.bf16.mxu0 0
      %3811 = vmatpush1.bf16.xpose.msra.mxu0 0
      %3812 = vmatprep.subr.bf16.mxu0 0
      %3813 = vmatpush1.bf16.xpose.msra.mxu0 0
      %3814 = vmatprep.subr.bf16.mxu0 0
      %3815 = vmatpush1.bf16.xpose.msra.mxu0 0
      %3816 = vmatprep.subr.bf16.mxu0 0
      %3817 = vmatpush1.bf16.xpose.msra.mxu0 0
      %3818 = vmatprep.subr.bf16.mxu0 0
      %3819 = vmatpush1.bf16.xpose.msra.mxu0 0
      %3820 = vmatprep.subr.bf16.mxu0 0
      %3821 = vmatpush1.bf16.xpose.msra.mxu0 0
      %3822 = vmatprep.subr.bf16.mxu0 0
      %3823 = vmatpush1.bf16.xpose.msra.mxu0 0
      %3824 = vmatprep.subr.bf16.mxu0 0
      %3825 = vmatpush1.bf16.xpose.msra.mxu0 0
      %3826 = vmatprep.subr.bf16.mxu0 0
      %3827 = vmatpush1.bf16.xpose.msra.mxu0 0
      %3828 = vmatprep.subr.bf16.mxu0 0
      %3829 = vmatpush1.bf16.xpose.msra.mxu0 0
      %3830 = vmatprep.mubr.bf16.mxu0 0
      %3831 = vmatmul.mubr.bf16.gmra.mrb[0].mxu0 %v3793
      %v3832 = vpop.f32.mrb[0].mxu0
      %v3833 = vadd.f32 0.0, %v3832
      %v3834 = vpop.f32.mrb[0].mxu0
      %v3835 = vpop.f32.mrb[0].mxu0
      %v3836 = vpop.f32.mrb[0].mxu0
      %3837 = vdwg.mxu0
      %v3838 = vsel %vm1034, %v3833, -inf
      %3839 = vmax.xlane.f32.xlu0 %v3838
      %v3840 = vpop.xlane.xlu0 %3839
      %v3841 = vsub.f32 %v3833, %v3840
      %v3842 = vmul.f32 %v3841, 1.442695
      %v3843 = vpow.pop %v3842
      %v3844 = vsel %vm1034, %v3843, 0.0
      %3845 = vadd.xlane.f32.xlu0 %v3844
      %v3846 = vpop.xlane.xlu0 %3845
      %v3847 = vrcp.pop %v3846
      %v3848 = vmul.f32 %v3843, %v3847
      %v3849 = vpack.c.bf16 %v3848, %v3848
      %3850 = vrot.lane.b32.xlu0 %v3677, 56
      %v3851 = vpop.permute.xlu0 %3850
      %v3853 = vsel %vm1034, %v3849, 0
      %v3856 = vsel %vm1098, %v3851, 0
      %3858 = vmatprep.subr.bf16.mxu0 0
      %3859 = vmatpush1.bf16.msra.mxu0 %v3856
      %3860 = vmatprep.subr.bf16.mxu0 0
      %3861 = vmatpush1.bf16.msra.mxu0 0
      %3862 = vmatprep.subr.bf16.mxu0 0
      %3863 = vmatpush1.bf16.msra.mxu0 0
      %3864 = vmatprep.subr.bf16.mxu0 0
      %3865 = vmatpush1.bf16.msra.mxu0 0
      %3866 = vmatprep.subr.bf16.mxu0 0
      %3867 = vmatpush1.bf16.msra.mxu0 0
      %3868 = vmatprep.subr.bf16.mxu0 0
      %3869 = vmatpush1.bf16.msra.mxu0 0
      %3870 = vmatprep.subr.bf16.mxu0 0
      %3871 = vmatpush1.bf16.msra.mxu0 0
      %3872 = vmatprep.subr.bf16.mxu0 0
      %3873 = vmatpush1.bf16.msra.mxu0 0
      %3874 = vmatprep.subr.bf16.mxu0 0
      %3875 = vmatpush1.bf16.msra.mxu0 0
      %3876 = vmatprep.subr.bf16.mxu0 0
      %3877 = vmatpush1.bf16.msra.mxu0 0
      %3878 = vmatprep.subr.bf16.mxu0 0
      %3879 = vmatpush1.bf16.msra.mxu0 0
      %3880 = vmatprep.subr.bf16.mxu0 0
      %3881 = vmatpush1.bf16.msra.mxu0 0
      %3882 = vmatprep.subr.bf16.mxu0 0
      %3883 = vmatpush1.bf16.msra.mxu0 0
      %3884 = vmatprep.subr.bf16.mxu0 0
      %3885 = vmatpush1.bf16.msra.mxu0 0
      %3886 = vmatprep.subr.bf16.mxu0 0
      %3887 = vmatpush1.bf16.msra.mxu0 0
      %3888 = vmatprep.subr.bf16.mxu0 0
      %3889 = vmatpush1.bf16.msra.mxu0 0
      %3890 = vmatprep.mubr.bf16.mxu0 0
      %3891 = vmatmul.mubr.bf16.gmra.mrb[0].mxu0 %v3853
      %v3892 = vpop.f32.mrb[0].mxu0
      %v3893 = vadd.f32 0.0, %v3892
      %v3894 = vpop.f32.mrb[0].mxu0
      %v3895 = vpop.f32.mrb[0].mxu0
      %v3896 = vpop.f32.mrb[0].mxu0
      %3897 = vdwg.mxu0
      %3898 = vrot.lane.b32.xlu0 %v3676, 112
      %v3899 = vpop.permute.xlu0 %3898
      %3900 = vrot.lane.b32.xlu0 %v3677, 80
      %v3901 = vpop.permute.xlu0 %3900
      %v3903 = vsel %vm1034, %v3899, 0
      %v3906 = vsel %vm1034, %v3901, 0
      %3908 = vmatprep.subr.bf16.mxu0 0
      %3909 = vmatpush1.bf16.xpose.msra.mxu0 %v3906
      %3910 = vmatprep.subr.bf16.mxu0 0
      %3911 = vmatpush1.bf16.xpose.msra.mxu0 0
      %3912 = vmatprep.subr.bf16.mxu0 0
      %3913 = vmatpush1.bf16.xpose.msra.mxu0 0
      %3914 = vmatprep.subr.bf16.mxu0 0
      %3915 = vmatpush1.bf16.xpose.msra.mxu0 0
      %3916 = vmatprep.subr.bf16.mxu0 0
      %3917 = vmatpush1.bf16.xpose.msra.mxu0 0
      %3918 = vmatprep.subr.bf16.mxu0 0
      %3919 = vmatpush1.bf16.xpose.msra.mxu0 0
      %3920 = vmatprep.subr.bf16.mxu0 0
      %3921 = vmatpush1.bf16.xpose.msra.mxu0 0
      %3922 = vmatprep.subr.bf16.mxu0 0
      %3923 = vmatpush1.bf16.xpose.msra.mxu0 0
      %3924 = vmatprep.subr.bf16.mxu0 0
      %3925 = vmatpush1.bf16.xpose.msra.mxu0 0
      %3926 = vmatprep.subr.bf16.mxu0 0
      %3927 = vmatpush1.bf16.xpose.msra.mxu0 0
      %3928 = vmatprep.subr.bf16.mxu0 0
      %3929 = vmatpush1.bf16.xpose.msra.mxu0 0
      %3930 = vmatprep.subr.bf16.mxu0 0
      %3931 = vmatpush1.bf16.xpose.msra.mxu0 0
      %3932 = vmatprep.subr.bf16.mxu0 0
      %3933 = vmatpush1.bf16.xpose.msra.mxu0 0
      %3934 = vmatprep.subr.bf16.mxu0 0
      %3935 = vmatpush1.bf16.xpose.msra.mxu0 0
      %3936 = vmatprep.subr.bf16.mxu0 0
      %3937 = vmatpush1.bf16.xpose.msra.mxu0 0
      %3938 = vmatprep.subr.bf16.mxu0 0
      %3939 = vmatpush1.bf16.xpose.msra.mxu0 0
      %3940 = vmatprep.mubr.bf16.mxu0 0
      %3941 = vmatmul.mubr.bf16.gmra.mrb[0].mxu0 %v3903
      %v3942 = vpop.f32.mrb[0].mxu0
      %v3943 = vadd.f32 0.0, %v3942
      %v3944 = vpop.f32.mrb[0].mxu0
      %v3945 = vpop.f32.mrb[0].mxu0
      %v3946 = vpop.f32.mrb[0].mxu0
      %3947 = vdwg.mxu0
      %v3948 = vsel %vm1034, %v3943, -inf
      %3949 = vmax.xlane.f32.xlu0 %v3948
      %v3950 = vpop.xlane.xlu0 %3949
      %v3951 = vsub.f32 %v3943, %v3950
      %v3952 = vmul.f32 %v3951, 1.442695
      %v3953 = vpow.pop %v3952
      %v3954 = vsel %vm1034, %v3953, 0.0
      %3955 = vadd.xlane.f32.xlu0 %v3954
      %v3956 = vpop.xlane.xlu0 %3955
      %v3957 = vrcp.pop %v3956
      %v3958 = vmul.f32 %v3953, %v3957
      %v3959 = vpack.c.bf16 %v3958, %v3958
      %3960 = vrot.lane.b32.xlu0 %v3677, 48
      %v3961 = vpop.permute.xlu0 %3960
      %v3963 = vsel %vm1034, %v3959, 0
      %v3966 = vsel %vm1098, %v3961, 0
      %3968 = vmatprep.subr.bf16.mxu0 0
      %3969 = vmatpush1.bf16.msra.mxu0 %v3966
      %3970 = vmatprep.subr.bf16.mxu0 0
      %3971 = vmatpush1.bf16.msra.mxu0 0
      %3972 = vmatprep.subr.bf16.mxu0 0
      %3973 = vmatpush1.bf16.msra.mxu0 0
      %3974 = vmatprep.subr.bf16.mxu0 0
      %3975 = vmatpush1.bf16.msra.mxu0 0
      %3976 = vmatprep.subr.bf16.mxu0 0
      %3977 = vmatpush1.bf16.msra.mxu0 0
      %3978 = vmatprep.subr.bf16.mxu0 0
      %3979 = vmatpush1.bf16.msra.mxu0 0
      %3980 = vmatprep.subr.bf16.mxu0 0
      %3981 = vmatpush1.bf16.msra.mxu0 0
      %3982 = vmatprep.subr.bf16.mxu0 0
      %3983 = vmatpush1.bf16.msra.mxu0 0
      %3984 = vmatprep.subr.bf16.mxu0 0
      %3985 = vmatpush1.bf16.msra.mxu0 0
      %3986 = vmatprep.subr.bf16.mxu0 0
      %3987 = vmatpush1.bf16.msra.mxu0 0
      %3988 = vmatprep.subr.bf16.mxu0 0
      %3989 = vmatpush1.bf16.msra.mxu0 0
      %3990 = vmatprep.subr.bf16.mxu0 0
      %3991 = vmatpush1.bf16.msra.mxu0 0
      %3992 = vmatprep.subr.bf16.mxu0 0
      %3993 = vmatpush1.bf16.msra.mxu0 0
      %3994 = vmatprep.subr.bf16.mxu0 0
      %3995 = vmatpush1.bf16.msra.mxu0 0
      %3996 = vmatprep.subr.bf16.mxu0 0
      %3997 = vmatpush1.bf16.msra.mxu0 0
      %3998 = vmatprep.subr.bf16.mxu0 0
      %3999 = vmatpush1.bf16.msra.mxu0 0
      %4000 = vmatprep.mubr.bf16.mxu0 0
      %4001 = vmatmul.mubr.bf16.gmra.mrb[0].mxu0 %v3963
      %v4002 = vpop.f32.mrb[0].mxu0
      %v4003 = vadd.f32 0.0, %v4002
      %v4004 = vpop.f32.mrb[0].mxu0
      %v4005 = vpop.f32.mrb[0].mxu0
      %v4006 = vpop.f32.mrb[0].mxu0
      %4007 = vdwg.mxu0
      %4008 = vrot.lane.b32.xlu0 %v3676, 104
      %v4009 = vpop.permute.xlu0 %4008
      %4010 = vrot.lane.b32.xlu0 %v3677, 72
      %v4011 = vpop.permute.xlu0 %4010
      %v4013 = vsel %vm1034, %v4009, 0
      %v4016 = vsel %vm1034, %v4011, 0
      %4018 = vmatprep.subr.bf16.mxu0 0
      %4019 = vmatpush1.bf16.xpose.msra.mxu0 %v4016
      %4020 = vmatprep.subr.bf16.mxu0 0
      %4021 = vmatpush1.bf16.xpose.msra.mxu0 0
      %4022 = vmatprep.subr.bf16.mxu0 0
      %4023 = vmatpush1.bf16.xpose.msra.mxu0 0
      %4024 = vmatprep.subr.bf16.mxu0 0
      %4025 = vmatpush1.bf16.xpose.msra.mxu0 0
      %4026 = vmatprep.subr.bf16.mxu0 0
      %4027 = vmatpush1.bf16.xpose.msra.mxu0 0
      %4028 = vmatprep.subr.bf16.mxu0 0
      %4029 = vmatpush1.bf16.xpose.msra.mxu0 0
      %4030 = vmatprep.subr.bf16.mxu0 0
      %4031 = vmatpush1.bf16.xpose.msra.mxu0 0
      %4032 = vmatprep.subr.bf16.mxu0 0
      %4033 = vmatpush1.bf16.xpose.msra.mxu0 0
      %4034 = vmatprep.subr.bf16.mxu0 0
      %4035 = vmatpush1.bf16.xpose.msra.mxu0 0
      %4036 = vmatprep.subr.bf16.mxu0 0
      %4037 = vmatpush1.bf16.xpose.msra.mxu0 0
      %4038 = vmatprep.subr.bf16.mxu0 0
      %4039 = vmatpush1.bf16.xpose.msra.mxu0 0
      %4040 = vmatprep.subr.bf16.mxu0 0
      %4041 = vmatpush1.bf16.xpose.msra.mxu0 0
      %4042 = vmatprep.subr.bf16.mxu0 0
      %4043 = vmatpush1.bf16.xpose.msra.mxu0 0
      %4044 = vmatprep.subr.bf16.mxu0 0
      %4045 = vmatpush1.bf16.xpose.msra.mxu0 0
      %4046 = vmatprep.subr.bf16.mxu0 0
      %4047 = vmatpush1.bf16.xpose.msra.mxu0 0
      %4048 = vmatprep.subr.bf16.mxu0 0
      %4049 = vmatpush1.bf16.xpose.msra.mxu0 0
      %4050 = vmatprep.mubr.bf16.mxu0 0
      %4051 = vmatmul.mubr.bf16.gmra.mrb[0].mxu0 %v4013
      %v4052 = vpop.f32.mrb[0].mxu0
      %v4053 = vadd.f32 0.0, %v4052
      %v4054 = vpop.f32.mrb[0].mxu0
      %v4055 = vpop.f32.mrb[0].mxu0
      %v4056 = vpop.f32.mrb[0].mxu0
      %4057 = vdwg.mxu0
      %v4058 = vsel %vm1034, %v4053, -inf
      %4059 = vmax.xlane.f32.xlu0 %v4058
      %v4060 = vpop.xlane.xlu0 %4059
      %v4061 = vsub.f32 %v4053, %v4060
      %v4062 = vmul.f32 %v4061, 1.442695
      %v4063 = vpow.pop %v4062
      %v4064 = vsel %vm1034, %v4063, 0.0
      %4065 = vadd.xlane.f32.xlu0 %v4064
      %v4066 = vpop.xlane.xlu0 %4065
      %v4067 = vrcp.pop %v4066
      %v4068 = vmul.f32 %v4063, %v4067
      %v4069 = vpack.c.bf16 %v4068, %v4068
      %4070 = vrot.lane.b32.xlu0 %v3677, 40
      %v4071 = vpop.permute.xlu0 %4070
      %v4073 = vsel %vm1034, %v4069, 0
      %v4076 = vsel %vm1098, %v4071, 0
      %4078 = vmatprep.subr.bf16.mxu0 0
      %4079 = vmatpush1.bf16.msra.mxu0 %v4076
      %4080 = vmatprep.subr.bf16.mxu0 0
      %4081 = vmatpush1.bf16.msra.mxu0 0
      %4082 = vmatprep.subr.bf16.mxu0 0
      %4083 = vmatpush1.bf16.msra.mxu0 0
      %4084 = vmatprep.subr.bf16.mxu0 0
      %4085 = vmatpush1.bf16.msra.mxu0 0
      %4086 = vmatprep.subr.bf16.mxu0 0
      %4087 = vmatpush1.bf16.msra.mxu0 0
      %4088 = vmatprep.subr.bf16.mxu0 0
      %4089 = vmatpush1.bf16.msra.mxu0 0
      %4090 = vmatprep.subr.bf16.mxu0 0
      %4091 = vmatpush1.bf16.msra.mxu0 0
      %4092 = vmatprep.subr.bf16.mxu0 0
      %4093 = vmatpush1.bf16.msra.mxu0 0
      %4094 = vmatprep.subr.bf16.mxu0 0
      %4095 = vmatpush1.bf16.msra.mxu0 0
      %4096 = vmatprep.subr.bf16.mxu0 0
      %4097 = vmatpush1.bf16.msra.mxu0 0
      %4098 = vmatprep.subr.bf16.mxu0 0
      %4099 = vmatpush1.bf16.msra.mxu0 0
      %4100 = vmatprep.subr.bf16.mxu0 0
      %4101 = vmatpush1.bf16.msra.mxu0 0
      %4102 = vmatprep.subr.bf16.mxu0 0
      %4103 = vmatpush1.bf16.msra.mxu0 0
      %4104 = vmatprep.subr.bf16.mxu0 0
      %4105 = vmatpush1.bf16.msra.mxu0 0
      %4106 = vmatprep.subr.bf16.mxu0 0
      %4107 = vmatpush1.bf16.msra.mxu0 0
      %4108 = vmatprep.subr.bf16.mxu0 0
      %4109 = vmatpush1.bf16.msra.mxu0 0
      %4110 = vmatprep.mubr.bf16.mxu0 0
      %4111 = vmatmul.mubr.bf16.gmra.mrb[0].mxu0 %v4073
      %v4112 = vpop.f32.mrb[0].mxu0
      %v4113 = vadd.f32 0.0, %v4112
      %v4114 = vpop.f32.mrb[0].mxu0
      %v4115 = vpop.f32.mrb[0].mxu0
      %v4116 = vpop.f32.mrb[0].mxu0
      %4117 = vdwg.mxu0
      %4119 = vrot.lane.b32.xlu0 %v3893, 8
      %v4120 = vpop.permute.xlu0 %4119
      %4123 = vrot.lane.b32.xlu0 %v4003, 16
      %v4124 = vpop.permute.xlu0 %4123
      %4127 = vrot.lane.b32.xlu0 %v4113, 24
      %v4128 = vpop.permute.xlu0 %4127
      %v4130 = vsel %vm1034, %v3782, %v4120
      %v4131 = vsel %vm916, %v4130, %v4124
      %v4132 = vsel %vm1487, %v4131, %v4128
      %v4133 = vpack.c.bf16 %v4132, %v4132
      %v4134 = vld [vmem:[%s35] sm:$0xf]
      %v4135 = vld [vmem:[%s35 + $0x4] sm:$0xf]
      %v4136 = vld [vmem:[%s35 + $0x8] sm:$0xf]
      %v4137 = vld [vmem:[%s35 + $0xc] sm:$0xf]
      %v4138 = vld [vmem:[%s37] sm:$0x1]
      %v4140 = vlaneseq
      %v4141 = vshrl.u32 %v4140, 7
      %v4142 = vsub.s32 0, %v4141
      %v4143 = vrot.slane %v4138, %v4142
      %v4149 = vunpack.c.l.b16 %v4134
      %v4150 = vunpack.c.l.b16 %v4135
      %v4151 = vunpack.c.l.b16 %v4136
      %v4152 = vunpack.c.l.b16 %v4137
      %v4153 = vpack.c.b16 %v4150, %v4149
      %v4154 = vpack.c.b16 %v4152, %v4151
      %v4158 = vsel %vm984, %v4133, 0
      %4160 = vmatprep.subr.bf16.mxu0 0
      %4161 = vmatpush1.bf16.msra.mxu0 %v4153
      %4162 = vmatprep.subr.bf16.mxu0 0
      %4163 = vmatpush1.bf16.msra.mxu0 %v4154
      %4164 = vmatprep.subr.bf16.mxu0 0
      %4165 = vmatpush1.bf16.msra.mxu0 0
      %4166 = vmatprep.subr.bf16.mxu0 0
      %4167 = vmatpush1.bf16.msra.mxu0 0
      %4168 = vmatprep.subr.bf16.mxu0 0
      %4169 = vmatpush1.bf16.msra.mxu0 0
      %4170 = vmatprep.subr.bf16.mxu0 0
      %4171 = vmatpush1.bf16.msra.mxu0 0
      %4172 = vmatprep.subr.bf16.mxu0 0
      %4173 = vmatpush1.bf16.msra.mxu0 0
      %4174 = vmatprep.subr.bf16.mxu0 0
      %4175 = vmatpush1.bf16.msra.mxu0 0
      %4176 = vmatprep.subr.bf16.mxu0 0
      %4177 = vmatpush1.bf16.msra.mxu0 0
      %4178 = vmatprep.subr.bf16.mxu0 0
      %4179 = vmatpush1.bf16.msra.mxu0 0
      %4180 = vmatprep.subr.bf16.mxu0 0
      %4181 = vmatpush1.bf16.msra.mxu0 0
      %4182 = vmatprep.subr.bf16.mxu0 0
      %4183 = vmatpush1.bf16.msra.mxu0 0
      %4184 = vmatprep.subr.bf16.mxu0 0
      %4185 = vmatpush1.bf16.msra.mxu0 0
      %4186 = vmatprep.subr.bf16.mxu0 0
      %4187 = vmatpush1.bf16.msra.mxu0 0
      %4188 = vmatprep.subr.bf16.mxu0 0
      %4189 = vmatpush1.bf16.msra.mxu0 0
      %4190 = vmatprep.subr.bf16.mxu0 0
      %4191 = vmatpush1.bf16.msra.mxu0 0
      %4192 = vmatprep.mubr.bf16.mxu0 0
      %4193 = vmatmul.mubr.bf16.gmra.mrb[0].mxu0 %v4158
      %v4194 = vpop.f32.mrb[0].mxu0
      %v4195 = vadd.f32 %v4143, %v4194
      %v4196 = vpop.f32.mrb[0].mxu0
      %v4197 = vpop.f32.mrb[0].mxu0
      %v4198 = vpop.f32.mrb[0].mxu0
      %4199 = vdwg.mxu0
      %v4200 = vadd.f32 %v3607, %v4195
      %v4201 = vsel %vm984, %v4200, 0.0
      %4202 = vadd.xlane.f32.xlu0 %v4201
      %v4203 = vpop.xlane.xlu0 %4202
      %v4204 = vmul.f32 %v4203, %v1560
      %v4205 = vsub.f32 %v4200, %v4204
      %v4206 = vmul.f32 %v4205, %v4205
      %v4207 = vsel %vm984, %v4206, 0.0
      %4208 = vadd.xlane.f32.xlu0 %v4207
      %v4209 = vpop.xlane.xlu0 %4208
      %v4210 = vmul.f32 %v4209, %v1560
      %v4211 = vadd.f32 %v4210, 1e-05
      %v4212 = vrsqrt.pop %v4211
      %v4213 = vmul.f32 %v4205, %v4212
      %v4214 = vld [vmem:[%s39] sm:$0x1]
      %v4216 = vlaneseq
      %v4217 = vshrl.u32 %v4216, 7
      %v4218 = vsub.s32 0, %v4217
      %v4219 = vrot.slane %v4214, %v4218
      %v4221 = vmul.f32 %v4213, %v4219
      %v4222 = vld [vmem:[%s41] sm:$0x1]
      %v4224 = vlaneseq
      %v4225 = vshrl.u32 %v4224, 7
      %v4226 = vsub.s32 0, %v4225
      %v4227 = vrot.slane %v4222, %v4226
      %v4229 = vadd.f32 %v4221, %v4227
      %v4230 = vpack.c.bf16 %v4229, %v4229
      %v4231 = vld [vmem:[%s43] sm:$0xff]
      %v4232 = vld [vmem:[%s43 + $0x8] sm:$0xff]
      %v4233 = vld [vmem:[%s43 + $0x10] sm:$0xff]
      %v4234 = vld [vmem:[%s43 + $0x18] sm:$0xff]
      %v4235 = vld [vmem:[%s43 + $0x20] sm:$0xff]
      %v4236 = vld [vmem:[%s43 + $0x28] sm:$0xff]
      %v4237 = vld [vmem:[%s43 + $0x30] sm:$0xff]
      %v4238 = vld [vmem:[%s43 + $0x38] sm:$0xff]
      %v4239 = vld [vmem:[%s43 + $0x40] sm:$0xff]
      %v4240 = vld [vmem:[%s43 + $0x48] sm:$0xff]
      %v4241 = vld [vmem:[%s43 + $0x50] sm:$0xff]
      %v4242 = vld [vmem:[%s43 + $0x58] sm:$0xff]
      %v4243 = vld [vmem:[%s43 + $0x60] sm:$0xff]
      %v4244 = vld [vmem:[%s43 + $0x68] sm:$0xff]
      %v4245 = vld [vmem:[%s43 + $0x70] sm:$0xff]
      %v4246 = vld [vmem:[%s43 + $0x78] sm:$0xff]
      %v4247 = vld [vmem:[%s43 + $0x80] sm:$0xff]
      %v4248 = vld [vmem:[%s43 + $0x88] sm:$0xff]
      %v4249 = vld [vmem:[%s43 + $0x90] sm:$0xff]
      %v4250 = vld [vmem:[%s43 + $0x98] sm:$0xff]
      %v4251 = vld [vmem:[%s43 + $0xa0] sm:$0xff]
      %v4252 = vld [vmem:[%s43 + $0xa8] sm:$0xff]
      %v4253 = vld [vmem:[%s43 + $0xb0] sm:$0xff]
      %v4254 = vld [vmem:[%s43 + $0xb8] sm:$0xff]
      %v4255 = vld [vmem:[%s43 + $0xc0] sm:$0xff]
      %v4256 = vld [vmem:[%s43 + $0xc8] sm:$0xff]
      %v4257 = vld [vmem:[%s43 + $0xd0] sm:$0xff]
      %v4258 = vld [vmem:[%s43 + $0xd8] sm:$0xff]
      %v4259 = vld [vmem:[%s43 + $0xe0] sm:$0xff]
      %v4260 = vld [vmem:[%s43 + $0xe8] sm:$0xff]
      %v4261 = vld [vmem:[%s43 + $0xf0] sm:$0xff]
      %v4262 = vld [vmem:[%s43 + $0xf8] sm:$0xff]
      %v4263 = vld [vmem:[%s45] sm:$0xff]
      %v4264 = vld [vmem:[%s45 + $0x8] sm:$0xff]
      %v4267 = vlaneseq
      %v4268 = vshrl.u32 %v4267, 7
      %v4269 = vsub.s32 0, %v4268
      %v4270 = vrot.slane %v4263, %v4269
      %v4271 = vlaneseq
      %v4272 = vshrl.u32 %v4271, 7
      %v4273 = vsub.s32 1, %v4272
      %v4274 = vrot.slane %v4263, %v4273
      %v4275 = vlaneseq
      %v4276 = vshrl.u32 %v4275, 7
      %v4277 = vsub.s32 2, %v4276
      %v4278 = vrot.slane %v4263, %v4277
      %v4279 = vlaneseq
      %v4280 = vshrl.u32 %v4279, 7
      %v4281 = vsub.s32 3, %v4280
      %v4282 = vrot.slane %v4263, %v4281
      %v4283 = vlaneseq
      %v4284 = vshrl.u32 %v4283, 7
      %v4285 = vsub.s32 4, %v4284
      %v4286 = vrot.slane %v4263, %v4285
      %v4287 = vlaneseq
      %v4288 = vshrl.u32 %v4287, 7
      %v4289 = vsub.s32 5, %v4288
      %v4290 = vrot.slane %v4263, %v4289
      %v4291 = vlaneseq
      %v4292 = vshrl.u32 %v4291, 7
      %v4293 = vsub.s32 6, %v4292
      %v4294 = vrot.slane %v4263, %v4293
      %v4295 = vlaneseq
      %v4296 = vshrl.u32 %v4295, 7
      %v4297 = vsub.s32 7, %v4296
      %v4298 = vrot.slane %v4263, %v4297
      %v4299 = vlaneseq
      %v4300 = vshrl.u32 %v4299, 7
      %v4301 = vsub.s32 0, %v4300
      %v4302 = vrot.slane %v4264, %v4301
      %v4303 = vlaneseq
      %v4304 = vshrl.u32 %v4303, 7
      %v4305 = vsub.s32 1, %v4304
      %v4306 = vrot.slane %v4264, %v4305
      %v4307 = vlaneseq
      %v4308 = vshrl.u32 %v4307, 7
      %v4309 = vsub.s32 2, %v4308
      %v4310 = vrot.slane %v4264, %v4309
      %v4311 = vlaneseq
      %v4312 = vshrl.u32 %v4311, 7
      %v4313 = vsub.s32 3, %v4312
      %v4314 = vrot.slane %v4264, %v4313
      %v4315 = vlaneseq
      %v4316 = vshrl.u32 %v4315, 7
      %v4317 = vsub.s32 4, %v4316
      %v4318 = vrot.slane %v4264, %v4317
      %v4319 = vlaneseq
      %v4320 = vshrl.u32 %v4319, 7
      %v4321 = vsub.s32 5, %v4320
      %v4322 = vrot.slane %v4264, %v4321
      %v4323 = vlaneseq
      %v4324 = vshrl.u32 %v4323, 7
      %v4325 = vsub.s32 6, %v4324
      %v4326 = vrot.slane %v4264, %v4325
      %v4327 = vlaneseq
      %v4328 = vshrl.u32 %v4327, 7
      %v4329 = vsub.s32 7, %v4328
      %v4330 = vrot.slane %v4264, %v4329
      %v4379 = vunpack.c.l.b16 %v4231
      %v4380 = vunpack.c.h.b16 %v4231
      %v4381 = vunpack.c.l.b16 %v4232
      %v4382 = vunpack.c.h.b16 %v4232
      %v4383 = vunpack.c.l.b16 %v4233
      %v4384 = vunpack.c.h.b16 %v4233
      %v4385 = vunpack.c.l.b16 %v4234
      %v4386 = vunpack.c.h.b16 %v4234
      %v4387 = vunpack.c.l.b16 %v4235
      %v4388 = vunpack.c.h.b16 %v4235
      %v4389 = vunpack.c.l.b16 %v4236
      %v4390 = vunpack.c.h.b16 %v4236
      %v4391 = vunpack.c.l.b16 %v4237
      %v4392 = vunpack.c.h.b16 %v4237
      %v4393 = vunpack.c.l.b16 %v4238
      %v4394 = vunpack.c.h.b16 %v4238
      %v4395 = vunpack.c.l.b16 %v4239
      %v4396 = vunpack.c.h.b16 %v4239
      %v4397 = vunpack.c.l.b16 %v4240
      %v4398 = vunpack.c.h.b16 %v4240
      %v4399 = vunpack.c.l.b16 %v4241
      %v4400 = vunpack.c.h.b16 %v4241
      %v4401 = vunpack.c.l.b16 %v4242
      %v4402 = vunpack.c.h.b16 %v4242
      %v4403 = vunpack.c.l.b16 %v4243
      %v4404 = vunpack.c.h.b16 %v4243
      %v4405 = vunpack.c.l.b16 %v4244
      %v4406 = vunpack.c.h.b16 %v4244
      %v4407 = vunpack.c.l.b16 %v4245
      %v4408 = vunpack.c.h.b16 %v4245
      %v4409 = vunpack.c.l.b16 %v4246
      %v4410 = vunpack.c.h.b16 %v4246
      %v4411 = vunpack.c.l.b16 %v4247
      %v4412 = vunpack.c.h.b16 %v4247
      %v4413 = vunpack.c.l.b16 %v4248
      %v4414 = vunpack.c.h.b16 %v4248
      %v4415 = vunpack.c.l.b16 %v4249
      %v4416 = vunpack.c.h.b16 %v4249
      %v4417 = vunpack.c.l.b16 %v4250
      %v4418 = vunpack.c.h.b16 %v4250
      %v4419 = vunpack.c.l.b16 %v4251
      %v4420 = vunpack.c.h.b16 %v4251
      %v4421 = vunpack.c.l.b16 %v4252
      %v4422 = vunpack.c.h.b16 %v4252
      %v4423 = vunpack.c.l.b16 %v4253
      %v4424 = vunpack.c.h.b16 %v4253
      %v4425 = vunpack.c.l.b16 %v4254
      %v4426 = vunpack.c.h.b16 %v4254
      %v4427 = vunpack.c.l.b16 %v4255
      %v4428 = vunpack.c.h.b16 %v4255
      %v4429 = vunpack.c.l.b16 %v4256
      %v4430 = vunpack.c.h.b16 %v4256
      %v4431 = vunpack.c.l.b16 %v4257
      %v4432 = vunpack.c.h.b16 %v4257
      %v4433 = vunpack.c.l.b16 %v4258
      %v4434 = vunpack.c.h.b16 %v4258
      %v4435 = vunpack.c.l.b16 %v4259
      %v4436 = vunpack.c.h.b16 %v4259
      %v4437 = vunpack.c.l.b16 %v4260
      %v4438 = vunpack.c.h.b16 %v4260
      %v4439 = vunpack.c.l.b16 %v4261
      %v4440 = vunpack.c.h.b16 %v4261
      %v4441 = vunpack.c.l.b16 %v4262
      %v4442 = vunpack.c.h.b16 %v4262
      %v4443 = vpack.c.b16 %v4395, %v4379
      %v4444 = vpack.c.b16 %v4396, %v4380
      %v4445 = vpack.c.b16 %v4397, %v4381
      %v4446 = vpack.c.b16 %v4398, %v4382
      %v4447 = vpack.c.b16 %v4399, %v4383
      %v4448 = vpack.c.b16 %v4400, %v4384
      %v4449 = vpack.c.b16 %v4401, %v4385
      %v4450 = vpack.c.b16 %v4402, %v4386
      %v4451 = vpack.c.b16 %v4403, %v4387
      %v4452 = vpack.c.b16 %v4404, %v4388
      %v4453 = vpack.c.b16 %v4405, %v4389
      %v4454 = vpack.c.b16 %v4406, %v4390
      %v4455 = vpack.c.b16 %v4407, %v4391
      %v4456 = vpack.c.b16 %v4408, %v4392
      %v4457 = vpack.c.b16 %v4409, %v4393
      %v4458 = vpack.c.b16 %v4410, %v4394
      %v4459 = vpack.c.b16 %v4427, %v4411
      %v4460 = vpack.c.b16 %v4428, %v4412
      %v4461 = vpack.c.b16 %v4429, %v4413
      %v4462 = vpack.c.b16 %v4430, %v4414
      %v4463 = vpack.c.b16 %v4431, %v4415
      %v4464 = vpack.c.b16 %v4432, %v4416
      %v4465 = vpack.c.b16 %v4433, %v4417
      %v4466 = vpack.c.b16 %v4434, %v4418
      %v4467 = vpack.c.b16 %v4435, %v4419
      %v4468 = vpack.c.b16 %v4436, %v4420
      %v4469 = vpack.c.b16 %v4437, %v4421
      %v4470 = vpack.c.b16 %v4438, %v4422
      %v4471 = vpack.c.b16 %v4439, %v4423
      %v4472 = vpack.c.b16 %v4440, %v4424
      %v4473 = vpack.c.b16 %v4441, %v4425
      %v4474 = vpack.c.b16 %v4442, %v4426
      %v4508 = vsel %vm984, %v4230, 0
      %4510 = vmatprep.subr.bf16.mxu0 %v4444
      %4511 = vmatpush1.bf16.msra.mxu0 %v4443
      %4512 = vmatprep.subr.bf16.mxu0 %v4460
      %4513 = vmatpush1.bf16.msra.mxu0 %v4459
      %4514 = vmatprep.subr.bf16.mxu0 0
      %4515 = vmatpush1.bf16.msra.mxu0 0
      %4516 = vmatprep.subr.bf16.mxu0 0
      %4517 = vmatpush1.bf16.msra.mxu0 0
      %4518 = vmatprep.subr.bf16.mxu0 0
      %4519 = vmatpush1.bf16.msra.mxu0 0
      %4520 = vmatprep.subr.bf16.mxu0 0
      %4521 = vmatpush1.bf16.msra.mxu0 0
      %4522 = vmatprep.subr.bf16.mxu0 0
      %4523 = vmatpush1.bf16.msra.mxu0 0
      %4524 = vmatprep.subr.bf16.mxu0 0
      %4525 = vmatpush1.bf16.msra.mxu0 0
      %4526 = vmatprep.subr.bf16.mxu0 0
      %4527 = vmatpush1.bf16.msra.mxu0 0
      %4528 = vmatprep.subr.bf16.mxu0 0
      %4529 = vmatpush1.bf16.msra.mxu0 0
      %4530 = vmatprep.subr.bf16.mxu0 0
      %4531 = vmatpush1.bf16.msra.mxu0 0
      %4532 = vmatprep.subr.bf16.mxu0 0
      %4533 = vmatpush1.bf16.msra.mxu0 0
      %4534 = vmatprep.subr.bf16.mxu0 0
      %4535 = vmatpush1.bf16.msra.mxu0 0
      %4536 = vmatprep.subr.bf16.mxu0 0
      %4537 = vmatpush1.bf16.msra.mxu0 0
      %4538 = vmatprep.subr.bf16.mxu0 0
      %4539 = vmatpush1.bf16.msra.mxu0 0
      %4540 = vmatprep.subr.bf16.mxu0 0
      %4541 = vmatpush1.bf16.msra.mxu0 0
      %4542 = vmatprep.mubr.bf16.mxu0 0
      %4543 = vmatmul.mubr.bf16.gmra.mrb[0].mxu0 %v4508
      %v4544 = vpop.f32.mrb[0].mxu0
      %v4545 = vadd.f32 %v4270, %v4544
      %v4546 = vpop.f32.mrb[0].mxu0
      %v4547 = vadd.f32 %v4274, %v4546
      %v4548 = vpop.f32.mrb[0].mxu0
      %v4549 = vpop.f32.mrb[0].mxu0
      %4550 = vdwg.mxu0
      %4551 = vmatprep.subr.bf16.mxu0 %v4446
      %4552 = vmatpush1.bf16.msra.mxu0 %v4445
      %4553 = vmatprep.subr.bf16.mxu0 %v4462
      %4554 = vmatpush1.bf16.msra.mxu0 %v4461
      %4555 = vmatprep.subr.bf16.mxu0 0
      %4556 = vmatpush1.bf16.msra.mxu0 0
      %4557 = vmatprep.subr.bf16.mxu0 0
      %4558 = vmatpush1.bf16.msra.mxu0 0
      %4559 = vmatprep.subr.bf16.mxu0 0
      %4560 = vmatpush1.bf16.msra.mxu0 0
      %4561 = vmatprep.subr.bf16.mxu0 0
      %4562 = vmatpush1.bf16.msra.mxu0 0
      %4563 = vmatprep.subr.bf16.mxu0 0
      %4564 = vmatpush1.bf16.msra.mxu0 0
      %4565 = vmatprep.subr.bf16.mxu0 0
      %4566 = vmatpush1.bf16.msra.mxu0 0
      %4567 = vmatprep.subr.bf16.mxu0 0
      %4568 = vmatpush1.bf16.msra.mxu0 0
      %4569 = vmatprep.subr.bf16.mxu0 0
      %4570 = vmatpush1.bf16.msra.mxu0 0
      %4571 = vmatprep.subr.bf16.mxu0 0
      %4572 = vmatpush1.bf16.msra.mxu0 0
      %4573 = vmatprep.subr.bf16.mxu0 0
      %4574 = vmatpush1.bf16.msra.mxu0 0
      %4575 = vmatprep.subr.bf16.mxu0 0
      %4576 = vmatpush1.bf16.msra.mxu0 0
      %4577 = vmatprep.subr.bf16.mxu0 0
      %4578 = vmatpush1.bf16.msra.mxu0 0
      %4579 = vmatprep.subr.bf16.mxu0 0
      %4580 = vmatpush1.bf16.msra.mxu0 0
      %4581 = vmatprep.subr.bf16.mxu0 0
      %4582 = vmatpush1.bf16.msra.mxu0 0
      %4583 = vmatprep.mubr.bf16.mxu0 0
      %4584 = vmatmul.mubr.bf16.gmra.mrb[0].mxu0 %v4508
      %v4585 = vpop.f32.mrb[0].mxu0
      %v4586 = vadd.f32 %v4278, %v4585
      %v4587 = vpop.f32.mrb[0].mxu0
      %v4588 = vadd.f32 %v4282, %v4587
      %v4589 = vpop.f32.mrb[0].mxu0
      %v4590 = vpop.f32.mrb[0].mxu0
      %4591 = vdwg.mxu0
      %4592 = vmatprep.subr.bf16.mxu0 %v4448
      %4593 = vmatpush1.bf16.msra.mxu0 %v4447
      %4594 = vmatprep.subr.bf16.mxu0 %v4464
      %4595 = vmatpush1.bf16.msra.mxu0 %v4463
      %4596 = vmatprep.subr.bf16.mxu0 0
      %4597 = vmatpush1.bf16.msra.mxu0 0
      %4598 = vmatprep.subr.bf16.mxu0 0
      %4599 = vmatpush1.bf16.msra.mxu0 0
      %4600 = vmatprep.subr.bf16.mxu0 0
      %4601 = vmatpush1.bf16.msra.mxu0 0
      %4602 = vmatprep.subr.bf16.mxu0 0
      %4603 = vmatpush1.bf16.msra.mxu0 0
      %4604 = vmatprep.subr.bf16.mxu0 0
      %4605 = vmatpush1.bf16.msra.mxu0 0
      %4606 = vmatprep.subr.bf16.mxu0 0
      %4607 = vmatpush1.bf16.msra.mxu0 0
      %4608 = vmatprep.subr.bf16.mxu0 0
      %4609 = vmatpush1.bf16.msra.mxu0 0
      %4610 = vmatprep.subr.bf16.mxu0 0
      %4611 = vmatpush1.bf16.msra.mxu0 0
      %4612 = vmatprep.subr.bf16.mxu0 0
      %4613 = vmatpush1.bf16.msra.mxu0 0
      %4614 = vmatprep.subr.bf16.mxu0 0
      %4615 = vmatpush1.bf16.msra.mxu0 0
      %4616 = vmatprep.subr.bf16.mxu0 0
      %4617 = vmatpush1.bf16.msra.mxu0 0
      %4618 = vmatprep.subr.bf16.mxu0 0
      %4619 = vmatpush1.bf16.msra.mxu0 0
      %4620 = vmatprep.subr.bf16.mxu0 0
      %4621 = vmatpush1.bf16.msra.mxu0 0
      %4622 = vmatprep.subr.bf16.mxu0 0
      %4623 = vmatpush1.bf16.msra.mxu0 0
      %4624 = vmatprep.mubr.bf16.mxu0 0
      %4625 = vmatmul.mubr.bf16.gmra.mrb[0].mxu0 %v4508
      %v4626 = vpop.f32.mrb[0].mxu0
      %v4627 = vadd.f32 %v4286, %v4626
      %v4628 = vpop.f32.mrb[0].mxu0
      %v4629 = vadd.f32 %v4290, %v4628
      %v4630 = vpop.f32.mrb[0].mxu0
      %v4631 = vpop.f32.mrb[0].mxu0
      %4632 = vdwg.mxu0
      %4633 = vmatprep.subr.bf16.mxu0 %v4450
      %4634 = vmatpush1.bf16.msra.mxu0 %v4449
      %4635 = vmatprep.subr.bf16.mxu0 %v4466
      %4636 = vmatpush1.bf16.msra.mxu0 %v4465
      %4637 = vmatprep.subr.bf16.mxu0 0
      %4638 = vmatpush1.bf16.msra.mxu0 0
      %4639 = vmatprep.subr.bf16.mxu0 0
      %4640 = vmatpush1.bf16.msra.mxu0 0
      %4641 = vmatprep.subr.bf16.mxu0 0
      %4642 = vmatpush1.bf16.msra.mxu0 0
      %4643 = vmatprep.subr.bf16.mxu0 0
      %4644 = vmatpush1.bf16.msra.mxu0 0
      %4645 = vmatprep.subr.bf16.mxu0 0
      %4646 = vmatpush1.bf16.msra.mxu0 0
      %4647 = vmatprep.subr.bf16.mxu0 0
      %4648 = vmatpush1.bf16.msra.mxu0 0
      %4649 = vmatprep.subr.bf16.mxu0 0
      %4650 = vmatpush1.bf16.msra.mxu0 0
      %4651 = vmatprep.subr.bf16.mxu0 0
      %4652 = vmatpush1.bf16.msra.mxu0 0
      %4653 = vmatprep.subr.bf16.mxu0 0
      %4654 = vmatpush1.bf16.msra.mxu0 0
      %4655 = vmatprep.subr.bf16.mxu0 0
      %4656 = vmatpush1.bf16.msra.mxu0 0
      %4657 = vmatprep.subr.bf16.mxu0 0
      %4658 = vmatpush1.bf16.msra.mxu0 0
      %4659 = vmatprep.subr.bf16.mxu0 0
      %4660 = vmatpush1.bf16.msra.mxu0 0
      %4661 = vmatprep.subr.bf16.mxu0 0
      %4662 = vmatpush1.bf16.msra.mxu0 0
      %4663 = vmatprep.subr.bf16.mxu0 0
      %4664 = vmatpush1.bf16.msra.mxu0 0
      %4665 = vmatprep.mubr.bf16.mxu0 0
      %4666 = vmatmul.mubr.bf16.gmra.mrb[0].mxu0 %v4508
      %v4667 = vpop.f32.mrb[0].mxu0
      %v4668 = vadd.f32 %v4294, %v4667
      %v4669 = vpop.f32.mrb[0].mxu0
      %v4670 = vadd.f32 %v4298, %v4669
      %v4671 = vpop.f32.mrb[0].mxu0
      %v4672 = vpop.f32.mrb[0].mxu0
      %4673 = vdwg.mxu0
      %4674 = vmatprep.subr.bf16.mxu0 %v4452
      %4675 = vmatpush1.bf16.msra.mxu0 %v4451
      %4676 = vmatprep.subr.bf16.mxu0 %v4468
      %4677 = vmatpush1.bf16.msra.mxu0 %v4467
      %4678 = vmatprep.subr.bf16.mxu0 0
      %4679 = vmatpush1.bf16.msra.mxu0 0
      %4680 = vmatprep.subr.bf16.mxu0 0
      %4681 = vmatpush1.bf16.msra.mxu0 0
      %4682 = vmatprep.subr.bf16.mxu0 0
      %4683 = vmatpush1.bf16.msra.mxu0 0
      %4684 = vmatprep.subr.bf16.mxu0 0
      %4685 = vmatpush1.bf16.msra.mxu0 0
      %4686 = vmatprep.subr.bf16.mxu0 0
      %4687 = vmatpush1.bf16.msra.mxu0 0
      %4688 = vmatprep.subr.bf16.mxu0 0
      %4689 = vmatpush1.bf16.msra.mxu0 0
      %4690 = vmatprep.subr.bf16.mxu0 0
      %4691 = vmatpush1.bf16.msra.mxu0 0
      %4692 = vmatprep.subr.bf16.mxu0 0
      %4693 = vmatpush1.bf16.msra.mxu0 0
      %4694 = vmatprep.subr.bf16.mxu0 0
      %4695 = vmatpush1.bf16.msra.mxu0 0
      %4696 = vmatprep.subr.bf16.mxu0 0
      %4697 = vmatpush1.bf16.msra.mxu0 0
      %4698 = vmatprep.subr.bf16.mxu0 0
      %4699 = vmatpush1.bf16.msra.mxu0 0
      %4700 = vmatprep.subr.bf16.mxu0 0
      %4701 = vmatpush1.bf16.msra.mxu0 0
      %4702 = vmatprep.subr.bf16.mxu0 0
      %4703 = vmatpush1.bf16.msra.mxu0 0
      %4704 = vmatprep.subr.bf16.mxu0 0
      %4705 = vmatpush1.bf16.msra.mxu0 0
      %4706 = vmatprep.mubr.bf16.mxu0 0
      %4707 = vmatmul.mubr.bf16.gmra.mrb[0].mxu0 %v4508
      %v4708 = vpop.f32.mrb[0].mxu0
      %v4709 = vadd.f32 %v4302, %v4708
      %v4710 = vpop.f32.mrb[0].mxu0
      %v4711 = vadd.f32 %v4306, %v4710
      %v4712 = vpop.f32.mrb[0].mxu0
      %v4713 = vpop.f32.mrb[0].mxu0
      %4714 = vdwg.mxu0
      %4715 = vmatprep.subr.bf16.mxu0 %v4454
      %4716 = vmatpush1.bf16.msra.mxu0 %v4453
      %4717 = vmatprep.subr.bf16.mxu0 %v4470
      %4718 = vmatpush1.bf16.msra.mxu0 %v4469
      %4719 = vmatprep.subr.bf16.mxu0 0
      %4720 = vmatpush1.bf16.msra.mxu0 0
      %4721 = vmatprep.subr.bf16.mxu0 0
      %4722 = vmatpush1.bf16.msra.mxu0 0
      %4723 = vmatprep.subr.bf16.mxu0 0
      %4724 = vmatpush1.bf16.msra.mxu0 0
      %4725 = vmatprep.subr.bf16.mxu0 0
      %4726 = vmatpush1.bf16.msra.mxu0 0
      %4727 = vmatprep.subr.bf16.mxu0 0
      %4728 = vmatpush1.bf16.msra.mxu0 0
      %4729 = vmatprep.subr.bf16.mxu0 0
      %4730 = vmatpush1.bf16.msra.mxu0 0
      %4731 = vmatprep.subr.bf16.mxu0 0
      %4732 = vmatpush1.bf16.msra.mxu0 0
      %4733 = vmatprep.subr.bf16.mxu0 0
      %4734 = vmatpush1.bf16.msra.mxu0 0
      %4735 = vmatprep.subr.bf16.mxu0 0
      %4736 = vmatpush1.bf16.msra.mxu0 0
      %4737 = vmatprep.subr.bf16.mxu0 0
      %4738 = vmatpush1.bf16.msra.mxu0 0
      %4739 = vmatprep.subr.bf16.mxu0 0
      %4740 = vmatpush1.bf16.msra.mxu0 0
      %4741 = vmatprep.subr.bf16.mxu0 0
      %4742 = vmatpush1.bf16.msra.mxu0 0
      %4743 = vmatprep.subr.bf16.mxu0 0
      %4744 = vmatpush1.bf16.msra.mxu0 0
      %4745 = vmatprep.subr.bf16.mxu0 0
      %4746 = vmatpush1.bf16.msra.mxu0 0
      %4747 = vmatprep.mubr.bf16.mxu0 0
      %4748 = vmatmul.mubr.bf16.gmra.mrb[0].mxu0 %v4508
      %v4749 = vpop.f32.mrb[0].mxu0
      %v4750 = vadd.f32 %v4310, %v4749
      %v4751 = vpop.f32.mrb[0].mxu0
      %v4752 = vadd.f32 %v4314, %v4751
      %v4753 = vpop.f32.mrb[0].mxu0
      %v4754 = vpop.f32.mrb[0].mxu0
      %4755 = vdwg.mxu0
      %4756 = vmatprep.subr.bf16.mxu0 %v4456
      %4757 = vmatpush1.bf16.msra.mxu0 %v4455
      %4758 = vmatprep.subr.bf16.mxu0 %v4472
      %4759 = vmatpush1.bf16.msra.mxu0 %v4471
      %4760 = vmatprep.subr.bf16.mxu0 0
      %4761 = vmatpush1.bf16.msra.mxu0 0
      %4762 = vmatprep.subr.bf16.mxu0 0
      %4763 = vmatpush1.bf16.msra.mxu0 0
      %4764 = vmatprep.subr.bf16.mxu0 0
      %4765 = vmatpush1.bf16.msra.mxu0 0
      %4766 = vmatprep.subr.bf16.mxu0 0
      %4767 = vmatpush1.bf16.msra.mxu0 0
      %4768 = vmatprep.subr.bf16.mxu0 0
      %4769 = vmatpush1.bf16.msra.mxu0 0
      %4770 = vmatprep.subr.bf16.mxu0 0
      %4771 = vmatpush1.bf16.msra.mxu0 0
      %4772 = vmatprep.subr.bf16.mxu0 0
      %4773 = vmatpush1.bf16.msra.mxu0 0
      %4774 = vmatprep.subr.bf16.mxu0 0
      %4775 = vmatpush1.bf16.msra.mxu0 0
      %4776 = vmatprep.subr.bf16.mxu0 0
      %4777 = vmatpush1.bf16.msra.mxu0 0
      %4778 = vmatprep.subr.bf16.mxu0 0
      %4779 = vmatpush1.bf16.msra.mxu0 0
      %4780 = vmatprep.subr.bf16.mxu0 0
      %4781 = vmatpush1.bf16.msra.mxu0 0
      %4782 = vmatprep.subr.bf16.mxu0 0
      %4783 = vmatpush1.bf16.msra.mxu0 0
      %4784 = vmatprep.subr.bf16.mxu0 0
      %4785 = vmatpush1.bf16.msra.mxu0 0
      %4786 = vmatprep.subr.bf16.mxu0 0
      %4787 = vmatpush1.bf16.msra.mxu0 0
      %4788 = vmatprep.mubr.bf16.mxu0 0
      %4789 = vmatmul.mubr.bf16.gmra.mrb[0].mxu0 %v4508
      %v4790 = vpop.f32.mrb[0].mxu0
      %v4791 = vadd.f32 %v4318, %v4790
      %v4792 = vpop.f32.mrb[0].mxu0
      %v4793 = vadd.f32 %v4322, %v4792
      %v4794 = vpop.f32.mrb[0].mxu0
      %v4795 = vpop.f32.mrb[0].mxu0
      %4796 = vdwg.mxu0
      %4797 = vmatprep.subr.bf16.mxu0 %v4458
      %4798 = vmatpush1.bf16.msra.mxu0 %v4457
      %4799 = vmatprep.subr.bf16.mxu0 %v4474
      %4800 = vmatpush1.bf16.msra.mxu0 %v4473
      %4801 = vmatprep.subr.bf16.mxu0 0
      %4802 = vmatpush1.bf16.msra.mxu0 0
      %4803 = vmatprep.subr.bf16.mxu0 0
      %4804 = vmatpush1.bf16.msra.mxu0 0
      %4805 = vmatprep.subr.bf16.mxu0 0
      %4806 = vmatpush1.bf16.msra.mxu0 0
      %4807 = vmatprep.subr.bf16.mxu0 0
      %4808 = vmatpush1.bf16.msra.mxu0 0
      %4809 = vmatprep.subr.bf16.mxu0 0
      %4810 = vmatpush1.bf16.msra.mxu0 0
      %4811 = vmatprep.subr.bf16.mxu0 0
      %4812 = vmatpush1.bf16.msra.mxu0 0
      %4813 = vmatprep.subr.bf16.mxu0 0
      %4814 = vmatpush1.bf16.msra.mxu0 0
      %4815 = vmatprep.subr.bf16.mxu0 0
      %4816 = vmatpush1.bf16.msra.mxu0 0
      %4817 = vmatprep.subr.bf16.mxu0 0
      %4818 = vmatpush1.bf16.msra.mxu0 0
      %4819 = vmatprep.subr.bf16.mxu0 0
      %4820 = vmatpush1.bf16.msra.mxu0 0
      %4821 = vmatprep.subr.bf16.mxu0 0
      %4822 = vmatpush1.bf16.msra.mxu0 0
      %4823 = vmatprep.subr.bf16.mxu0 0
      %4824 = vmatpush1.bf16.msra.mxu0 0
      %4825 = vmatprep.subr.bf16.mxu0 0
      %4826 = vmatpush1.bf16.msra.mxu0 0
      %4827 = vmatprep.subr.bf16.mxu0 0
      %4828 = vmatpush1.bf16.msra.mxu0 0
      %4829 = vmatprep.mubr.bf16.mxu0 0
      %4830 = vmatmul.mubr.bf16.gmra.mrb[0].mxu0 %v4508
      %v4831 = vpop.f32.mrb[0].mxu0
      %v4832 = vadd.f32 %v4326, %v4831
      %v4833 = vpop.f32.mrb[0].mxu0
      %v4834 = vadd.f32 %v4330, %v4833
      %v4835 = vpop.f32.mrb[0].mxu0
      %v4836 = vpop.f32.mrb[0].mxu0
      %4837 = vdwg.mxu0
      %v4838 = vmax.f32 %v4545, 0.0
      %v4839 = vmax.f32 %v4547, 0.0
      %v4840 = vmax.f32 %v4586, 0.0
      %v4841 = vmax.f32 %v4588, 0.0
      %v4842 = vmax.f32 %v4627, 0.0
      %v4843 = vmax.f32 %v4629, 0.0
      %v4844 = vmax.f32 %v4668, 0.0
      %v4845 = vmax.f32 %v4670, 0.0
      %v4846 = vmax.f32 %v4709, 0.0
      %v4847 = vmax.f32 %v4711, 0.0
      %v4848 = vmax.f32 %v4750, 0.0
      %v4849 = vmax.f32 %v4752, 0.0
      %v4850 = vmax.f32 %v4791, 0.0
      %v4851 = vmax.f32 %v4793, 0.0
      %v4852 = vmax.f32 %v4832, 0.0
      %v4853 = vmax.f32 %v4834, 0.0
      %v4854 = vpack.c.bf16 %v4838, %v4838
      %v4855 = vpack.c.bf16 %v4839, %v4839
      %v4856 = vpack.c.bf16 %v4840, %v4840
      %v4857 = vpack.c.bf16 %v4841, %v4841
      %v4858 = vpack.c.bf16 %v4842, %v4842
      %v4859 = vpack.c.bf16 %v4843, %v4843
      %v4860 = vpack.c.bf16 %v4844, %v4844
      %v4861 = vpack.c.bf16 %v4845, %v4845
      %v4862 = vpack.c.bf16 %v4846, %v4846
      %v4863 = vpack.c.bf16 %v4847, %v4847
      %v4864 = vpack.c.bf16 %v4848, %v4848
      %v4865 = vpack.c.bf16 %v4849, %v4849
      %v4866 = vpack.c.bf16 %v4850, %v4850
      %v4867 = vpack.c.bf16 %v4851, %v4851
      %v4868 = vpack.c.bf16 %v4852, %v4852
      %v4869 = vpack.c.bf16 %v4853, %v4853
      %v4870 = vld [vmem:[%s47] sm:$0xf]
      %v4871 = vld [vmem:[%s47 + $0x4] sm:$0xf]
      %v4872 = vld [vmem:[%s47 + $0x8] sm:$0xf]
      %v4873 = vld [vmem:[%s47 + $0xc] sm:$0xf]
      %v4874 = vld [vmem:[%s47 + $0x10] sm:$0xf]
      %v4875 = vld [vmem:[%s47 + $0x14] sm:$0xf]
      %v4876 = vld [vmem:[%s47 + $0x18] sm:$0xf]
      %v4877 = vld [vmem:[%s47 + $0x1c] sm:$0xf]
      %v4878 = vld [vmem:[%s47 + $0x20] sm:$0xf]
      %v4879 = vld [vmem:[%s47 + $0x24] sm:$0xf]
      %v4880 = vld [vmem:[%s47 + $0x28] sm:$0xf]
      %v4881 = vld [vmem:[%s47 + $0x2c] sm:$0xf]
      %v4882 = vld [vmem:[%s47 + $0x30] sm:$0xf]
      %v4883 = vld [vmem:[%s47 + $0x34] sm:$0xf]
      %v4884 = vld [vmem:[%s47 + $0x38] sm:$0xf]
      %v4885 = vld [vmem:[%s47 + $0x3c] sm:$0xf]
      %v4886 = vld [vmem:[%s47 + $0x40] sm:$0xf]
      %v4887 = vld [vmem:[%s47 + $0x44] sm:$0xf]
      %v4888 = vld [vmem:[%s47 + $0x48] sm:$0xf]
      %v4889 = vld [vmem:[%s47 + $0x4c] sm:$0xf]
      %v4890 = vld [vmem:[%s47 + $0x50] sm:$0xf]
      %v4891 = vld [vmem:[%s47 + $0x54] sm:$0xf]
      %v4892 = vld [vmem:[%s47 + $0x58] sm:$0xf]
      %v4893 = vld [vmem:[%s47 + $0x5c] sm:$0xf]
      %v4894 = vld [vmem:[%s47 + $0x60] sm:$0xf]
      %v4895 = vld [vmem:[%s47 + $0x64] sm:$0xf]
      %v4896 = vld [vmem:[%s47 + $0x68] sm:$0xf]
      %v4897 = vld [vmem:[%s47 + $0x6c] sm:$0xf]
      %v4898 = vld [vmem:[%s47 + $0x70] sm:$0xf]
      %v4899 = vld [vmem:[%s47 + $0x74] sm:$0xf]
      %v4900 = vld [vmem:[%s47 + $0x78] sm:$0xf]
      %v4901 = vld [vmem:[%s47 + $0x7c] sm:$0xf]
      %v4902 = vld [vmem:[%s47 + $0x80] sm:$0xf]
      %v4903 = vld [vmem:[%s47 + $0x84] sm:$0xf]
      %v4904 = vld [vmem:[%s47 + $0x88] sm:$0xf]
      %v4905 = vld [vmem:[%s47 + $0x8c] sm:$0xf]
      %v4906 = vld [vmem:[%s47 + $0x90] sm:$0xf]
      %v4907 = vld [vmem:[%s47 + $0x94] sm:$0xf]
      %v4908 = vld [vmem:[%s47 + $0x98] sm:$0xf]
      %v4909 = vld [vmem:[%s47 + $0x9c] sm:$0xf]
      %v4910 = vld [vmem:[%s47 + $0xa0] sm:$0xf]
      %v4911 = vld [vmem:[%s47 + $0xa4] sm:$0xf]
      %v4912 = vld [vmem:[%s47 + $0xa8] sm:$0xf]
      %v4913 = vld [vmem:[%s47 + $0xac] sm:$0xf]
      %v4914 = vld [vmem:[%s47 + $0xb0] sm:$0xf]
      %v4915 = vld [vmem:[%s47 + $0xb4] sm:$0xf]
      %v4916 = vld [vmem:[%s47 + $0xb8] sm:$0xf]
      %v4917 = vld [vmem:[%s47 + $0xbc] sm:$0xf]
      %v4918 = vld [vmem:[%s47 + $0xc0] sm:$0xf]
      %v4919 = vld [vmem:[%s47 + $0xc4] sm:$0xf]
      %v4920 = vld [vmem:[%s47 + $0xc8] sm:$0xf]
      %v4921 = vld [vmem:[%s47 + $0xcc] sm:$0xf]
      %v4922 = vld [vmem:[%s47 + $0xd0] sm:$0xf]
      %v4923 = vld [vmem:[%s47 + $0xd4] sm:$0xf]
      %v4924 = vld [vmem:[%s47 + $0xd8] sm:$0xf]
      %v4925 = vld [vmem:[%s47 + $0xdc] sm:$0xf]
      %v4926 = vld [vmem:[%s47 + $0xe0] sm:$0xf]
      %v4927 = vld [vmem:[%s47 + $0xe4] sm:$0xf]
      %v4928 = vld [vmem:[%s47 + $0xe8] sm:$0xf]
      %v4929 = vld [vmem:[%s47 + $0xec] sm:$0xf]
      %v4930 = vld [vmem:[%s47 + $0xf0] sm:$0xf]
      %v4931 = vld [vmem:[%s47 + $0xf4] sm:$0xf]
      %v4932 = vld [vmem:[%s47 + $0xf8] sm:$0xf]
      %v4933 = vld [vmem:[%s47 + $0xfc] sm:$0xf]
      %v4934 = vld [vmem:[%s47 + $0x100] sm:$0xf]
      %v4935 = vld [vmem:[%s47 + $0x104] sm:$0xf]
      %v4936 = vld [vmem:[%s47 + $0x108] sm:$0xf]
      %v4937 = vld [vmem:[%s47 + $0x10c] sm:$0xf]
      %v4938 = vld [vmem:[%s47 + $0x110] sm:$0xf]
      %v4939 = vld [vmem:[%s47 + $0x114] sm:$0xf]
      %v4940 = vld [vmem:[%s47 + $0x118] sm:$0xf]
      %v4941 = vld [vmem:[%s47 + $0x11c] sm:$0xf]
      %v4942 = vld [vmem:[%s47 + $0x120] sm:$0xf]
      %v4943 = vld [vmem:[%s47 + $0x124] sm:$0xf]
      %v4944 = vld [vmem:[%s47 + $0x128] sm:$0xf]
      %v4945 = vld [vmem:[%s47 + $0x12c] sm:$0xf]
      %v4946 = vld [vmem:[%s47 + $0x130] sm:$0xf]
      %v4947 = vld [vmem:[%s47 + $0x134] sm:$0xf]
      %v4948 = vld [vmem:[%s47 + $0x138] sm:$0xf]
      %v4949 = vld [vmem:[%s47 + $0x13c] sm:$0xf]
      %v4950 = vld [vmem:[%s47 + $0x140] sm:$0xf]
      %v4951 = vld [vmem:[%s47 + $0x144] sm:$0xf]
      %v4952 = vld [vmem:[%s47 + $0x148] sm:$0xf]
      %v4953 = vld [vmem:[%s47 + $0x14c] sm:$0xf]
      %v4954 = vld [vmem:[%s47 + $0x150] sm:$0xf]
      %v4955 = vld [vmem:[%s47 + $0x154] sm:$0xf]
      %v4956 = vld [vmem:[%s47 + $0x158] sm:$0xf]
      %v4957 = vld [vmem:[%s47 + $0x15c] sm:$0xf]
      %v4958 = vld [vmem:[%s47 + $0x160] sm:$0xf]
      %v4959 = vld [vmem:[%s47 + $0x164] sm:$0xf]
      %v4960 = vld [vmem:[%s47 + $0x168] sm:$0xf]
      %v4961 = vld [vmem:[%s47 + $0x16c] sm:$0xf]
      %v4962 = vld [vmem:[%s47 + $0x170] sm:$0xf]
      %v4963 = vld [vmem:[%s47 + $0x174] sm:$0xf]
      %v4964 = vld [vmem:[%s47 + $0x178] sm:$0xf]
      %v4965 = vld [vmem:[%s47 + $0x17c] sm:$0xf]
      %v4966 = vld [vmem:[%s47 + $0x180] sm:$0xf]
      %v4967 = vld [vmem:[%s47 + $0x184] sm:$0xf]
      %v4968 = vld [vmem:[%s47 + $0x188] sm:$0xf]
      %v4969 = vld [vmem:[%s47 + $0x18c] sm:$0xf]
      %v4970 = vld [vmem:[%s47 + $0x190] sm:$0xf]
      %v4971 = vld [vmem:[%s47 + $0x194] sm:$0xf]
      %v4972 = vld [vmem:[%s47 + $0x198] sm:$0xf]
      %v4973 = vld [vmem:[%s47 + $0x19c] sm:$0xf]
      %v4974 = vld [vmem:[%s47 + $0x1a0] sm:$0xf]
      %v4975 = vld [vmem:[%s47 + $0x1a4] sm:$0xf]
      %v4976 = vld [vmem:[%s47 + $0x1a8] sm:$0xf]
      %v4977 = vld [vmem:[%s47 + $0x1ac] sm:$0xf]
      %v4978 = vld [vmem:[%s47 + $0x1b0] sm:$0xf]
      %v4979 = vld [vmem:[%s47 + $0x1b4] sm:$0xf]
      %v4980 = vld [vmem:[%s47 + $0x1b8] sm:$0xf]
      %v4981 = vld [vmem:[%s47 + $0x1bc] sm:$0xf]
      %v4982 = vld [vmem:[%s47 + $0x1c0] sm:$0xf]
      %v4983 = vld [vmem:[%s47 + $0x1c4] sm:$0xf]
      %v4984 = vld [vmem:[%s47 + $0x1c8] sm:$0xf]
      %v4985 = vld [vmem:[%s47 + $0x1cc] sm:$0xf]
      %v4986 = vld [vmem:[%s47 + $0x1d0] sm:$0xf]
      %v4987 = vld [vmem:[%s47 + $0x1d4] sm:$0xf]
      %v4988 = vld [vmem:[%s47 + $0x1d8] sm:$0xf]
      %v4989 = vld [vmem:[%s47 + $0x1dc] sm:$0xf]
      %v4990 = vld [vmem:[%s47 + $0x1e0] sm:$0xf]
      %v4991 = vld [vmem:[%s47 + $0x1e4] sm:$0xf]
      %v4992 = vld [vmem:[%s47 + $0x1e8] sm:$0xf]
      %v4993 = vld [vmem:[%s47 + $0x1ec] sm:$0xf]
      %v4994 = vld [vmem:[%s47 + $0x1f0] sm:$0xf]
      %v4995 = vld [vmem:[%s47 + $0x1f4] sm:$0xf]
      %v4996 = vld [vmem:[%s47 + $0x1f8] sm:$0xf]
      %v4997 = vld [vmem:[%s47 + $0x1fc] sm:$0xf]
      %v4998 = vld [vmem:[%s47 + $0x200] sm:$0xf]
      %v4999 = vld [vmem:[%s47 + $0x204] sm:$0xf]
      %v5000 = vld [vmem:[%s47 + $0x208] sm:$0xf]
      %v5001 = vld [vmem:[%s47 + $0x20c] sm:$0xf]
      %v5002 = vld [vmem:[%s47 + $0x210] sm:$0xf]
      %v5003 = vld [vmem:[%s47 + $0x214] sm:$0xf]
      %v5004 = vld [vmem:[%s47 + $0x218] sm:$0xf]
      %v5005 = vld [vmem:[%s47 + $0x21c] sm:$0xf]
      %v5006 = vld [vmem:[%s47 + $0x220] sm:$0xf]
      %v5007 = vld [vmem:[%s47 + $0x224] sm:$0xf]
      %v5008 = vld [vmem:[%s47 + $0x228] sm:$0xf]
      %v5009 = vld [vmem:[%s47 + $0x22c] sm:$0xf]
      %v5010 = vld [vmem:[%s47 + $0x230] sm:$0xf]
      %v5011 = vld [vmem:[%s47 + $0x234] sm:$0xf]
      %v5012 = vld [vmem:[%s47 + $0x238] sm:$0xf]
      %v5013 = vld [vmem:[%s47 + $0x23c] sm:$0xf]
      %v5014 = vld [vmem:[%s47 + $0x240] sm:$0xf]
      %v5015 = vld [vmem:[%s47 + $0x244] sm:$0xf]
      %v5016 = vld [vmem:[%s47 + $0x248] sm:$0xf]
      %v5017 = vld [vmem:[%s47 + $0x24c] sm:$0xf]
      %v5018 = vld [vmem:[%s47 + $0x250] sm:$0xf]
      %v5019 = vld [vmem:[%s47 + $0x254] sm:$0xf]
      %v5020 = vld [vmem:[%s47 + $0x258] sm:$0xf]
      %v5021 = vld [vmem:[%s47 + $0x25c] sm:$0xf]
      %v5022 = vld [vmem:[%s47 + $0x260] sm:$0xf]
      %v5023 = vld [vmem:[%s47 + $0x264] sm:$0xf]
      %v5024 = vld [vmem:[%s47 + $0x268] sm:$0xf]
      %v5025 = vld [vmem:[%s47 + $0x26c] sm:$0xf]
      %v5026 = vld [vmem:[%s47 + $0x270] sm:$0xf]
      %v5027 = vld [vmem:[%s47 + $0x274] sm:$0xf]
      %v5028 = vld [vmem:[%s47 + $0x278] sm:$0xf]
      %v5029 = vld [vmem:[%s47 + $0x27c] sm:$0xf]
      %v5030 = vld [vmem:[%s47 + $0x280] sm:$0xf]
      %v5031 = vld [vmem:[%s47 + $0x284] sm:$0xf]
      %v5032 = vld [vmem:[%s47 + $0x288] sm:$0xf]
      %v5033 = vld [vmem:[%s47 + $0x28c] sm:$0xf]
      %v5034 = vld [vmem:[%s47 + $0x290] sm:$0xf]
      %v5035 = vld [vmem:[%s47 + $0x294] sm:$0xf]
      %v5036 = vld [vmem:[%s47 + $0x298] sm:$0xf]
      %v5037 = vld [vmem:[%s47 + $0x29c] sm:$0xf]
      %v5038 = vld [vmem:[%s47 + $0x2a0] sm:$0xf]
      %v5039 = vld [vmem:[%s47 + $0x2a4] sm:$0xf]
      %v5040 = vld [vmem:[%s47 + $0x2a8] sm:$0xf]
      %v5041 = vld [vmem:[%s47 + $0x2ac] sm:$0xf]
      %v5042 = vld [vmem:[%s47 + $0x2b0] sm:$0xf]
      %v5043 = vld [vmem:[%s47 + $0x2b4] sm:$0xf]
      %v5044 = vld [vmem:[%s47 + $0x2b8] sm:$0xf]
      %v5045 = vld [vmem:[%s47 + $0x2bc] sm:$0xf]
      %v5046 = vld [vmem:[%s47 + $0x2c0] sm:$0xf]
      %v5047 = vld [vmem:[%s47 + $0x2c4] sm:$0xf]
      %v5048 = vld [vmem:[%s47 + $0x2c8] sm:$0xf]
      %v5049 = vld [vmem:[%s47 + $0x2cc] sm:$0xf]
      %v5050 = vld [vmem:[%s47 + $0x2d0] sm:$0xf]
      %v5051 = vld [vmem:[%s47 + $0x2d4] sm:$0xf]
      %v5052 = vld [vmem:[%s47 + $0x2d8] sm:$0xf]
      %v5053 = vld [vmem:[%s47 + $0x2dc] sm:$0xf]
      %v5054 = vld [vmem:[%s47 + $0x2e0] sm:$0xf]
      %v5055 = vld [vmem:[%s47 + $0x2e4] sm:$0xf]
      %v5056 = vld [vmem:[%s47 + $0x2e8] sm:$0xf]
      %v5057 = vld [vmem:[%s47 + $0x2ec] sm:$0xf]
      %v5058 = vld [vmem:[%s47 + $0x2f0] sm:$0xf]
      %v5059 = vld [vmem:[%s47 + $0x2f4] sm:$0xf]
      %v5060 = vld [vmem:[%s47 + $0x2f8] sm:$0xf]
      %v5061 = vld [vmem:[%s47 + $0x2fc] sm:$0xf]
      %v5062 = vld [vmem:[%s47 + $0x300] sm:$0xf]
      %v5063 = vld [vmem:[%s47 + $0x304] sm:$0xf]
      %v5064 = vld [vmem:[%s47 + $0x308] sm:$0xf]
      %v5065 = vld [vmem:[%s47 + $0x30c] sm:$0xf]
      %v5066 = vld [vmem:[%s47 + $0x310] sm:$0xf]
      %v5067 = vld [vmem:[%s47 + $0x314] sm:$0xf]
      %v5068 = vld [vmem:[%s47 + $0x318] sm:$0xf]
      %v5069 = vld [vmem:[%s47 + $0x31c] sm:$0xf]
      %v5070 = vld [vmem:[%s47 + $0x320] sm:$0xf]
      %v5071 = vld [vmem:[%s47 + $0x324] sm:$0xf]
      %v5072 = vld [vmem:[%s47 + $0x328] sm:$0xf]
      %v5073 = vld [vmem:[%s47 + $0x32c] sm:$0xf]
      %v5074 = vld [vmem:[%s47 + $0x330] sm:$0xf]
      %v5075 = vld [vmem:[%s47 + $0x334] sm:$0xf]
      %v5076 = vld [vmem:[%s47 + $0x338] sm:$0xf]
      %v5077 = vld [vmem:[%s47 + $0x33c] sm:$0xf]
      %v5078 = vld [vmem:[%s47 + $0x340] sm:$0xf]
      %v5079 = vld [vmem:[%s47 + $0x344] sm:$0xf]
      %v5080 = vld [vmem:[%s47 + $0x348] sm:$0xf]
      %v5081 = vld [vmem:[%s47 + $0x34c] sm:$0xf]
      %v5082 = vld [vmem:[%s47 + $0x350] sm:$0xf]
      %v5083 = vld [vmem:[%s47 + $0x354] sm:$0xf]
      %v5084 = vld [vmem:[%s47 + $0x358] sm:$0xf]
      %v5085 = vld [vmem:[%s47 + $0x35c] sm:$0xf]
      %v5086 = vld [vmem:[%s47 + $0x360] sm:$0xf]
      %v5087 = vld [vmem:[%s47 + $0x364] sm:$0xf]
      %v5088 = vld [vmem:[%s47 + $0x368] sm:$0xf]
      %v5089 = vld [vmem:[%s47 + $0x36c] sm:$0xf]
      %v5090 = vld [vmem:[%s47 + $0x370] sm:$0xf]
      %v5091 = vld [vmem:[%s47 + $0x374] sm:$0xf]
      %v5092 = vld [vmem:[%s47 + $0x378] sm:$0xf]
      %v5093 = vld [vmem:[%s47 + $0x37c] sm:$0xf]
      %v5094 = vld [vmem:[%s47 + $0x380] sm:$0xf]
      %v5095 = vld [vmem:[%s47 + $0x384] sm:$0xf]
      %v5096 = vld [vmem:[%s47 + $0x388] sm:$0xf]
      %v5097 = vld [vmem:[%s47 + $0x38c] sm:$0xf]
      %v5098 = vld [vmem:[%s47 + $0x390] sm:$0xf]
      %v5099 = vld [vmem:[%s47 + $0x394] sm:$0xf]
      %v5100 = vld [vmem:[%s47 + $0x398] sm:$0xf]
      %v5101 = vld [vmem:[%s47 + $0x39c] sm:$0xf]
      %v5102 = vld [vmem:[%s47 + $0x3a0] sm:$0xf]
      %v5103 = vld [vmem:[%s47 + $0x3a4] sm:$0xf]
      %v5104 = vld [vmem:[%s47 + $0x3a8] sm:$0xf]
      %v5105 = vld [vmem:[%s47 + $0x3ac] sm:$0xf]
      %v5106 = vld [vmem:[%s47 + $0x3b0] sm:$0xf]
      %v5107 = vld [vmem:[%s47 + $0x3b4] sm:$0xf]
      %v5108 = vld [vmem:[%s47 + $0x3b8] sm:$0xf]
      %v5109 = vld [vmem:[%s47 + $0x3bc] sm:$0xf]
      %v5110 = vld [vmem:[%s47 + $0x3c0] sm:$0xf]
      %v5111 = vld [vmem:[%s47 + $0x3c4] sm:$0xf]
      %v5112 = vld [vmem:[%s47 + $0x3c8] sm:$0xf]
      %v5113 = vld [vmem:[%s47 + $0x3cc] sm:$0xf]
      %v5114 = vld [vmem:[%s47 + $0x3d0] sm:$0xf]
      %v5115 = vld [vmem:[%s47 + $0x3d4] sm:$0xf]
      %v5116 = vld [vmem:[%s47 + $0x3d8] sm:$0xf]
      %v5117 = vld [vmem:[%s47 + $0x3dc] sm:$0xf]
      %v5118 = vld [vmem:[%s47 + $0x3e0] sm:$0xf]
      %v5119 = vld [vmem:[%s47 + $0x3e4] sm:$0xf]
      %v5120 = vld [vmem:[%s47 + $0x3e8] sm:$0xf]
      %v5121 = vld [vmem:[%s47 + $0x3ec] sm:$0xf]
      %v5122 = vld [vmem:[%s47 + $0x3f0] sm:$0xf]
      %v5123 = vld [vmem:[%s47 + $0x3f4] sm:$0xf]
      %v5124 = vld [vmem:[%s47 + $0x3f8] sm:$0xf]
      %v5125 = vld [vmem:[%s47 + $0x3fc] sm:$0xf]
      %v5126 = vld [vmem:[%s49] sm:$0x1]
      %v5128 = vlaneseq
      %v5129 = vshrl.u32 %v5128, 7
      %v5130 = vsub.s32 0, %v5129
      %v5131 = vrot.slane %v5126, %v5130
      %v5389 = vunpack.c.l.b16 %v4870
      %v5390 = vunpack.c.l.b16 %v4871
      %v5391 = vunpack.c.l.b16 %v4872
      %v5392 = vunpack.c.l.b16 %v4873
      %v5393 = vunpack.c.l.b16 %v4874
      %v5394 = vunpack.c.l.b16 %v4875
      %v5395 = vunpack.c.l.b16 %v4876
      %v5396 = vunpack.c.l.b16 %v4877
      %v5397 = vunpack.c.l.b16 %v4878
      %v5398 = vunpack.c.l.b16 %v4879
      %v5399 = vunpack.c.l.b16 %v4880
      %v5400 = vunpack.c.l.b16 %v4881
      %v5401 = vunpack.c.l.b16 %v4882
      %v5402 = vunpack.c.l.b16 %v4883
      %v5403 = vunpack.c.l.b16 %v4884
      %v5404 = vunpack.c.l.b16 %v4885
      %v5405 = vunpack.c.l.b16 %v4886
      %v5406 = vunpack.c.l.b16 %v4887
      %v5407 = vunpack.c.l.b16 %v4888
      %v5408 = vunpack.c.l.b16 %v4889
      %v5409 = vunpack.c.l.b16 %v4890
      %v5410 = vunpack.c.l.b16 %v4891
      %v5411 = vunpack.c.l.b16 %v4892
      %v5412 = vunpack.c.l.b16 %v4893
      %v5413 = vunpack.c.l.b16 %v4894
      %v5414 = vunpack.c.l.b16 %v4895
      %v5415 = vunpack.c.l.b16 %v4896
      %v5416 = vunpack.c.l.b16 %v4897
      %v5417 = vunpack.c.l.b16 %v4898
      %v5418 = vunpack.c.l.b16 %v4899
      %v5419 = vunpack.c.l.b16 %v4900
      %v5420 = vunpack.c.l.b16 %v4901
      %v5421 = vunpack.c.l.b16 %v4902
      %v5422 = vunpack.c.l.b16 %v4903
      %v5423 = vunpack.c.l.b16 %v4904
      %v5424 = vunpack.c.l.b16 %v4905
      %v5425 = vunpack.c.l.b16 %v4906
      %v5426 = vunpack.c.l.b16 %v4907
      %v5427 = vunpack.c.l.b16 %v4908
      %v5428 = vunpack.c.l.b16 %v4909
      %v5429 = vunpack.c.l.b16 %v4910
      %v5430 = vunpack.c.l.b16 %v4911
      %v5431 = vunpack.c.l.b16 %v4912
      %v5432 = vunpack.c.l.b16 %v4913
      %v5433 = vunpack.c.l.b16 %v4914
      %v5434 = vunpack.c.l.b16 %v4915
      %v5435 = vunpack.c.l.b16 %v4916
      %v5436 = vunpack.c.l.b16 %v4917
      %v5437 = vunpack.c.l.b16 %v4918
      %v5438 = vunpack.c.l.b16 %v4919
      %v5439 = vunpack.c.l.b16 %v4920
      %v5440 = vunpack.c.l.b16 %v4921
      %v5441 = vunpack.c.l.b16 %v4922
      %v5442 = vunpack.c.l.b16 %v4923
      %v5443 = vunpack.c.l.b16 %v4924
      %v5444 = vunpack.c.l.b16 %v4925
      %v5445 = vunpack.c.l.b16 %v4926
      %v5446 = vunpack.c.l.b16 %v4927
      %v5447 = vunpack.c.l.b16 %v4928
      %v5448 = vunpack.c.l.b16 %v4929
      %v5449 = vunpack.c.l.b16 %v4930
      %v5450 = vunpack.c.l.b16 %v4931
      %v5451 = vunpack.c.l.b16 %v4932
      %v5452 = vunpack.c.l.b16 %v4933
      %v5453 = vunpack.c.l.b16 %v4934
      %v5454 = vunpack.c.l.b16 %v4935
      %v5455 = vunpack.c.l.b16 %v4936
      %v5456 = vunpack.c.l.b16 %v4937
      %v5457 = vunpack.c.l.b16 %v4938
      %v5458 = vunpack.c.l.b16 %v4939
      %v5459 = vunpack.c.l.b16 %v4940
      %v5460 = vunpack.c.l.b16 %v4941
      %v5461 = vunpack.c.l.b16 %v4942
      %v5462 = vunpack.c.l.b16 %v4943
      %v5463 = vunpack.c.l.b16 %v4944
      %v5464 = vunpack.c.l.b16 %v4945
      %v5465 = vunpack.c.l.b16 %v4946
      %v5466 = vunpack.c.l.b16 %v4947
      %v5467 = vunpack.c.l.b16 %v4948
      %v5468 = vunpack.c.l.b16 %v4949
      %v5469 = vunpack.c.l.b16 %v4950
      %v5470 = vunpack.c.l.b16 %v4951
      %v5471 = vunpack.c.l.b16 %v4952
      %v5472 = vunpack.c.l.b16 %v4953
      %v5473 = vunpack.c.l.b16 %v4954
      %v5474 = vunpack.c.l.b16 %v4955
      %v5475 = vunpack.c.l.b16 %v4956
      %v5476 = vunpack.c.l.b16 %v4957
      %v5477 = vunpack.c.l.b16 %v4958
      %v5478 = vunpack.c.l.b16 %v4959
      %v5479 = vunpack.c.l.b16 %v4960
      %v5480 = vunpack.c.l.b16 %v4961
      %v5481 = vunpack.c.l.b16 %v4962
      %v5482 = vunpack.c.l.b16 %v4963
      %v5483 = vunpack.c.l.b16 %v4964
      %v5484 = vunpack.c.l.b16 %v4965
      %v5485 = vunpack.c.l.b16 %v4966
      %v5486 = vunpack.c.l.b16 %v4967
      %v5487 = vunpack.c.l.b16 %v4968
      %v5488 = vunpack.c.l.b16 %v4969
      %v5489 = vunpack.c.l.b16 %v4970
      %v5490 = vunpack.c.l.b16 %v4971
      %v5491 = vunpack.c.l.b16 %v4972
      %v5492 = vunpack.c.l.b16 %v4973
      %v5493 = vunpack.c.l.b16 %v4974
      %v5494 = vunpack.c.l.b16 %v4975
      %v5495 = vunpack.c.l.b16 %v4976
      %v5496 = vunpack.c.l.b16 %v4977
      %v5497 = vunpack.c.l.b16 %v4978
      %v5498 = vunpack.c.l.b16 %v4979
      %v5499 = vunpack.c.l.b16 %v4980
      %v5500 = vunpack.c.l.b16 %v4981
      %v5501 = vunpack.c.l.b16 %v4982
      %v5502 = vunpack.c.l.b16 %v4983
      %v5503 = vunpack.c.l.b16 %v4984
      %v5504 = vunpack.c.l.b16 %v4985
      %v5505 = vunpack.c.l.b16 %v4986
      %v5506 = vunpack.c.l.b16 %v4987
      %v5507 = vunpack.c.l.b16 %v4988
      %v5508 = vunpack.c.l.b16 %v4989
      %v5509 = vunpack.c.l.b16 %v4990
      %v5510 = vunpack.c.l.b16 %v4991
      %v5511 = vunpack.c.l.b16 %v4992
      %v5512 = vunpack.c.l.b16 %v4993
      %v5513 = vunpack.c.l.b16 %v4994
      %v5514 = vunpack.c.l.b16 %v4995
      %v5515 = vunpack.c.l.b16 %v4996
      %v5516 = vunpack.c.l.b16 %v4997
      %v5517 = vunpack.c.l.b16 %v4998
      %v5518 = vunpack.c.l.b16 %v4999
      %v5519 = vunpack.c.l.b16 %v5000
      %v5520 = vunpack.c.l.b16 %v5001
      %v5521 = vunpack.c.l.b16 %v5002
      %v5522 = vunpack.c.l.b16 %v5003
      %v5523 = vunpack.c.l.b16 %v5004
      %v5524 = vunpack.c.l.b16 %v5005
      %v5525 = vunpack.c.l.b16 %v5006
      %v5526 = vunpack.c.l.b16 %v5007
      %v5527 = vunpack.c.l.b16 %v5008
      %v5528 = vunpack.c.l.b16 %v5009
      %v5529 = vunpack.c.l.b16 %v5010
      %v5530 = vunpack.c.l.b16 %v5011
      %v5531 = vunpack.c.l.b16 %v5012
      %v5532 = vunpack.c.l.b16 %v5013
      %v5533 = vunpack.c.l.b16 %v5014
      %v5534 = vunpack.c.l.b16 %v5015
      %v5535 = vunpack.c.l.b16 %v5016
      %v5536 = vunpack.c.l.b16 %v5017
      %v5537 = vunpack.c.l.b16 %v5018
      %v5538 = vunpack.c.l.b16 %v5019
      %v5539 = vunpack.c.l.b16 %v5020
      %v5540 = vunpack.c.l.b16 %v5021
      %v5541 = vunpack.c.l.b16 %v5022
      %v5542 = vunpack.c.l.b16 %v5023
      %v5543 = vunpack.c.l.b16 %v5024
      %v5544 = vunpack.c.l.b16 %v5025
      %v5545 = vunpack.c.l.b16 %v5026
      %v5546 = vunpack.c.l.b16 %v5027
      %v5547 = vunpack.c.l.b16 %v5028
      %v5548 = vunpack.c.l.b16 %v5029
      %v5549 = vunpack.c.l.b16 %v5030
      %v5550 = vunpack.c.l.b16 %v5031
      %v5551 = vunpack.c.l.b16 %v5032
      %v5552 = vunpack.c.l.b16 %v5033
      %v5553 = vunpack.c.l.b16 %v5034
      %v5554 = vunpack.c.l.b16 %v5035
      %v5555 = vunpack.c.l.b16 %v5036
      %v5556 = vunpack.c.l.b16 %v5037
      %v5557 = vunpack.c.l.b16 %v5038
      %v5558 = vunpack.c.l.b16 %v5039
      %v5559 = vunpack.c.l.b16 %v5040
      %v5560 = vunpack.c.l.b16 %v5041
      %v5561 = vunpack.c.l.b16 %v5042
      %v5562 = vunpack.c.l.b16 %v5043
      %v5563 = vunpack.c.l.b16 %v5044
      %v5564 = vunpack.c.l.b16 %v5045
      %v5565 = vunpack.c.l.b16 %v5046
      %v5566 = vunpack.c.l.b16 %v5047
      %v5567 = vunpack.c.l.b16 %v5048
      %v5568 = vunpack.c.l.b16 %v5049
      %v5569 = vunpack.c.l.b16 %v5050
      %v5570 = vunpack.c.l.b16 %v5051
      %v5571 = vunpack.c.l.b16 %v5052
      %v5572 = vunpack.c.l.b16 %v5053
      %v5573 = vunpack.c.l.b16 %v5054
      %v5574 = vunpack.c.l.b16 %v5055
      %v5575 = vunpack.c.l.b16 %v5056
      %v5576 = vunpack.c.l.b16 %v5057
      %v5577 = vunpack.c.l.b16 %v5058
      %v5578 = vunpack.c.l.b16 %v5059
      %v5579 = vunpack.c.l.b16 %v5060
      %v5580 = vunpack.c.l.b16 %v5061
      %v5581 = vunpack.c.l.b16 %v5062
      %v5582 = vunpack.c.l.b16 %v5063
      %v5583 = vunpack.c.l.b16 %v5064
      %v5584 = vunpack.c.l.b16 %v5065
      %v5585 = vunpack.c.l.b16 %v5066
      %v5586 = vunpack.c.l.b16 %v5067
      %v5587 = vunpack.c.l.b16 %v5068
      %v5588 = vunpack.c.l.b16 %v5069
      %v5589 = vunpack.c.l.b16 %v5070
      %v5590 = vunpack.c.l.b16 %v5071
      %v5591 = vunpack.c.l.b16 %v5072
      %v5592 = vunpack.c.l.b16 %v5073
      %v5593 = vunpack.c.l.b16 %v5074
      %v5594 = vunpack.c.l.b16 %v5075
      %v5595 = vunpack.c.l.b16 %v5076
      %v5596 = vunpack.c.l.b16 %v5077
      %v5597 = vunpack.c.l.b16 %v5078
      %v5598 = vunpack.c.l.b16 %v5079
      %v5599 = vunpack.c.l.b16 %v5080
      %v5600 = vunpack.c.l.b16 %v5081
      %v5601 = vunpack.c.l.b16 %v5082
      %v5602 = vunpack.c.l.b16 %v5083
      %v5603 = vunpack.c.l.b16 %v5084
      %v5604 = vunpack.c.l.b16 %v5085
      %v5605 = vunpack.c.l.b16 %v5086
      %v5606 = vunpack.c.l.b16 %v5087
      %v5607 = vunpack.c.l.b16 %v5088
      %v5608 = vunpack.c.l.b16 %v5089
      %v5609 = vunpack.c.l.b16 %v5090
      %v5610 = vunpack.c.l.b16 %v5091
      %v5611 = vunpack.c.l.b16 %v5092
      %v5612 = vunpack.c.l.b16 %v5093
      %v5613 = vunpack.c.l.b16 %v5094
      %v5614 = vunpack.c.l.b16 %v5095
      %v5615 = vunpack.c.l.b16 %v5096
      %v5616 = vunpack.c.l.b16 %v5097
      %v5617 = vunpack.c.l.b16 %v5098
      %v5618 = vunpack.c.l.b16 %v5099
      %v5619 = vunpack.c.l.b16 %v5100
      %v5620 = vunpack.c.l.b16 %v5101
      %v5621 = vunpack.c.l.b16 %v5102
      %v5622 = vunpack.c.l.b16 %v5103
      %v5623 = vunpack.c.l.b16 %v5104
      %v5624 = vunpack.c.l.b16 %v5105
      %v5625 = vunpack.c.l.b16 %v5106
      %v5626 = vunpack.c.l.b16 %v5107
      %v5627 = vunpack.c.l.b16 %v5108
      %v5628 = vunpack.c.l.b16 %v5109
      %v5629 = vunpack.c.l.b16 %v5110
      %v5630 = vunpack.c.l.b16 %v5111
      %v5631 = vunpack.c.l.b16 %v5112
      %v5632 = vunpack.c.l.b16 %v5113
      %v5633 = vunpack.c.l.b16 %v5114
      %v5634 = vunpack.c.l.b16 %v5115
      %v5635 = vunpack.c.l.b16 %v5116
      %v5636 = vunpack.c.l.b16 %v5117
      %v5637 = vunpack.c.l.b16 %v5118
      %v5638 = vunpack.c.l.b16 %v5119
      %v5639 = vunpack.c.l.b16 %v5120
      %v5640 = vunpack.c.l.b16 %v5121
      %v5641 = vunpack.c.l.b16 %v5122
      %v5642 = vunpack.c.l.b16 %v5123
      %v5643 = vunpack.c.l.b16 %v5124
      %v5644 = vunpack.c.l.b16 %v5125
      %v5645 = vpack.c.b16 %v5390, %v5389
      %v5646 = vpack.c.b16 %v5392, %v5391
      %v5647 = vpack.c.b16 %v5394, %v5393
      %v5648 = vpack.c.b16 %v5396, %v5395
      %v5649 = vpack.c.b16 %v5398, %v5397
      %v5650 = vpack.c.b16 %v5400, %v5399
      %v5651 = vpack.c.b16 %v5402, %v5401
      %v5652 = vpack.c.b16 %v5404, %v5403
      %v5653 = vpack.c.b16 %v5406, %v5405
      %v5654 = vpack.c.b16 %v5408, %v5407
      %v5655 = vpack.c.b16 %v5410, %v5409
      %v5656 = vpack.c.b16 %v5412, %v5411
      %v5657 = vpack.c.b16 %v5414, %v5413
      %v5658 = vpack.c.b16 %v5416, %v5415
      %v5659 = vpack.c.b16 %v5418, %v5417
      %v5660 = vpack.c.b16 %v5420, %v5419
      %v5661 = vpack.c.b16 %v5422, %v5421
      %v5662 = vpack.c.b16 %v5424, %v5423
      %v5663 = vpack.c.b16 %v5426, %v5425
      %v5664 = vpack.c.b16 %v5428, %v5427
      %v5665 = vpack.c.b16 %v5430, %v5429
      %v5666 = vpack.c.b16 %v5432, %v5431
      %v5667 = vpack.c.b16 %v5434, %v5433
      %v5668 = vpack.c.b16 %v5436, %v5435
      %v5669 = vpack.c.b16 %v5438, %v5437
      %v5670 = vpack.c.b16 %v5440, %v5439
      %v5671 = vpack.c.b16 %v5442, %v5441
      %v5672 = vpack.c.b16 %v5444, %v5443
      %v5673 = vpack.c.b16 %v5446, %v5445
      %v5674 = vpack.c.b16 %v5448, %v5447
      %v5675 = vpack.c.b16 %v5450, %v5449
      %v5676 = vpack.c.b16 %v5452, %v5451
      %v5677 = vpack.c.b16 %v5454, %v5453
      %v5678 = vpack.c.b16 %v5456, %v5455
      %v5679 = vpack.c.b16 %v5458, %v5457
      %v5680 = vpack.c.b16 %v5460, %v5459
      %v5681 = vpack.c.b16 %v5462, %v5461
      %v5682 = vpack.c.b16 %v5464, %v5463
      %v5683 = vpack.c.b16 %v5466, %v5465
      %v5684 = vpack.c.b16 %v5468, %v5467
      %v5685 = vpack.c.b16 %v5470, %v5469
      %v5686 = vpack.c.b16 %v5472, %v5471
      %v5687 = vpack.c.b16 %v5474, %v5473
      %v5688 = vpack.c.b16 %v5476, %v5475
      %v5689 = vpack.c.b16 %v5478, %v5477
      %v5690 = vpack.c.b16 %v5480, %v5479
      %v5691 = vpack.c.b16 %v5482, %v5481
      %v5692 = vpack.c.b16 %v5484, %v5483
      %v5693 = vpack.c.b16 %v5486, %v5485
      %v5694 = vpack.c.b16 %v5488, %v5487
      %v5695 = vpack.c.b16 %v5490, %v5489
      %v5696 = vpack.c.b16 %v5492, %v5491
      %v5697 = vpack.c.b16 %v5494, %v5493
      %v5698 = vpack.c.b16 %v5496, %v5495
      %v5699 = vpack.c.b16 %v5498, %v5497
      %v5700 = vpack.c.b16 %v5500, %v5499
      %v5701 = vpack.c.b16 %v5502, %v5501
      %v5702 = vpack.c.b16 %v5504, %v5503
      %v5703 = vpack.c.b16 %v5506, %v5505
      %v5704 = vpack.c.b16 %v5508, %v5507
      %v5705 = vpack.c.b16 %v5510, %v5509
      %v5706 = vpack.c.b16 %v5512, %v5511
      %v5707 = vpack.c.b16 %v5514, %v5513
      %v5708 = vpack.c.b16 %v5516, %v5515
      %v5709 = vpack.c.b16 %v5518, %v5517
      %v5710 = vpack.c.b16 %v5520, %v5519
      %v5711 = vpack.c.b16 %v5522, %v5521
      %v5712 = vpack.c.b16 %v5524, %v5523
      %v5713 = vpack.c.b16 %v5526, %v5525
      %v5714 = vpack.c.b16 %v5528, %v5527
      %v5715 = vpack.c.b16 %v5530, %v5529
      %v5716 = vpack.c.b16 %v5532, %v5531
      %v5717 = vpack.c.b16 %v5534, %v5533
      %v5718 = vpack.c.b16 %v5536, %v5535
      %v5719 = vpack.c.b16 %v5538, %v5537
      %v5720 = vpack.c.b16 %v5540, %v5539
      %v5721 = vpack.c.b16 %v5542, %v5541
      %v5722 = vpack.c.b16 %v5544, %v5543
      %v5723 = vpack.c.b16 %v5546, %v5545
      %v5724 = vpack.c.b16 %v5548, %v5547
      %v5725 = vpack.c.b16 %v5550, %v5549
      %v5726 = vpack.c.b16 %v5552, %v5551
      %v5727 = vpack.c.b16 %v5554, %v5553
      %v5728 = vpack.c.b16 %v5556, %v5555
      %v5729 = vpack.c.b16 %v5558, %v5557
      %v5730 = vpack.c.b16 %v5560, %v5559
      %v5731 = vpack.c.b16 %v5562, %v5561
      %v5732 = vpack.c.b16 %v5564, %v5563
      %v5733 = vpack.c.b16 %v5566, %v5565
      %v5734 = vpack.c.b16 %v5568, %v5567
      %v5735 = vpack.c.b16 %v5570, %v5569
      %v5736 = vpack.c.b16 %v5572, %v5571
      %v5737 = vpack.c.b16 %v5574, %v5573
      %v5738 = vpack.c.b16 %v5576, %v5575
      %v5739 = vpack.c.b16 %v5578, %v5577
      %v5740 = vpack.c.b16 %v5580, %v5579
      %v5741 = vpack.c.b16 %v5582, %v5581
      %v5742 = vpack.c.b16 %v5584, %v5583
      %v5743 = vpack.c.b16 %v5586, %v5585
      %v5744 = vpack.c.b16 %v5588, %v5587
      %v5745 = vpack.c.b16 %v5590, %v5589
      %v5746 = vpack.c.b16 %v5592, %v5591
      %v5747 = vpack.c.b16 %v5594, %v5593
      %v5748 = vpack.c.b16 %v5596, %v5595
      %v5749 = vpack.c.b16 %v5598, %v5597
      %v5750 = vpack.c.b16 %v5600, %v5599
      %v5751 = vpack.c.b16 %v5602, %v5601
      %v5752 = vpack.c.b16 %v5604, %v5603
      %v5753 = vpack.c.b16 %v5606, %v5605
      %v5754 = vpack.c.b16 %v5608, %v5607
      %v5755 = vpack.c.b16 %v5610, %v5609
      %v5756 = vpack.c.b16 %v5612, %v5611
      %v5757 = vpack.c.b16 %v5614, %v5613
      %v5758 = vpack.c.b16 %v5616, %v5615
      %v5759 = vpack.c.b16 %v5618, %v5617
      %v5760 = vpack.c.b16 %v5620, %v5619
      %v5761 = vpack.c.b16 %v5622, %v5621
      %v5762 = vpack.c.b16 %v5624, %v5623
      %v5763 = vpack.c.b16 %v5626, %v5625
      %v5764 = vpack.c.b16 %v5628, %v5627
      %v5765 = vpack.c.b16 %v5630, %v5629
      %v5766 = vpack.c.b16 %v5632, %v5631
      %v5767 = vpack.c.b16 %v5634, %v5633
      %v5768 = vpack.c.b16 %v5636, %v5635
      %v5769 = vpack.c.b16 %v5638, %v5637
      %v5770 = vpack.c.b16 %v5640, %v5639
      %v5771 = vpack.c.b16 %v5642, %v5641
      %v5772 = vpack.c.b16 %v5644, %v5643
      %5901 = vmatprep.subr.bf16.mxu0 0
      %5902 = vmatpush1.bf16.msra.mxu0 %v5645
      %5903 = vmatprep.subr.bf16.mxu0 0
      %5904 = vmatpush1.bf16.msra.mxu0 %v5646
      %5905 = vmatprep.subr.bf16.mxu0 0
      %5906 = vmatpush1.bf16.msra.mxu0 %v5647
      %5907 = vmatprep.subr.bf16.mxu0 0
      %5908 = vmatpush1.bf16.msra.mxu0 %v5648
      %5909 = vmatprep.subr.bf16.mxu0 0
      %5910 = vmatpush1.bf16.msra.mxu0 %v5649
      %5911 = vmatprep.subr.bf16.mxu0 0
      %5912 = vmatpush1.bf16.msra.mxu0 %v5650
      %5913 = vmatprep.subr.bf16.mxu0 0
      %5914 = vmatpush1.bf16.msra.mxu0 %v5651
      %5915 = vmatprep.subr.bf16.mxu0 0
      %5916 = vmatpush1.bf16.msra.mxu0 %v5652
      %5917 = vmatprep.subr.bf16.mxu0 0
      %5918 = vmatpush1.bf16.msra.mxu0 %v5653
      %5919 = vmatprep.subr.bf16.mxu0 0
      %5920 = vmatpush1.bf16.msra.mxu0 %v5654
      %5921 = vmatprep.subr.bf16.mxu0 0
      %5922 = vmatpush1.bf16.msra.mxu0 %v5655
      %5923 = vmatprep.subr.bf16.mxu0 0
      %5924 = vmatpush1.bf16.msra.mxu0 %v5656
      %5925 = vmatprep.subr.bf16.mxu0 0
      %5926 = vmatpush1.bf16.msra.mxu0 %v5657
      %5927 = vmatprep.subr.bf16.mxu0 0
      %5928 = vmatpush1.bf16.msra.mxu0 %v5658
      %5929 = vmatprep.subr.bf16.mxu0 0
      %5930 = vmatpush1.bf16.msra.mxu0 %v5659
      %5931 = vmatprep.subr.bf16.mxu0 0
      %5932 = vmatpush1.bf16.msra.mxu0 %v5660
      %5933 = vmatprep.mubr.bf16.mxu0 %v4855
      %5934 = vmatmul.mubr.bf16.gmra.mrb[0].mxu0 %v4854
      %v5935 = vpop.f32.mrb[0].mxu0
      %v5936 = vadd.f32 %v5131, %v5935
      %v5937 = vpop.f32.mrb[0].mxu0
      %v5938 = vpop.f32.mrb[0].mxu0
      %v5939 = vpop.f32.mrb[0].mxu0
      %5940 = vdwg.mxu0
      %5941 = vmatprep.subr.bf16.mxu0 0
      %5942 = vmatpush1.bf16.msra.mxu0 %v5661
      %5943 = vmatprep.subr.bf16.mxu0 0
      %5944 = vmatpush1.bf16.msra.mxu0 %v5662
      %5945 = vmatprep.subr.bf16.mxu0 0
      %5946 = vmatpush1.bf16.msra.mxu0 %v5663
      %5947 = vmatprep.subr.bf16.mxu0 0
      %5948 = vmatpush1.bf16.msra.mxu0 %v5664
      %5949 = vmatprep.subr.bf16.mxu0 0
      %5950 = vmatpush1.bf16.msra.mxu0 %v5665
      %5951 = vmatprep.subr.bf16.mxu0 0
      %5952 = vmatpush1.bf16.msra.mxu0 %v5666
      %5953 = vmatprep.subr.bf16.mxu0 0
      %5954 = vmatpush1.bf16.msra.mxu0 %v5667
      %5955 = vmatprep.subr.bf16.mxu0 0
      %5956 = vmatpush1.bf16.msra.mxu0 %v5668
      %5957 = vmatprep.subr.bf16.mxu0 0
      %5958 = vmatpush1.bf16.msra.mxu0 %v5669
      %5959 = vmatprep.subr.bf16.mxu0 0
      %5960 = vmatpush1.bf16.msra.mxu0 %v5670
      %5961 = vmatprep.subr.bf16.mxu0 0
      %5962 = vmatpush1.bf16.msra.mxu0 %v5671
      %5963 = vmatprep.subr.bf16.mxu0 0
      %5964 = vmatpush1.bf16.msra.mxu0 %v5672
      %5965 = vmatprep.subr.bf16.mxu0 0
      %5966 = vmatpush1.bf16.msra.mxu0 %v5673
      %5967 = vmatprep.subr.bf16.mxu0 0
      %5968 = vmatpush1.bf16.msra.mxu0 %v5674
      %5969 = vmatprep.subr.bf16.mxu0 0
      %5970 = vmatpush1.bf16.msra.mxu0 %v5675
      %5971 = vmatprep.subr.bf16.mxu0 0
      %5972 = vmatpush1.bf16.msra.mxu0 %v5676
      %5973 = vmatprep.mubr.bf16.mxu0 %v4857
      %5974 = vmatmul.mubr.bf16.gmra.mrb[0].mxu0 %v4856
      %v5975 = vpop.f32.mrb[0].mxu0
      %v5976 = vadd.f32 %v5936, %v5975
      %v5977 = vpop.f32.mrb[0].mxu0
      %v5978 = vpop.f32.mrb[0].mxu0
      %v5979 = vpop.f32.mrb[0].mxu0
      %5980 = vdwg.mxu0
      %5981 = vmatprep.subr.bf16.mxu0 0
      %5982 = vmatpush1.bf16.msra.mxu0 %v5677
      %5983 = vmatprep.subr.bf16.mxu0 0
      %5984 = vmatpush1.bf16.msra.mxu0 %v5678
      %5985 = vmatprep.subr.bf16.mxu0 0
      %5986 = vmatpush1.bf16.msra.mxu0 %v5679
      %5987 = vmatprep.subr.bf16.mxu0 0
      %5988 = vmatpush1.bf16.msra.mxu0 %v5680
      %5989 = vmatprep.subr.bf16.mxu0 0
      %5990 = vmatpush1.bf16.msra.mxu0 %v5681
      %5991 = vmatprep.subr.bf16.mxu0 0
      %5992 = vmatpush1.bf16.msra.mxu0 %v5682
      %5993 = vmatprep.subr.bf16.mxu0 0
      %5994 = vmatpush1.bf16.msra.mxu0 %v5683
      %5995 = vmatprep.subr.bf16.mxu0 0
      %5996 = vmatpush1.bf16.msra.mxu0 %v5684
      %5997 = vmatprep.subr.bf16.mxu0 0
      %5998 = vmatpush1.bf16.msra.mxu0 %v5685
      %5999 = vmatprep.subr.bf16.mxu0 0
      %6000 = vmatpush1.bf16.msra.mxu0 %v5686
      %6001 = vmatprep.subr.bf16.mxu0 0
      %6002 = vmatpush1.bf16.msra.mxu0 %v5687
      %6003 = vmatprep.subr.bf16.mxu0 0
      %6004 = vmatpush1.bf16.msra.mxu0 %v5688
      %6005 = vmatprep.subr.bf16.mxu0 0
      %6006 = vmatpush1.bf16.msra.mxu0 %v5689
      %6007 = vmatprep.subr.bf16.mxu0 0
      %6008 = vmatpush1.bf16.msra.mxu0 %v5690
      %6009 = vmatprep.subr.bf16.mxu0 0
      %6010 = vmatpush1.bf16.msra.mxu0 %v5691
      %6011 = vmatprep.subr.bf16.mxu0 0
      %6012 = vmatpush1.bf16.msra.mxu0 %v5692
      %6013 = vmatprep.mubr.bf16.mxu0 %v4859
      %6014 = vmatmul.mubr.bf16.gmra.mrb[0].mxu0 %v4858
      %v6015 = vpop.f32.mrb[0].mxu0
      %v6016 = vadd.f32 %v5976, %v6015
      %v6017 = vpop.f32.mrb[0].mxu0
      %v6018 = vpop.f32.mrb[0].mxu0
      %v6019 = vpop.f32.mrb[0].mxu0
      %6020 = vdwg.mxu0
      %6021 = vmatprep.subr.bf16.mxu0 0
      %6022 = vmatpush1.bf16.msra.mxu0 %v5693
      %6023 = vmatprep.subr.bf16.mxu0 0
      %6024 = vmatpush1.bf16.msra.mxu0 %v5694
      %6025 = vmatprep.subr.bf16.mxu0 0
      %6026 = vmatpush1.bf16.msra.mxu0 %v5695
      %6027 = vmatprep.subr.bf16.mxu0 0
      %6028 = vmatpush1.bf16.msra.mxu0 %v5696
      %6029 = vmatprep.subr.bf16.mxu0 0
      %6030 = vmatpush1.bf16.msra.mxu0 %v5697
      %6031 = vmatprep.subr.bf16.mxu0 0
      %6032 = vmatpush1.bf16.msra.mxu0 %v5698
      %6033 = vmatprep.subr.bf16.mxu0 0
      %6034 = vmatpush1.bf16.msra.mxu0 %v5699
      %6035 = vmatprep.subr.bf16.mxu0 0
      %6036 = vmatpush1.bf16.msra.mxu0 %v5700
      %6037 = vmatprep.subr.bf16.mxu0 0
      %6038 = vmatpush1.bf16.msra.mxu0 %v5701
      %6039 = vmatprep.subr.bf16.mxu0 0
      %6040 = vmatpush1.bf16.msra.mxu0 %v5702
      %6041 = vmatprep.subr.bf16.mxu0 0
      %6042 = vmatpush1.bf16.msra.mxu0 %v5703
      %6043 = vmatprep.subr.bf16.mxu0 0
      %6044 = vmatpush1.bf16.msra.mxu0 %v5704
      %6045 = vmatprep.subr.bf16.mxu0 0
      %6046 = vmatpush1.bf16.msra.mxu0 %v5705
      %6047 = vmatprep.subr.bf16.mxu0 0
      %6048 = vmatpush1.bf16.msra.mxu0 %v5706
      %6049 = vmatprep.subr.bf16.mxu0 0
      %6050 = vmatpush1.bf16.msra.mxu0 %v5707
      %6051 = vmatprep.subr.bf16.mxu0 0
      %6052 = vmatpush1.bf16.msra.mxu0 %v5708
      %6053 = vmatprep.mubr.bf16.mxu0 %v4861
      %6054 = vmatmul.mubr.bf16.gmra.mrb[0].mxu0 %v4860
      %v6055 = vpop.f32.mrb[0].mxu0
      %v6056 = vadd.f32 %v6016, %v6055
      %v6057 = vpop.f32.mrb[0].mxu0
      %v6058 = vpop.f32.mrb[0].mxu0
      %v6059 = vpop.f32.mrb[0].mxu0
      %6060 = vdwg.mxu0
      %6061 = vmatprep.subr.bf16.mxu0 0
      %6062 = vmatpush1.bf16.msra.mxu0 %v5709
      %6063 = vmatprep.subr.bf16.mxu0 0
      %6064 = vmatpush1.bf16.msra.mxu0 %v5710
      %6065 = vmatprep.subr.bf16.mxu0 0
      %6066 = vmatpush1.bf16.msra.mxu0 %v5711
      %6067 = vmatprep.subr.bf16.mxu0 0
      %6068 = vmatpush1.bf16.msra.mxu0 %v5712
      %6069 = vmatprep.subr.bf16.mxu0 0
      %6070 = vmatpush1.bf16.msra.mxu0 %v5713
      %6071 = vmatprep.subr.bf16.mxu0 0
      %6072 = vmatpush1.bf16.msra.mxu0 %v5714
      %6073 = vmatprep.subr.bf16.mxu0 0
      %6074 = vmatpush1.bf16.msra.mxu0 %v5715
      %6075 = vmatprep.subr.bf16.mxu0 0
      %6076 = vmatpush1.bf16.msra.mxu0 %v5716
      %6077 = vmatprep.subr.bf16.mxu0 0
      %6078 = vmatpush1.bf16.msra.mxu0 %v5717
      %6079 = vmatprep.subr.bf16.mxu0 0
      %6080 = vmatpush1.bf16.msra.mxu0 %v5718
      %6081 = vmatprep.subr.bf16.mxu0 0
      %6082 = vmatpush1.bf16.msra.mxu0 %v5719
      %6083 = vmatprep.subr.bf16.mxu0 0
      %6084 = vmatpush1.bf16.msra.mxu0 %v5720
      %6085 = vmatprep.subr.bf16.mxu0 0
      %6086 = vmatpush1.bf16.msra.mxu0 %v5721
      %6087 = vmatprep.subr.bf16.mxu0 0
      %6088 = vmatpush1.bf16.msra.mxu0 %v5722
      %6089 = vmatprep.subr.bf16.mxu0 0
      %6090 = vmatpush1.bf16.msra.mxu0 %v5723
      %6091 = vmatprep.subr.bf16.mxu0 0
      %6092 = vmatpush1.bf16.msra.mxu0 %v5724
      %6093 = vmatprep.mubr.bf16.mxu0 %v4863
      %6094 = vmatmul.mubr.bf16.gmra.mrb[0].mxu0 %v4862
      %v6095 = vpop.f32.mrb[0].mxu0
      %v6096 = vadd.f32 %v6056, %v6095
      %v6097 = vpop.f32.mrb[0].mxu0
      %v6098 = vpop.f32.mrb[0].mxu0
      %v6099 = vpop.f32.mrb[0].mxu0
      %6100 = vdwg.mxu0
      %6101 = vmatprep.subr.bf16.mxu0 0
      %6102 = vmatpush1.bf16.msra.mxu0 %v5725
      %6103 = vmatprep.subr.bf16.mxu0 0
      %6104 = vmatpush1.bf16.msra.mxu0 %v5726
      %6105 = vmatprep.subr.bf16.mxu0 0
      %6106 = vmatpush1.bf16.msra.mxu0 %v5727
      %6107 = vmatprep.subr.bf16.mxu0 0
      %6108 = vmatpush1.bf16.msra.mxu0 %v5728
      %6109 = vmatprep.subr.bf16.mxu0 0
      %6110 = vmatpush1.bf16.msra.mxu0 %v5729
      %6111 = vmatprep.subr.bf16.mxu0 0
      %6112 = vmatpush1.bf16.msra.mxu0 %v5730
      %6113 = vmatprep.subr.bf16.mxu0 0
      %6114 = vmatpush1.bf16.msra.mxu0 %v5731
      %6115 = vmatprep.subr.bf16.mxu0 0
      %6116 = vmatpush1.bf16.msra.mxu0 %v5732
      %6117 = vmatprep.subr.bf16.mxu0 0
      %6118 = vmatpush1.bf16.msra.mxu0 %v5733
      %6119 = vmatprep.subr.bf16.mxu0 0
      %6120 = vmatpush1.bf16.msra.mxu0 %v5734
      %6121 = vmatprep.subr.bf16.mxu0 0
      %6122 = vmatpush1.bf16.msra.mxu0 %v5735
      %6123 = vmatprep.subr.bf16.mxu0 0
      %6124 = vmatpush1.bf16.msra.mxu0 %v5736
      %6125 = vmatprep.subr.bf16.mxu0 0
      %6126 = vmatpush1.bf16.msra.mxu0 %v5737
      %6127 = vmatprep.subr.bf16.mxu0 0
      %6128 = vmatpush1.bf16.msra.mxu0 %v5738
      %6129 = vmatprep.subr.bf16.mxu0 0
      %6130 = vmatpush1.bf16.msra.mxu0 %v5739
      %6131 = vmatprep.subr.bf16.mxu0 0
      %6132 = vmatpush1.bf16.msra.mxu0 %v5740
      %6133 = vmatprep.mubr.bf16.mxu0 %v4865
      %6134 = vmatmul.mubr.bf16.gmra.mrb[0].mxu0 %v4864
      %v6135 = vpop.f32.mrb[0].mxu0
      %v6136 = vadd.f32 %v6096, %v6135
      %v6137 = vpop.f32.mrb[0].mxu0
      %v6138 = vpop.f32.mrb[0].mxu0
      %v6139 = vpop.f32.mrb[0].mxu0
      %6140 = vdwg.mxu0
      %6141 = vmatprep.subr.bf16.mxu0 0
      %6142 = vmatpush1.bf16.msra.mxu0 %v5741
      %6143 = vmatprep.subr.bf16.mxu0 0
      %6144 = vmatpush1.bf16.msra.mxu0 %v5742
      %6145 = vmatprep.subr.bf16.mxu0 0
      %6146 = vmatpush1.bf16.msra.mxu0 %v5743
      %6147 = vmatprep.subr.bf16.mxu0 0
      %6148 = vmatpush1.bf16.msra.mxu0 %v5744
      %6149 = vmatprep.subr.bf16.mxu0 0
      %6150 = vmatpush1.bf16.msra.mxu0 %v5745
      %6151 = vmatprep.subr.bf16.mxu0 0
      %6152 = vmatpush1.bf16.msra.mxu0 %v5746
      %6153 = vmatprep.subr.bf16.mxu0 0
      %6154 = vmatpush1.bf16.msra.mxu0 %v5747
      %6155 = vmatprep.subr.bf16.mxu0 0
      %6156 = vmatpush1.bf16.msra.mxu0 %v5748
      %6157 = vmatprep.subr.bf16.mxu0 0
      %6158 = vmatpush1.bf16.msra.mxu0 %v5749
      %6159 = vmatprep.subr.bf16.mxu0 0
      %6160 = vmatpush1.bf16.msra.mxu0 %v5750
      %6161 = vmatprep.subr.bf16.mxu0 0
      %6162 = vmatpush1.bf16.msra.mxu0 %v5751
      %6163 = vmatprep.subr.bf16.mxu0 0
      %6164 = vmatpush1.bf16.msra.mxu0 %v5752
      %6165 = vmatprep.subr.bf16.mxu0 0
      %6166 = vmatpush1.bf16.msra.mxu0 %v5753
      %6167 = vmatprep.subr.bf16.mxu0 0
      %6168 = vmatpush1.bf16.msra.mxu0 %v5754
      %6169 = vmatprep.subr.bf16.mxu0 0
      %6170 = vmatpush1.bf16.msra.mxu0 %v5755
      %6171 = vmatprep.subr.bf16.mxu0 0
      %6172 = vmatpush1.bf16.msra.mxu0 %v5756
      %6173 = vmatprep.mubr.bf16.mxu0 %v4867
      %6174 = vmatmul.mubr.bf16.gmra.mrb[0].mxu0 %v4866
      %v6175 = vpop.f32.mrb[0].mxu0
      %v6176 = vadd.f32 %v6136, %v6175
      %v6177 = vpop.f32.mrb[0].mxu0
      %v6178 = vpop.f32.mrb[0].mxu0
      %v6179 = vpop.f32.mrb[0].mxu0
      %6180 = vdwg.mxu0
      %6181 = vmatprep.subr.bf16.mxu0 0
      %6182 = vmatpush1.bf16.msra.mxu0 %v5757
      %6183 = vmatprep.subr.bf16.mxu0 0
      %6184 = vmatpush1.bf16.msra.mxu0 %v5758
      %6185 = vmatprep.subr.bf16.mxu0 0
      %6186 = vmatpush1.bf16.msra.mxu0 %v5759
      %6187 = vmatprep.subr.bf16.mxu0 0
      %6188 = vmatpush1.bf16.msra.mxu0 %v5760
      %6189 = vmatprep.subr.bf16.mxu0 0
      %6190 = vmatpush1.bf16.msra.mxu0 %v5761
      %6191 = vmatprep.subr.bf16.mxu0 0
      %6192 = vmatpush1.bf16.msra.mxu0 %v5762
      %6193 = vmatprep.subr.bf16.mxu0 0
      %6194 = vmatpush1.bf16.msra.mxu0 %v5763
      %6195 = vmatprep.subr.bf16.mxu0 0
      %6196 = vmatpush1.bf16.msra.mxu0 %v5764
      %6197 = vmatprep.subr.bf16.mxu0 0
      %6198 = vmatpush1.bf16.msra.mxu0 %v5765
      %6199 = vmatprep.subr.bf16.mxu0 0
      %6200 = vmatpush1.bf16.msra.mxu0 %v5766
      %6201 = vmatprep.subr.bf16.mxu0 0
      %6202 = vmatpush1.bf16.msra.mxu0 %v5767
      %6203 = vmatprep.subr.bf16.mxu0 0
      %6204 = vmatpush1.bf16.msra.mxu0 %v5768
      %6205 = vmatprep.subr.bf16.mxu0 0
      %6206 = vmatpush1.bf16.msra.mxu0 %v5769
      %6207 = vmatprep.subr.bf16.mxu0 0
      %6208 = vmatpush1.bf16.msra.mxu0 %v5770
      %6209 = vmatprep.subr.bf16.mxu0 0
      %6210 = vmatpush1.bf16.msra.mxu0 %v5771
      %6211 = vmatprep.subr.bf16.mxu0 0
      %6212 = vmatpush1.bf16.msra.mxu0 %v5772
      %6213 = vmatprep.mubr.bf16.mxu0 %v4869
      %6214 = vmatmul.mubr.bf16.gmra.mrb[0].mxu0 %v4868
      %v6215 = vpop.f32.mrb[0].mxu0
      %v6216 = vadd.f32 %v6176, %v6215
      %v6217 = vpop.f32.mrb[0].mxu0
      %v6218 = vpop.f32.mrb[0].mxu0
      %v6219 = vpop.f32.mrb[0].mxu0
      %6220 = vdwg.mxu0
      %v6221 = vadd.f32 %v4229, %v6216
      %v6222 = vsel %vm984, %v6221, 0.0
      %6223 = vadd.xlane.f32.xlu0 %v6222
      %v6224 = vpop.xlane.xlu0 %6223
      %v6225 = vmul.f32 %v6224, %v1560
      %v6226 = vsub.f32 %v6221, %v6225
      %v6227 = vmul.f32 %v6226, %v6226
      %v6228 = vsel %vm984, %v6227, 0.0
      %6229 = vadd.xlane.f32.xlu0 %v6228
      %v6230 = vpop.xlane.xlu0 %6229
      %v6231 = vmul.f32 %v6230, %v1560
      %v6232 = vadd.f32 %v6231, 1e-05
      %v6233 = vrsqrt.pop %v6232
      %v6234 = vmul.f32 %v6226, %v6233
      %v6235 = vld [vmem:[%s51] sm:$0x1]
      %v6237 = vlaneseq
      %v6238 = vshrl.u32 %v6237, 7
      %v6239 = vsub.s32 0, %v6238
      %v6240 = vrot.slane %v6235, %v6239
      %v6242 = vmul.f32 %v6234, %v6240
      %v6243 = vld [vmem:[%s53] sm:$0x1]
      %v6245 = vlaneseq
      %v6246 = vshrl.u32 %v6245, 7
      %v6247 = vsub.s32 0, %v6246
      %v6248 = vrot.slane %v6243, %v6247
      %v6250 = vadd.f32 %v6242, %v6248
      %v6251 = vpack.c.bf16 %v6250, %v6250
      %v6252 = vld [vmem:[%s55] sm:$0xf]
      %v6253 = vld [vmem:[%s55 + $0x4] sm:$0xf]
      %v6254 = vld [vmem:[%s55 + $0x8] sm:$0xf]
      %v6255 = vld [vmem:[%s55 + $0xc] sm:$0xf]
      %v6256 = vld [vmem:[%s57] sm:$0x1]
      %v6258 = vlaneseq
      %v6259 = vshrl.u32 %v6258, 7
      %v6260 = vsub.s32 0, %v6259
      %v6261 = vrot.slane %v6256, %v6260
      %v6267 = vunpack.c.l.b16 %v6252
      %v6268 = vunpack.c.l.b16 %v6253
      %v6269 = vunpack.c.l.b16 %v6254
      %v6270 = vunpack.c.l.b16 %v6255
      %v6271 = vpack.c.b16 %v6268, %v6267
      %v6272 = vpack.c.b16 %v6270, %v6269
      %v6276 = vsel %vm984, %v6251, 0
      %6278 = vmatprep.subr.bf16.mxu0 0
      %6279 = vmatpush1.bf16.msra.mxu0 %v6271
      %6280 = vmatprep.subr.bf16.mxu0 0
      %6281 = vmatpush1.bf16.msra.mxu0 %v6272
      %6282 = vmatprep.subr.bf16.mxu0 0
      %6283 = vmatpush1.bf16.msra.mxu0 0
      %6284 = vmatprep.subr.bf16.mxu0 0
      %6285 = vmatpush1.bf16.msra.mxu0 0
      %6286 = vmatprep.subr.bf16.mxu0 0
      %6287 = vmatpush1.bf16.msra.mxu0 0
      %6288 = vmatprep.subr.bf16.mxu0 0
      %6289 = vmatpush1.bf16.msra.mxu0 0
      %6290 = vmatprep.subr.bf16.mxu0 0
      %6291 = vmatpush1.bf16.msra.mxu0 0
      %6292 = vmatprep.subr.bf16.mxu0 0
      %6293 = vmatpush1.bf16.msra.mxu0 0
      %6294 = vmatprep.subr.bf16.mxu0 0
      %6295 = vmatpush1.bf16.msra.mxu0 0
      %6296 = vmatprep.subr.bf16.mxu0 0
      %6297 = vmatpush1.bf16.msra.mxu0 0
      %6298 = vmatprep.subr.bf16.mxu0 0
      %6299 = vmatpush1.bf16.msra.mxu0 0
      %6300 = vmatprep.subr.bf16.mxu0 0
      %6301 = vmatpush1.bf16.msra.mxu0 0
      %6302 = vmatprep.subr.bf16.mxu0 0
      %6303 = vmatpush1.bf16.msra.mxu0 0
      %6304 = vmatprep.subr.bf16.mxu0 0
      %6305 = vmatpush1.bf16.msra.mxu0 0
      %6306 = vmatprep.subr.bf16.mxu0 0
      %6307 = vmatpush1.bf16.msra.mxu0 0
      %6308 = vmatprep.subr.bf16.mxu0 0
      %6309 = vmatpush1.bf16.msra.mxu0 0
      %6310 = vmatprep.mubr.bf16.mxu0 0
      %6311 = vmatmul.mubr.bf16.gmra.mrb[0].mxu0 %v6276
      %v6312 = vpop.f32.mrb[0].mxu0
      %v6313 = vadd.f32 %v6261, %v6312
      %v6314 = vpop.f32.mrb[0].mxu0
      %v6315 = vpop.f32.mrb[0].mxu0
      %v6316 = vpop.f32.mrb[0].mxu0
      %6317 = vdwg.mxu0
      %vm6318 = vcmask 31744
      %6319 = vst.msk [vmem:[%s897] sm:$0xff] %vm6318, %v6313
      %p6320 = scmp.lt.s32.totalorder %s70, 1
      %s6321 = scalar_select %p6320, %s70, 1
      %s6322 = smul.addr %s6321, 8
      %s6323 = scalar_lea.vmem %s59, %s6322
      // Predicated region
      $region137: #{forward_pallas.1} parent=135 // pred_check
        %p6324 = pneg %p702
      $region138: #{forward_pallas.1} parent=135 // pred_check_branch
        %6326 = sbr.rel (%p6324) target = $region140
      $region139: #{forward_pallas.1} parent=135 // pred_region
        _
      $region140: #{forward_pallas.1} parent=135 // pred_fallthru
        _
    $region136: #{forward_pallas.1} parent=5 // pred_fallthru
      _
    %p6327 = scmp.le.s32.totalorder 2, %s65
    // Predicated region
    $region141: #{forward_pallas.1} parent=5 // pred_check
      %p6328 = pneg %p6327
    $region142: #{forward_pallas.1} parent=5 // pred_check_branch
      %6330 = sbr.rel (%p6328) target = $region144
    $region143: #{forward_pallas.1} parent=5 // pred_region
      %s6331 = ssub.s32 %s65, 2
      // Predicated region
      $region145: #{forward_pallas.1} parent=143 // pred_check
        %p6332 = pneg %p708
      $region146: #{forward_pallas.1} parent=143 // pred_check_branch
        %6334 = sbr.rel (%p6332) target = $region148
      $region147: #{forward_pallas.1} parent=143 // pred_region
        %p6335 = scmp.lt.s32.totalorder %s71, 1
        %s6336 = scalar_select %p6335, %s71, 1
        %s6337 = smul.addr %s6336, 8
        %s6338 = scalar_lea.vmem %s59, %s6337
      $region148: #{forward_pallas.1} parent=143 // pred_fallthru
        _
    $region144: #{forward_pallas.1} parent=5 // pred_fallthru
      _
  $region6: #{forward_pallas.1} parent=0 // loop_footer
    %s69 = sadd.s32 1, %s65
  $region7: #{forward_pallas.1} parent=0 // loop_footer_branch
    %64 = sbr.rel target = $region3
  $region8: #{forward_pallas.1} parent=0 // loop_exit
    _

</llo_original>
